<compile_context>
chip_gen: v6e
topology: v6e:2x2x1
jax: 0.10.0
libtpu: 0.0.40
codegen_flags: <defaults>
</compile_context>

<pallas_src>
import functools

import jax
import jax.numpy as jnp
from jax.experimental import pallas as pl
from jax.experimental.pallas import tpu as pltpu

EPS = 1e-5
MXU_DTYPE = jnp.bfloat16   # dtype fed to the MXU (f32 accumulation everywhere)
ACT_DTYPE = jnp.bfloat16   # dtype of y1/y2 HBM intermediates


def _cdiv(a, b):
    return (a + b - 1) // b


def _vmem_budget():
    """Scoped-VMEM budget per generation: ~96 MiB on 128 MiB chips, ~48 MiB on v7x."""
    try:
        cap = pltpu.get_tpu_info().vmem_capacity_bytes
    except Exception:
        cap = 64 * 1024 * 1024
    return int(min((cap * 3) // 4, 96 * 1024 * 1024))


def _cparams(budget, *sems):
    return pltpu.CompilerParams(
        dimension_semantics=sems if sems else None,
        vmem_limit_bytes=budget)


def _tile_rows(n_rows, bytes_per_row, budget, target):
    """Row tile: multiple of 8, <= target, double-buffered in/out fits the budget."""
    fit = budget // (6 * max(bytes_per_row, 1))
    t = int(min(target, max(fit, 8)))
    if n_rows <= t:
        return n_rows            # full extent (always a legal block)
    return max(8, (t // 8) * 8)


# --------------------------------------------------------------------------- kernels

def _bn_stats_kernel(x_ref, sum_ref, sumsq_ref, *, rows_total):
    # Per-tile partial sums for BN1 (finalized in the wrapper).
    x = x_ref[...]                                            # (TR, Cin) f32
    tr = x.shape[0]
    if rows_total % tr != 0:                                  # mask ragged last tile
        rows = jax.lax.broadcasted_iota(jnp.int32, x.shape, 0) + pl.program_id(0) * tr
        x = jnp.where(rows < rows_total, x, 0.0)
    sum_ref[0] = jnp.sum(x, axis=0, keepdims=True)            # (1, Cin)
    sumsq_ref[0] = jnp.sum(x * x, axis=0, keepdims=True)


def _block1_kernel(x_ref, scale_ref, shift_ref, w_ref, b_ref,
                   y_ref, sum_ref, sumsq_ref, *, rows_total):
    # y1 = conv1x1(relu(bn1(x))) on a row tile, plus BN2 partial stats.
    tr = x_ref.shape[0]
    x = x_ref[...]                                            # (TR, Cin) f32
    a = jnp.maximum(x * scale_ref[...] + shift_ref[...], 0.0)
    y = jnp.dot(a.astype(MXU_DTYPE), w_ref[...],
                preferred_element_type=jnp.float32) + b_ref[...]
    y_ref[...] = y.astype(y_ref.dtype)                        # bf16 to HBM
    if rows_total % tr != 0:                                  # mask ragged last tile
        rows = jax.lax.broadcasted_iota(jnp.int32, y.shape, 0) + pl.program_id(0) * tr
        y = jnp.where(rows < rows_total, y, 0.0)
    sum_ref[0] = jnp.sum(y, axis=0, keepdims=True)
    sumsq_ref[0] = jnp.sum(y * y, axis=0, keepdims=True)


def _block2_kernel(y1_ref, scale_ref, shift_ref, w_ref, b_ref,
                   y2_ref, sum_ref, sumsq_ref, pad_ref):
    # y2 = conv3x3(relu(bn2(y1))) for one image, plus BN3 partial stats.
    H, W, C = y1_ref.shape[1], y1_ref.shape[2], y1_ref.shape[3]

    # Zero ONLY the 1-pixel border each step (interior is fully overwritten below),
    # so the scratch never carries state between steps -> safe if v7x shards the grid.
    zrow = jnp.zeros((1, W + 2, C), pad_ref.dtype)
    zcol = jnp.zeros((H + 2, 1, C), pad_ref.dtype)
    pad_ref[0:1, :, :] = zrow
    pad_ref[H + 1:H + 2, :, :] = zrow
    pad_ref[:, 0:1, :] = zcol
    pad_ref[:, W + 1:W + 2, :] = zcol

    a = jnp.maximum(y1_ref[0].astype(jnp.float32) * scale_ref[...] + shift_ref[...], 0.0)
    pad_ref[1:H + 1, 1:W + 1, :] = a                          # (H, W, C) interior

    # 3x3 conv as 9 accumulated MXU dots into an f32 accumulator
    # (no (HW, 9C) im2col matrix, no concatenate).
    acc = jnp.zeros((H * W, C), jnp.float32)
    for ky in range(3):
        for kx in range(3):
            tap = pad_ref[ky:ky + H, kx:kx + W, :].reshape(H * W, C)
            acc = acc + jnp.dot(tap.astype(MXU_DTYPE), w_ref[ky * 3 + kx],
                                preferred_element_type=jnp.float32)
    y2 = acc + b_ref[...]

    y2_ref[0] = y2.astype(y2_ref.dtype)                       # bf16 to HBM
    sum_ref[0] = jnp.sum(y2, axis=0, keepdims=True)
    sumsq_ref[0] = jnp.sum(y2 * y2, axis=0, keepdims=True)


def _block3_max_kernel(y2_ref, scale_ref, shift_ref, w_ref, b_ref,
                       pmax_ref, *, hw_total):
    # Per-tile spatial max of y3 = conv1x1(relu(bn3(y2))); y3 never leaves VMEM.
    thw = y2_ref.shape[1]
    y2 = y2_ref[0].astype(jnp.float32)                        # (THW, Cmid)
    a = jnp.maximum(y2 * scale_ref[...] + shift_ref[...], 0.0)
    y3 = jnp.dot(a.astype(MXU_DTYPE), w_ref[...],
                 preferred_element_type=jnp.float32) + b_ref[...]
    if hw_total % thw != 0:                                   # mask ragged last tile
        rows = jax.lax.broadcasted_iota(jnp.int32, y3.shape, 0) + pl.program_id(1) * thw
        y3 = jnp.where(rows < hw_total, y3, -jnp.inf)
    pmax_ref[0, 0] = jnp.max(y3, axis=0, keepdims=True)       # (1, Cout)


def _block3_residual_kernel(y2_ref, scale_ref, shift_ref, w_ref, b_ref,
                            gate_ref, x_ref, out_ref):
    # Recompute y3 from the Cmid-wide y2, apply the SE gate and the residual.
    y2 = y2_ref[0].astype(jnp.float32)                        # (THW, Cmid)
    a = jnp.maximum(y2 * scale_ref[...] + shift_ref[...], 0.0)
    y3 = jnp.dot(a.astype(MXU_DTYPE), w_ref[...],
                 preferred_element_type=jnp.float32) + b_ref[...]
    out_ref[0] = y3 * gate_ref[0] + x_ref[0]


# --------------------------------------------------------------------------- wrapper

def _bn_scale_shift(psum, psumsq, count, gamma, beta):
    """Finalize per-channel BN: y = x*scale + shift (training-mode batch stats)."""
    mean = jnp.sum(psum, axis=0) / count                      # (1, C)
    var = jnp.maximum(jnp.sum(psumsq, axis=0) / count - mean * mean, 0.0)
    scale = gamma * jax.lax.rsqrt(var + EPS)
    shift = beta - mean * scale
    return scale, shift


@jax.jit
def se_bottleneck(x_nchw, params):
    """x_nchw: (N, Cin, H, W) float32. Returns (N, Cout, H, W) float32."""
    N, Cin, H, W = x_nchw.shape
    Cmid = params["w1"].shape[1]
    Cout = params["w3"].shape[1]
    assert Cin == Cout, "residual add requires in_chans == out_chans"

    budget = _vmem_budget()

    # TODO(synk): drop these NCHW<->NHWC transposes if the surrounding graph stays NHWC.
    x = jnp.transpose(x_nchw, (0, 2, 3, 1)).astype(jnp.float32)   # NHWC
    R, HW = N * H * W, H * W
    x2d = x.reshape(R, Cin)

    TR = _tile_rows(R, Cin * 4 + Cmid * 2, budget, 1024)
    THW = _tile_rows(HW, Cmid * 2 + (Cin + Cout) * 4, budget, 512)
    G, T = _cdiv(R, TR), _cdiv(HW, THW)

    # bf16 weights for the MXU; biases / BN affine stay f32.
    w1 = params["w1"].astype(MXU_DTYPE)
    w2 = params["w2"].reshape(9, Cmid, Cmid).astype(MXU_DTYPE)
    w3 = params["w3"].astype(MXU_DTYPE)

    # ---- pass 1: BN1 partial statistics of x --------------------------------
    stat1 = jax.ShapeDtypeStruct((G, 1, Cin), jnp.float32)
    s1, ss1 = pl.pallas_call(
        functools.partial(_bn_stats_kernel, rows_total=R),
        grid=(G,),
        in_specs=[pl.BlockSpec((TR, Cin), lambda i: (i, 0))],
        out_specs=[pl.BlockSpec((1, 1, Cin), lambda i: (i, 0, 0)),
                   pl.BlockSpec((1, 1, Cin), lambda i: (i, 0, 0))],
        out_shape=(stat1, stat1),
        compiler_params=_cparams(budget, "parallel"),
    )(x2d)
    scale1, shift1 = _bn_scale_shift(s1, ss1, R, params["g1"], params["b1"])

    # ---- pass 2: y1 = conv1x1(relu(bn1(x))) + BN2 partial stats --------------
    stat2 = jax.ShapeDtypeStruct((G, 1, Cmid), jnp.float32)
    y1, s2, ss2 = pl.pallas_call(
        functools.partial(_block1_kernel, rows_total=R),
        grid=(G,),
        in_specs=[
            pl.BlockSpec((TR, Cin), lambda i: (i, 0)),
            pl.BlockSpec((1, Cin), lambda i: (0, 0)),
            pl.BlockSpec((1, Cin), lambda i: (0, 0)),
            pl.BlockSpec((Cin, Cmid), lambda i: (0, 0)),
            pl.BlockSpec((1, Cmid), lambda i: (0, 0)),
        ],
        out_specs=[
            pl.BlockSpec((TR, Cmid), lambda i: (i, 0)),
            pl.BlockSpec((1, 1, Cmid), lambda i: (i, 0, 0)),
            pl.BlockSpec((1, 1, Cmid), lambda i: (i, 0, 0)),
        ],
        out_shape=(jax.ShapeDtypeStruct((R, Cmid), ACT_DTYPE), stat2, stat2),
        compiler_params=_cparams(budget, "parallel"),
    )(x2d, scale1, shift1, w1, params["cb1"])
    scale2, shift2 = _bn_scale_shift(s2, ss2, R, params["g2"], params["b2"])

    # ---- pass 3: y2 = conv3x3(relu(bn2(y1))) + BN3 partial stats -------------
    # TODO(synk): for large H*W on v7x (64 MiB VMEM), tile this pass over H strips
    # with a 1-row halo instead of one full image per grid step.
    y1_4d = y1.reshape(N, H, W, Cmid)
    stat3 = jax.ShapeDtypeStruct((N, 1, Cmid), jnp.float32)
    y2, s3, ss3 = pl.pallas_call(
        _block2_kernel,
        grid=(N,),
        in_specs=[
            pl.BlockSpec((1, H, W, Cmid), lambda n: (n, 0, 0, 0)),
            pl.BlockSpec((1, Cmid), lambda n: (0, 0)),
            pl.BlockSpec((1, Cmid), lambda n: (0, 0)),
            pl.BlockSpec((9, Cmid, Cmid), lambda n: (0, 0, 0)),
            pl.BlockSpec((1, Cmid), lambda n: (0, 0)),
        ],
        out_specs=[
            pl.BlockSpec((1, HW, Cmid), lambda n: (n, 0, 0)),
            pl.BlockSpec((1, 1, Cmid), lambda n: (n, 0, 0)),
            pl.BlockSpec((1, 1, Cmid), lambda n: (n, 0, 0)),
        ],
        out_shape=(jax.ShapeDtypeStruct((N, HW, Cmid), ACT_DTYPE), stat3, stat3),
        scratch_shapes=[pltpu.VMEM((H + 2, W + 2, Cmid), jnp.float32)],
        compiler_params=_cparams(budget, "parallel"),
    )(y1_4d, scale2, shift2, w2, params["cb2"])
    scale3, shift3 = _bn_scale_shift(s3, ss3, R, params["g3"], params["b3"])

    # ---- pass 4: per-tile spatial max of y3 (y3 is not written to HBM) -------
    pmax = pl.pallas_call(
        functools.partial(_block3_max_kernel, hw_total=HW),
        grid=(N, T),
        in_specs=[
            pl.BlockSpec((1, THW, Cmid), lambda n, t: (n, t, 0)),
            pl.BlockSpec((1, Cmid), lambda n, t: (0, 0)),
            pl.BlockSpec((1, Cmid), lambda n, t: (0, 0)),
            pl.BlockSpec((Cmid, Cout), lambda n, t: (0, 0)),
            pl.BlockSpec((1, Cout), lambda n, t: (0, 0)),
        ],
        out_specs=pl.BlockSpec((1, 1, 1, Cout), lambda n, t: (n, t, 0, 0)),
        out_shape=jax.ShapeDtypeStruct((N, T, 1, Cout), jnp.float32),
        compiler_params=_cparams(budget, "parallel", "parallel"),
    )(y2, scale3, shift3, w3, params["cb3"])

    # ---- SE gate: tiny (N, Cout) math, plain XLA (no pallas_call overhead) ---
    squ = jnp.max(pmax, axis=(1, 2))                          # (N, Cout) global max
    h = jnp.maximum(jnp.dot(squ, params["wfc1"]), 0.0)
    gate = jax.nn.sigmoid(jnp.dot(h, params["wfc2"]))
    gate3 = gate.reshape(N, 1, Cout)

    # ---- pass 5: out = conv1x1(relu(bn3(y2))) * gate + x (residual) ----------
    x3d = x.reshape(N, HW, Cin)
    out = pl.pallas_call(
        _block3_residual_kernel,
        grid=(N, T),
        in_specs=[
            pl.BlockSpec((1, THW, Cmid), lambda n, t: (n, t, 0)),
            pl.BlockSpec((1, Cmid), lambda n, t: (0, 0)),
            pl.BlockSpec((1, Cmid), lambda n, t: (0, 0)),
            pl.BlockSpec((Cmid, Cout), lambda n, t: (0, 0)),
            pl.BlockSpec((1, Cout), lambda n, t: (0, 0)),
            pl.BlockSpec((1, 1, Cout), lambda n, t: (n, 0, 0)),
            pl.BlockSpec((1, THW, Cin), lambda n, t: (n, t, 0)),
        ],
        out_specs=pl.BlockSpec((1, THW, Cout), lambda n, t: (n, t, 0)),
        out_shape=jax.ShapeDtypeStruct((N, HW, Cout), jnp.float32),
        compiler_params=_cparams(budget, "parallel", "parallel"),
    )(y2, scale3, shift3, w3, params["cb3"], gate3, x3d)

    return jnp.transpose(out.reshape(N, H, W, Cout), (0, 3, 1, 2))   # NHWC -> NCHW


# --------------------------------------------------------------------------- params

def init_params(key, in_chans, out_chans):
    assert out_chans % 4 == 0
    cmid = out_chans // 4
    cse = out_chans // 4
    ks = jax.random.split(key, 16)

    def nrm(k, shape, scale=0.1):
        return scale * jax.random.normal(k, shape, dtype=jnp.float32)

    return {
        # block1: BN(in_chans), conv1x1 in->cmid (with bias)
        "g1": 1.0 + nrm(ks[0], (1, in_chans)), "b1": nrm(ks[1], (1, in_chans)),
        "w1": nrm(ks[2], (in_chans, cmid)),    "cb1": nrm(ks[3], (1, cmid)),
        # block2: BN(cmid), conv3x3 cmid->cmid (with bias); weight layout (ky, kx, cin, cout)
        "g2": 1.0 + nrm(ks[4], (1, cmid)),     "b2": nrm(ks[5], (1, cmid)),
        "w2": nrm(ks[6], (3, 3, cmid, cmid)),  "cb2": nrm(ks[7], (1, cmid)),
        # block3: BN(cmid), conv1x1 cmid->out (with bias)
        "g3": 1.0 + nrm(ks[8], (1, cmid)),     "b3": nrm(ks[9], (1, cmid)),
        "w3": nrm(ks[10], (cmid, out_chans)),  "cb3": nrm(ks[11], (1, out_chans)),
        # SE fc1/fc2: bias-free 1x1 convs
        "wfc1": nrm(ks[12], (out_chans, cse)),
        "wfc2": nrm(ks[13], (cse, out_chans)),
    }


if __name__ == "__main__":
    # residual add requires in_chans == out_chans (as in the PyTorch forward)
    N, C, H, W = 2, 16, 16, 16
    key = jax.random.PRNGKey(0)
    kx, kp = jax.random.split(key)
    x = jax.random.normal(kx, (N, C, H, W), dtype=jnp.float32)
    params = init_params(kp, in_chans=C, out_chans=C)

    out = se_bottleneck(x, params)
    out = jax.block_until_ready(out)

    assert out.shape == (N, C, H, W), out.shape
    assert bool(jnp.all(jnp.isfinite(out)))
    print("KERNEL_OK")
</pallas_src>

<mosaic_0001>
module attributes {stable_mosaic.version = 11 : i64} {
  func.func @_bn_stats_kernel(%arg0: i32, %arg1: memref<512x16xf32, #tpu.memory_space<vmem>>, %arg2: memref<1x1x16xf32, #tpu.memory_space<vmem>>, %arg3: memref<1x1x16xf32, #tpu.memory_space<vmem>>) attributes {dimension_semantics = [#tpu.dimension_semantics<parallel>], iteration_bounds = array<i64: 1>, scalar_prefetch = 0 : i64, scratch_operands = 0 : i64, tpu.core_type = #tpu.core_type<tc>, window_params = [{transform_indices = @transform_0, window_bounds = array<i64: 512, 16>}, {transform_indices = @transform_1, window_bounds = array<i64: 1, 1, 16>}, {transform_indices = @transform_2, window_bounds = array<i64: 1, 1, 16>}]} {
    %c0 = arith.constant 0 : index
    %c0_0 = arith.constant 0 : index
    %0 = vector.load %arg1[%c0, %c0_0] : memref<512x16xf32, #tpu.memory_space<vmem>>, vector<512x16xf32>
    %cst = arith.constant dense<0.000000e+00> : vector<16xf32>
    %1 = vector.multi_reduction <add>, %0, %cst [0] : vector<512x16xf32> to vector<16xf32>
    %2 = vector.shape_cast %1 : vector<16xf32> to vector<1x16xf32>
    %c0_1 = arith.constant 0 : index
    %c0_2 = arith.constant 0 : index
    %c0_3 = arith.constant 0 : index
    %3 = vector.load %arg2[%c0_1, %c0_2, %c0_3] : memref<1x1x16xf32, #tpu.memory_space<vmem>>, vector<1x1x16xf32>
    %4 = vector.shape_cast %3 : vector<1x1x16xf32> to vector<1x16xf32>
    %5 = vector.shape_cast %2 : vector<1x16xf32> to vector<1x1x16xf32>
    tpu.vector_store %arg2[%c0_1, %c0_2, %c0_3], %5 {strides = array<i32>} : memref<1x1x16xf32, #tpu.memory_space<vmem>>, vector<1x1x16xf32>,
    %6 = arith.mulf %0, %0 : vector<512x16xf32>
    %cst_4 = arith.constant dense<0.000000e+00> : vector<16xf32>
    %7 = vector.multi_reduction <add>, %6, %cst_4 [0] : vector<512x16xf32> to vector<16xf32>
    %8 = vector.shape_cast %7 : vector<16xf32> to vector<1x16xf32>
    %c0_5 = arith.constant 0 : index
    %c0_6 = arith.constant 0 : index
    %c0_7 = arith.constant 0 : index
    %9 = vector.load %arg3[%c0_5, %c0_6, %c0_7] : memref<1x1x16xf32, #tpu.memory_space<vmem>>, vector<1x1x16xf32>
    %10 = vector.shape_cast %9 : vector<1x1x16xf32> to vector<1x16xf32>
    %11 = vector.shape_cast %8 : vector<1x16xf32> to vector<1x1x16xf32>
    tpu.vector_store %arg3[%c0_5, %c0_6, %c0_7], %11 {strides = array<i32>} : memref<1x1x16xf32, #tpu.memory_space<vmem>>, vector<1x1x16xf32>,
    return
  }
  func.func @transform_0(%arg0: i32) -> (i32, i32) {
    %c0_i32 = arith.constant 0 : i32
    %c0_i32_0 = arith.constant 0 : i32
    return %arg0, %c0_i32 : i32, i32
  }
  func.func @transform_1(%arg0: i32) -> (i32, i32, i32) {
    %c0_i32 = arith.constant 0 : i32
    %c0_i32_0 = arith.constant 0 : i32
    %c0_i32_1 = arith.constant 0 : i32
    return %arg0, %c0_i32, %c0_i32_0 : i32, i32, i32
  }
  func.func @transform_2(%arg0: i32) -> (i32, i32, i32) {
    %c0_i32 = arith.constant 0 : i32
    %c0_i32_0 = arith.constant 0 : i32
    %c0_i32_1 = arith.constant 0 : i32
    return %arg0, %c0_i32, %c0_i32_0 : i32, i32, i32
  }
}

module attributes {stable_mosaic.version = 11 : i64} {
  func.func @_block1_kernel(%arg0: i32, %arg1: memref<512x16xf32, #tpu.memory_space<vmem>>, %arg2: memref<1x16xf32, #tpu.memory_space<vmem>>, %arg3: memref<1x16xf32, #tpu.memory_space<vmem>>, %arg4: memref<16x4xbf16, #tpu.memory_space<vmem>>, %arg5: memref<1x4xf32, #tpu.memory_space<vmem>>, %arg6: memref<512x4xbf16, #tpu.memory_space<vmem>>, %arg7: memref<1x1x4xf32, #tpu.memory_space<vmem>>, %arg8: memref<1x1x4xf32, #tpu.memory_space<vmem>>) attributes {dimension_semantics = [#tpu.dimension_semantics<parallel>], iteration_bounds = array<i64: 1>, scalar_prefetch = 0 : i64, scratch_operands = 0 : i64, tpu.core_type = #tpu.core_type<tc>, window_params = [{transform_indices = @transform_0, window_bounds = array<i64: 512, 16>}, {pipeline_mode = #tpu.pipeline_mode<synchronous>, transform_indices = @transform_1, window_bounds = array<i64: 1, 16>}, {pipeline_mode = #tpu.pipeline_mode<synchronous>, transform_indices = @transform_2, window_bounds = array<i64: 1, 16>}, {pipeline_mode = #tpu.pipeline_mode<synchronous>, transform_indices = @transform_3, window_bounds = array<i64: 16, 4>}, {pipeline_mode = #tpu.pipeline_mode<synchronous>, transform_indices = @transform_4, window_bounds = array<i64: 1, 4>}, {transform_indices = @transform_5, window_bounds = array<i64: 512, 4>}, {transform_indices = @transform_6, window_bounds = array<i64: 1, 1, 4>}, {transform_indices = @transform_7, window_bounds = array<i64: 1, 1, 4>}]} {
    %c0 = arith.constant 0 : index
    %c0_0 = arith.constant 0 : index
    %0 = vector.load %arg1[%c0, %c0_0] : memref<512x16xf32, #tpu.memory_space<vmem>>, vector<512x16xf32>
    %c0_1 = arith.constant 0 : index
    %c0_2 = arith.constant 0 : index
    %1 = vector.load %arg2[%c0_1, %c0_2] : memref<1x16xf32, #tpu.memory_space<vmem>>, vector<1x16xf32>
    %2 = vector.broadcast %1 : vector<1x16xf32> to vector<512x16xf32>
    %3 = arith.mulf %0, %2 : vector<512x16xf32>
    %c0_3 = arith.constant 0 : index
    %c0_4 = arith.constant 0 : index
    %4 = vector.load %arg3[%c0_3, %c0_4] : memref<1x16xf32, #tpu.memory_space<vmem>>, vector<1x16xf32>
    %5 = vector.broadcast %4 : vector<1x16xf32> to vector<512x16xf32>
    %6 = arith.addf %3, %5 : vector<512x16xf32>
    %cst = arith.constant 0.000000e+00 : f32
    %7 = vector.broadcast %cst : f32 to vector<512x16xf32>
    %8 = arith.maximumf %6, %7 : vector<512x16xf32>
    %9 = arith.truncf %8 : vector<512x16xf32> to vector<512x16xbf16>
    %c0_5 = arith.constant 0 : index
    %c0_6 = arith.constant 0 : index
    %10 = vector.load %arg4[%c0_5, %c0_6] : memref<16x4xbf16, #tpu.memory_space<vmem>>, vector<16x4xbf16>
    %cst_7 = arith.constant dense<0.000000e+00> : vector<512x4xf32>
    %11 = tpu.matmul %9, %10, %cst_7 {dimension_numbers = #tpu.dot_dimension_numbers<[1], [0], [0], [1], [0, 0, 1, 1], [], []>} : vector<512x16xbf16>, vector<16x4xbf16>, vector<512x4xf32> -> vector<512x4xf32>
    %c0_8 = arith.constant 0 : index
    %c0_9 = arith.constant 0 : index
    %12 = vector.load %arg5[%c0_8, %c0_9] : memref<1x4xf32, #tpu.memory_space<vmem>>, vector<1x4xf32>
    %13 = vector.broadcast %12 : vector<1x4xf32> to vector<512x4xf32>
    %14 = arith.addf %11, %13 : vector<512x4xf32>
    %15 = arith.truncf %14 : vector<512x4xf32> to vector<512x4xbf16>
    %c0_10 = arith.constant 0 : index
    %c0_11 = arith.constant 0 : index
    %16 = vector.load %arg6[%c0_10, %c0_11] : memref<512x4xbf16, #tpu.memory_space<vmem>>, vector<512x4xbf16>
    tpu.vector_store %arg6[%c0_10, %c0_11], %15 {strides = array<i32>} : memref<512x4xbf16, #tpu.memory_space<vmem>>, vector<512x4xbf16>,
    %cst_12 = arith.constant dense<0.000000e+00> : vector<4xf32>
    %17 = vector.multi_reduction <add>, %14, %cst_12 [0] : vector<512x4xf32> to vector<4xf32>
    %18 = vector.shape_cast %17 : vector<4xf32> to vector<1x4xf32>
    %c0_13 = arith.constant 0 : index
    %c0_14 = arith.constant 0 : index
    %c0_15 = arith.constant 0 : index
    %19 = vector.load %arg7[%c0_13, %c0_14, %c0_15] : memref<1x1x4xf32, #tpu.memory_space<vmem>>, vector<1x1x4xf32>
    %20 = vector.shape_cast %19 : vector<1x1x4xf32> to vector<1x4xf32>
    %21 = vector.shape_cast %18 : vector<1x4xf32> to vector<1x1x4xf32>
    tpu.vector_store %arg7[%c0_13, %c0_14, %c0_15], %21 {strides = array<i32>} : memref<1x1x4xf32, #tpu.memory_space<vmem>>, vector<1x1x4xf32>,
    %22 = arith.mulf %14, %14 : vector<512x4xf32>
    %cst_16 = arith.constant dense<0.000000e+00> : vector<4xf32>
    %23 = vector.multi_reduction <add>, %22, %cst_16 [0] : vector<512x4xf32> to vector<4xf32>
    %24 = vector.shape_cast %23 : vector<4xf32> to vector<1x4xf32>
    %c0_17 = arith.constant 0 : index
    %c0_18 = arith.constant 0 : index
    %c0_19 = arith.constant 0 : index
    %25 = vector.load %arg8[%c0_17, %c0_18, %c0_19] : memref<1x1x4xf32, #tpu.memory_space<vmem>>, vector<1x1x4xf32>
    %26 = vector.shape_cast %25 : vector<1x1x4xf32> to vector<1x4xf32>
    %27 = vector.shape_cast %24 : vector<1x4xf32> to vector<1x1x4xf32>
    tpu.vector_store %arg8[%c0_17, %c0_18, %c0_19], %27 {strides = array<i32>} : memref<1x1x4xf32, #tpu.memory_space<vmem>>, vector<1x1x4xf32>,
    return
  }
  func.func @transform_0(%arg0: i32) -> (i32, i32) {
    %c0_i32 = arith.constant 0 : i32
    %c0_i32_0 = arith.constant 0 : i32
    return %arg0, %c0_i32 : i32, i32
  }
  func.func @transform_1(%arg0: i32) -> (i32, i32) {
    %c0_i32 = arith.constant 0 : i32
    %c0_i32_0 = arith.constant 0 : i32
    %c0_i32_1 = arith.constant 0 : i32
    return %c0_i32, %c0_i32_0 : i32, i32
  }
  func.func @transform_2(%arg0: i32) -> (i32, i32) {
    %c0_i32 = arith.constant 0 : i32
    %c0_i32_0 = arith.constant 0 : i32
    %c0_i32_1 = arith.constant 0 : i32
    return %c0_i32, %c0_i32_0 : i32, i32
  }
  func.func @transform_3(%arg0: i32) -> (i32, i32) {
    %c0_i32 = arith.constant 0 : i32
    %c0_i32_0 = arith.constant 0 : i32
    %c0_i32_1 = arith.constant 0 : i32
    return %c0_i32, %c0_i32_0 : i32, i32
  }
  func.func @transform_4(%arg0: i32) -> (i32, i32) {
    %c0_i32 = arith.constant 0 : i32
    %c0_i32_0 = arith.constant 0 : i32
    %c0_i32_1 = arith.constant 0 : i32
    return %c0_i32, %c0_i32_0 : i32, i32
  }
  func.func @transform_5(%arg0: i32) -> (i32, i32) {
    %c0_i32 = arith.constant 0 : i32
    %c0_i32_0 = arith.constant 0 : i32
    return %arg0, %c0_i32 : i32, i32
  }
  func.func @transform_6(%arg0: i32) -> (i32, i32, i32) {
    %c0_i32 = arith.constant 0 : i32
    %c0_i32_0 = arith.constant 0 : i32
    %c0_i32_1 = arith.constant 0 : i32
    return %arg0, %c0_i32, %c0_i32_0 : i32, i32, i32
  }
  func.func @transform_7(%arg0: i32) -> (i32, i32, i32) {
    %c0_i32 = arith.constant 0 : i32
    %c0_i32_0 = arith.constant 0 : i32
    %c0_i32_1 = arith.constant 0 : i32
    return %arg0, %c0_i32, %c0_i32_0 : i32, i32, i32
  }
}

module attributes {stable_mosaic.version = 11 : i64} {
  func.func @_block2_kernel(%arg0: i32, %arg1: memref<1x16x16x4xbf16, #tpu.memory_space<vmem>>, %arg2: memref<1x4xf32, #tpu.memory_space<vmem>>, %arg3: memref<1x4xf32, #tpu.memory_space<vmem>>, %arg4: memref<9x4x4xbf16, #tpu.memory_space<vmem>>, %arg5: memref<1x4xf32, #tpu.memory_space<vmem>>, %arg6: memref<1x256x4xbf16, #tpu.memory_space<vmem>>, %arg7: memref<1x1x4xf32, #tpu.memory_space<vmem>>, %arg8: memref<1x1x4xf32, #tpu.memory_space<vmem>>, %arg9: memref<18x18x4xf32, #tpu.memory_space<vmem>>) attributes {dimension_semantics = [#tpu.dimension_semantics<parallel>], iteration_bounds = array<i64: 2>, scalar_prefetch = 0 : i64, scratch_operands = 1 : i64, tpu.core_type = #tpu.core_type<tc>, window_params = [{transform_indices = @transform_0, window_bounds = array<i64: 1, 16, 16, 4>}, {pipeline_mode = #tpu.pipeline_mode<synchronous>, transform_indices = @transform_1, window_bounds = array<i64: 1, 4>}, {pipeline_mode = #tpu.pipeline_mode<synchronous>, transform_indices = @transform_2, window_bounds = array<i64: 1, 4>}, {pipeline_mode = #tpu.pipeline_mode<synchronous>, transform_indices = @transform_3, window_bounds = array<i64: 9, 4, 4>}, {pipeline_mode = #tpu.pipeline_mode<synchronous>, transform_indices = @transform_4, window_bounds = array<i64: 1, 4>}, {transform_indices = @transform_5, window_bounds = array<i64: 1, 256, 4>}, {transform_indices = @transform_6, window_bounds = array<i64: 1, 1, 4>}, {transform_indices = @transform_7, window_bounds = array<i64: 1, 1, 4>}]} {
    %cst = arith.constant 0.000000e+00 : f32
    %0 = vector.broadcast %cst : f32 to vector<1x18x4xf32>
    %cst_0 = arith.constant 0.000000e+00 : f32
    %1 = vector.broadcast %cst_0 : f32 to vector<18x1x4xf32>
    %c0 = arith.constant 0 : index
    %c0_1 = arith.constant 0 : index
    %c0_2 = arith.constant 0 : index
    %2 = vector.load %arg9[%c0, %c0_1, %c0_2] : memref<18x18x4xf32, #tpu.memory_space<vmem>>, vector<1x18x4xf32>
    tpu.vector_store %arg9[%c0, %c0_1, %c0_2], %0 {strides = array<i32>} : memref<18x18x4xf32, #tpu.memory_space<vmem>>, vector<1x18x4xf32>,
    %c17 = arith.constant 17 : index
    %c0_3 = arith.constant 0 : index
    %c0_4 = arith.constant 0 : index
    %3 = vector.load %arg9[%c17, %c0_3, %c0_4] : memref<18x18x4xf32, #tpu.memory_space<vmem>>, vector<1x18x4xf32>
    tpu.vector_store %arg9[%c17, %c0_3, %c0_4], %0 {strides = array<i32>} : memref<18x18x4xf32, #tpu.memory_space<vmem>>, vector<1x18x4xf32>,
    %c0_5 = arith.constant 0 : index
    %c0_6 = arith.constant 0 : index
    %c0_7 = arith.constant 0 : index
    %4 = vector.load %arg9[%c0_5, %c0_6, %c0_7] : memref<18x18x4xf32, #tpu.memory_space<vmem>>, vector<18x1x4xf32>
    tpu.vector_store %arg9[%c0_5, %c0_6, %c0_7], %1 {strides = array<i32>} : memref<18x18x4xf32, #tpu.memory_space<vmem>>, vector<18x1x4xf32>,
    %c0_8 = arith.constant 0 : index
    %c17_9 = arith.constant 17 : index
    %c0_10 = arith.constant 0 : index
    %5 = vector.load %arg9[%c0_8, %c17_9, %c0_10] : memref<18x18x4xf32, #tpu.memory_space<vmem>>, vector<18x1x4xf32>
    tpu.vector_store %arg9[%c0_8, %c17_9, %c0_10], %1 {strides = array<i32>} : memref<18x18x4xf32, #tpu.memory_space<vmem>>, vector<18x1x4xf32>,
    %c0_11 = arith.constant 0 : index
    %c0_12 = arith.constant 0 : index
    %c0_13 = arith.constant 0 : index
    %c0_14 = arith.constant 0 : index
    %6 = vector.load %arg1[%c0_11, %c0_12, %c0_13, %c0_14] : memref<1x16x16x4xbf16, #tpu.memory_space<vmem>>, vector<1x16x16x4xbf16>
    %7 = vector.shape_cast %6 : vector<1x16x16x4xbf16> to vector<16x16x4xbf16>
    %8 = arith.extf %7 : vector<16x16x4xbf16> to vector<16x16x4xf32>
    %c0_15 = arith.constant 0 : index
    %c0_16 = arith.constant 0 : index
    %9 = vector.load %arg2[%c0_15, %c0_16] : memref<1x4xf32, #tpu.memory_space<vmem>>, vector<1x4xf32>
    %10 = vector.shape_cast %9 : vector<1x4xf32> to vector<1x1x4xf32>
    %11 = vector.broadcast %10 : vector<1x1x4xf32> to vector<16x16x4xf32>
    %12 = arith.mulf %8, %11 : vector<16x16x4xf32>
    %c0_17 = arith.constant 0 : index
    %c0_18 = arith.constant 0 : index
    %13 = vector.load %arg3[%c0_17, %c0_18] : memref<1x4xf32, #tpu.memory_space<vmem>>, vector<1x4xf32>
    %14 = vector.shape_cast %13 : vector<1x4xf32> to vector<1x1x4xf32>
    %15 = vector.broadcast %14 : vector<1x1x4xf32> to vector<16x16x4xf32>
    %16 = arith.addf %12, %15 : vector<16x16x4xf32>
    %cst_19 = arith.constant 0.000000e+00 : f32
    %17 = vector.broadcast %cst_19 : f32 to vector<16x16x4xf32>
    %18 = arith.maximumf %16, %17 : vector<16x16x4xf32>
    %c1 = arith.constant 1 : index
    %c1_20 = arith.constant 1 : index
    %c0_21 = arith.constant 0 : index
    %19 = vector.load %arg9[%c1, %c1_20, %c0_21] : memref<18x18x4xf32, #tpu.memory_space<vmem>>, vector<16x16x4xf32>
    tpu.vector_store %arg9[%c1, %c1_20, %c0_21], %18 {strides = array<i32>} : memref<18x18x4xf32, #tpu.memory_space<vmem>>, vector<16x16x4xf32>,
    %cst_22 = arith.constant 0.000000e+00 : f32
    %20 = vector.broadcast %cst_22 : f32 to vector<256x4xf32>
    %c0_23 = arith.constant 0 : index
    %c0_24 = arith.constant 0 : index
    %c0_25 = arith.constant 0 : index
    %21 = vector.load %arg9[%c0_23, %c0_24, %c0_25] : memref<18x18x4xf32, #tpu.memory_space<vmem>>, vector<16x16x4xf32>
    %22 = vector.shape_cast %21 : vector<16x16x4xf32> to vector<256x4xf32>
    %23 = arith.truncf %22 : vector<256x4xf32> to vector<256x4xbf16>
    %c0_26 = arith.constant 0 : index
    %c0_27 = arith.constant 0 : index
    %c0_28 = arith.constant 0 : index
    %24 = vector.load %arg4[%c0_26, %c0_27, %c0_28] : memref<9x4x4xbf16, #tpu.memory_space<vmem>>, vector<1x4x4xbf16>
    %25 = vector.shape_cast %24 : vector<1x4x4xbf16> to vector<4x4xbf16>
    %cst_29 = arith.constant dense<0.000000e+00> : vector<256x4xf32>
    %26 = tpu.matmul %23, %25, %cst_29 {dimension_numbers = #tpu.dot_dimension_numbers<[1], [0], [0], [1], [0, 0, 1, 1], [], []>} : vector<256x4xbf16>, vector<4x4xbf16>, vector<256x4xf32> -> vector<256x4xf32>
    %27 = arith.addf %20, %26 : vector<256x4xf32>
    %c0_30 = arith.constant 0 : index
    %c1_31 = arith.constant 1 : index
    %c0_32 = arith.constant 0 : index
    %28 = vector.load %arg9[%c0_30, %c1_31, %c0_32] : memref<18x18x4xf32, #tpu.memory_space<vmem>>, vector<16x16x4xf32>
    %29 = vector.shape_cast %28 : vector<16x16x4xf32> to vector<256x4xf32>
    %30 = arith.truncf %29 : vector<256x4xf32> to vector<256x4xbf16>
    %c1_33 = arith.constant 1 : index
    %c0_34 = arith.constant 0 : index
    %c0_35 = arith.constant 0 : index
    %31 = vector.load %arg4[%c1_33, %c0_34, %c0_35] : memref<9x4x4xbf16, #tpu.memory_space<vmem>>, vector<1x4x4xbf16>
    %32 = vector.shape_cast %31 : vector<1x4x4xbf16> to vector<4x4xbf16>
    %cst_36 = arith.constant dense<0.000000e+00> : vector<256x4xf32>
    %33 = tpu.matmul %30, %32, %cst_36 {dimension_numbers = #tpu.dot_dimension_numbers<[1], [0], [0], [1], [0, 0, 1, 1], [], []>} : vector<256x4xbf16>, vector<4x4xbf16>, vector<256x4xf32> -> vector<256x4xf32>
    %34 = arith.addf %27, %33 : vector<256x4xf32>
    %c0_37 = arith.constant 0 : index
    %c2 = arith.constant 2 : index
    %c0_38 = arith.constant 0 : index
    %35 = vector.load %arg9[%c0_37, %c2, %c0_38] : memref<18x18x4xf32, #tpu.memory_space<vmem>>, vector<16x16x4xf32>
    %36 = vector.shape_cast %35 : vector<16x16x4xf32> to vector<256x4xf32>
    %37 = arith.truncf %36 : vector<256x4xf32> to vector<256x4xbf16>
    %c2_39 = arith.constant 2 : index
    %c0_40 = arith.constant 0 : index
    %c0_41 = arith.constant 0 : index
    %38 = vector.load %arg4[%c2_39, %c0_40, %c0_41] : memref<9x4x4xbf16, #tpu.memory_space<vmem>>, vector<1x4x4xbf16>
    %39 = vector.shape_cast %38 : vector<1x4x4xbf16> to vector<4x4xbf16>
    %cst_42 = arith.constant dense<0.000000e+00> : vector<256x4xf32>
    %40 = tpu.matmul %37, %39, %cst_42 {dimension_numbers = #tpu.dot_dimension_numbers<[1], [0], [0], [1], [0, 0, 1, 1], [], []>} : vector<256x4xbf16>, vector<4x4xbf16>, vector<256x4xf32> -> vector<256x4xf32>
    %41 = arith.addf %34, %40 : vector<256x4xf32>
    %c1_43 = arith.constant 1 : index
    %c0_44 = arith.constant 0 : index
    %c0_45 = arith.constant 0 : index
    %42 = vector.load %arg9[%c1_43, %c0_44, %c0_45] : memref<18x18x4xf32, #tpu.memory_space<vmem>>, vector<16x16x4xf32>
    %43 = vector.shape_cast %42 : vector<16x16x4xf32> to vector<256x4xf32>
    %44 = arith.truncf %43 : vector<256x4xf32> to vector<256x4xbf16>
    %c3 = arith.constant 3 : index
    %c0_46 = arith.constant 0 : index
    %c0_47 = arith.constant 0 : index
    %45 = vector.load %arg4[%c3, %c0_46, %c0_47] : memref<9x4x4xbf16, #tpu.memory_space<vmem>>, vector<1x4x4xbf16>
    %46 = vector.shape_cast %45 : vector<1x4x4xbf16> to vector<4x4xbf16>
    %cst_48 = arith.constant dense<0.000000e+00> : vector<256x4xf32>
    %47 = tpu.matmul %44, %46, %cst_48 {dimension_numbers = #tpu.dot_dimension_numbers<[1], [0], [0], [1], [0, 0, 1, 1], [], []>} : vector<256x4xbf16>, vector<4x4xbf16>, vector<256x4xf32> -> vector<256x4xf32>
    %48 = arith.addf %41, %47 : vector<256x4xf32>
    %c1_49 = arith.constant 1 : index
    %c1_50 = arith.constant 1 : index
    %c0_51 = arith.constant 0 : index
    %49 = vector.load %arg9[%c1_49, %c1_50, %c0_51] : memref<18x18x4xf32, #tpu.memory_space<vmem>>, vector<16x16x4xf32>
    %50 = vector.shape_cast %49 : vector<16x16x4xf32> to vector<256x4xf32>
    %51 = arith.truncf %50 : vector<256x4xf32> to vector<256x4xbf16>
    %c4 = arith.constant 4 : index
    %c0_52 = arith.constant 0 : index
    %c0_53 = arith.constant 0 : index
    %52 = vector.load %arg4[%c4, %c0_52, %c0_53] : memref<9x4x4xbf16, #tpu.memory_space<vmem>>, vector<1x4x4xbf16>
    %53 = vector.shape_cast %52 : vector<1x4x4xbf16> to vector<4x4xbf16>
    %cst_54 = arith.constant dense<0.000000e+00> : vector<256x4xf32>
    %54 = tpu.matmul %51, %53, %cst_54 {dimension_numbers = #tpu.dot_dimension_numbers<[1], [0], [0], [1], [0, 0, 1, 1], [], []>} : vector<256x4xbf16>, vector<4x4xbf16>, vector<256x4xf32> -> vector<256x4xf32>
    %55 = arith.addf %48, %54 : vector<256x4xf32>
    %c1_55 = arith.constant 1 : index
    %c2_56 = arith.constant 2 : index
    %c0_57 = arith.constant 0 : index
    %56 = vector.load %arg9[%c1_55, %c2_56, %c0_57] : memref<18x18x4xf32, #tpu.memory_space<vmem>>, vector<16x16x4xf32>
    %57 = vector.shape_cast %56 : vector<16x16x4xf32> to vector<256x4xf32>
    %58 = arith.truncf %57 : vector<256x4xf32> to vector<256x4xbf16>
    %c5 = arith.constant 5 : index
    %c0_58 = arith.constant 0 : index
    %c0_59 = arith.constant 0 : index
    %59 = vector.load %arg4[%c5, %c0_58, %c0_59] : memref<9x4x4xbf16, #tpu.memory_space<vmem>>, vector<1x4x4xbf16>
    %60 = vector.shape_cast %59 : vector<1x4x4xbf16> to vector<4x4xbf16>
    %cst_60 = arith.constant dense<0.000000e+00> : vector<256x4xf32>
    %61 = tpu.matmul %58, %60, %cst_60 {dimension_numbers = #tpu.dot_dimension_numbers<[1], [0], [0], [1], [0, 0, 1, 1], [], []>} : vector<256x4xbf16>, vector<4x4xbf16>, vector<256x4xf32> -> vector<256x4xf32>
    %62 = arith.addf %55, %61 : vector<256x4xf32>
    %c2_61 = arith.constant 2 : index
    %c0_62 = arith.constant 0 : index
    %c0_63 = arith.constant 0 : index
    %63 = vector.load %arg9[%c2_61, %c0_62, %c0_63] : memref<18x18x4xf32, #tpu.memory_space<vmem>>, vector<16x16x4xf32>
    %64 = vector.shape_cast %63 : vector<16x16x4xf32> to vector<256x4xf32>
    %65 = arith.truncf %64 : vector<256x4xf32> to vector<256x4xbf16>
    %c6 = arith.constant 6 : index
    %c0_64 = arith.constant 0 : index
    %c0_65 = arith.constant 0 : index
    %66 = vector.load %arg4[%c6, %c0_64, %c0_65] : memref<9x4x4xbf16, #tpu.memory_space<vmem>>, vector<1x4x4xbf16>
    %67 = vector.shape_cast %66 : vector<1x4x4xbf16> to vector<4x4xbf16>
    %cst_66 = arith.constant dense<0.000000e+00> : vector<256x4xf32>
    %68 = tpu.matmul %65, %67, %cst_66 {dimension_numbers = #tpu.dot_dimension_numbers<[1], [0], [0], [1], [0, 0, 1, 1], [], []>} : vector<256x4xbf16>, vector<4x4xbf16>, vector<256x4xf32> -> vector<256x4xf32>
    %69 = arith.addf %62, %68 : vector<256x4xf32>
    %c2_67 = arith.constant 2 : index
    %c1_68 = arith.constant 1 : index
    %c0_69 = arith.constant 0 : index
    %70 = vector.load %arg9[%c2_67, %c1_68, %c0_69] : memref<18x18x4xf32, #tpu.memory_space<vmem>>, vector<16x16x4xf32>
    %71 = vector.shape_cast %70 : vector<16x16x4xf32> to vector<256x4xf32>
    %72 = arith.truncf %71 : vector<256x4xf32> to vector<256x4xbf16>
    %c7 = arith.constant 7 : index
    %c0_70 = arith.constant 0 : index
    %c0_71 = arith.constant 0 : index
    %73 = vector.load %arg4[%c7, %c0_70, %c0_71] : memref<9x4x4xbf16, #tpu.memory_space<vmem>>, vector<1x4x4xbf16>
    %74 = vector.shape_cast %73 : vector<1x4x4xbf16> to vector<4x4xbf16>
    %cst_72 = arith.constant dense<0.000000e+00> : vector<256x4xf32>
    %75 = tpu.matmul %72, %74, %cst_72 {dimension_numbers = #tpu.dot_dimension_numbers<[1], [0], [0], [1], [0, 0, 1, 1], [], []>} : vector<256x4xbf16>, vector<4x4xbf16>, vector<256x4xf32> -> vector<256x4xf32>
    %76 = arith.addf %69, %75 : vector<256x4xf32>
    %c2_73 = arith.constant 2 : index
    %c2_74 = arith.constant 2 : index
    %c0_75 = arith.constant 0 : index
    %77 = vector.load %arg9[%c2_73, %c2_74, %c0_75] : memref<18x18x4xf32, #tpu.memory_space<vmem>>, vector<16x16x4xf32>
    %78 = vector.shape_cast %77 : vector<16x16x4xf32> to vector<256x4xf32>
    %79 = arith.truncf %78 : vector<256x4xf32> to vector<256x4xbf16>
    %c8 = arith.constant 8 : index
    %c0_76 = arith.constant 0 : index
    %c0_77 = arith.constant 0 : index
    %80 = vector.load %arg4[%c8, %c0_76, %c0_77] : memref<9x4x4xbf16, #tpu.memory_space<vmem>>, vector<1x4x4xbf16>
    %81 = vector.shape_cast %80 : vector<1x4x4xbf16> to vector<4x4xbf16>
    %cst_78 = arith.constant dense<0.000000e+00> : vector<256x4xf32>
    %82 = tpu.matmul %79, %81, %cst_78 {dimension_numbers = #tpu.dot_dimension_numbers<[1], [0], [0], [1], [0, 0, 1, 1], [], []>} : vector<256x4xbf16>, vector<4x4xbf16>, vector<256x4xf32> -> vector<256x4xf32>
    %83 = arith.addf %76, %82 : vector<256x4xf32>
    %c0_79 = arith.constant 0 : index
    %c0_80 = arith.constant 0 : index
    %84 = vector.load %arg5[%c0_79, %c0_80] : memref<1x4xf32, #tpu.memory_space<vmem>>, vector<1x4xf32>
    %85 = vector.broadcast %84 : vector<1x4xf32> to vector<256x4xf32>
    %86 = arith.addf %83, %85 : vector<256x4xf32>
    %87 = arith.truncf %86 : vector<256x4xf32> to vector<256x4xbf16>
    %c0_81 = arith.constant 0 : index
    %c0_82 = arith.constant 0 : index
    %c0_83 = arith.constant 0 : index
    %88 = vector.load %arg6[%c0_81, %c0_82, %c0_83] : memref<1x256x4xbf16, #tpu.memory_space<vmem>>, vector<1x256x4xbf16>
    %89 = vector.shape_cast %88 : vector<1x256x4xbf16> to vector<256x4xbf16>
    %90 = vector.shape_cast %87 : vector<256x4xbf16> to vector<1x256x4xbf16>
    tpu.vector_store %arg6[%c0_81, %c0_82, %c0_83], %90 {strides = array<i32>} : memref<1x256x4xbf16, #tpu.memory_space<vmem>>, vector<1x256x4xbf16>,
    %cst_84 = arith.constant dense<0.000000e+00> : vector<4xf32>
    %91 = vector.multi_reduction <add>, %86, %cst_84 [0] : vector<256x4xf32> to vector<4xf32>
    %92 = vector.shape_cast %91 : vector<4xf32> to vector<1x4xf32>
    %c0_85 = arith.constant 0 : index
    %c0_86 = arith.constant 0 : index
    %c0_87 = arith.constant 0 : index
    %93 = vector.load %arg7[%c0_85, %c0_86, %c0_87] : memref<1x1x4xf32, #tpu.memory_space<vmem>>, vector<1x1x4xf32>
    %94 = vector.shape_cast %93 : vector<1x1x4xf32> to vector<1x4xf32>
    %95 = vector.shape_cast %92 : vector<1x4xf32> to vector<1x1x4xf32>
    tpu.vector_store %arg7[%c0_85, %c0_86, %c0_87], %95 {strides = array<i32>} : memref<1x1x4xf32, #tpu.memory_space<vmem>>, vector<1x1x4xf32>,
    %96 = arith.mulf %86, %86 : vector<256x4xf32>
    %cst_88 = arith.constant dense<0.000000e+00> : vector<4xf32>
    %97 = vector.multi_reduction <add>, %96, %cst_88 [0] : vector<256x4xf32> to vector<4xf32>
    %98 = vector.shape_cast %97 : vector<4xf32> to vector<1x4xf32>
    %c0_89 = arith.constant 0 : index
    %c0_90 = arith.constant 0 : index
    %c0_91 = arith.constant 0 : index
    %99 = vector.load %arg8[%c0_89, %c0_90, %c0_91] : memref<1x1x4xf32, #tpu.memory_space<vmem>>, vector<1x1x4xf32>
    %100 = vector.shape_cast %99 : vector<1x1x4xf32> to vector<1x4xf32>
    %101 = vector.shape_cast %98 : vector<1x4xf32> to vector<1x1x4xf32>
    tpu.vector_store %arg8[%c0_89, %c0_90, %c0_91], %101 {strides = array<i32>} : memref<1x1x4xf32, #tpu.memory_space<vmem>>, vector<1x1x4xf32>,
    return
  }
  func.func @transform_0(%arg0: i32) -> (i32, i32, i32, i32) {
    %c0_i32 = arith.constant 0 : i32
    %c0_i32_0 = arith.constant 0 : i32
    %c0_i32_1 = arith.constant 0 : i32
    %c0_i32_2 = arith.constant 0 : i32
    return %arg0, %c0_i32, %c0_i32_0, %c0_i32_1 : i32, i32, i32, i32
  }
  func.func @transform_1(%arg0: i32) -> (i32, i32) {
    %c0_i32 = arith.constant 0 : i32
    %c0_i32_0 = arith.constant 0 : i32
    %c0_i32_1 = arith.constant 0 : i32
    return %c0_i32, %c0_i32_0 : i32, i32
  }
  func.func @transform_2(%arg0: i32) -> (i32, i32) {
    %c0_i32 = arith.constant 0 : i32
    %c0_i32_0 = arith.constant 0 : i32
    %c0_i32_1 = arith.constant 0 : i32
    return %c0_i32, %c0_i32_0 : i32, i32
  }
  func.func @transform_3(%arg0: i32) -> (i32, i32, i32) {
    %c0_i32 = arith.constant 0 : i32
    %c0_i32_0 = arith.constant 0 : i32
    %c0_i32_1 = arith.constant 0 : i32
    %c0_i32_2 = arith.constant 0 : i32
    return %c0_i32, %c0_i32_0, %c0_i32_1 : i32, i32, i32
  }
  func.func @transform_4(%arg0: i32) -> (i32, i32) {
    %c0_i32 = arith.constant 0 : i32
    %c0_i32_0 = arith.constant 0 : i32
    %c0_i32_1 = arith.constant 0 : i32
    return %c0_i32, %c0_i32_0 : i32, i32
  }
  func.func @transform_5(%arg0: i32) -> (i32, i32, i32) {
    %c0_i32 = arith.constant 0 : i32
    %c0_i32_0 = arith.constant 0 : i32
    %c0_i32_1 = arith.constant 0 : i32
    return %arg0, %c0_i32, %c0_i32_0 : i32, i32, i32
  }
  func.func @transform_6(%arg0: i32) -> (i32, i32, i32) {
    %c0_i32 = arith.constant 0 : i32
    %c0_i32_0 = arith.constant 0 : i32
    %c0_i32_1 = arith.constant 0 : i32
    return %arg0, %c0_i32, %c0_i32_0 : i32, i32, i32
  }
  func.func @transform_7(%arg0: i32) -> (i32, i32, i32) {
    %c0_i32 = arith.constant 0 : i32
    %c0_i32_0 = arith.constant 0 : i32
    %c0_i32_1 = arith.constant 0 : i32
    return %arg0, %c0_i32, %c0_i32_0 : i32, i32, i32
  }
}

module attributes {stable_mosaic.version = 11 : i64} {
  func.func @_block3_max_kernel(%arg0: i32, %arg1: i32, %arg2: memref<1x256x4xbf16, #tpu.memory_space<vmem>>, %arg3: memref<1x4xf32, #tpu.memory_space<vmem>>, %arg4: memref<1x4xf32, #tpu.memory_space<vmem>>, %arg5: memref<4x16xbf16, #tpu.memory_space<vmem>>, %arg6: memref<1x16xf32, #tpu.memory_space<vmem>>, %arg7: memref<1x1x1x16xf32, #tpu.memory_space<vmem>>) attributes {dimension_semantics = [#tpu.dimension_semantics<parallel>, #tpu.dimension_semantics<parallel>], iteration_bounds = array<i64: 2, 1>, scalar_prefetch = 0 : i64, scratch_operands = 0 : i64, tpu.core_type = #tpu.core_type<tc>, window_params = [{transform_indices = @transform_0, window_bounds = array<i64: 1, 256, 4>}, {pipeline_mode = #tpu.pipeline_mode<synchronous>, transform_indices = @transform_1, window_bounds = array<i64: 1, 4>}, {pipeline_mode = #tpu.pipeline_mode<synchronous>, transform_indices = @transform_2, window_bounds = array<i64: 1, 4>}, {pipeline_mode = #tpu.pipeline_mode<synchronous>, transform_indices = @transform_3, window_bounds = array<i64: 4, 16>}, {pipeline_mode = #tpu.pipeline_mode<synchronous>, transform_indices = @transform_4, window_bounds = array<i64: 1, 16>}, {transform_indices = @transform_5, window_bounds = array<i64: 1, 1, 1, 16>}]} {
    %c0 = arith.constant 0 : index
    %c0_0 = arith.constant 0 : index
    %c0_1 = arith.constant 0 : index
    %0 = vector.load %arg2[%c0, %c0_0, %c0_1] : memref<1x256x4xbf16, #tpu.memory_space<vmem>>, vector<1x256x4xbf16>
    %1 = vector.shape_cast %0 : vector<1x256x4xbf16> to vector<256x4xbf16>
    %2 = arith.extf %1 : vector<256x4xbf16> to vector<256x4xf32>
    %c0_2 = arith.constant 0 : index
    %c0_3 = arith.constant 0 : index
    %3 = vector.load %arg3[%c0_2, %c0_3] : memref<1x4xf32, #tpu.memory_space<vmem>>, vector<1x4xf32>
    %4 = vector.broadcast %3 : vector<1x4xf32> to vector<256x4xf32>
    %5 = arith.mulf %2, %4 : vector<256x4xf32>
    %c0_4 = arith.constant 0 : index
    %c0_5 = arith.constant 0 : index
    %6 = vector.load %arg4[%c0_4, %c0_5] : memref<1x4xf32, #tpu.memory_space<vmem>>, vector<1x4xf32>
    %7 = vector.broadcast %6 : vector<1x4xf32> to vector<256x4xf32>
    %8 = arith.addf %5, %7 : vector<256x4xf32>
    %cst = arith.constant 0.000000e+00 : f32
    %9 = vector.broadcast %cst : f32 to vector<256x4xf32>
    %10 = arith.maximumf %8, %9 : vector<256x4xf32>
    %11 = arith.truncf %10 : vector<256x4xf32> to vector<256x4xbf16>
    %c0_6 = arith.constant 0 : index
    %c0_7 = arith.constant 0 : index
    %12 = vector.load %arg5[%c0_6, %c0_7] : memref<4x16xbf16, #tpu.memory_space<vmem>>, vector<4x16xbf16>
    %cst_8 = arith.constant dense<0.000000e+00> : vector<256x16xf32>
    %13 = tpu.matmul %11, %12, %cst_8 {dimension_numbers = #tpu.dot_dimension_numbers<[1], [0], [0], [1], [0, 0, 1, 1], [], []>} : vector<256x4xbf16>, vector<4x16xbf16>, vector<256x16xf32> -> vector<256x16xf32>
    %c0_9 = arith.constant 0 : index
    %c0_10 = arith.constant 0 : index
    %14 = vector.load %arg6[%c0_9, %c0_10] : memref<1x16xf32, #tpu.memory_space<vmem>>, vector<1x16xf32>
    %15 = vector.broadcast %14 : vector<1x16xf32> to vector<256x16xf32>
    %16 = arith.addf %13, %15 : vector<256x16xf32>
    %cst_11 = arith.constant dense<0xFF800000> : vector<16xf32>
    %17 = vector.multi_reduction <maximumf>, %16, %cst_11 [0] : vector<256x16xf32> to vector<16xf32>
    %18 = vector.shape_cast %17 : vector<16xf32> to vector<1x16xf32>
    %c0_12 = arith.constant 0 : index
    %c0_13 = arith.constant 0 : index
    %c0_14 = arith.constant 0 : index
    %c0_15 = arith.constant 0 : index
    %19 = vector.load %arg7[%c0_12, %c0_13, %c0_14, %c0_15] : memref<1x1x1x16xf32, #tpu.memory_space<vmem>>, vector<1x1x1x16xf32>
    %20 = vector.shape_cast %19 : vector<1x1x1x16xf32> to vector<1x16xf32>
    %21 = vector.shape_cast %18 : vector<1x16xf32> to vector<1x1x1x16xf32>
    tpu.vector_store %arg7[%c0_12, %c0_13, %c0_14, %c0_15], %21 {strides = array<i32>} : memref<1x1x1x16xf32, #tpu.memory_space<vmem>>, vector<1x1x1x16xf32>,
    return
  }
  func.func @transform_0(%arg0: i32, %arg1: i32) -> (i32, i32, i32) {
    %c0_i32 = arith.constant 0 : i32
    %c0_i32_0 = arith.constant 0 : i32
    return %arg0, %arg1, %c0_i32 : i32, i32, i32
  }
  func.func @transform_1(%arg0: i32, %arg1: i32) -> (i32, i32) {
    %c0_i32 = arith.constant 0 : i32
    %c0_i32_0 = arith.constant 0 : i32
    %c0_i32_1 = arith.constant 0 : i32
    return %c0_i32, %c0_i32_0 : i32, i32
  }
  func.func @transform_2(%arg0: i32, %arg1: i32) -> (i32, i32) {
    %c0_i32 = arith.constant 0 : i32
    %c0_i32_0 = arith.constant 0 : i32
    %c0_i32_1 = arith.constant 0 : i32
    return %c0_i32, %c0_i32_0 : i32, i32
  }
  func.func @transform_3(%arg0: i32, %arg1: i32) -> (i32, i32) {
    %c0_i32 = arith.constant 0 : i32
    %c0_i32_0 = arith.constant 0 : i32
    %c0_i32_1 = arith.constant 0 : i32
    return %c0_i32, %c0_i32_0 : i32, i32
  }
  func.func @transform_4(%arg0: i32, %arg1: i32) -> (i32, i32) {
    %c0_i32 = arith.constant 0 : i32
    %c0_i32_0 = arith.constant 0 : i32
    %c0_i32_1 = arith.constant 0 : i32
    return %c0_i32, %c0_i32_0 : i32, i32
  }
  func.func @transform_5(%arg0: i32, %arg1: i32) -> (i32, i32, i32, i32) {
    %c0_i32 = arith.constant 0 : i32
    %c0_i32_0 = arith.constant 0 : i32
    %c0_i32_1 = arith.constant 0 : i32
    return %arg0, %arg1, %c0_i32, %c0_i32_0 : i32, i32, i32, i32
  }
}

module attributes {stable_mosaic.version = 11 : i64} {
  func.func @_block3_residual_kernel(%arg0: i32, %arg1: i32, %arg2: memref<1x256x4xbf16, #tpu.memory_space<vmem>>, %arg3: memref<1x4xf32, #tpu.memory_space<vmem>>, %arg4: memref<1x4xf32, #tpu.memory_space<vmem>>, %arg5: memref<4x16xbf16, #tpu.memory_space<vmem>>, %arg6: memref<1x16xf32, #tpu.memory_space<vmem>>, %arg7: memref<1x1x16xf32, #tpu.memory_space<vmem>>, %arg8: memref<1x256x16xf32, #tpu.memory_space<vmem>>, %arg9: memref<1x256x16xf32, #tpu.memory_space<vmem>>) attributes {dimension_semantics = [#tpu.dimension_semantics<parallel>, #tpu.dimension_semantics<parallel>], iteration_bounds = array<i64: 2, 1>, scalar_prefetch = 0 : i64, scratch_operands = 0 : i64, tpu.core_type = #tpu.core_type<tc>, window_params = [{transform_indices = @transform_0, window_bounds = array<i64: 1, 256, 4>}, {pipeline_mode = #tpu.pipeline_mode<synchronous>, transform_indices = @transform_1, window_bounds = array<i64: 1, 4>}, {pipeline_mode = #tpu.pipeline_mode<synchronous>, transform_indices = @transform_2, window_bounds = array<i64: 1, 4>}, {pipeline_mode = #tpu.pipeline_mode<synchronous>, transform_indices = @transform_3, window_bounds = array<i64: 4, 16>}, {pipeline_mode = #tpu.pipeline_mode<synchronous>, transform_indices = @transform_4, window_bounds = array<i64: 1, 16>}, {transform_indices = @transform_5, window_bounds = array<i64: 1, 1, 16>}, {transform_indices = @transform_6, window_bounds = array<i64: 1, 256, 16>}, {transform_indices = @transform_7, window_bounds = array<i64: 1, 256, 16>}]} {
    %c0 = arith.constant 0 : index
    %c0_0 = arith.constant 0 : index
    %c0_1 = arith.constant 0 : index
    %0 = vector.load %arg2[%c0, %c0_0, %c0_1] : memref<1x256x4xbf16, #tpu.memory_space<vmem>>, vector<1x256x4xbf16>
    %1 = vector.shape_cast %0 : vector<1x256x4xbf16> to vector<256x4xbf16>
    %2 = arith.extf %1 : vector<256x4xbf16> to vector<256x4xf32>
    %c0_2 = arith.constant 0 : index
    %c0_3 = arith.constant 0 : index
    %3 = vector.load %arg3[%c0_2, %c0_3] : memref<1x4xf32, #tpu.memory_space<vmem>>, vector<1x4xf32>
    %4 = vector.broadcast %3 : vector<1x4xf32> to vector<256x4xf32>
    %5 = arith.mulf %2, %4 : vector<256x4xf32>
    %c0_4 = arith.constant 0 : index
    %c0_5 = arith.constant 0 : index
    %6 = vector.load %arg4[%c0_4, %c0_5] : memref<1x4xf32, #tpu.memory_space<vmem>>, vector<1x4xf32>
    %7 = vector.broadcast %6 : vector<1x4xf32> to vector<256x4xf32>
    %8 = arith.addf %5, %7 : vector<256x4xf32>
    %cst = arith.constant 0.000000e+00 : f32
    %9 = vector.broadcast %cst : f32 to vector<256x4xf32>
    %10 = arith.maximumf %8, %9 : vector<256x4xf32>
    %11 = arith.truncf %10 : vector<256x4xf32> to vector<256x4xbf16>
    %c0_6 = arith.constant 0 : index
    %c0_7 = arith.constant 0 : index
    %12 = vector.load %arg5[%c0_6, %c0_7] : memref<4x16xbf16, #tpu.memory_space<vmem>>, vector<4x16xbf16>
    %cst_8 = arith.constant dense<0.000000e+00> : vector<256x16xf32>
    %13 = tpu.matmul %11, %12, %cst_8 {dimension_numbers = #tpu.dot_dimension_numbers<[1], [0], [0], [1], [0, 0, 1, 1], [], []>} : vector<256x4xbf16>, vector<4x16xbf16>, vector<256x16xf32> -> vector<256x16xf32>
    %c0_9 = arith.constant 0 : index
    %c0_10 = arith.constant 0 : index
    %14 = vector.load %arg6[%c0_9, %c0_10] : memref<1x16xf32, #tpu.memory_space<vmem>>, vector<1x16xf32>
    %15 = vector.broadcast %14 : vector<1x16xf32> to vector<256x16xf32>
    %16 = arith.addf %13, %15 : vector<256x16xf32>
    %c0_11 = arith.constant 0 : index
    %c0_12 = arith.constant 0 : index
    %c0_13 = arith.constant 0 : index
    %17 = vector.load %arg7[%c0_11, %c0_12, %c0_13] : memref<1x1x16xf32, #tpu.memory_space<vmem>>, vector<1x1x16xf32>
    %18 = vector.shape_cast %17 : vector<1x1x16xf32> to vector<1x16xf32>
    %19 = vector.broadcast %18 : vector<1x16xf32> to vector<256x16xf32>
    %20 = arith.mulf %16, %19 : vector<256x16xf32>
    %c0_14 = arith.constant 0 : index
    %c0_15 = arith.constant 0 : index
    %c0_16 = arith.constant 0 : index
    %21 = vector.load %arg8[%c0_14, %c0_15, %c0_16] : memref<1x256x16xf32, #tpu.memory_space<vmem>>, vector<1x256x16xf32>
    %22 = vector.shape_cast %21 : vector<1x256x16xf32> to vector<256x16xf32>
    %23 = arith.addf %20, %22 : vector<256x16xf32>
    %c0_17 = arith.constant 0 : index
    %c0_18 = arith.constant 0 : index
    %c0_19 = arith.constant 0 : index
    %24 = vector.load %arg9[%c0_17, %c0_18, %c0_19] : memref<1x256x16xf32, #tpu.memory_space<vmem>>, vector<1x256x16xf32>
    %25 = vector.shape_cast %24 : vector<1x256x16xf32> to vector<256x16xf32>
    %26 = vector.shape_cast %23 : vector<256x16xf32> to vector<1x256x16xf32>
    tpu.vector_store %arg9[%c0_17, %c0_18, %c0_19], %26 {strides = array<i32>} : memref<1x256x16xf32, #tpu.memory_space<vmem>>, vector<1x256x16xf32>,
    return
  }
  func.func @transform_0(%arg0: i32, %arg1: i32) -> (i32, i32, i32) {
    %c0_i32 = arith.constant 0 : i32
    %c0_i32_0 = arith.constant 0 : i32
    return %arg0, %arg1, %c0_i32 : i32, i32, i32
  }
  func.func @transform_1(%arg0: i32, %arg1: i32) -> (i32, i32) {
    %c0_i32 = arith.constant 0 : i32
    %c0_i32_0 = arith.constant 0 : i32
    %c0_i32_1 = arith.constant 0 : i32
    return %c0_i32, %c0_i32_0 : i32, i32
  }
  func.func @transform_2(%arg0: i32, %arg1: i32) -> (i32, i32) {
    %c0_i32 = arith.constant 0 : i32
    %c0_i32_0 = arith.constant 0 : i32
    %c0_i32_1 = arith.constant 0 : i32
    return %c0_i32, %c0_i32_0 : i32, i32
  }
  func.func @transform_3(%arg0: i32, %arg1: i32) -> (i32, i32) {
    %c0_i32 = arith.constant 0 : i32
    %c0_i32_0 = arith.constant 0 : i32
    %c0_i32_1 = arith.constant 0 : i32
    return %c0_i32, %c0_i32_0 : i32, i32
  }
  func.func @transform_4(%arg0: i32, %arg1: i32) -> (i32, i32) {
    %c0_i32 = arith.constant 0 : i32
    %c0_i32_0 = arith.constant 0 : i32
    %c0_i32_1 = arith.constant 0 : i32
    return %c0_i32, %c0_i32_0 : i32, i32
  }
  func.func @transform_5(%arg0: i32, %arg1: i32) -> (i32, i32, i32) {
    %c0_i32 = arith.constant 0 : i32
    %c0_i32_0 = arith.constant 0 : i32
    %c0_i32_1 = arith.constant 0 : i32
    return %arg0, %c0_i32, %c0_i32_0 : i32, i32, i32
  }
  func.func @transform_6(%arg0: i32, %arg1: i32) -> (i32, i32, i32) {
    %c0_i32 = arith.constant 0 : i32
    %c0_i32_0 = arith.constant 0 : i32
    return %arg0, %arg1, %c0_i32 : i32, i32, i32
  }
  func.func @transform_7(%arg0: i32, %arg1: i32) -> (i32, i32, i32) {
    %c0_i32 = arith.constant 0 : i32
    %c0_i32_0 = arith.constant 0 : i32
    return %arg0, %arg1, %c0_i32 : i32, i32, i32
  }
}

</mosaic_0001>

<llo_original>
// kernel: se_bottleneck.5
$region0: #{se_bottleneck.5}
  #allocation0 [shape = 'u32[]', space=smem, size = 0x4, offset = 0x4, fixed_abs, tag = 'smem constant byte address 0x4 - core index']
  #allocation1 [shape = 'u32[144,128]{1,0:T(1,128)}', space=vmem, size = 0x12000, scoped, tag = 'internal scratch']
  %s0 = inlined_call_operand.vmem [shape: f32[512,16], index: 0, kind: input, shape index: {}]
  %s1 = inlined_call_operand.vmem [shape: f32[1,1,16], index: 1, kind: output, shape index: {0}]
  %s2 = inlined_call_operand.vmem [shape: f32[1,1,16], index: 2, kind: output, shape index: {1}]
  %3 = xla_tuple %s1, %s2
  %s4 = sld [smem:[#allocation0]]
  $region22: #{se_bottleneck.5} parent=0
    _
  %s6 = ssub.s32 1, %s4
  %s7 = scalar_select 0, %s6, %s4
  // Predicated region
  $region2: #{se_bottleneck.5} parent=0 // pred_check
    _
  $region3: #{se_bottleneck.5} parent=0 // pred_check_branch
    %9 = sbr.rel (0) target = $region5
  $region4: #{se_bottleneck.5} parent=0 // pred_region
    _
  $region5: #{se_bottleneck.5} parent=0 // pred_fallthru
    _
  %v10 = vld [vmem:[%s0] sm:$0xff]
  %v11 = vld [vmem:[%s0 + $0x8] sm:$0xff]
  %v12 = vld [vmem:[%s0 + $0x10] sm:$0xff]
  %v13 = vld [vmem:[%s0 + $0x18] sm:$0xff]
  %v14 = vld [vmem:[%s0 + $0x20] sm:$0xff]
  %v15 = vld [vmem:[%s0 + $0x28] sm:$0xff]
  %v16 = vld [vmem:[%s0 + $0x30] sm:$0xff]
  %v17 = vld [vmem:[%s0 + $0x38] sm:$0xff]
  %v18 = vld [vmem:[%s0 + $0x40] sm:$0xff]
  %v19 = vld [vmem:[%s0 + $0x48] sm:$0xff]
  %v20 = vld [vmem:[%s0 + $0x50] sm:$0xff]
  %v21 = vld [vmem:[%s0 + $0x58] sm:$0xff]
  %v22 = vld [vmem:[%s0 + $0x60] sm:$0xff]
  %v23 = vld [vmem:[%s0 + $0x68] sm:$0xff]
  %v24 = vld [vmem:[%s0 + $0x70] sm:$0xff]
  %v25 = vld [vmem:[%s0 + $0x78] sm:$0xff]
  %v26 = vld [vmem:[%s0 + $0x80] sm:$0xff]
  %v27 = vld [vmem:[%s0 + $0x88] sm:$0xff]
  %v28 = vld [vmem:[%s0 + $0x90] sm:$0xff]
  %v29 = vld [vmem:[%s0 + $0x98] sm:$0xff]
  %v30 = vld [vmem:[%s0 + $0xa0] sm:$0xff]
  %v31 = vld [vmem:[%s0 + $0xa8] sm:$0xff]
  %v32 = vld [vmem:[%s0 + $0xb0] sm:$0xff]
  %v33 = vld [vmem:[%s0 + $0xb8] sm:$0xff]
  %v34 = vld [vmem:[%s0 + $0xc0] sm:$0xff]
  %v35 = vld [vmem:[%s0 + $0xc8] sm:$0xff]
  %v36 = vld [vmem:[%s0 + $0xd0] sm:$0xff]
  %v37 = vld [vmem:[%s0 + $0xd8] sm:$0xff]
  %v38 = vld [vmem:[%s0 + $0xe0] sm:$0xff]
  %v39 = vld [vmem:[%s0 + $0xe8] sm:$0xff]
  %v40 = vld [vmem:[%s0 + $0xf0] sm:$0xff]
  %v41 = vld [vmem:[%s0 + $0xf8] sm:$0xff]
  %v42 = vld [vmem:[%s0 + $0x100] sm:$0xff]
  %v43 = vld [vmem:[%s0 + $0x108] sm:$0xff]
  %v44 = vld [vmem:[%s0 + $0x110] sm:$0xff]
  %v45 = vld [vmem:[%s0 + $0x118] sm:$0xff]
  %v46 = vld [vmem:[%s0 + $0x120] sm:$0xff]
  %v47 = vld [vmem:[%s0 + $0x128] sm:$0xff]
  %v48 = vld [vmem:[%s0 + $0x130] sm:$0xff]
  %v49 = vld [vmem:[%s0 + $0x138] sm:$0xff]
  %v50 = vld [vmem:[%s0 + $0x140] sm:$0xff]
  %v51 = vld [vmem:[%s0 + $0x148] sm:$0xff]
  %v52 = vld [vmem:[%s0 + $0x150] sm:$0xff]
  %v53 = vld [vmem:[%s0 + $0x158] sm:$0xff]
  %v54 = vld [vmem:[%s0 + $0x160] sm:$0xff]
  %v55 = vld [vmem:[%s0 + $0x168] sm:$0xff]
  %v56 = vld [vmem:[%s0 + $0x170] sm:$0xff]
  %v57 = vld [vmem:[%s0 + $0x178] sm:$0xff]
  %v58 = vld [vmem:[%s0 + $0x180] sm:$0xff]
  %v59 = vld [vmem:[%s0 + $0x188] sm:$0xff]
  %v60 = vld [vmem:[%s0 + $0x190] sm:$0xff]
  %v61 = vld [vmem:[%s0 + $0x198] sm:$0xff]
  %v62 = vld [vmem:[%s0 + $0x1a0] sm:$0xff]
  %v63 = vld [vmem:[%s0 + $0x1a8] sm:$0xff]
  %v64 = vld [vmem:[%s0 + $0x1b0] sm:$0xff]
  %v65 = vld [vmem:[%s0 + $0x1b8] sm:$0xff]
  %v66 = vld [vmem:[%s0 + $0x1c0] sm:$0xff]
  %v67 = vld [vmem:[%s0 + $0x1c8] sm:$0xff]
  %v68 = vld [vmem:[%s0 + $0x1d0] sm:$0xff]
  %v69 = vld [vmem:[%s0 + $0x1d8] sm:$0xff]
  %v70 = vld [vmem:[%s0 + $0x1e0] sm:$0xff]
  %v71 = vld [vmem:[%s0 + $0x1e8] sm:$0xff]
  %v72 = vld [vmem:[%s0 + $0x1f0] sm:$0xff]
  %v73 = vld [vmem:[%s0 + $0x1f8] sm:$0xff]
  %vm74 = vcmask 130048
  %v75 = vsel %vm74, %v10, 0.0
  %v76 = vsel %vm74, %v11, 0.0
  %v77 = vadd.f32 %v75, %v76
  %v78 = vsel %vm74, %v12, 0.0
  %v79 = vadd.f32 %v77, %v78
  %v80 = vsel %vm74, %v13, 0.0
  %v81 = vadd.f32 %v79, %v80
  %v82 = vsel %vm74, %v14, 0.0
  %v83 = vadd.f32 %v81, %v82
  %v84 = vsel %vm74, %v15, 0.0
  %v85 = vadd.f32 %v83, %v84
  %v86 = vsel %vm74, %v16, 0.0
  %v87 = vadd.f32 %v85, %v86
  %v88 = vsel %vm74, %v17, 0.0
  %v89 = vadd.f32 %v87, %v88
  %v90 = vsel %vm74, %v18, 0.0
  %v91 = vadd.f32 %v89, %v90
  %v92 = vsel %vm74, %v19, 0.0
  %v93 = vadd.f32 %v91, %v92
  %v94 = vsel %vm74, %v20, 0.0
  %v95 = vadd.f32 %v93, %v94
  %v96 = vsel %vm74, %v21, 0.0
  %v97 = vadd.f32 %v95, %v96
  %v98 = vsel %vm74, %v22, 0.0
  %v99 = vadd.f32 %v97, %v98
  %v100 = vsel %vm74, %v23, 0.0
  %v101 = vadd.f32 %v99, %v100
  %v102 = vsel %vm74, %v24, 0.0
  %v103 = vadd.f32 %v101, %v102
  %v104 = vsel %vm74, %v25, 0.0
  %v105 = vadd.f32 %v103, %v104
  %v106 = vsel %vm74, %v26, 0.0
  %v107 = vadd.f32 %v105, %v106
  %v108 = vsel %vm74, %v27, 0.0
  %v109 = vadd.f32 %v107, %v108
  %v110 = vsel %vm74, %v28, 0.0
  %v111 = vadd.f32 %v109, %v110
  %v112 = vsel %vm74, %v29, 0.0
  %v113 = vadd.f32 %v111, %v112
  %v114 = vsel %vm74, %v30, 0.0
  %v115 = vadd.f32 %v113, %v114
  %v116 = vsel %vm74, %v31, 0.0
  %v117 = vadd.f32 %v115, %v116
  %v118 = vsel %vm74, %v32, 0.0
  %v119 = vadd.f32 %v117, %v118
  %v120 = vsel %vm74, %v33, 0.0
  %v121 = vadd.f32 %v119, %v120
  %v122 = vsel %vm74, %v34, 0.0
  %v123 = vadd.f32 %v121, %v122
  %v124 = vsel %vm74, %v35, 0.0
  %v125 = vadd.f32 %v123, %v124
  %v126 = vsel %vm74, %v36, 0.0
  %v127 = vadd.f32 %v125, %v126
  %v128 = vsel %vm74, %v37, 0.0
  %v129 = vadd.f32 %v127, %v128
  %v130 = vsel %vm74, %v38, 0.0
  %v131 = vadd.f32 %v129, %v130
  %v132 = vsel %vm74, %v39, 0.0
  %v133 = vadd.f32 %v131, %v132
  %v134 = vsel %vm74, %v40, 0.0
  %v135 = vadd.f32 %v133, %v134
  %v136 = vsel %vm74, %v41, 0.0
  %v137 = vadd.f32 %v135, %v136
  %v138 = vsel %vm74, %v42, 0.0
  %v139 = vadd.f32 %v137, %v138
  %v140 = vsel %vm74, %v43, 0.0
  %v141 = vadd.f32 %v139, %v140
  %v142 = vsel %vm74, %v44, 0.0
  %v143 = vadd.f32 %v141, %v142
  %v144 = vsel %vm74, %v45, 0.0
  %v145 = vadd.f32 %v143, %v144
  %v146 = vsel %vm74, %v46, 0.0
  %v147 = vadd.f32 %v145, %v146
  %v148 = vsel %vm74, %v47, 0.0
  %v149 = vadd.f32 %v147, %v148
  %v150 = vsel %vm74, %v48, 0.0
  %v151 = vadd.f32 %v149, %v150
  %v152 = vsel %vm74, %v49, 0.0
  %v153 = vadd.f32 %v151, %v152
  %v154 = vsel %vm74, %v50, 0.0
  %v155 = vadd.f32 %v153, %v154
  %v156 = vsel %vm74, %v51, 0.0
  %v157 = vadd.f32 %v155, %v156
  %v158 = vsel %vm74, %v52, 0.0
  %v159 = vadd.f32 %v157, %v158
  %v160 = vsel %vm74, %v53, 0.0
  %v161 = vadd.f32 %v159, %v160
  %v162 = vsel %vm74, %v54, 0.0
  %v163 = vadd.f32 %v161, %v162
  %v164 = vsel %vm74, %v55, 0.0
  %v165 = vadd.f32 %v163, %v164
  %v166 = vsel %vm74, %v56, 0.0
  %v167 = vadd.f32 %v165, %v166
  %v168 = vsel %vm74, %v57, 0.0
  %v169 = vadd.f32 %v167, %v168
  %v170 = vsel %vm74, %v58, 0.0
  %v171 = vadd.f32 %v169, %v170
  %v172 = vsel %vm74, %v59, 0.0
  %v173 = vadd.f32 %v171, %v172
  %v174 = vsel %vm74, %v60, 0.0
  %v175 = vadd.f32 %v173, %v174
  %v176 = vsel %vm74, %v61, 0.0
  %v177 = vadd.f32 %v175, %v176
  %v178 = vsel %vm74, %v62, 0.0
  %v179 = vadd.f32 %v177, %v178
  %v180 = vsel %vm74, %v63, 0.0
  %v181 = vadd.f32 %v179, %v180
  %v182 = vsel %vm74, %v64, 0.0
  %v183 = vadd.f32 %v181, %v182
  %v184 = vsel %vm74, %v65, 0.0
  %v185 = vadd.f32 %v183, %v184
  %v186 = vsel %vm74, %v66, 0.0
  %v187 = vadd.f32 %v185, %v186
  %v188 = vsel %vm74, %v67, 0.0
  %v189 = vadd.f32 %v187, %v188
  %v190 = vsel %vm74, %v68, 0.0
  %v191 = vadd.f32 %v189, %v190
  %v192 = vsel %vm74, %v69, 0.0
  %v193 = vadd.f32 %v191, %v192
  %v194 = vsel %vm74, %v70, 0.0
  %v195 = vadd.f32 %v193, %v194
  %v196 = vsel %vm74, %v71, 0.0
  %v197 = vadd.f32 %v195, %v196
  %v198 = vsel %vm74, %v72, 0.0
  %v199 = vadd.f32 %v197, %v198
  %v200 = vsel %vm74, %v73, 0.0
  %v201 = vadd.f32 %v199, %v200
  %v202 = vrot.slane %v201, 4
  %v203 = vadd.f32 %v201, %v202
  %v204 = vrot.slane %v203, 2
  %v205 = vadd.f32 %v203, %v204
  %v206 = vrot.slane %v205, 1
  %v207 = vadd.f32 %v205, %v206
  %vm208 = vcmask 122880
  %209 = vst.msk [vmem:[%s1] sm:$0x1] %vm208, %v207
  %v210 = vmul.f32 %v10, %v10
  %v211 = vmul.f32 %v11, %v11
  %v212 = vmul.f32 %v12, %v12
  %v213 = vmul.f32 %v13, %v13
  %v214 = vmul.f32 %v14, %v14
  %v215 = vmul.f32 %v15, %v15
  %v216 = vmul.f32 %v16, %v16
  %v217 = vmul.f32 %v17, %v17
  %v218 = vmul.f32 %v18, %v18
  %v219 = vmul.f32 %v19, %v19
  %v220 = vmul.f32 %v20, %v20
  %v221 = vmul.f32 %v21, %v21
  %v222 = vmul.f32 %v22, %v22
  %v223 = vmul.f32 %v23, %v23
  %v224 = vmul.f32 %v24, %v24
  %v225 = vmul.f32 %v25, %v25
  %v226 = vmul.f32 %v26, %v26
  %v227 = vmul.f32 %v27, %v27
  %v228 = vmul.f32 %v28, %v28
  %v229 = vmul.f32 %v29, %v29
  %v230 = vmul.f32 %v30, %v30
  %v231 = vmul.f32 %v31, %v31
  %v232 = vmul.f32 %v32, %v32
  %v233 = vmul.f32 %v33, %v33
  %v234 = vmul.f32 %v34, %v34
  %v235 = vmul.f32 %v35, %v35
  %v236 = vmul.f32 %v36, %v36
  %v237 = vmul.f32 %v37, %v37
  %v238 = vmul.f32 %v38, %v38
  %v239 = vmul.f32 %v39, %v39
  %v240 = vmul.f32 %v40, %v40
  %v241 = vmul.f32 %v41, %v41
  %v242 = vmul.f32 %v42, %v42
  %v243 = vmul.f32 %v43, %v43
  %v244 = vmul.f32 %v44, %v44
  %v245 = vmul.f32 %v45, %v45
  %v246 = vmul.f32 %v46, %v46
  %v247 = vmul.f32 %v47, %v47
  %v248 = vmul.f32 %v48, %v48
  %v249 = vmul.f32 %v49, %v49
  %v250 = vmul.f32 %v50, %v50
  %v251 = vmul.f32 %v51, %v51
  %v252 = vmul.f32 %v52, %v52
  %v253 = vmul.f32 %v53, %v53
  %v254 = vmul.f32 %v54, %v54
  %v255 = vmul.f32 %v55, %v55
  %v256 = vmul.f32 %v56, %v56
  %v257 = vmul.f32 %v57, %v57
  %v258 = vmul.f32 %v58, %v58
  %v259 = vmul.f32 %v59, %v59
  %v260 = vmul.f32 %v60, %v60
  %v261 = vmul.f32 %v61, %v61
  %v262 = vmul.f32 %v62, %v62
  %v263 = vmul.f32 %v63, %v63
  %v264 = vmul.f32 %v64, %v64
  %v265 = vmul.f32 %v65, %v65
  %v266 = vmul.f32 %v66, %v66
  %v267 = vmul.f32 %v67, %v67
  %v268 = vmul.f32 %v68, %v68
  %v269 = vmul.f32 %v69, %v69
  %v270 = vmul.f32 %v70, %v70
  %v271 = vmul.f32 %v71, %v71
  %v272 = vmul.f32 %v72, %v72
  %v273 = vmul.f32 %v73, %v73
  %v274 = vsel %vm74, %v210, 0.0
  %v275 = vsel %vm74, %v211, 0.0
  %v276 = vadd.f32 %v274, %v275
  %v277 = vsel %vm74, %v212, 0.0
  %v278 = vadd.f32 %v276, %v277
  %v279 = vsel %vm74, %v213, 0.0
  %v280 = vadd.f32 %v278, %v279
  %v281 = vsel %vm74, %v214, 0.0
  %v282 = vadd.f32 %v280, %v281
  %v283 = vsel %vm74, %v215, 0.0
  %v284 = vadd.f32 %v282, %v283
  %v285 = vsel %vm74, %v216, 0.0
  %v286 = vadd.f32 %v284, %v285
  %v287 = vsel %vm74, %v217, 0.0
  %v288 = vadd.f32 %v286, %v287
  %v289 = vsel %vm74, %v218, 0.0
  %v290 = vadd.f32 %v288, %v289
  %v291 = vsel %vm74, %v219, 0.0
  %v292 = vadd.f32 %v290, %v291
  %v293 = vsel %vm74, %v220, 0.0
  %v294 = vadd.f32 %v292, %v293
  %v295 = vsel %vm74, %v221, 0.0
  %v296 = vadd.f32 %v294, %v295
  %v297 = vsel %vm74, %v222, 0.0
  %v298 = vadd.f32 %v296, %v297
  %v299 = vsel %vm74, %v223, 0.0
  %v300 = vadd.f32 %v298, %v299
  %v301 = vsel %vm74, %v224, 0.0
  %v302 = vadd.f32 %v300, %v301
  %v303 = vsel %vm74, %v225, 0.0
  %v304 = vadd.f32 %v302, %v303
  %v305 = vsel %vm74, %v226, 0.0
  %v306 = vadd.f32 %v304, %v305
  %v307 = vsel %vm74, %v227, 0.0
  %v308 = vadd.f32 %v306, %v307
  %v309 = vsel %vm74, %v228, 0.0
  %v310 = vadd.f32 %v308, %v309
  %v311 = vsel %vm74, %v229, 0.0
  %v312 = vadd.f32 %v310, %v311
  %v313 = vsel %vm74, %v230, 0.0
  %v314 = vadd.f32 %v312, %v313
  %v315 = vsel %vm74, %v231, 0.0
  %v316 = vadd.f32 %v314, %v315
  %v317 = vsel %vm74, %v232, 0.0
  %v318 = vadd.f32 %v316, %v317
  %v319 = vsel %vm74, %v233, 0.0
  %v320 = vadd.f32 %v318, %v319
  %v321 = vsel %vm74, %v234, 0.0
  %v322 = vadd.f32 %v320, %v321
  %v323 = vsel %vm74, %v235, 0.0
  %v324 = vadd.f32 %v322, %v323
  %v325 = vsel %vm74, %v236, 0.0
  %v326 = vadd.f32 %v324, %v325
  %v327 = vsel %vm74, %v237, 0.0
  %v328 = vadd.f32 %v326, %v327
  %v329 = vsel %vm74, %v238, 0.0
  %v330 = vadd.f32 %v328, %v329
  %v331 = vsel %vm74, %v239, 0.0
  %v332 = vadd.f32 %v330, %v331
  %v333 = vsel %vm74, %v240, 0.0
  %v334 = vadd.f32 %v332, %v333
  %v335 = vsel %vm74, %v241, 0.0
  %v336 = vadd.f32 %v334, %v335
  %v337 = vsel %vm74, %v242, 0.0
  %v338 = vadd.f32 %v336, %v337
  %v339 = vsel %vm74, %v243, 0.0
  %v340 = vadd.f32 %v338, %v339
  %v341 = vsel %vm74, %v244, 0.0
  %v342 = vadd.f32 %v340, %v341
  %v343 = vsel %vm74, %v245, 0.0
  %v344 = vadd.f32 %v342, %v343
  %v345 = vsel %vm74, %v246, 0.0
  %v346 = vadd.f32 %v344, %v345
  %v347 = vsel %vm74, %v247, 0.0
  %v348 = vadd.f32 %v346, %v347
  %v349 = vsel %vm74, %v248, 0.0
  %v350 = vadd.f32 %v348, %v349
  %v351 = vsel %vm74, %v249, 0.0
  %v352 = vadd.f32 %v350, %v351
  %v353 = vsel %vm74, %v250, 0.0
  %v354 = vadd.f32 %v352, %v353
  %v355 = vsel %vm74, %v251, 0.0
  %v356 = vadd.f32 %v354, %v355
  %v357 = vsel %vm74, %v252, 0.0
  %v358 = vadd.f32 %v356, %v357
  %v359 = vsel %vm74, %v253, 0.0
  %v360 = vadd.f32 %v358, %v359
  %v361 = vsel %vm74, %v254, 0.0
  %v362 = vadd.f32 %v360, %v361
  %v363 = vsel %vm74, %v255, 0.0
  %v364 = vadd.f32 %v362, %v363
  %v365 = vsel %vm74, %v256, 0.0
  %v366 = vadd.f32 %v364, %v365
  %v367 = vsel %vm74, %v257, 0.0
  %v368 = vadd.f32 %v366, %v367
  %v369 = vsel %vm74, %v258, 0.0
  %v370 = vadd.f32 %v368, %v369
  %v371 = vsel %vm74, %v259, 0.0
  %v372 = vadd.f32 %v370, %v371
  %v373 = vsel %vm74, %v260, 0.0
  %v374 = vadd.f32 %v372, %v373
  %v375 = vsel %vm74, %v261, 0.0
  %v376 = vadd.f32 %v374, %v375
  %v377 = vsel %vm74, %v262, 0.0
  %v378 = vadd.f32 %v376, %v377
  %v379 = vsel %vm74, %v263, 0.0
  %v380 = vadd.f32 %v378, %v379
  %v381 = vsel %vm74, %v264, 0.0
  %v382 = vadd.f32 %v380, %v381
  %v383 = vsel %vm74, %v265, 0.0
  %v384 = vadd.f32 %v382, %v383
  %v385 = vsel %vm74, %v266, 0.0
  %v386 = vadd.f32 %v384, %v385
  %v387 = vsel %vm74, %v267, 0.0
  %v388 = vadd.f32 %v386, %v387
  %v389 = vsel %vm74, %v268, 0.0
  %v390 = vadd.f32 %v388, %v389
  %v391 = vsel %vm74, %v269, 0.0
  %v392 = vadd.f32 %v390, %v391
  %v393 = vsel %vm74, %v270, 0.0
  %v394 = vadd.f32 %v392, %v393
  %v395 = vsel %vm74, %v271, 0.0
  %v396 = vadd.f32 %v394, %v395
  %v397 = vsel %vm74, %v272, 0.0
  %v398 = vadd.f32 %v396, %v397
  %v399 = vsel %vm74, %v273, 0.0
  %v400 = vadd.f32 %v398, %v399
  %v401 = vrot.slane %v400, 4
  %v402 = vadd.f32 %v400, %v401
  %v403 = vrot.slane %v402, 2
  %v404 = vadd.f32 %v402, %v403
  %v405 = vrot.slane %v404, 1
  %v406 = vadd.f32 %v404, %v405
  %407 = vst.msk [vmem:[%s2] sm:$0x1] %vm208, %v406
  // Predicated region
  $region6: #{se_bottleneck.5} parent=0 // pred_check
    _
  $region7: #{se_bottleneck.5} parent=0 // pred_check_branch
    %409 = sbr.rel (0) target = $region9
  $region8: #{se_bottleneck.5} parent=0 // pred_region
    _
  $region9: #{se_bottleneck.5} parent=0 // pred_fallthru
    _
  // Predicated region
  $region10: #{se_bottleneck.5} parent=0 // pred_check
    _
  $region11: #{se_bottleneck.5} parent=0 // pred_check_branch
    %411 = sbr.rel (0) target = $region13
  $region12: #{se_bottleneck.5} parent=0 // pred_region
    _
  $region13: #{se_bottleneck.5} parent=0 // pred_fallthru
    _
  // Predicated region
  $region14: #{se_bottleneck.5} parent=0 // pred_check
    _
  $region15: #{se_bottleneck.5} parent=0 // pred_check_branch
    %413 = sbr.rel (0) target = $region17
  $region16: #{se_bottleneck.5} parent=0 // pred_region
    _
  $region17: #{se_bottleneck.5} parent=0 // pred_fallthru
    _
  // Predicated region
  $region18: #{se_bottleneck.5} parent=0 // pred_check
    _
  $region19: #{se_bottleneck.5} parent=0 // pred_check_branch
    %415 = sbr.rel (0) target = $region21
  $region20: #{se_bottleneck.5} parent=0 // pred_region
    _
  $region21: #{se_bottleneck.5} parent=0 // pred_fallthru
    _

// kernel: se_bottleneck.8
$region0: #{se_bottleneck.8}
  #allocation0 [shape = 'u32[]', space=smem, size = 0x4, offset = 0x4, fixed_abs, tag = 'smem constant byte address 0x4 - core index']
  #allocation1 [shape = 'u32[144,128]{1,0:T(1,128)}', space=vmem, size = 0x12000, scoped, tag = 'internal scratch']
  %s0 = inlined_call_operand.vmem [shape: bf16[2,256,4], index: 0, kind: input, shape index: {}]
  %s1 = inlined_call_operand.vmem [shape: f32[1,4], index: 1, kind: input, shape index: {}]
  %s2 = inlined_call_operand.vmem [shape: f32[1,4], index: 2, kind: input, shape index: {}]
  %s3 = inlined_call_operand.vmem [shape: bf16[4,16], index: 3, kind: input, shape index: {}]
  %s4 = inlined_call_operand.vmem [shape: f32[1,16], index: 4, kind: input, shape index: {}]
  %s5 = inlined_call_operand.vmem [shape: f32[2,1,1,16], index: 5, kind: output, shape index: {}]
  %s6 = sld [smem:[#allocation0]]
  $region53: #{se_bottleneck.8} parent=0
    _
  %s8 = ssub.s32 1, %s6
  %s9 = scalar_select 0, %s8, %s6
  loop: start=0, step=1, limit=4
  $region2: #{se_bottleneck.8} parent=0 // loop_pre_header
    _
  $region3: #{se_bottleneck.8} parent=0 // loop_header
    %s11 = sphi 0, %s15
    %p12 = scmp.ge.s32.totalorder %s11, 4
    %s18 = sphi 0, %s30
    %s19 = sphi 0, %s26
    %s20 = sphi 0, %s18
    %s21 = sphi 0, %s19
    %s22 = sphi 0, %s20
    %s23 = sphi 0, %s21
    %s35 = sphi 0, %s37
    %s38 = sphi 0, %s35
    %s39 = sphi 0, %s38
    %s55 = sphi 0, %s39
    %s59 = sphi 0, %s59
    %s61 = sphi 0, %s59
    %s62 = sphi 0, %s61
    %s76 = sphi 0, %s62
    %s80 = sphi 0, %s80
    %s82 = sphi 0, %s80
    %s83 = sphi 0, %s82
    %s97 = sphi 0, %s83
    %s101 = sphi 0, %s101
    %s103 = sphi 0, %s101
    %s104 = sphi 0, %s103
    %s118 = sphi 0, %s104
    %s122 = sphi 0, %s122
    %s124 = sphi 0, %s122
    %s125 = sphi 0, %s124
    %s139 = sphi 0, %s125
    %s147 = sphi 0, %s149
    %s150 = sphi 0, %s147
    %s151 = sphi 0, %s150
    %s167 = sphi 0, %s151
  $region4: #{se_bottleneck.8} parent=0 // loop_header_branch
    %14 = sbr.rel (%p12) target = $region8
  $region5: #{se_bottleneck.8} parent=0 // loop_body
    %s16 = ssub.s32 %s11, 1
    %s17 = ssub.s32 %s11, 2
    %s24 = sadd.s32 1, %s19
    %p25 = scmp.ge.s32.totalorder %s24, 1
    %s26 = scalar_select %p25, 0, %s24
    %s27 = sadd.s32 1, %s18
    %s28 = scalar_select %p25, %s27, %s18
    %p29 = scmp.ge.s32.totalorder %s28, 2
    %s30 = scalar_select %p29, 0, %s28
    %s31 = ssub.s32 %s18, %s30
    %s32 = ssub.s32 %s19, %s26
    %s33 = sor.u32 %s31, %s32
    %p34 = scmp.eq.s32.totalorder %s33, 0
    %s36 = sadd.s32 %s35, 1
    %s37 = scalar_select %p34, %s35, %s36
    %p40 = pneg %p34
    %p41 = scmp.eq.s32.totalorder %s11, 1
    %p42 = por %p40, %p41
    %p43 = scmp.ne.s32.totalorder %s35, %s38
    %p44 = scmp.eq.s32.totalorder %s11, 0
    %p45 = por %p43, %p44
    %p46 = scmp.ne.s32.totalorder %s35, %s38
    %p47 = scmp.eq.s32.totalorder %s16, 1
    %p48 = por %p46, %p47
    %p49 = scmp.ne.s32.totalorder %s38, %s39
    %p50 = scmp.eq.s32.totalorder %s16, 0
    %p51 = por %p49, %p50
    %p52 = scmp.ne.s32.totalorder %s38, %s39
    %p53 = scmp.eq.s32.totalorder %s17, 1
    %p54 = por %p52, %p53
    %p56 = scmp.ne.s32.totalorder %s39, %s55
    %p57 = scmp.eq.s32.totalorder %s17, 0
    %p58 = por %p56, %p57
    %s60 = sadd.s32 %s59, 1
    %p63 = scmp.eq.s32.totalorder %s11, 1
    %p64 = scmp.ne.s32.totalorder %s59, %s61
    %p65 = scmp.eq.s32.totalorder %s11, 0
    %p66 = por %p64, %p65
    %p67 = scmp.ne.s32.totalorder %s59, %s61
    %p68 = scmp.eq.s32.totalorder %s16, 1
    %p69 = por %p67, %p68
    %p70 = scmp.ne.s32.totalorder %s61, %s62
    %p71 = scmp.eq.s32.totalorder %s16, 0
    %p72 = por %p70, %p71
    %p73 = scmp.ne.s32.totalorder %s61, %s62
    %p74 = scmp.eq.s32.totalorder %s17, 1
    %p75 = por %p73, %p74
    %p77 = scmp.ne.s32.totalorder %s62, %s76
    %p78 = scmp.eq.s32.totalorder %s17, 0
    %p79 = por %p77, %p78
    %s81 = sadd.s32 %s80, 1
    %p84 = scmp.eq.s32.totalorder %s11, 1
    %p85 = scmp.ne.s32.totalorder %s80, %s82
    %p86 = scmp.eq.s32.totalorder %s11, 0
    %p87 = por %p85, %p86
    %p88 = scmp.ne.s32.totalorder %s80, %s82
    %p89 = scmp.eq.s32.totalorder %s16, 1
    %p90 = por %p88, %p89
    %p91 = scmp.ne.s32.totalorder %s82, %s83
    %p92 = scmp.eq.s32.totalorder %s16, 0
    %p93 = por %p91, %p92
    %p94 = scmp.ne.s32.totalorder %s82, %s83
    %p95 = scmp.eq.s32.totalorder %s17, 1
    %p96 = por %p94, %p95
    %p98 = scmp.ne.s32.totalorder %s83, %s97
    %p99 = scmp.eq.s32.totalorder %s17, 0
    %p100 = por %p98, %p99
    %s102 = sadd.s32 %s101, 1
    %p105 = scmp.eq.s32.totalorder %s11, 1
    %p106 = scmp.ne.s32.totalorder %s101, %s103
    %p107 = scmp.eq.s32.totalorder %s11, 0
    %p108 = por %p106, %p107
    %p109 = scmp.ne.s32.totalorder %s101, %s103
    %p110 = scmp.eq.s32.totalorder %s16, 1
    %p111 = por %p109, %p110
    %p112 = scmp.ne.s32.totalorder %s103, %s104
    %p113 = scmp.eq.s32.totalorder %s16, 0
    %p114 = por %p112, %p113
    %p115 = scmp.ne.s32.totalorder %s103, %s104
    %p116 = scmp.eq.s32.totalorder %s17, 1
    %p117 = por %p115, %p116
    %p119 = scmp.ne.s32.totalorder %s104, %s118
    %p120 = scmp.eq.s32.totalorder %s17, 0
    %p121 = por %p119, %p120
    %s123 = sadd.s32 %s122, 1
    %p126 = scmp.eq.s32.totalorder %s11, 1
    %p127 = scmp.ne.s32.totalorder %s122, %s124
    %p128 = scmp.eq.s32.totalorder %s11, 0
    %p129 = por %p127, %p128
    %p130 = scmp.ne.s32.totalorder %s122, %s124
    %p131 = scmp.eq.s32.totalorder %s16, 1
    %p132 = por %p130, %p131
    %p133 = scmp.ne.s32.totalorder %s124, %s125
    %p134 = scmp.eq.s32.totalorder %s16, 0
    %p135 = por %p133, %p134
    %p136 = scmp.ne.s32.totalorder %s124, %s125
    %p137 = scmp.eq.s32.totalorder %s17, 1
    %p138 = por %p136, %p137
    %p140 = scmp.ne.s32.totalorder %s125, %s139
    %p141 = scmp.eq.s32.totalorder %s17, 0
    %p142 = por %p140, %p141
    %s143 = ssub.s32 %s18, %s30
    %s144 = ssub.s32 %s19, %s26
    %s145 = sor.u32 %s143, %s144
    %p146 = scmp.eq.s32.totalorder %s145, 0
    %s148 = sadd.s32 %s147, 1
    %s149 = scalar_select %p146, %s147, %s148
    %p152 = pneg %p146
    %p153 = scmp.eq.s32.totalorder %s11, 1
    %p154 = por %p152, %p153
    %p155 = scmp.ne.s32.totalorder %s147, %s150
    %p156 = scmp.eq.s32.totalorder %s11, 0
    %p157 = por %p155, %p156
    %p158 = scmp.ne.s32.totalorder %s147, %s150
    %p159 = scmp.eq.s32.totalorder %s16, 1
    %p160 = por %p158, %p159
    %p161 = scmp.ne.s32.totalorder %s150, %s151
    %p162 = scmp.eq.s32.totalorder %s16, 0
    %p163 = por %p161, %p162
    %p164 = scmp.ne.s32.totalorder %s150, %s151
    %p165 = scmp.eq.s32.totalorder %s17, 1
    %p166 = por %p164, %p165
    %p168 = scmp.ne.s32.totalorder %s151, %s167
    %p169 = scmp.eq.s32.totalorder %s17, 0
    %p170 = por %p168, %p169
    %p171 = scmp.le.s32.totalorder 1, %s11
    %p172 = scmp.lt.s32.totalorder %s11, 3
    %p173 = pnand %p171, %p172
    %p174 = pneg %p173
    // Predicated region
    $region9: #{se_bottleneck.8} parent=5 // pred_check
      _
    $region10: #{se_bottleneck.8} parent=5 // pred_check_branch
      %176 = sbr.rel (%p173) target = $region12
    $region11: #{se_bottleneck.8} parent=5 // pred_region
      %s177 = ssub.s32 %s11, 1
      // Predicated region
      $region13: #{se_bottleneck.8} parent=11 // pred_check
        %p178 = pneg %p72
      $region14: #{se_bottleneck.8} parent=11 // pred_check_branch
        %180 = sbr.rel (%p178) target = $region16
      $region15: #{se_bottleneck.8} parent=11 // pred_region
        _
      $region16: #{se_bottleneck.8} parent=11 // pred_fallthru
        _
      // Predicated region
      $region17: #{se_bottleneck.8} parent=11 // pred_check
        %p181 = pneg %p93
      $region18: #{se_bottleneck.8} parent=11 // pred_check_branch
        %183 = sbr.rel (%p181) target = $region20
      $region19: #{se_bottleneck.8} parent=11 // pred_region
        _
      $region20: #{se_bottleneck.8} parent=11 // pred_fallthru
        _
      // Predicated region
      $region21: #{se_bottleneck.8} parent=11 // pred_check
        %p184 = pneg %p114
      $region22: #{se_bottleneck.8} parent=11 // pred_check_branch
        %186 = sbr.rel (%p184) target = $region24
      $region23: #{se_bottleneck.8} parent=11 // pred_region
        _
      $region24: #{se_bottleneck.8} parent=11 // pred_fallthru
        _
      // Predicated region
      $region25: #{se_bottleneck.8} parent=11 // pred_check
        %p187 = pneg %p135
      $region26: #{se_bottleneck.8} parent=11 // pred_check_branch
        %189 = sbr.rel (%p187) target = $region28
      $region27: #{se_bottleneck.8} parent=11 // pred_region
        _
      $region28: #{se_bottleneck.8} parent=11 // pred_fallthru
        _
    $region12: #{se_bottleneck.8} parent=5 // pred_fallthru
      _
    %p190 = scmp.lt.s32.totalorder %s11, 2
    // Predicated region
    $region29: #{se_bottleneck.8} parent=5 // pred_check
      %p191 = pneg %p190
    $region30: #{se_bottleneck.8} parent=5 // pred_check_branch
      %193 = sbr.rel (%p191) target = $region32
    $region31: #{se_bottleneck.8} parent=5 // pred_region
      // Predicated region
      $region33: #{se_bottleneck.8} parent=31 // pred_check
        %p194 = pneg %p45
      $region34: #{se_bottleneck.8} parent=31 // pred_check_branch
        %196 = sbr.rel (%p194) target = $region36
      $region35: #{se_bottleneck.8} parent=31 // pred_region
        %s197 = smul.u32 32, %s19
        %p198 = scmp.lt.s32.totalorder %s18, 1
        %s199 = scalar_select %p198, %s18, 1
        %p200 = scmp.lt.s32.totalorder %s197, 31
        %s201 = scalar_select %p200, %s197, 31
        %s202 = smul.addr %s199, 32
        %s203 = sadd.s32 %s201, %s202
        %s204 = smul.addr %s203, 4
        %s205 = scalar_lea.vmem %s0, %s204
        %s206 = smul.u32 32, %s19
      $region36: #{se_bottleneck.8} parent=31 // pred_fallthru
        _
    $region32: #{se_bottleneck.8} parent=5 // pred_fallthru
      _
    %p207 = scmp.le.s32.totalorder 1, %s11
    %p208 = scmp.lt.s32.totalorder %s11, 3
    %p209 = pnand %p207, %p208
    %p210 = pneg %p209
    // Predicated region
    $region37: #{se_bottleneck.8} parent=5 // pred_check
      _
    $region38: #{se_bottleneck.8} parent=5 // pred_check_branch
      %212 = sbr.rel (%p209) target = $region40
    $region39: #{se_bottleneck.8} parent=5 // pred_region
      %s213 = ssub.s32 %s11, 1
      %s214 = smul.u32 32, %s21
      %p215 = scmp.lt.s32.totalorder %s20, 1
      %s216 = scalar_select %p215, %s20, 1
      %p217 = scmp.lt.s32.totalorder %s214, 31
      %s218 = scalar_select %p217, %s214, 31
      %s219 = smul.addr %s216, 32
      %s220 = sadd.s32 %s218, %s219
      %s221 = smul.addr %s220, 4
      %s222 = scalar_lea.vmem %s0, %s221
      %p223 = pneg %p51
      %p224 = pneg %p48
      %p225 = pneg %p72
      %p226 = pneg %p69
      %p227 = pneg %p93
      %p228 = pneg %p90
      %p229 = pneg %p114
      %p230 = pneg %p111
      %p231 = pneg %p135
      %p232 = pneg %p132
      %p233 = pneg %p163
      %p234 = pneg %p160
      %p235 = scmp.lt.s32.totalorder %s20, 1
      %s236 = scalar_select %p235, %s20, 1
      %p237 = scmp.lt.s32.totalorder %s21, 0
      %s238 = scalar_select %p237, %s21, 0
      %s239 = sadd.s32 %s238, %s236
      %s240 = scalar_lea.vmem %s5, %s239
      %s241 = smul.u32 32, %s21
      %p242 = scmp.lt.s32.totalorder %s20, 1
      %s243 = scalar_select %p242, %s20, 1
      %p244 = scmp.lt.s32.totalorder %s241, 31
      %s245 = scalar_select %p244, %s241, 31
      %s246 = smul.addr %s243, 32
      %s247 = sadd.s32 %s245, %s246
      %s248 = smul.addr %s247, 4
      %s249 = scalar_lea.vmem %s0, %s248
      %s250 = smul.u32 32, %s21
      %p251 = scmp.lt.s32.totalorder %s20, 1
      %s252 = scalar_select %p251, %s20, 1
      %p253 = scmp.lt.s32.totalorder %s21, 0
      %s254 = scalar_select %p253, %s21, 0
      %s255 = sadd.s32 %s254, %s252
      %s256 = scalar_lea.vmem %s5, %s255
      %v258 = vld [vmem:[%s249] sm:$0xf]
      %v259 = vld [vmem:[%s249 + $0x4] sm:$0xf]
      %v260 = vld [vmem:[%s249 + $0x8] sm:$0xf]
      %v261 = vld [vmem:[%s249 + $0xc] sm:$0xf]
      %v262 = vld [vmem:[%s249 + $0x10] sm:$0xf]
      %v263 = vld [vmem:[%s249 + $0x14] sm:$0xf]
      %v264 = vld [vmem:[%s249 + $0x18] sm:$0xf]
      %v265 = vld [vmem:[%s249 + $0x1c] sm:$0xf]
      %v266 = vld [vmem:[%s249 + $0x20] sm:$0xf]
      %v267 = vld [vmem:[%s249 + $0x24] sm:$0xf]
      %v268 = vld [vmem:[%s249 + $0x28] sm:$0xf]
      %v269 = vld [vmem:[%s249 + $0x2c] sm:$0xf]
      %v270 = vld [vmem:[%s249 + $0x30] sm:$0xf]
      %v271 = vld [vmem:[%s249 + $0x34] sm:$0xf]
      %v272 = vld [vmem:[%s249 + $0x38] sm:$0xf]
      %v273 = vld [vmem:[%s249 + $0x3c] sm:$0xf]
      %v274 = vld [vmem:[%s249 + $0x40] sm:$0xf]
      %v275 = vld [vmem:[%s249 + $0x44] sm:$0xf]
      %v276 = vld [vmem:[%s249 + $0x48] sm:$0xf]
      %v277 = vld [vmem:[%s249 + $0x4c] sm:$0xf]
      %v278 = vld [vmem:[%s249 + $0x50] sm:$0xf]
      %v279 = vld [vmem:[%s249 + $0x54] sm:$0xf]
      %v280 = vld [vmem:[%s249 + $0x58] sm:$0xf]
      %v281 = vld [vmem:[%s249 + $0x5c] sm:$0xf]
      %v282 = vld [vmem:[%s249 + $0x60] sm:$0xf]
      %v283 = vld [vmem:[%s249 + $0x64] sm:$0xf]
      %v284 = vld [vmem:[%s249 + $0x68] sm:$0xf]
      %v285 = vld [vmem:[%s249 + $0x6c] sm:$0xf]
      %v286 = vld [vmem:[%s249 + $0x70] sm:$0xf]
      %v287 = vld [vmem:[%s249 + $0x74] sm:$0xf]
      %v288 = vld [vmem:[%s249 + $0x78] sm:$0xf]
      %v289 = vld [vmem:[%s249 + $0x7c] sm:$0xf]
      %v290 = vunpack.c.l.bf16 %v258
      %v291 = vunpack.c.l.bf16 %v259
      %v292 = vunpack.c.l.bf16 %v260
      %v293 = vunpack.c.l.bf16 %v261
      %v294 = vunpack.c.l.bf16 %v262
      %v295 = vunpack.c.l.bf16 %v263
      %v296 = vunpack.c.l.bf16 %v264
      %v297 = vunpack.c.l.bf16 %v265
      %v298 = vunpack.c.l.bf16 %v266
      %v299 = vunpack.c.l.bf16 %v267
      %v300 = vunpack.c.l.bf16 %v268
      %v301 = vunpack.c.l.bf16 %v269
      %v302 = vunpack.c.l.bf16 %v270
      %v303 = vunpack.c.l.bf16 %v271
      %v304 = vunpack.c.l.bf16 %v272
      %v305 = vunpack.c.l.bf16 %v273
      %v306 = vunpack.c.l.bf16 %v274
      %v307 = vunpack.c.l.bf16 %v275
      %v308 = vunpack.c.l.bf16 %v276
      %v309 = vunpack.c.l.bf16 %v277
      %v310 = vunpack.c.l.bf16 %v278
      %v311 = vunpack.c.l.bf16 %v279
      %v312 = vunpack.c.l.bf16 %v280
      %v313 = vunpack.c.l.bf16 %v281
      %v314 = vunpack.c.l.bf16 %v282
      %v315 = vunpack.c.l.bf16 %v283
      %v316 = vunpack.c.l.bf16 %v284
      %v317 = vunpack.c.l.bf16 %v285
      %v318 = vunpack.c.l.bf16 %v286
      %v319 = vunpack.c.l.bf16 %v287
      %v320 = vunpack.c.l.bf16 %v288
      %v321 = vunpack.c.l.bf16 %v289
      %v322 = vld [vmem:[%s1] sm:$0x1]
      %v324 = vlaneseq
      %v325 = vshrl.u32 %v324, 7
      %v326 = vsub.s32 0, %v325
      %v327 = vrot.slane %v322, %v326
      %v329 = vmul.f32 %v290, %v327
      %v330 = vmul.f32 %v291, %v327
      %v331 = vmul.f32 %v292, %v327
      %v332 = vmul.f32 %v293, %v327
      %v333 = vmul.f32 %v294, %v327
      %v334 = vmul.f32 %v295, %v327
      %v335 = vmul.f32 %v296, %v327
      %v336 = vmul.f32 %v297, %v327
      %v337 = vmul.f32 %v298, %v327
      %v338 = vmul.f32 %v299, %v327
      %v339 = vmul.f32 %v300, %v327
      %v340 = vmul.f32 %v301, %v327
      %v341 = vmul.f32 %v302, %v327
      %v342 = vmul.f32 %v303, %v327
      %v343 = vmul.f32 %v304, %v327
      %v344 = vmul.f32 %v305, %v327
      %v345 = vmul.f32 %v306, %v327
      %v346 = vmul.f32 %v307, %v327
      %v347 = vmul.f32 %v308, %v327
      %v348 = vmul.f32 %v309, %v327
      %v349 = vmul.f32 %v310, %v327
      %v350 = vmul.f32 %v311, %v327
      %v351 = vmul.f32 %v312, %v327
      %v352 = vmul.f32 %v313, %v327
      %v353 = vmul.f32 %v314, %v327
      %v354 = vmul.f32 %v315, %v327
      %v355 = vmul.f32 %v316, %v327
      %v356 = vmul.f32 %v317, %v327
      %v357 = vmul.f32 %v318, %v327
      %v358 = vmul.f32 %v319, %v327
      %v359 = vmul.f32 %v320, %v327
      %v360 = vmul.f32 %v321, %v327
      %v361 = vld [vmem:[%s2] sm:$0x1]
      %v363 = vlaneseq
      %v364 = vshrl.u32 %v363, 7
      %v365 = vsub.s32 0, %v364
      %v366 = vrot.slane %v361, %v365
      %v368 = vadd.f32 %v329, %v366
      %v369 = vadd.f32 %v330, %v366
      %v370 = vadd.f32 %v331, %v366
      %v371 = vadd.f32 %v332, %v366
      %v372 = vadd.f32 %v333, %v366
      %v373 = vadd.f32 %v334, %v366
      %v374 = vadd.f32 %v335, %v366
      %v375 = vadd.f32 %v336, %v366
      %v376 = vadd.f32 %v337, %v366
      %v377 = vadd.f32 %v338, %v366
      %v378 = vadd.f32 %v339, %v366
      %v379 = vadd.f32 %v340, %v366
      %v380 = vadd.f32 %v341, %v366
      %v381 = vadd.f32 %v342, %v366
      %v382 = vadd.f32 %v343, %v366
      %v383 = vadd.f32 %v344, %v366
      %v384 = vadd.f32 %v345, %v366
      %v385 = vadd.f32 %v346, %v366
      %v386 = vadd.f32 %v347, %v366
      %v387 = vadd.f32 %v348, %v366
      %v388 = vadd.f32 %v349, %v366
      %v389 = vadd.f32 %v350, %v366
      %v390 = vadd.f32 %v351, %v366
      %v391 = vadd.f32 %v352, %v366
      %v392 = vadd.f32 %v353, %v366
      %v393 = vadd.f32 %v354, %v366
      %v394 = vadd.f32 %v355, %v366
      %v395 = vadd.f32 %v356, %v366
      %v396 = vadd.f32 %v357, %v366
      %v397 = vadd.f32 %v358, %v366
      %v398 = vadd.f32 %v359, %v366
      %v399 = vadd.f32 %v360, %v366
      %v400 = vmax.f32 %v368, 0.0
      %v401 = vmax.f32 %v369, 0.0
      %v402 = vmax.f32 %v370, 0.0
      %v403 = vmax.f32 %v371, 0.0
      %v404 = vmax.f32 %v372, 0.0
      %v405 = vmax.f32 %v373, 0.0
      %v406 = vmax.f32 %v374, 0.0
      %v407 = vmax.f32 %v375, 0.0
      %v408 = vmax.f32 %v376, 0.0
      %v409 = vmax.f32 %v377, 0.0
      %v410 = vmax.f32 %v378, 0.0
      %v411 = vmax.f32 %v379, 0.0
      %v412 = vmax.f32 %v380, 0.0
      %v413 = vmax.f32 %v381, 0.0
      %v414 = vmax.f32 %v382, 0.0
      %v415 = vmax.f32 %v383, 0.0
      %v416 = vmax.f32 %v384, 0.0
      %v417 = vmax.f32 %v385, 0.0
      %v418 = vmax.f32 %v386, 0.0
      %v419 = vmax.f32 %v387, 0.0
      %v420 = vmax.f32 %v388, 0.0
      %v421 = vmax.f32 %v389, 0.0
      %v422 = vmax.f32 %v390, 0.0
      %v423 = vmax.f32 %v391, 0.0
      %v424 = vmax.f32 %v392, 0.0
      %v425 = vmax.f32 %v393, 0.0
      %v426 = vmax.f32 %v394, 0.0
      %v427 = vmax.f32 %v395, 0.0
      %v428 = vmax.f32 %v396, 0.0
      %v429 = vmax.f32 %v397, 0.0
      %v430 = vmax.f32 %v398, 0.0
      %v431 = vmax.f32 %v399, 0.0
      %v432 = vpack.c.bf16 %v401, %v400
      %v433 = vpack.c.bf16 %v403, %v402
      %v434 = vpack.c.bf16 %v405, %v404
      %v435 = vpack.c.bf16 %v407, %v406
      %v436 = vpack.c.bf16 %v409, %v408
      %v437 = vpack.c.bf16 %v411, %v410
      %v438 = vpack.c.bf16 %v413, %v412
      %v439 = vpack.c.bf16 %v415, %v414
      %v440 = vpack.c.bf16 %v417, %v416
      %v441 = vpack.c.bf16 %v419, %v418
      %v442 = vpack.c.bf16 %v421, %v420
      %v443 = vpack.c.bf16 %v423, %v422
      %v444 = vpack.c.bf16 %v425, %v424
      %v445 = vpack.c.bf16 %v427, %v426
      %v446 = vpack.c.bf16 %v429, %v428
      %v447 = vpack.c.bf16 %v431, %v430
      %v448 = vld [vmem:[%s3] sm:$0x3]
      %v449 = vld [vmem:[%s4] sm:$0x1]
      %v451 = vlaneseq
      %v452 = vshrl.u32 %v451, 7
      %v453 = vsub.s32 0, %v452
      %v454 = vrot.slane %v449, %v453
      %vm456 = vcmask 31744
      %v458 = vsel %vm456, %v432, 0
      %v461 = vsel %vm456, %v433, 0
      %v464 = vsel %vm456, %v434, 0
      %v467 = vsel %vm456, %v435, 0
      %v470 = vsel %vm456, %v436, 0
      %v473 = vsel %vm456, %v437, 0
      %v476 = vsel %vm456, %v438, 0
      %v479 = vsel %vm456, %v439, 0
      %v482 = vsel %vm456, %v440, 0
      %v485 = vsel %vm456, %v441, 0
      %v488 = vsel %vm456, %v442, 0
      %v491 = vsel %vm456, %v443, 0
      %v494 = vsel %vm456, %v444, 0
      %v497 = vsel %vm456, %v445, 0
      %v500 = vsel %vm456, %v446, 0
      %v503 = vsel %vm456, %v447, 0
      %vm505 = vcmask 1041408
      %v507 = vsel %vm505, %v448, 0
      %509 = vmatprep.subr.bf16.mxu0 0
      %510 = vmatpush1.bf16.msra.mxu0 0
      %511 = vmatprep.subr.bf16.mxu0 0
      %512 = vmatpush1.bf16.msra.mxu0 0
      %513 = vmatprep.subr.bf16.mxu0 0
      %514 = vmatpush1.bf16.msra.mxu0 0
      %515 = vmatprep.subr.bf16.mxu0 0
      %516 = vmatpush1.bf16.msra.mxu0 0
      %517 = vmatprep.subr.bf16.mxu0 0
      %518 = vmatpush1.bf16.msra.mxu0 0
      %519 = vmatprep.subr.bf16.mxu0 0
      %520 = vmatpush1.bf16.msra.mxu0 0
      %521 = vmatprep.subr.bf16.mxu0 0
      %522 = vmatpush1.bf16.msra.mxu0 0
      %523 = vmatprep.subr.bf16.mxu0 0
      %524 = vmatpush1.bf16.msra.mxu0 %v507
      %525 = vmatprep.subr.bf16.mxu0 0
      %526 = vmatpush2.bf16.msra.mxu0 0
      %527 = vmatprep.subr.bf16.mxu0 0
      %528 = vmatpush2.bf16.msra.mxu0 0
      %529 = vmatprep.subr.bf16.mxu0 0
      %530 = vmatpush2.bf16.msra.mxu0 0
      %531 = vmatprep.subr.bf16.mxu0 0
      %532 = vmatpush2.bf16.msra.mxu0 0
      %533 = vmatprep.subr.bf16.mxu0 0
      %534 = vmatpush2.bf16.msra.mxu0 0
      %535 = vmatprep.subr.bf16.mxu0 0
      %536 = vmatpush2.bf16.msra.mxu0 0
      %537 = vmatprep.subr.bf16.mxu0 0
      %538 = vmatpush2.bf16.msra.mxu0 0
      %539 = vmatprep.subr.bf16.mxu0 0
      %540 = vmatpush2.bf16.msra.mxu0 0
      %541 = vmatprep.mubr.bf16.mxu0 0
      %542 = vmatmul.mubr.bf16.gmra.mxu0 %v458
      %v543 = vpop.f32.mrf.mxu0
      %v544 = vadd.f32 %v454, %v543
      %v545 = vpop.f32.mrf.mxu0
      %v546 = vpop.f32.mrf.mxu0
      %v547 = vadd.f32 %v454, %v546
      %v548 = vpop.f32.mrf.mxu0
      %549 = vmatprep.mubr.bf16.mxu0 0
      %550 = vmatmul.mubr.bf16.gmra.mxu0 %v461
      %v551 = vpop.f32.mrf.mxu0
      %v552 = vadd.f32 %v454, %v551
      %v553 = vpop.f32.mrf.mxu0
      %v554 = vpop.f32.mrf.mxu0
      %v555 = vadd.f32 %v454, %v554
      %v556 = vpop.f32.mrf.mxu0
      %557 = vmatprep.mubr.bf16.mxu0 0
      %558 = vmatmul.mubr.bf16.gmra.mxu0 %v464
      %v559 = vpop.f32.mrf.mxu0
      %v560 = vadd.f32 %v454, %v559
      %v561 = vpop.f32.mrf.mxu0
      %v562 = vpop.f32.mrf.mxu0
      %v563 = vadd.f32 %v454, %v562
      %v564 = vpop.f32.mrf.mxu0
      %565 = vmatprep.mubr.bf16.mxu0 0
      %566 = vmatmul.mubr.bf16.gmra.mxu0 %v467
      %v567 = vpop.f32.mrf.mxu0
      %v568 = vadd.f32 %v454, %v567
      %v569 = vpop.f32.mrf.mxu0
      %v570 = vpop.f32.mrf.mxu0
      %v571 = vadd.f32 %v454, %v570
      %v572 = vpop.f32.mrf.mxu0
      %573 = vmatprep.mubr.bf16.mxu0 0
      %574 = vmatmul.mubr.bf16.gmra.mxu0 %v470
      %v575 = vpop.f32.mrf.mxu0
      %v576 = vadd.f32 %v454, %v575
      %v577 = vpop.f32.mrf.mxu0
      %v578 = vpop.f32.mrf.mxu0
      %v579 = vadd.f32 %v454, %v578
      %v580 = vpop.f32.mrf.mxu0
      %581 = vmatprep.mubr.bf16.mxu0 0
      %582 = vmatmul.mubr.bf16.gmra.mxu0 %v473
      %v583 = vpop.f32.mrf.mxu0
      %v584 = vadd.f32 %v454, %v583
      %v585 = vpop.f32.mrf.mxu0
      %v586 = vpop.f32.mrf.mxu0
      %v587 = vadd.f32 %v454, %v586
      %v588 = vpop.f32.mrf.mxu0
      %589 = vmatprep.mubr.bf16.mxu0 0
      %590 = vmatmul.mubr.bf16.gmra.mxu0 %v476
      %v591 = vpop.f32.mrf.mxu0
      %v592 = vadd.f32 %v454, %v591
      %v593 = vpop.f32.mrf.mxu0
      %v594 = vpop.f32.mrf.mxu0
      %v595 = vadd.f32 %v454, %v594
      %v596 = vpop.f32.mrf.mxu0
      %597 = vmatprep.mubr.bf16.mxu0 0
      %598 = vmatmul.mubr.bf16.gmra.mxu0 %v479
      %v599 = vpop.f32.mrf.mxu0
      %v600 = vadd.f32 %v454, %v599
      %v601 = vpop.f32.mrf.mxu0
      %v602 = vpop.f32.mrf.mxu0
      %v603 = vadd.f32 %v454, %v602
      %v604 = vpop.f32.mrf.mxu0
      %605 = vmatprep.mubr.bf16.mxu0 0
      %606 = vmatmul.mubr.bf16.gmra.mxu0 %v482
      %v607 = vpop.f32.mrf.mxu0
      %v608 = vadd.f32 %v454, %v607
      %v609 = vpop.f32.mrf.mxu0
      %v610 = vpop.f32.mrf.mxu0
      %v611 = vadd.f32 %v454, %v610
      %v612 = vpop.f32.mrf.mxu0
      %613 = vmatprep.mubr.bf16.mxu0 0
      %614 = vmatmul.mubr.bf16.gmra.mxu0 %v485
      %v615 = vpop.f32.mrf.mxu0
      %v616 = vadd.f32 %v454, %v615
      %v617 = vpop.f32.mrf.mxu0
      %v618 = vpop.f32.mrf.mxu0
      %v619 = vadd.f32 %v454, %v618
      %v620 = vpop.f32.mrf.mxu0
      %621 = vmatprep.mubr.bf16.mxu0 0
      %622 = vmatmul.mubr.bf16.gmra.mxu0 %v488
      %v623 = vpop.f32.mrf.mxu0
      %v624 = vadd.f32 %v454, %v623
      %v625 = vpop.f32.mrf.mxu0
      %v626 = vpop.f32.mrf.mxu0
      %v627 = vadd.f32 %v454, %v626
      %v628 = vpop.f32.mrf.mxu0
      %629 = vmatprep.mubr.bf16.mxu0 0
      %630 = vmatmul.mubr.bf16.gmra.mxu0 %v491
      %v631 = vpop.f32.mrf.mxu0
      %v632 = vadd.f32 %v454, %v631
      %v633 = vpop.f32.mrf.mxu0
      %v634 = vpop.f32.mrf.mxu0
      %v635 = vadd.f32 %v454, %v634
      %v636 = vpop.f32.mrf.mxu0
      %637 = vmatprep.mubr.bf16.mxu0 0
      %638 = vmatmul.mubr.bf16.gmra.mxu0 %v494
      %v639 = vpop.f32.mrf.mxu0
      %v640 = vadd.f32 %v454, %v639
      %v641 = vpop.f32.mrf.mxu0
      %v642 = vpop.f32.mrf.mxu0
      %v643 = vadd.f32 %v454, %v642
      %v644 = vpop.f32.mrf.mxu0
      %645 = vmatprep.mubr.bf16.mxu0 0
      %646 = vmatmul.mubr.bf16.gmra.mxu0 %v497
      %v647 = vpop.f32.mrf.mxu0
      %v648 = vadd.f32 %v454, %v647
      %v649 = vpop.f32.mrf.mxu0
      %v650 = vpop.f32.mrf.mxu0
      %v651 = vadd.f32 %v454, %v650
      %v652 = vpop.f32.mrf.mxu0
      %653 = vmatprep.mubr.bf16.mxu0 0
      %654 = vmatmul.mubr.bf16.gmra.mxu0 %v500
      %v655 = vpop.f32.mrf.mxu0
      %v656 = vadd.f32 %v454, %v655
      %v657 = vpop.f32.mrf.mxu0
      %v658 = vpop.f32.mrf.mxu0
      %v659 = vadd.f32 %v454, %v658
      %v660 = vpop.f32.mrf.mxu0
      %661 = vmatprep.mubr.bf16.mxu0 0
      %662 = vmatmul.mubr.bf16.gmra.mxu0 %v503
      %v663 = vpop.f32.mrf.mxu0
      %v664 = vadd.f32 %v454, %v663
      %v665 = vpop.f32.mrf.mxu0
      %v666 = vpop.f32.mrf.mxu0
      %v667 = vadd.f32 %v454, %v666
      %v668 = vpop.f32.mrf.mxu0
      %669 = vdwg.mxu0
      %vm670 = vcmask 130048
      %v671 = vsel %vm670, %v544, -inf
      %v672 = vsel %vm670, %v547, -inf
      %v673 = vsel %vm670, %v552, -inf
      %v674 = vsel %vm670, %v555, -inf
      %v675 = vsel %vm670, %v560, -inf
      %v676 = vmax.f32 %v671, %v675
      %v677 = vsel %vm670, %v563, -inf
      %v678 = vmax.f32 %v672, %v677
      %v679 = vsel %vm670, %v568, -inf
      %v680 = vmax.f32 %v673, %v679
      %v681 = vsel %vm670, %v571, -inf
      %v682 = vmax.f32 %v674, %v681
      %v683 = vsel %vm670, %v576, -inf
      %v684 = vmax.f32 %v676, %v683
      %v685 = vsel %vm670, %v579, -inf
      %v686 = vmax.f32 %v678, %v685
      %v687 = vsel %vm670, %v584, -inf
      %v688 = vmax.f32 %v680, %v687
      %v689 = vsel %vm670, %v587, -inf
      %v690 = vmax.f32 %v682, %v689
      %v691 = vsel %vm670, %v592, -inf
      %v692 = vmax.f32 %v684, %v691
      %v693 = vsel %vm670, %v595, -inf
      %v694 = vmax.f32 %v686, %v693
      %v695 = vsel %vm670, %v600, -inf
      %v696 = vmax.f32 %v688, %v695
      %v697 = vsel %vm670, %v603, -inf
      %v698 = vmax.f32 %v690, %v697
      %v699 = vsel %vm670, %v608, -inf
      %v700 = vmax.f32 %v692, %v699
      %v701 = vsel %vm670, %v611, -inf
      %v702 = vmax.f32 %v694, %v701
      %v703 = vsel %vm670, %v616, -inf
      %v704 = vmax.f32 %v696, %v703
      %v705 = vsel %vm670, %v619, -inf
      %v706 = vmax.f32 %v698, %v705
      %v707 = vsel %vm670, %v624, -inf
      %v708 = vmax.f32 %v700, %v707
      %v709 = vsel %vm670, %v627, -inf
      %v710 = vmax.f32 %v702, %v709
      %v711 = vsel %vm670, %v632, -inf
      %v712 = vmax.f32 %v704, %v711
      %v713 = vsel %vm670, %v635, -inf
      %v714 = vmax.f32 %v706, %v713
      %v715 = vsel %vm670, %v640, -inf
      %v716 = vmax.f32 %v708, %v715
      %v717 = vsel %vm670, %v643, -inf
      %v718 = vmax.f32 %v710, %v717
      %v719 = vsel %vm670, %v648, -inf
      %v720 = vmax.f32 %v712, %v719
      %v721 = vsel %vm670, %v651, -inf
      %v722 = vmax.f32 %v714, %v721
      %v723 = vsel %vm670, %v656, -inf
      %v724 = vmax.f32 %v716, %v723
      %v725 = vsel %vm670, %v659, -inf
      %v726 = vmax.f32 %v718, %v725
      %v727 = vsel %vm670, %v664, -inf
      %v728 = vmax.f32 %v720, %v727
      %v729 = vsel %vm670, %v667, -inf
      %v730 = vmax.f32 %v722, %v729
      %v731 = vmax.f32 %v724, %v726
      %v732 = vmax.f32 %v728, %v730
      %v733 = vmax.f32 %v731, %v732
      %v734 = vrot.slane %v733, 4
      %v735 = vmax.f32 %v733, %v734
      %v736 = vrot.slane %v735, 2
      %v737 = vmax.f32 %v735, %v736
      %v738 = vrot.slane %v737, 1
      %v739 = vmax.f32 %v737, %v738
      %vm740 = vcmask 122880
      %741 = vst.msk [vmem:[%s256] sm:$0x1] %vm740, %v739
      %p742 = scmp.lt.s32.totalorder %s20, 1
      %s743 = scalar_select %p742, %s20, 1
      %p744 = scmp.lt.s32.totalorder %s21, 0
      %s745 = scalar_select %p744, %s21, 0
      %s746 = sadd.s32 %s745, %s743
      %s747 = scalar_lea.vmem %s5, %s746
      // Predicated region
      $region41: #{se_bottleneck.8} parent=39 // pred_check
        %p748 = pneg %p160
      $region42: #{se_bottleneck.8} parent=39 // pred_check_branch
        %750 = sbr.rel (%p748) target = $region44
      $region43: #{se_bottleneck.8} parent=39 // pred_region
        _
      $region44: #{se_bottleneck.8} parent=39 // pred_fallthru
        _
    $region40: #{se_bottleneck.8} parent=5 // pred_fallthru
      _
    %p751 = scmp.le.s32.totalorder 2, %s11
    // Predicated region
    $region45: #{se_bottleneck.8} parent=5 // pred_check
      %p752 = pneg %p751
    $region46: #{se_bottleneck.8} parent=5 // pred_check_branch
      %754 = sbr.rel (%p752) target = $region48
    $region47: #{se_bottleneck.8} parent=5 // pred_region
      %s755 = ssub.s32 %s11, 2
      // Predicated region
      $region49: #{se_bottleneck.8} parent=47 // pred_check
        %p756 = pneg %p166
      $region50: #{se_bottleneck.8} parent=47 // pred_check_branch
        %758 = sbr.rel (%p756) target = $region52
      $region51: #{se_bottleneck.8} parent=47 // pred_region
        %p759 = scmp.lt.s32.totalorder %s22, 1
        %s760 = scalar_select %p759, %s22, 1
        %p761 = scmp.lt.s32.totalorder %s23, 0
        %s762 = scalar_select %p761, %s23, 0
        %s763 = sadd.s32 %s762, %s760
        %s764 = scalar_lea.vmem %s5, %s763
      $region52: #{se_bottleneck.8} parent=47 // pred_fallthru
        _
    $region48: #{se_bottleneck.8} parent=5 // pred_fallthru
      _
  $region6: #{se_bottleneck.8} parent=0 // loop_footer
    %s15 = sadd.s32 1, %s11
  $region7: #{se_bottleneck.8} parent=0 // loop_footer_branch
    %10 = sbr.rel target = $region3
  $region8: #{se_bottleneck.8} parent=0 // loop_exit
    _

// kernel: se_bottleneck.6
$region0: #{se_bottleneck.6}
  #allocation0 [shape = 'u32[]', space=smem, size = 0x4, offset = 0x4, fixed_abs, tag = 'smem constant byte address 0x4 - core index']
  #allocation1 [shape = 'u32[144,128]{1,0:T(1,128)}', space=vmem, size = 0x12000, scoped, tag = 'internal scratch']
  %s0 = inlined_call_operand.vmem [shape: f32[512,16], index: 0, kind: input, shape index: {}]
  %s1 = inlined_call_operand.vmem [shape: f32[1,16], index: 1, kind: input, shape index: {}]
  %s2 = inlined_call_operand.vmem [shape: f32[1,16], index: 2, kind: input, shape index: {}]
  %s3 = inlined_call_operand.vmem [shape: bf16[16,4], index: 3, kind: input, shape index: {}]
  %s4 = inlined_call_operand.vmem [shape: f32[1,4], index: 4, kind: input, shape index: {}]
  %s5 = inlined_call_operand.vmem [shape: bf16[512,4], index: 5, kind: output, shape index: {0}]
  %s6 = inlined_call_operand.vmem [shape: f32[1,1,4], index: 6, kind: output, shape index: {1}]
  %s7 = inlined_call_operand.vmem [shape: f32[1,1,4], index: 7, kind: output, shape index: {2}]
  %8 = xla_tuple %s5, %s6, %s7
  %s9 = sld [smem:[#allocation0]]
  $region46: #{se_bottleneck.6} parent=0
    _
  %s11 = ssub.s32 1, %s9
  %s12 = scalar_select 0, %s11, %s9
  // Predicated region
  $region2: #{se_bottleneck.6} parent=0 // pred_check
    _
  $region3: #{se_bottleneck.6} parent=0 // pred_check_branch
    %14 = sbr.rel (0) target = $region5
  $region4: #{se_bottleneck.6} parent=0 // pred_region
    _
  $region5: #{se_bottleneck.6} parent=0 // pred_fallthru
    _
  // Predicated region
  $region6: #{se_bottleneck.6} parent=0 // pred_check
    _
  $region7: #{se_bottleneck.6} parent=0 // pred_check_branch
    %16 = sbr.rel (0) target = $region9
  $region8: #{se_bottleneck.6} parent=0 // pred_region
    _
  $region9: #{se_bottleneck.6} parent=0 // pred_fallthru
    _
  // Predicated region
  $region10: #{se_bottleneck.6} parent=0 // pred_check
    _
  $region11: #{se_bottleneck.6} parent=0 // pred_check_branch
    %18 = sbr.rel (0) target = $region13
  $region12: #{se_bottleneck.6} parent=0 // pred_region
    _
  $region13: #{se_bottleneck.6} parent=0 // pred_fallthru
    _
  // Predicated region
  $region14: #{se_bottleneck.6} parent=0 // pred_check
    _
  $region15: #{se_bottleneck.6} parent=0 // pred_check_branch
    %20 = sbr.rel (0) target = $region17
  $region16: #{se_bottleneck.6} parent=0 // pred_region
    _
  $region17: #{se_bottleneck.6} parent=0 // pred_fallthru
    _
  // Predicated region
  $region18: #{se_bottleneck.6} parent=0 // pred_check
    _
  $region19: #{se_bottleneck.6} parent=0 // pred_check_branch
    %22 = sbr.rel (0) target = $region21
  $region20: #{se_bottleneck.6} parent=0 // pred_region
    _
  $region21: #{se_bottleneck.6} parent=0 // pred_fallthru
    _
  %v24 = vld [vmem:[%s0] sm:$0xff]
  %v25 = vld [vmem:[%s0 + $0x8] sm:$0xff]
  %v26 = vld [vmem:[%s0 + $0x10] sm:$0xff]
  %v27 = vld [vmem:[%s0 + $0x18] sm:$0xff]
  %v28 = vld [vmem:[%s0 + $0x20] sm:$0xff]
  %v29 = vld [vmem:[%s0 + $0x28] sm:$0xff]
  %v30 = vld [vmem:[%s0 + $0x30] sm:$0xff]
  %v31 = vld [vmem:[%s0 + $0x38] sm:$0xff]
  %v32 = vld [vmem:[%s0 + $0x40] sm:$0xff]
  %v33 = vld [vmem:[%s0 + $0x48] sm:$0xff]
  %v34 = vld [vmem:[%s0 + $0x50] sm:$0xff]
  %v35 = vld [vmem:[%s0 + $0x58] sm:$0xff]
  %v36 = vld [vmem:[%s0 + $0x60] sm:$0xff]
  %v37 = vld [vmem:[%s0 + $0x68] sm:$0xff]
  %v38 = vld [vmem:[%s0 + $0x70] sm:$0xff]
  %v39 = vld [vmem:[%s0 + $0x78] sm:$0xff]
  %v40 = vld [vmem:[%s0 + $0x80] sm:$0xff]
  %v41 = vld [vmem:[%s0 + $0x88] sm:$0xff]
  %v42 = vld [vmem:[%s0 + $0x90] sm:$0xff]
  %v43 = vld [vmem:[%s0 + $0x98] sm:$0xff]
  %v44 = vld [vmem:[%s0 + $0xa0] sm:$0xff]
  %v45 = vld [vmem:[%s0 + $0xa8] sm:$0xff]
  %v46 = vld [vmem:[%s0 + $0xb0] sm:$0xff]
  %v47 = vld [vmem:[%s0 + $0xb8] sm:$0xff]
  %v48 = vld [vmem:[%s0 + $0xc0] sm:$0xff]
  %v49 = vld [vmem:[%s0 + $0xc8] sm:$0xff]
  %v50 = vld [vmem:[%s0 + $0xd0] sm:$0xff]
  %v51 = vld [vmem:[%s0 + $0xd8] sm:$0xff]
  %v52 = vld [vmem:[%s0 + $0xe0] sm:$0xff]
  %v53 = vld [vmem:[%s0 + $0xe8] sm:$0xff]
  %v54 = vld [vmem:[%s0 + $0xf0] sm:$0xff]
  %v55 = vld [vmem:[%s0 + $0xf8] sm:$0xff]
  %v56 = vld [vmem:[%s0 + $0x100] sm:$0xff]
  %v57 = vld [vmem:[%s0 + $0x108] sm:$0xff]
  %v58 = vld [vmem:[%s0 + $0x110] sm:$0xff]
  %v59 = vld [vmem:[%s0 + $0x118] sm:$0xff]
  %v60 = vld [vmem:[%s0 + $0x120] sm:$0xff]
  %v61 = vld [vmem:[%s0 + $0x128] sm:$0xff]
  %v62 = vld [vmem:[%s0 + $0x130] sm:$0xff]
  %v63 = vld [vmem:[%s0 + $0x138] sm:$0xff]
  %v64 = vld [vmem:[%s0 + $0x140] sm:$0xff]
  %v65 = vld [vmem:[%s0 + $0x148] sm:$0xff]
  %v66 = vld [vmem:[%s0 + $0x150] sm:$0xff]
  %v67 = vld [vmem:[%s0 + $0x158] sm:$0xff]
  %v68 = vld [vmem:[%s0 + $0x160] sm:$0xff]
  %v69 = vld [vmem:[%s0 + $0x168] sm:$0xff]
  %v70 = vld [vmem:[%s0 + $0x170] sm:$0xff]
  %v71 = vld [vmem:[%s0 + $0x178] sm:$0xff]
  %v72 = vld [vmem:[%s0 + $0x180] sm:$0xff]
  %v73 = vld [vmem:[%s0 + $0x188] sm:$0xff]
  %v74 = vld [vmem:[%s0 + $0x190] sm:$0xff]
  %v75 = vld [vmem:[%s0 + $0x198] sm:$0xff]
  %v76 = vld [vmem:[%s0 + $0x1a0] sm:$0xff]
  %v77 = vld [vmem:[%s0 + $0x1a8] sm:$0xff]
  %v78 = vld [vmem:[%s0 + $0x1b0] sm:$0xff]
  %v79 = vld [vmem:[%s0 + $0x1b8] sm:$0xff]
  %v80 = vld [vmem:[%s0 + $0x1c0] sm:$0xff]
  %v81 = vld [vmem:[%s0 + $0x1c8] sm:$0xff]
  %v82 = vld [vmem:[%s0 + $0x1d0] sm:$0xff]
  %v83 = vld [vmem:[%s0 + $0x1d8] sm:$0xff]
  %v84 = vld [vmem:[%s0 + $0x1e0] sm:$0xff]
  %v85 = vld [vmem:[%s0 + $0x1e8] sm:$0xff]
  %v86 = vld [vmem:[%s0 + $0x1f0] sm:$0xff]
  %v87 = vld [vmem:[%s0 + $0x1f8] sm:$0xff]
  %v88 = vld [vmem:[%s1] sm:$0x1]
  %v90 = vlaneseq
  %v91 = vshrl.u32 %v90, 7
  %v92 = vsub.s32 0, %v91
  %v93 = vrot.slane %v88, %v92
  %v95 = vmul.f32 %v24, %v93
  %v96 = vmul.f32 %v25, %v93
  %v97 = vmul.f32 %v26, %v93
  %v98 = vmul.f32 %v27, %v93
  %v99 = vmul.f32 %v28, %v93
  %v100 = vmul.f32 %v29, %v93
  %v101 = vmul.f32 %v30, %v93
  %v102 = vmul.f32 %v31, %v93
  %v103 = vmul.f32 %v32, %v93
  %v104 = vmul.f32 %v33, %v93
  %v105 = vmul.f32 %v34, %v93
  %v106 = vmul.f32 %v35, %v93
  %v107 = vmul.f32 %v36, %v93
  %v108 = vmul.f32 %v37, %v93
  %v109 = vmul.f32 %v38, %v93
  %v110 = vmul.f32 %v39, %v93
  %v111 = vmul.f32 %v40, %v93
  %v112 = vmul.f32 %v41, %v93
  %v113 = vmul.f32 %v42, %v93
  %v114 = vmul.f32 %v43, %v93
  %v115 = vmul.f32 %v44, %v93
  %v116 = vmul.f32 %v45, %v93
  %v117 = vmul.f32 %v46, %v93
  %v118 = vmul.f32 %v47, %v93
  %v119 = vmul.f32 %v48, %v93
  %v120 = vmul.f32 %v49, %v93
  %v121 = vmul.f32 %v50, %v93
  %v122 = vmul.f32 %v51, %v93
  %v123 = vmul.f32 %v52, %v93
  %v124 = vmul.f32 %v53, %v93
  %v125 = vmul.f32 %v54, %v93
  %v126 = vmul.f32 %v55, %v93
  %v127 = vmul.f32 %v56, %v93
  %v128 = vmul.f32 %v57, %v93
  %v129 = vmul.f32 %v58, %v93
  %v130 = vmul.f32 %v59, %v93
  %v131 = vmul.f32 %v60, %v93
  %v132 = vmul.f32 %v61, %v93
  %v133 = vmul.f32 %v62, %v93
  %v134 = vmul.f32 %v63, %v93
  %v135 = vmul.f32 %v64, %v93
  %v136 = vmul.f32 %v65, %v93
  %v137 = vmul.f32 %v66, %v93
  %v138 = vmul.f32 %v67, %v93
  %v139 = vmul.f32 %v68, %v93
  %v140 = vmul.f32 %v69, %v93
  %v141 = vmul.f32 %v70, %v93
  %v142 = vmul.f32 %v71, %v93
  %v143 = vmul.f32 %v72, %v93
  %v144 = vmul.f32 %v73, %v93
  %v145 = vmul.f32 %v74, %v93
  %v146 = vmul.f32 %v75, %v93
  %v147 = vmul.f32 %v76, %v93
  %v148 = vmul.f32 %v77, %v93
  %v149 = vmul.f32 %v78, %v93
  %v150 = vmul.f32 %v79, %v93
  %v151 = vmul.f32 %v80, %v93
  %v152 = vmul.f32 %v81, %v93
  %v153 = vmul.f32 %v82, %v93
  %v154 = vmul.f32 %v83, %v93
  %v155 = vmul.f32 %v84, %v93
  %v156 = vmul.f32 %v85, %v93
  %v157 = vmul.f32 %v86, %v93
  %v158 = vmul.f32 %v87, %v93
  %v159 = vld [vmem:[%s2] sm:$0x1]
  %v161 = vlaneseq
  %v162 = vshrl.u32 %v161, 7
  %v163 = vsub.s32 0, %v162
  %v164 = vrot.slane %v159, %v163
  %v166 = vadd.f32 %v95, %v164
  %v167 = vadd.f32 %v96, %v164
  %v168 = vadd.f32 %v97, %v164
  %v169 = vadd.f32 %v98, %v164
  %v170 = vadd.f32 %v99, %v164
  %v171 = vadd.f32 %v100, %v164
  %v172 = vadd.f32 %v101, %v164
  %v173 = vadd.f32 %v102, %v164
  %v174 = vadd.f32 %v103, %v164
  %v175 = vadd.f32 %v104, %v164
  %v176 = vadd.f32 %v105, %v164
  %v177 = vadd.f32 %v106, %v164
  %v178 = vadd.f32 %v107, %v164
  %v179 = vadd.f32 %v108, %v164
  %v180 = vadd.f32 %v109, %v164
  %v181 = vadd.f32 %v110, %v164
  %v182 = vadd.f32 %v111, %v164
  %v183 = vadd.f32 %v112, %v164
  %v184 = vadd.f32 %v113, %v164
  %v185 = vadd.f32 %v114, %v164
  %v186 = vadd.f32 %v115, %v164
  %v187 = vadd.f32 %v116, %v164
  %v188 = vadd.f32 %v117, %v164
  %v189 = vadd.f32 %v118, %v164
  %v190 = vadd.f32 %v119, %v164
  %v191 = vadd.f32 %v120, %v164
  %v192 = vadd.f32 %v121, %v164
  %v193 = vadd.f32 %v122, %v164
  %v194 = vadd.f32 %v123, %v164
  %v195 = vadd.f32 %v124, %v164
  %v196 = vadd.f32 %v125, %v164
  %v197 = vadd.f32 %v126, %v164
  %v198 = vadd.f32 %v127, %v164
  %v199 = vadd.f32 %v128, %v164
  %v200 = vadd.f32 %v129, %v164
  %v201 = vadd.f32 %v130, %v164
  %v202 = vadd.f32 %v131, %v164
  %v203 = vadd.f32 %v132, %v164
  %v204 = vadd.f32 %v133, %v164
  %v205 = vadd.f32 %v134, %v164
  %v206 = vadd.f32 %v135, %v164
  %v207 = vadd.f32 %v136, %v164
  %v208 = vadd.f32 %v137, %v164
  %v209 = vadd.f32 %v138, %v164
  %v210 = vadd.f32 %v139, %v164
  %v211 = vadd.f32 %v140, %v164
  %v212 = vadd.f32 %v141, %v164
  %v213 = vadd.f32 %v142, %v164
  %v214 = vadd.f32 %v143, %v164
  %v215 = vadd.f32 %v144, %v164
  %v216 = vadd.f32 %v145, %v164
  %v217 = vadd.f32 %v146, %v164
  %v218 = vadd.f32 %v147, %v164
  %v219 = vadd.f32 %v148, %v164
  %v220 = vadd.f32 %v149, %v164
  %v221 = vadd.f32 %v150, %v164
  %v222 = vadd.f32 %v151, %v164
  %v223 = vadd.f32 %v152, %v164
  %v224 = vadd.f32 %v153, %v164
  %v225 = vadd.f32 %v154, %v164
  %v226 = vadd.f32 %v155, %v164
  %v227 = vadd.f32 %v156, %v164
  %v228 = vadd.f32 %v157, %v164
  %v229 = vadd.f32 %v158, %v164
  %v230 = vmax.f32 %v166, 0.0
  %v231 = vmax.f32 %v167, 0.0
  %v232 = vmax.f32 %v168, 0.0
  %v233 = vmax.f32 %v169, 0.0
  %v234 = vmax.f32 %v170, 0.0
  %v235 = vmax.f32 %v171, 0.0
  %v236 = vmax.f32 %v172, 0.0
  %v237 = vmax.f32 %v173, 0.0
  %v238 = vmax.f32 %v174, 0.0
  %v239 = vmax.f32 %v175, 0.0
  %v240 = vmax.f32 %v176, 0.0
  %v241 = vmax.f32 %v177, 0.0
  %v242 = vmax.f32 %v178, 0.0
  %v243 = vmax.f32 %v179, 0.0
  %v244 = vmax.f32 %v180, 0.0
  %v245 = vmax.f32 %v181, 0.0
  %v246 = vmax.f32 %v182, 0.0
  %v247 = vmax.f32 %v183, 0.0
  %v248 = vmax.f32 %v184, 0.0
  %v249 = vmax.f32 %v185, 0.0
  %v250 = vmax.f32 %v186, 0.0
  %v251 = vmax.f32 %v187, 0.0
  %v252 = vmax.f32 %v188, 0.0
  %v253 = vmax.f32 %v189, 0.0
  %v254 = vmax.f32 %v190, 0.0
  %v255 = vmax.f32 %v191, 0.0
  %v256 = vmax.f32 %v192, 0.0
  %v257 = vmax.f32 %v193, 0.0
  %v258 = vmax.f32 %v194, 0.0
  %v259 = vmax.f32 %v195, 0.0
  %v260 = vmax.f32 %v196, 0.0
  %v261 = vmax.f32 %v197, 0.0
  %v262 = vmax.f32 %v198, 0.0
  %v263 = vmax.f32 %v199, 0.0
  %v264 = vmax.f32 %v200, 0.0
  %v265 = vmax.f32 %v201, 0.0
  %v266 = vmax.f32 %v202, 0.0
  %v267 = vmax.f32 %v203, 0.0
  %v268 = vmax.f32 %v204, 0.0
  %v269 = vmax.f32 %v205, 0.0
  %v270 = vmax.f32 %v206, 0.0
  %v271 = vmax.f32 %v207, 0.0
  %v272 = vmax.f32 %v208, 0.0
  %v273 = vmax.f32 %v209, 0.0
  %v274 = vmax.f32 %v210, 0.0
  %v275 = vmax.f32 %v211, 0.0
  %v276 = vmax.f32 %v212, 0.0
  %v277 = vmax.f32 %v213, 0.0
  %v278 = vmax.f32 %v214, 0.0
  %v279 = vmax.f32 %v215, 0.0
  %v280 = vmax.f32 %v216, 0.0
  %v281 = vmax.f32 %v217, 0.0
  %v282 = vmax.f32 %v218, 0.0
  %v283 = vmax.f32 %v219, 0.0
  %v284 = vmax.f32 %v220, 0.0
  %v285 = vmax.f32 %v221, 0.0
  %v286 = vmax.f32 %v222, 0.0
  %v287 = vmax.f32 %v223, 0.0
  %v288 = vmax.f32 %v224, 0.0
  %v289 = vmax.f32 %v225, 0.0
  %v290 = vmax.f32 %v226, 0.0
  %v291 = vmax.f32 %v227, 0.0
  %v292 = vmax.f32 %v228, 0.0
  %v293 = vmax.f32 %v229, 0.0
  %v294 = vpack.c.bf16 %v231, %v230
  %v295 = vpack.c.bf16 %v233, %v232
  %v296 = vpack.c.bf16 %v235, %v234
  %v297 = vpack.c.bf16 %v237, %v236
  %v298 = vpack.c.bf16 %v239, %v238
  %v299 = vpack.c.bf16 %v241, %v240
  %v300 = vpack.c.bf16 %v243, %v242
  %v301 = vpack.c.bf16 %v245, %v244
  %v302 = vpack.c.bf16 %v247, %v246
  %v303 = vpack.c.bf16 %v249, %v248
  %v304 = vpack.c.bf16 %v251, %v250
  %v305 = vpack.c.bf16 %v253, %v252
  %v306 = vpack.c.bf16 %v255, %v254
  %v307 = vpack.c.bf16 %v257, %v256
  %v308 = vpack.c.bf16 %v259, %v258
  %v309 = vpack.c.bf16 %v261, %v260
  %v310 = vpack.c.bf16 %v263, %v262
  %v311 = vpack.c.bf16 %v265, %v264
  %v312 = vpack.c.bf16 %v267, %v266
  %v313 = vpack.c.bf16 %v269, %v268
  %v314 = vpack.c.bf16 %v271, %v270
  %v315 = vpack.c.bf16 %v273, %v272
  %v316 = vpack.c.bf16 %v275, %v274
  %v317 = vpack.c.bf16 %v277, %v276
  %v318 = vpack.c.bf16 %v279, %v278
  %v319 = vpack.c.bf16 %v281, %v280
  %v320 = vpack.c.bf16 %v283, %v282
  %v321 = vpack.c.bf16 %v285, %v284
  %v322 = vpack.c.bf16 %v287, %v286
  %v323 = vpack.c.bf16 %v289, %v288
  %v324 = vpack.c.bf16 %v291, %v290
  %v325 = vpack.c.bf16 %v293, %v292
  %v326 = vld [vmem:[%s3] sm:$0xf]
  %v327 = vld [vmem:[%s3 + $0x4] sm:$0xf]
  %v328 = vld [vmem:[%s4] sm:$0x1]
  %v330 = vlaneseq
  %v331 = vshrl.u32 %v330, 7
  %v332 = vsub.s32 0, %v331
  %v333 = vrot.slane %v328, %v332
  %v337 = vunpack.c.l.b16 %v326
  %v338 = vunpack.c.l.b16 %v327
  %v339 = vpack.c.b16 %v338, %v337
  %vm341 = vcmask 130048
  %v343 = vsel %vm341, %v294, 0
  %v346 = vsel %vm341, %v295, 0
  %v349 = vsel %vm341, %v296, 0
  %v352 = vsel %vm341, %v297, 0
  %v355 = vsel %vm341, %v298, 0
  %v358 = vsel %vm341, %v299, 0
  %v361 = vsel %vm341, %v300, 0
  %v364 = vsel %vm341, %v301, 0
  %v367 = vsel %vm341, %v302, 0
  %v370 = vsel %vm341, %v303, 0
  %v373 = vsel %vm341, %v304, 0
  %v376 = vsel %vm341, %v305, 0
  %v379 = vsel %vm341, %v306, 0
  %v382 = vsel %vm341, %v307, 0
  %v385 = vsel %vm341, %v308, 0
  %v388 = vsel %vm341, %v309, 0
  %v391 = vsel %vm341, %v310, 0
  %v394 = vsel %vm341, %v311, 0
  %v397 = vsel %vm341, %v312, 0
  %v400 = vsel %vm341, %v313, 0
  %v403 = vsel %vm341, %v314, 0
  %v406 = vsel %vm341, %v315, 0
  %v409 = vsel %vm341, %v316, 0
  %v412 = vsel %vm341, %v317, 0
  %v415 = vsel %vm341, %v318, 0
  %v418 = vsel %vm341, %v319, 0
  %v421 = vsel %vm341, %v320, 0
  %v424 = vsel %vm341, %v321, 0
  %v427 = vsel %vm341, %v322, 0
  %v430 = vsel %vm341, %v323, 0
  %v433 = vsel %vm341, %v324, 0
  %v436 = vsel %vm341, %v325, 0
  %438 = vmatprep.subr.bf16.mxu0 0
  %439 = vmatpush1.bf16.msra.mxu0 0
  %440 = vmatprep.subr.bf16.mxu0 0
  %441 = vmatpush1.bf16.msra.mxu0 0
  %442 = vmatprep.subr.bf16.mxu0 0
  %443 = vmatpush1.bf16.msra.mxu0 0
  %444 = vmatprep.subr.bf16.mxu0 0
  %445 = vmatpush1.bf16.msra.mxu0 0
  %446 = vmatprep.subr.bf16.mxu0 0
  %447 = vmatpush1.bf16.msra.mxu0 0
  %448 = vmatprep.subr.bf16.mxu0 0
  %449 = vmatpush1.bf16.msra.mxu0 0
  %450 = vmatprep.subr.bf16.mxu0 0
  %451 = vmatpush1.bf16.msra.mxu0 0
  %452 = vmatprep.subr.bf16.mxu0 0
  %453 = vmatpush1.bf16.msra.mxu0 %v339
  %454 = vmatprep.subr.bf16.mxu0 0
  %455 = vmatpush2.bf16.msra.mxu0 0
  %456 = vmatprep.subr.bf16.mxu0 0
  %457 = vmatpush2.bf16.msra.mxu0 0
  %458 = vmatprep.subr.bf16.mxu0 0
  %459 = vmatpush2.bf16.msra.mxu0 0
  %460 = vmatprep.subr.bf16.mxu0 0
  %461 = vmatpush2.bf16.msra.mxu0 0
  %462 = vmatprep.subr.bf16.mxu0 0
  %463 = vmatpush2.bf16.msra.mxu0 0
  %464 = vmatprep.subr.bf16.mxu0 0
  %465 = vmatpush2.bf16.msra.mxu0 0
  %466 = vmatprep.subr.bf16.mxu0 0
  %467 = vmatpush2.bf16.msra.mxu0 0
  %468 = vmatprep.subr.bf16.mxu0 0
  %469 = vmatpush2.bf16.msra.mxu0 0
  %470 = vmatprep.mubr.bf16.mxu0 0
  %471 = vmatmul.mubr.bf16.gmra.mxu0 %v343
  %v472 = vpop.f32.mrf.mxu0
  %v473 = vadd.f32 %v333, %v472
  %v474 = vpop.f32.mrf.mxu0
  %v475 = vpop.f32.mrf.mxu0
  %v476 = vadd.f32 %v333, %v475
  %v477 = vpop.f32.mrf.mxu0
  %478 = vmatprep.mubr.bf16.mxu0 0
  %479 = vmatmul.mubr.bf16.gmra.mxu0 %v346
  %v480 = vpop.f32.mrf.mxu0
  %v481 = vadd.f32 %v333, %v480
  %v482 = vpop.f32.mrf.mxu0
  %v483 = vpop.f32.mrf.mxu0
  %v484 = vadd.f32 %v333, %v483
  %v485 = vpop.f32.mrf.mxu0
  %486 = vmatprep.mubr.bf16.mxu0 0
  %487 = vmatmul.mubr.bf16.gmra.mxu0 %v349
  %v488 = vpop.f32.mrf.mxu0
  %v489 = vadd.f32 %v333, %v488
  %v490 = vpop.f32.mrf.mxu0
  %v491 = vpop.f32.mrf.mxu0
  %v492 = vadd.f32 %v333, %v491
  %v493 = vpop.f32.mrf.mxu0
  %494 = vmatprep.mubr.bf16.mxu0 0
  %495 = vmatmul.mubr.bf16.gmra.mxu0 %v352
  %v496 = vpop.f32.mrf.mxu0
  %v497 = vadd.f32 %v333, %v496
  %v498 = vpop.f32.mrf.mxu0
  %v499 = vpop.f32.mrf.mxu0
  %v500 = vadd.f32 %v333, %v499
  %v501 = vpop.f32.mrf.mxu0
  %502 = vmatprep.mubr.bf16.mxu0 0
  %503 = vmatmul.mubr.bf16.gmra.mxu0 %v355
  %v504 = vpop.f32.mrf.mxu0
  %v505 = vadd.f32 %v333, %v504
  %v506 = vpop.f32.mrf.mxu0
  %v507 = vpop.f32.mrf.mxu0
  %v508 = vadd.f32 %v333, %v507
  %v509 = vpop.f32.mrf.mxu0
  %510 = vmatprep.mubr.bf16.mxu0 0
  %511 = vmatmul.mubr.bf16.gmra.mxu0 %v358
  %v512 = vpop.f32.mrf.mxu0
  %v513 = vadd.f32 %v333, %v512
  %v514 = vpop.f32.mrf.mxu0
  %v515 = vpop.f32.mrf.mxu0
  %v516 = vadd.f32 %v333, %v515
  %v517 = vpop.f32.mrf.mxu0
  %518 = vmatprep.mubr.bf16.mxu0 0
  %519 = vmatmul.mubr.bf16.gmra.mxu0 %v361
  %v520 = vpop.f32.mrf.mxu0
  %v521 = vadd.f32 %v333, %v520
  %v522 = vpop.f32.mrf.mxu0
  %v523 = vpop.f32.mrf.mxu0
  %v524 = vadd.f32 %v333, %v523
  %v525 = vpop.f32.mrf.mxu0
  %526 = vmatprep.mubr.bf16.mxu0 0
  %527 = vmatmul.mubr.bf16.gmra.mxu0 %v364
  %v528 = vpop.f32.mrf.mxu0
  %v529 = vadd.f32 %v333, %v528
  %v530 = vpop.f32.mrf.mxu0
  %v531 = vpop.f32.mrf.mxu0
  %v532 = vadd.f32 %v333, %v531
  %v533 = vpop.f32.mrf.mxu0
  %534 = vmatprep.mubr.bf16.mxu0 0
  %535 = vmatmul.mubr.bf16.gmra.mxu0 %v367
  %v536 = vpop.f32.mrf.mxu0
  %v537 = vadd.f32 %v333, %v536
  %v538 = vpop.f32.mrf.mxu0
  %v539 = vpop.f32.mrf.mxu0
  %v540 = vadd.f32 %v333, %v539
  %v541 = vpop.f32.mrf.mxu0
  %542 = vmatprep.mubr.bf16.mxu0 0
  %543 = vmatmul.mubr.bf16.gmra.mxu0 %v370
  %v544 = vpop.f32.mrf.mxu0
  %v545 = vadd.f32 %v333, %v544
  %v546 = vpop.f32.mrf.mxu0
  %v547 = vpop.f32.mrf.mxu0
  %v548 = vadd.f32 %v333, %v547
  %v549 = vpop.f32.mrf.mxu0
  %550 = vmatprep.mubr.bf16.mxu0 0
  %551 = vmatmul.mubr.bf16.gmra.mxu0 %v373
  %v552 = vpop.f32.mrf.mxu0
  %v553 = vadd.f32 %v333, %v552
  %v554 = vpop.f32.mrf.mxu0
  %v555 = vpop.f32.mrf.mxu0
  %v556 = vadd.f32 %v333, %v555
  %v557 = vpop.f32.mrf.mxu0
  %558 = vmatprep.mubr.bf16.mxu0 0
  %559 = vmatmul.mubr.bf16.gmra.mxu0 %v376
  %v560 = vpop.f32.mrf.mxu0
  %v561 = vadd.f32 %v333, %v560
  %v562 = vpop.f32.mrf.mxu0
  %v563 = vpop.f32.mrf.mxu0
  %v564 = vadd.f32 %v333, %v563
  %v565 = vpop.f32.mrf.mxu0
  %566 = vmatprep.mubr.bf16.mxu0 0
  %567 = vmatmul.mubr.bf16.gmra.mxu0 %v379
  %v568 = vpop.f32.mrf.mxu0
  %v569 = vadd.f32 %v333, %v568
  %v570 = vpop.f32.mrf.mxu0
  %v571 = vpop.f32.mrf.mxu0
  %v572 = vadd.f32 %v333, %v571
  %v573 = vpop.f32.mrf.mxu0
  %574 = vmatprep.mubr.bf16.mxu0 0
  %575 = vmatmul.mubr.bf16.gmra.mxu0 %v382
  %v576 = vpop.f32.mrf.mxu0
  %v577 = vadd.f32 %v333, %v576
  %v578 = vpop.f32.mrf.mxu0
  %v579 = vpop.f32.mrf.mxu0
  %v580 = vadd.f32 %v333, %v579
  %v581 = vpop.f32.mrf.mxu0
  %582 = vmatprep.mubr.bf16.mxu0 0
  %583 = vmatmul.mubr.bf16.gmra.mxu0 %v385
  %v584 = vpop.f32.mrf.mxu0
  %v585 = vadd.f32 %v333, %v584
  %v586 = vpop.f32.mrf.mxu0
  %v587 = vpop.f32.mrf.mxu0
  %v588 = vadd.f32 %v333, %v587
  %v589 = vpop.f32.mrf.mxu0
  %590 = vmatprep.mubr.bf16.mxu0 0
  %591 = vmatmul.mubr.bf16.gmra.mxu0 %v388
  %v592 = vpop.f32.mrf.mxu0
  %v593 = vadd.f32 %v333, %v592
  %v594 = vpop.f32.mrf.mxu0
  %v595 = vpop.f32.mrf.mxu0
  %v596 = vadd.f32 %v333, %v595
  %v597 = vpop.f32.mrf.mxu0
  %598 = vmatprep.mubr.bf16.mxu0 0
  %599 = vmatmul.mubr.bf16.gmra.mxu0 %v391
  %v600 = vpop.f32.mrf.mxu0
  %v601 = vadd.f32 %v333, %v600
  %v602 = vpop.f32.mrf.mxu0
  %v603 = vpop.f32.mrf.mxu0
  %v604 = vadd.f32 %v333, %v603
  %v605 = vpop.f32.mrf.mxu0
  %606 = vmatprep.mubr.bf16.mxu0 0
  %607 = vmatmul.mubr.bf16.gmra.mxu0 %v394
  %v608 = vpop.f32.mrf.mxu0
  %v609 = vadd.f32 %v333, %v608
  %v610 = vpop.f32.mrf.mxu0
  %v611 = vpop.f32.mrf.mxu0
  %v612 = vadd.f32 %v333, %v611
  %v613 = vpop.f32.mrf.mxu0
  %614 = vmatprep.mubr.bf16.mxu0 0
  %615 = vmatmul.mubr.bf16.gmra.mxu0 %v397
  %v616 = vpop.f32.mrf.mxu0
  %v617 = vadd.f32 %v333, %v616
  %v618 = vpop.f32.mrf.mxu0
  %v619 = vpop.f32.mrf.mxu0
  %v620 = vadd.f32 %v333, %v619
  %v621 = vpop.f32.mrf.mxu0
  %622 = vmatprep.mubr.bf16.mxu0 0
  %623 = vmatmul.mubr.bf16.gmra.mxu0 %v400
  %v624 = vpop.f32.mrf.mxu0
  %v625 = vadd.f32 %v333, %v624
  %v626 = vpop.f32.mrf.mxu0
  %v627 = vpop.f32.mrf.mxu0
  %v628 = vadd.f32 %v333, %v627
  %v629 = vpop.f32.mrf.mxu0
  %630 = vmatprep.mubr.bf16.mxu0 0
  %631 = vmatmul.mubr.bf16.gmra.mxu0 %v403
  %v632 = vpop.f32.mrf.mxu0
  %v633 = vadd.f32 %v333, %v632
  %v634 = vpop.f32.mrf.mxu0
  %v635 = vpop.f32.mrf.mxu0
  %v636 = vadd.f32 %v333, %v635
  %v637 = vpop.f32.mrf.mxu0
  %638 = vmatprep.mubr.bf16.mxu0 0
  %639 = vmatmul.mubr.bf16.gmra.mxu0 %v406
  %v640 = vpop.f32.mrf.mxu0
  %v641 = vadd.f32 %v333, %v640
  %v642 = vpop.f32.mrf.mxu0
  %v643 = vpop.f32.mrf.mxu0
  %v644 = vadd.f32 %v333, %v643
  %v645 = vpop.f32.mrf.mxu0
  %646 = vmatprep.mubr.bf16.mxu0 0
  %647 = vmatmul.mubr.bf16.gmra.mxu0 %v409
  %v648 = vpop.f32.mrf.mxu0
  %v649 = vadd.f32 %v333, %v648
  %v650 = vpop.f32.mrf.mxu0
  %v651 = vpop.f32.mrf.mxu0
  %v652 = vadd.f32 %v333, %v651
  %v653 = vpop.f32.mrf.mxu0
  %654 = vmatprep.mubr.bf16.mxu0 0
  %655 = vmatmul.mubr.bf16.gmra.mxu0 %v412
  %v656 = vpop.f32.mrf.mxu0
  %v657 = vadd.f32 %v333, %v656
  %v658 = vpop.f32.mrf.mxu0
  %v659 = vpop.f32.mrf.mxu0
  %v660 = vadd.f32 %v333, %v659
  %v661 = vpop.f32.mrf.mxu0
  %662 = vmatprep.mubr.bf16.mxu0 0
  %663 = vmatmul.mubr.bf16.gmra.mxu0 %v415
  %v664 = vpop.f32.mrf.mxu0
  %v665 = vadd.f32 %v333, %v664
  %v666 = vpop.f32.mrf.mxu0
  %v667 = vpop.f32.mrf.mxu0
  %v668 = vadd.f32 %v333, %v667
  %v669 = vpop.f32.mrf.mxu0
  %670 = vmatprep.mubr.bf16.mxu0 0
  %671 = vmatmul.mubr.bf16.gmra.mxu0 %v418
  %v672 = vpop.f32.mrf.mxu0
  %v673 = vadd.f32 %v333, %v672
  %v674 = vpop.f32.mrf.mxu0
  %v675 = vpop.f32.mrf.mxu0
  %v676 = vadd.f32 %v333, %v675
  %v677 = vpop.f32.mrf.mxu0
  %678 = vmatprep.mubr.bf16.mxu0 0
  %679 = vmatmul.mubr.bf16.gmra.mxu0 %v421
  %v680 = vpop.f32.mrf.mxu0
  %v681 = vadd.f32 %v333, %v680
  %v682 = vpop.f32.mrf.mxu0
  %v683 = vpop.f32.mrf.mxu0
  %v684 = vadd.f32 %v333, %v683
  %v685 = vpop.f32.mrf.mxu0
  %686 = vmatprep.mubr.bf16.mxu0 0
  %687 = vmatmul.mubr.bf16.gmra.mxu0 %v424
  %v688 = vpop.f32.mrf.mxu0
  %v689 = vadd.f32 %v333, %v688
  %v690 = vpop.f32.mrf.mxu0
  %v691 = vpop.f32.mrf.mxu0
  %v692 = vadd.f32 %v333, %v691
  %v693 = vpop.f32.mrf.mxu0
  %694 = vmatprep.mubr.bf16.mxu0 0
  %695 = vmatmul.mubr.bf16.gmra.mxu0 %v427
  %v696 = vpop.f32.mrf.mxu0
  %v697 = vadd.f32 %v333, %v696
  %v698 = vpop.f32.mrf.mxu0
  %v699 = vpop.f32.mrf.mxu0
  %v700 = vadd.f32 %v333, %v699
  %v701 = vpop.f32.mrf.mxu0
  %702 = vmatprep.mubr.bf16.mxu0 0
  %703 = vmatmul.mubr.bf16.gmra.mxu0 %v430
  %v704 = vpop.f32.mrf.mxu0
  %v705 = vadd.f32 %v333, %v704
  %v706 = vpop.f32.mrf.mxu0
  %v707 = vpop.f32.mrf.mxu0
  %v708 = vadd.f32 %v333, %v707
  %v709 = vpop.f32.mrf.mxu0
  %710 = vmatprep.mubr.bf16.mxu0 0
  %711 = vmatmul.mubr.bf16.gmra.mxu0 %v433
  %v712 = vpop.f32.mrf.mxu0
  %v713 = vadd.f32 %v333, %v712
  %v714 = vpop.f32.mrf.mxu0
  %v715 = vpop.f32.mrf.mxu0
  %v716 = vadd.f32 %v333, %v715
  %v717 = vpop.f32.mrf.mxu0
  %718 = vmatprep.mubr.bf16.mxu0 0
  %719 = vmatmul.mubr.bf16.gmra.mxu0 %v436
  %v720 = vpop.f32.mrf.mxu0
  %v721 = vadd.f32 %v333, %v720
  %v722 = vpop.f32.mrf.mxu0
  %v723 = vpop.f32.mrf.mxu0
  %v724 = vadd.f32 %v333, %v723
  %v725 = vpop.f32.mrf.mxu0
  %726 = vdwg.mxu0
  %v727 = vpack.c.bf16 %v476, %v473
  %v728 = vpack.c.bf16 %v484, %v481
  %v729 = vpack.c.bf16 %v492, %v489
  %v730 = vpack.c.bf16 %v500, %v497
  %v731 = vpack.c.bf16 %v508, %v505
  %v732 = vpack.c.bf16 %v516, %v513
  %v733 = vpack.c.bf16 %v524, %v521
  %v734 = vpack.c.bf16 %v532, %v529
  %v735 = vpack.c.bf16 %v540, %v537
  %v736 = vpack.c.bf16 %v548, %v545
  %v737 = vpack.c.bf16 %v556, %v553
  %v738 = vpack.c.bf16 %v564, %v561
  %v739 = vpack.c.bf16 %v572, %v569
  %v740 = vpack.c.bf16 %v580, %v577
  %v741 = vpack.c.bf16 %v588, %v585
  %v742 = vpack.c.bf16 %v596, %v593
  %v743 = vpack.c.bf16 %v604, %v601
  %v744 = vpack.c.bf16 %v612, %v609
  %v745 = vpack.c.bf16 %v620, %v617
  %v746 = vpack.c.bf16 %v628, %v625
  %v747 = vpack.c.bf16 %v636, %v633
  %v748 = vpack.c.bf16 %v644, %v641
  %v749 = vpack.c.bf16 %v652, %v649
  %v750 = vpack.c.bf16 %v660, %v657
  %v751 = vpack.c.bf16 %v668, %v665
  %v752 = vpack.c.bf16 %v676, %v673
  %v753 = vpack.c.bf16 %v684, %v681
  %v754 = vpack.c.bf16 %v692, %v689
  %v755 = vpack.c.bf16 %v700, %v697
  %v756 = vpack.c.bf16 %v708, %v705
  %v757 = vpack.c.bf16 %v716, %v713
  %v758 = vpack.c.bf16 %v724, %v721
  %v791 = vunpack.c.l.b16 %v727
  %v792 = vunpack.c.h.b16 %v727
  %v793 = vunpack.c.l.b16 %v728
  %v794 = vunpack.c.h.b16 %v728
  %v795 = vunpack.c.l.b16 %v729
  %v796 = vunpack.c.h.b16 %v729
  %v797 = vunpack.c.l.b16 %v730
  %v798 = vunpack.c.h.b16 %v730
  %v799 = vunpack.c.l.b16 %v731
  %v800 = vunpack.c.h.b16 %v731
  %v801 = vunpack.c.l.b16 %v732
  %v802 = vunpack.c.h.b16 %v732
  %v803 = vunpack.c.l.b16 %v733
  %v804 = vunpack.c.h.b16 %v733
  %v805 = vunpack.c.l.b16 %v734
  %v806 = vunpack.c.h.b16 %v734
  %v807 = vunpack.c.l.b16 %v735
  %v808 = vunpack.c.h.b16 %v735
  %v809 = vunpack.c.l.b16 %v736
  %v810 = vunpack.c.h.b16 %v736
  %v811 = vunpack.c.l.b16 %v737
  %v812 = vunpack.c.h.b16 %v737
  %v813 = vunpack.c.l.b16 %v738
  %v814 = vunpack.c.h.b16 %v738
  %v815 = vunpack.c.l.b16 %v739
  %v816 = vunpack.c.h.b16 %v739
  %v817 = vunpack.c.l.b16 %v740
  %v818 = vunpack.c.h.b16 %v740
  %v819 = vunpack.c.l.b16 %v741
  %v820 = vunpack.c.h.b16 %v741
  %v821 = vunpack.c.l.b16 %v742
  %v822 = vunpack.c.h.b16 %v742
  %v823 = vunpack.c.l.b16 %v743
  %v824 = vunpack.c.h.b16 %v743
  %v825 = vunpack.c.l.b16 %v744
  %v826 = vunpack.c.h.b16 %v744
  %v827 = vunpack.c.l.b16 %v745
  %v828 = vunpack.c.h.b16 %v745
  %v829 = vunpack.c.l.b16 %v746
  %v830 = vunpack.c.h.b16 %v746
  %v831 = vunpack.c.l.b16 %v747
  %v832 = vunpack.c.h.b16 %v747
  %v833 = vunpack.c.l.b16 %v748
  %v834 = vunpack.c.h.b16 %v748
  %v835 = vunpack.c.l.b16 %v749
  %v836 = vunpack.c.h.b16 %v749
  %v837 = vunpack.c.l.b16 %v750
  %v838 = vunpack.c.h.b16 %v750
  %v839 = vunpack.c.l.b16 %v751
  %v840 = vunpack.c.h.b16 %v751
  %v841 = vunpack.c.l.b16 %v752
  %v842 = vunpack.c.h.b16 %v752
  %v843 = vunpack.c.l.b16 %v753
  %v844 = vunpack.c.h.b16 %v753
  %v845 = vunpack.c.l.b16 %v754
  %v846 = vunpack.c.h.b16 %v754
  %v847 = vunpack.c.l.b16 %v755
  %v848 = vunpack.c.h.b16 %v755
  %v849 = vunpack.c.l.b16 %v756
  %v850 = vunpack.c.h.b16 %v756
  %v851 = vunpack.c.l.b16 %v757
  %v852 = vunpack.c.h.b16 %v757
  %v853 = vunpack.c.l.b16 %v758
  %v854 = vunpack.c.h.b16 %v758
  %v855 = vpack.c.b16 %v791, %v791
  %v856 = vpack.c.b16 %v792, %v792
  %v857 = vpack.c.b16 %v793, %v793
  %v858 = vpack.c.b16 %v794, %v794
  %v859 = vpack.c.b16 %v795, %v795
  %v860 = vpack.c.b16 %v796, %v796
  %v861 = vpack.c.b16 %v797, %v797
  %v862 = vpack.c.b16 %v798, %v798
  %v863 = vpack.c.b16 %v799, %v799
  %v864 = vpack.c.b16 %v800, %v800
  %v865 = vpack.c.b16 %v801, %v801
  %v866 = vpack.c.b16 %v802, %v802
  %v867 = vpack.c.b16 %v803, %v803
  %v868 = vpack.c.b16 %v804, %v804
  %v869 = vpack.c.b16 %v805, %v805
  %v870 = vpack.c.b16 %v806, %v806
  %v871 = vpack.c.b16 %v807, %v807
  %v872 = vpack.c.b16 %v808, %v808
  %v873 = vpack.c.b16 %v809, %v809
  %v874 = vpack.c.b16 %v810, %v810
  %v875 = vpack.c.b16 %v811, %v811
  %v876 = vpack.c.b16 %v812, %v812
  %v877 = vpack.c.b16 %v813, %v813
  %v878 = vpack.c.b16 %v814, %v814
  %v879 = vpack.c.b16 %v815, %v815
  %v880 = vpack.c.b16 %v816, %v816
  %v881 = vpack.c.b16 %v817, %v817
  %v882 = vpack.c.b16 %v818, %v818
  %v883 = vpack.c.b16 %v819, %v819
  %v884 = vpack.c.b16 %v820, %v820
  %v885 = vpack.c.b16 %v821, %v821
  %v886 = vpack.c.b16 %v822, %v822
  %v887 = vpack.c.b16 %v823, %v823
  %v888 = vpack.c.b16 %v824, %v824
  %v889 = vpack.c.b16 %v825, %v825
  %v890 = vpack.c.b16 %v826, %v826
  %v891 = vpack.c.b16 %v827, %v827
  %v892 = vpack.c.b16 %v828, %v828
  %v893 = vpack.c.b16 %v829, %v829
  %v894 = vpack.c.b16 %v830, %v830
  %v895 = vpack.c.b16 %v831, %v831
  %v896 = vpack.c.b16 %v832, %v832
  %v897 = vpack.c.b16 %v833, %v833
  %v898 = vpack.c.b16 %v834, %v834
  %v899 = vpack.c.b16 %v835, %v835
  %v900 = vpack.c.b16 %v836, %v836
  %v901 = vpack.c.b16 %v837, %v837
  %v902 = vpack.c.b16 %v838, %v838
  %v903 = vpack.c.b16 %v839, %v839
  %v904 = vpack.c.b16 %v840, %v840
  %v905 = vpack.c.b16 %v841, %v841
  %v906 = vpack.c.b16 %v842, %v842
  %v907 = vpack.c.b16 %v843, %v843
  %v908 = vpack.c.b16 %v844, %v844
  %v909 = vpack.c.b16 %v845, %v845
  %v910 = vpack.c.b16 %v846, %v846
  %v911 = vpack.c.b16 %v847, %v847
  %v912 = vpack.c.b16 %v848, %v848
  %v913 = vpack.c.b16 %v849, %v849
  %v914 = vpack.c.b16 %v850, %v850
  %v915 = vpack.c.b16 %v851, %v851
  %v916 = vpack.c.b16 %v852, %v852
  %v917 = vpack.c.b16 %v853, %v853
  %v918 = vpack.c.b16 %v854, %v854
  %vm983 = vcmask 27648
  %984 = vst.msk [vmem:[%s5] sm:$0xf] %vm983, %v855
  %985 = vst.msk [vmem:[%s5 + $0x4] sm:$0xf] %vm983, %v856
  %986 = vst.msk [vmem:[%s5 + $0x8] sm:$0xf] %vm983, %v857
  %987 = vst.msk [vmem:[%s5 + $0xc] sm:$0xf] %vm983, %v858
  %988 = vst.msk [vmem:[%s5 + $0x10] sm:$0xf] %vm983, %v859
  %989 = vst.msk [vmem:[%s5 + $0x14] sm:$0xf] %vm983, %v860
  %990 = vst.msk [vmem:[%s5 + $0x18] sm:$0xf] %vm983, %v861
  %991 = vst.msk [vmem:[%s5 + $0x1c] sm:$0xf] %vm983, %v862
  %992 = vst.msk [vmem:[%s5 + $0x20] sm:$0xf] %vm983, %v863
  %993 = vst.msk [vmem:[%s5 + $0x24] sm:$0xf] %vm983, %v864
  %994 = vst.msk [vmem:[%s5 + $0x28] sm:$0xf] %vm983, %v865
  %995 = vst.msk [vmem:[%s5 + $0x2c] sm:$0xf] %vm983, %v866
  %996 = vst.msk [vmem:[%s5 + $0x30] sm:$0xf] %vm983, %v867
  %997 = vst.msk [vmem:[%s5 + $0x34] sm:$0xf] %vm983, %v868
  %998 = vst.msk [vmem:[%s5 + $0x38] sm:$0xf] %vm983, %v869
  %999 = vst.msk [vmem:[%s5 + $0x3c] sm:$0xf] %vm983, %v870
  %1000 = vst.msk [vmem:[%s5 + $0x40] sm:$0xf] %vm983, %v871
  %1001 = vst.msk [vmem:[%s5 + $0x44] sm:$0xf] %vm983, %v872
  %1002 = vst.msk [vmem:[%s5 + $0x48] sm:$0xf] %vm983, %v873
  %1003 = vst.msk [vmem:[%s5 + $0x4c] sm:$0xf] %vm983, %v874
  %1004 = vst.msk [vmem:[%s5 + $0x50] sm:$0xf] %vm983, %v875
  %1005 = vst.msk [vmem:[%s5 + $0x54] sm:$0xf] %vm983, %v876
  %1006 = vst.msk [vmem:[%s5 + $0x58] sm:$0xf] %vm983, %v877
  %1007 = vst.msk [vmem:[%s5 + $0x5c] sm:$0xf] %vm983, %v878
  %1008 = vst.msk [vmem:[%s5 + $0x60] sm:$0xf] %vm983, %v879
  %1009 = vst.msk [vmem:[%s5 + $0x64] sm:$0xf] %vm983, %v880
  %1010 = vst.msk [vmem:[%s5 + $0x68] sm:$0xf] %vm983, %v881
  %1011 = vst.msk [vmem:[%s5 + $0x6c] sm:$0xf] %vm983, %v882
  %1012 = vst.msk [vmem:[%s5 + $0x70] sm:$0xf] %vm983, %v883
  %1013 = vst.msk [vmem:[%s5 + $0x74] sm:$0xf] %vm983, %v884
  %1014 = vst.msk [vmem:[%s5 + $0x78] sm:$0xf] %vm983, %v885
  %1015 = vst.msk [vmem:[%s5 + $0x7c] sm:$0xf] %vm983, %v886
  %1016 = vst.msk [vmem:[%s5 + $0x80] sm:$0xf] %vm983, %v887
  %1017 = vst.msk [vmem:[%s5 + $0x84] sm:$0xf] %vm983, %v888
  %1018 = vst.msk [vmem:[%s5 + $0x88] sm:$0xf] %vm983, %v889
  %1019 = vst.msk [vmem:[%s5 + $0x8c] sm:$0xf] %vm983, %v890
  %1020 = vst.msk [vmem:[%s5 + $0x90] sm:$0xf] %vm983, %v891
  %1021 = vst.msk [vmem:[%s5 + $0x94] sm:$0xf] %vm983, %v892
  %1022 = vst.msk [vmem:[%s5 + $0x98] sm:$0xf] %vm983, %v893
  %1023 = vst.msk [vmem:[%s5 + $0x9c] sm:$0xf] %vm983, %v894
  %1024 = vst.msk [vmem:[%s5 + $0xa0] sm:$0xf] %vm983, %v895
  %1025 = vst.msk [vmem:[%s5 + $0xa4] sm:$0xf] %vm983, %v896
  %1026 = vst.msk [vmem:[%s5 + $0xa8] sm:$0xf] %vm983, %v897
  %1027 = vst.msk [vmem:[%s5 + $0xac] sm:$0xf] %vm983, %v898
  %1028 = vst.msk [vmem:[%s5 + $0xb0] sm:$0xf] %vm983, %v899
  %1029 = vst.msk [vmem:[%s5 + $0xb4] sm:$0xf] %vm983, %v900
  %1030 = vst.msk [vmem:[%s5 + $0xb8] sm:$0xf] %vm983, %v901
  %1031 = vst.msk [vmem:[%s5 + $0xbc] sm:$0xf] %vm983, %v902
  %1032 = vst.msk [vmem:[%s5 + $0xc0] sm:$0xf] %vm983, %v903
  %1033 = vst.msk [vmem:[%s5 + $0xc4] sm:$0xf] %vm983, %v904
  %1034 = vst.msk [vmem:[%s5 + $0xc8] sm:$0xf] %vm983, %v905
  %1035 = vst.msk [vmem:[%s5 + $0xcc] sm:$0xf] %vm983, %v906
  %1036 = vst.msk [vmem:[%s5 + $0xd0] sm:$0xf] %vm983, %v907
  %1037 = vst.msk [vmem:[%s5 + $0xd4] sm:$0xf] %vm983, %v908
  %1038 = vst.msk [vmem:[%s5 + $0xd8] sm:$0xf] %vm983, %v909
  %1039 = vst.msk [vmem:[%s5 + $0xdc] sm:$0xf] %vm983, %v910
  %1040 = vst.msk [vmem:[%s5 + $0xe0] sm:$0xf] %vm983, %v911
  %1041 = vst.msk [vmem:[%s5 + $0xe4] sm:$0xf] %vm983, %v912
  %1042 = vst.msk [vmem:[%s5 + $0xe8] sm:$0xf] %vm983, %v913
  %1043 = vst.msk [vmem:[%s5 + $0xec] sm:$0xf] %vm983, %v914
  %1044 = vst.msk [vmem:[%s5 + $0xf0] sm:$0xf] %vm983, %v915
  %1045 = vst.msk [vmem:[%s5 + $0xf4] sm:$0xf] %vm983, %v916
  %1046 = vst.msk [vmem:[%s5 + $0xf8] sm:$0xf] %vm983, %v917
  %1047 = vst.msk [vmem:[%s5 + $0xfc] sm:$0xf] %vm983, %v918
  %vm1048 = vcmask 31744
  %v1049 = vsel %vm1048, %v473, 0.0
  %v1050 = vsel %vm1048, %v476, 0.0
  %v1051 = vadd.f32 %v1049, %v1050
  %v1052 = vsel %vm1048, %v481, 0.0
  %v1053 = vadd.f32 %v1051, %v1052
  %v1054 = vsel %vm1048, %v484, 0.0
  %v1055 = vadd.f32 %v1053, %v1054
  %v1056 = vsel %vm1048, %v489, 0.0
  %v1057 = vadd.f32 %v1055, %v1056
  %v1058 = vsel %vm1048, %v492, 0.0
  %v1059 = vadd.f32 %v1057, %v1058
  %v1060 = vsel %vm1048, %v497, 0.0
  %v1061 = vadd.f32 %v1059, %v1060
  %v1062 = vsel %vm1048, %v500, 0.0
  %v1063 = vadd.f32 %v1061, %v1062
  %v1064 = vsel %vm1048, %v505, 0.0
  %v1065 = vadd.f32 %v1063, %v1064
  %v1066 = vsel %vm1048, %v508, 0.0
  %v1067 = vadd.f32 %v1065, %v1066
  %v1068 = vsel %vm1048, %v513, 0.0
  %v1069 = vadd.f32 %v1067, %v1068
  %v1070 = vsel %vm1048, %v516, 0.0
  %v1071 = vadd.f32 %v1069, %v1070
  %v1072 = vsel %vm1048, %v521, 0.0
  %v1073 = vadd.f32 %v1071, %v1072
  %v1074 = vsel %vm1048, %v524, 0.0
  %v1075 = vadd.f32 %v1073, %v1074
  %v1076 = vsel %vm1048, %v529, 0.0
  %v1077 = vadd.f32 %v1075, %v1076
  %v1078 = vsel %vm1048, %v532, 0.0
  %v1079 = vadd.f32 %v1077, %v1078
  %v1080 = vsel %vm1048, %v537, 0.0
  %v1081 = vadd.f32 %v1079, %v1080
  %v1082 = vsel %vm1048, %v540, 0.0
  %v1083 = vadd.f32 %v1081, %v1082
  %v1084 = vsel %vm1048, %v545, 0.0
  %v1085 = vadd.f32 %v1083, %v1084
  %v1086 = vsel %vm1048, %v548, 0.0
  %v1087 = vadd.f32 %v1085, %v1086
  %v1088 = vsel %vm1048, %v553, 0.0
  %v1089 = vadd.f32 %v1087, %v1088
  %v1090 = vsel %vm1048, %v556, 0.0
  %v1091 = vadd.f32 %v1089, %v1090
  %v1092 = vsel %vm1048, %v561, 0.0
  %v1093 = vadd.f32 %v1091, %v1092
  %v1094 = vsel %vm1048, %v564, 0.0
  %v1095 = vadd.f32 %v1093, %v1094
  %v1096 = vsel %vm1048, %v569, 0.0
  %v1097 = vadd.f32 %v1095, %v1096
  %v1098 = vsel %vm1048, %v572, 0.0
  %v1099 = vadd.f32 %v1097, %v1098
  %v1100 = vsel %vm1048, %v577, 0.0
  %v1101 = vadd.f32 %v1099, %v1100
  %v1102 = vsel %vm1048, %v580, 0.0
  %v1103 = vadd.f32 %v1101, %v1102
  %v1104 = vsel %vm1048, %v585, 0.0
  %v1105 = vadd.f32 %v1103, %v1104
  %v1106 = vsel %vm1048, %v588, 0.0
  %v1107 = vadd.f32 %v1105, %v1106
  %v1108 = vsel %vm1048, %v593, 0.0
  %v1109 = vadd.f32 %v1107, %v1108
  %v1110 = vsel %vm1048, %v596, 0.0
  %v1111 = vadd.f32 %v1109, %v1110
  %v1112 = vsel %vm1048, %v601, 0.0
  %v1113 = vadd.f32 %v1111, %v1112
  %v1114 = vsel %vm1048, %v604, 0.0
  %v1115 = vadd.f32 %v1113, %v1114
  %v1116 = vsel %vm1048, %v609, 0.0
  %v1117 = vadd.f32 %v1115, %v1116
  %v1118 = vsel %vm1048, %v612, 0.0
  %v1119 = vadd.f32 %v1117, %v1118
  %v1120 = vsel %vm1048, %v617, 0.0
  %v1121 = vadd.f32 %v1119, %v1120
  %v1122 = vsel %vm1048, %v620, 0.0
  %v1123 = vadd.f32 %v1121, %v1122
  %v1124 = vsel %vm1048, %v625, 0.0
  %v1125 = vadd.f32 %v1123, %v1124
  %v1126 = vsel %vm1048, %v628, 0.0
  %v1127 = vadd.f32 %v1125, %v1126
  %v1128 = vsel %vm1048, %v633, 0.0
  %v1129 = vadd.f32 %v1127, %v1128
  %v1130 = vsel %vm1048, %v636, 0.0
  %v1131 = vadd.f32 %v1129, %v1130
  %v1132 = vsel %vm1048, %v641, 0.0
  %v1133 = vadd.f32 %v1131, %v1132
  %v1134 = vsel %vm1048, %v644, 0.0
  %v1135 = vadd.f32 %v1133, %v1134
  %v1136 = vsel %vm1048, %v649, 0.0
  %v1137 = vadd.f32 %v1135, %v1136
  %v1138 = vsel %vm1048, %v652, 0.0
  %v1139 = vadd.f32 %v1137, %v1138
  %v1140 = vsel %vm1048, %v657, 0.0
  %v1141 = vadd.f32 %v1139, %v1140
  %v1142 = vsel %vm1048, %v660, 0.0
  %v1143 = vadd.f32 %v1141, %v1142
  %v1144 = vsel %vm1048, %v665, 0.0
  %v1145 = vadd.f32 %v1143, %v1144
  %v1146 = vsel %vm1048, %v668, 0.0
  %v1147 = vadd.f32 %v1145, %v1146
  %v1148 = vsel %vm1048, %v673, 0.0
  %v1149 = vadd.f32 %v1147, %v1148
  %v1150 = vsel %vm1048, %v676, 0.0
  %v1151 = vadd.f32 %v1149, %v1150
  %v1152 = vsel %vm1048, %v681, 0.0
  %v1153 = vadd.f32 %v1151, %v1152
  %v1154 = vsel %vm1048, %v684, 0.0
  %v1155 = vadd.f32 %v1153, %v1154
  %v1156 = vsel %vm1048, %v689, 0.0
  %v1157 = vadd.f32 %v1155, %v1156
  %v1158 = vsel %vm1048, %v692, 0.0
  %v1159 = vadd.f32 %v1157, %v1158
  %v1160 = vsel %vm1048, %v697, 0.0
  %v1161 = vadd.f32 %v1159, %v1160
  %v1162 = vsel %vm1048, %v700, 0.0
  %v1163 = vadd.f32 %v1161, %v1162
  %v1164 = vsel %vm1048, %v705, 0.0
  %v1165 = vadd.f32 %v1163, %v1164
  %v1166 = vsel %vm1048, %v708, 0.0
  %v1167 = vadd.f32 %v1165, %v1166
  %v1168 = vsel %vm1048, %v713, 0.0
  %v1169 = vadd.f32 %v1167, %v1168
  %v1170 = vsel %vm1048, %v716, 0.0
  %v1171 = vadd.f32 %v1169, %v1170
  %v1172 = vsel %vm1048, %v721, 0.0
  %v1173 = vadd.f32 %v1171, %v1172
  %v1174 = vsel %vm1048, %v724, 0.0
  %v1175 = vadd.f32 %v1173, %v1174
  %v1176 = vrot.slane %v1175, 4
  %v1177 = vadd.f32 %v1175, %v1176
  %v1178 = vrot.slane %v1177, 2
  %v1179 = vadd.f32 %v1177, %v1178
  %v1180 = vrot.slane %v1179, 1
  %v1181 = vadd.f32 %v1179, %v1180
  %vm1182 = vcmask 24576
  %1183 = vst.msk [vmem:[%s6] sm:$0x1] %vm1182, %v1181
  %v1184 = vmul.f32 %v473, %v473
  %v1185 = vmul.f32 %v476, %v476
  %v1186 = vmul.f32 %v481, %v481
  %v1187 = vmul.f32 %v484, %v484
  %v1188 = vmul.f32 %v489, %v489
  %v1189 = vmul.f32 %v492, %v492
  %v1190 = vmul.f32 %v497, %v497
  %v1191 = vmul.f32 %v500, %v500
  %v1192 = vmul.f32 %v505, %v505
  %v1193 = vmul.f32 %v508, %v508
  %v1194 = vmul.f32 %v513, %v513
  %v1195 = vmul.f32 %v516, %v516
  %v1196 = vmul.f32 %v521, %v521
  %v1197 = vmul.f32 %v524, %v524
  %v1198 = vmul.f32 %v529, %v529
  %v1199 = vmul.f32 %v532, %v532
  %v1200 = vmul.f32 %v537, %v537
  %v1201 = vmul.f32 %v540, %v540
  %v1202 = vmul.f32 %v545, %v545
  %v1203 = vmul.f32 %v548, %v548
  %v1204 = vmul.f32 %v553, %v553
  %v1205 = vmul.f32 %v556, %v556
  %v1206 = vmul.f32 %v561, %v561
  %v1207 = vmul.f32 %v564, %v564
  %v1208 = vmul.f32 %v569, %v569
  %v1209 = vmul.f32 %v572, %v572
  %v1210 = vmul.f32 %v577, %v577
  %v1211 = vmul.f32 %v580, %v580
  %v1212 = vmul.f32 %v585, %v585
  %v1213 = vmul.f32 %v588, %v588
  %v1214 = vmul.f32 %v593, %v593
  %v1215 = vmul.f32 %v596, %v596
  %v1216 = vmul.f32 %v601, %v601
  %v1217 = vmul.f32 %v604, %v604
  %v1218 = vmul.f32 %v609, %v609
  %v1219 = vmul.f32 %v612, %v612
  %v1220 = vmul.f32 %v617, %v617
  %v1221 = vmul.f32 %v620, %v620
  %v1222 = vmul.f32 %v625, %v625
  %v1223 = vmul.f32 %v628, %v628
  %v1224 = vmul.f32 %v633, %v633
  %v1225 = vmul.f32 %v636, %v636
  %v1226 = vmul.f32 %v641, %v641
  %v1227 = vmul.f32 %v644, %v644
  %v1228 = vmul.f32 %v649, %v649
  %v1229 = vmul.f32 %v652, %v652
  %v1230 = vmul.f32 %v657, %v657
  %v1231 = vmul.f32 %v660, %v660
  %v1232 = vmul.f32 %v665, %v665
  %v1233 = vmul.f32 %v668, %v668
  %v1234 = vmul.f32 %v673, %v673
  %v1235 = vmul.f32 %v676, %v676
  %v1236 = vmul.f32 %v681, %v681
  %v1237 = vmul.f32 %v684, %v684
  %v1238 = vmul.f32 %v689, %v689
  %v1239 = vmul.f32 %v692, %v692
  %v1240 = vmul.f32 %v697, %v697
  %v1241 = vmul.f32 %v700, %v700
  %v1242 = vmul.f32 %v705, %v705
  %v1243 = vmul.f32 %v708, %v708
  %v1244 = vmul.f32 %v713, %v713
  %v1245 = vmul.f32 %v716, %v716
  %v1246 = vmul.f32 %v721, %v721
  %v1247 = vmul.f32 %v724, %v724
  %v1248 = vsel %vm1048, %v1184, 0.0
  %v1249 = vsel %vm1048, %v1185, 0.0
  %v1250 = vadd.f32 %v1248, %v1249
  %v1251 = vsel %vm1048, %v1186, 0.0
  %v1252 = vadd.f32 %v1250, %v1251
  %v1253 = vsel %vm1048, %v1187, 0.0
  %v1254 = vadd.f32 %v1252, %v1253
  %v1255 = vsel %vm1048, %v1188, 0.0
  %v1256 = vadd.f32 %v1254, %v1255
  %v1257 = vsel %vm1048, %v1189, 0.0
  %v1258 = vadd.f32 %v1256, %v1257
  %v1259 = vsel %vm1048, %v1190, 0.0
  %v1260 = vadd.f32 %v1258, %v1259
  %v1261 = vsel %vm1048, %v1191, 0.0
  %v1262 = vadd.f32 %v1260, %v1261
  %v1263 = vsel %vm1048, %v1192, 0.0
  %v1264 = vadd.f32 %v1262, %v1263
  %v1265 = vsel %vm1048, %v1193, 0.0
  %v1266 = vadd.f32 %v1264, %v1265
  %v1267 = vsel %vm1048, %v1194, 0.0
  %v1268 = vadd.f32 %v1266, %v1267
  %v1269 = vsel %vm1048, %v1195, 0.0
  %v1270 = vadd.f32 %v1268, %v1269
  %v1271 = vsel %vm1048, %v1196, 0.0
  %v1272 = vadd.f32 %v1270, %v1271
  %v1273 = vsel %vm1048, %v1197, 0.0
  %v1274 = vadd.f32 %v1272, %v1273
  %v1275 = vsel %vm1048, %v1198, 0.0
  %v1276 = vadd.f32 %v1274, %v1275
  %v1277 = vsel %vm1048, %v1199, 0.0
  %v1278 = vadd.f32 %v1276, %v1277
  %v1279 = vsel %vm1048, %v1200, 0.0
  %v1280 = vadd.f32 %v1278, %v1279
  %v1281 = vsel %vm1048, %v1201, 0.0
  %v1282 = vadd.f32 %v1280, %v1281
  %v1283 = vsel %vm1048, %v1202, 0.0
  %v1284 = vadd.f32 %v1282, %v1283
  %v1285 = vsel %vm1048, %v1203, 0.0
  %v1286 = vadd.f32 %v1284, %v1285
  %v1287 = vsel %vm1048, %v1204, 0.0
  %v1288 = vadd.f32 %v1286, %v1287
  %v1289 = vsel %vm1048, %v1205, 0.0
  %v1290 = vadd.f32 %v1288, %v1289
  %v1291 = vsel %vm1048, %v1206, 0.0
  %v1292 = vadd.f32 %v1290, %v1291
  %v1293 = vsel %vm1048, %v1207, 0.0
  %v1294 = vadd.f32 %v1292, %v1293
  %v1295 = vsel %vm1048, %v1208, 0.0
  %v1296 = vadd.f32 %v1294, %v1295
  %v1297 = vsel %vm1048, %v1209, 0.0
  %v1298 = vadd.f32 %v1296, %v1297
  %v1299 = vsel %vm1048, %v1210, 0.0
  %v1300 = vadd.f32 %v1298, %v1299
  %v1301 = vsel %vm1048, %v1211, 0.0
  %v1302 = vadd.f32 %v1300, %v1301
  %v1303 = vsel %vm1048, %v1212, 0.0
  %v1304 = vadd.f32 %v1302, %v1303
  %v1305 = vsel %vm1048, %v1213, 0.0
  %v1306 = vadd.f32 %v1304, %v1305
  %v1307 = vsel %vm1048, %v1214, 0.0
  %v1308 = vadd.f32 %v1306, %v1307
  %v1309 = vsel %vm1048, %v1215, 0.0
  %v1310 = vadd.f32 %v1308, %v1309
  %v1311 = vsel %vm1048, %v1216, 0.0
  %v1312 = vadd.f32 %v1310, %v1311
  %v1313 = vsel %vm1048, %v1217, 0.0
  %v1314 = vadd.f32 %v1312, %v1313
  %v1315 = vsel %vm1048, %v1218, 0.0
  %v1316 = vadd.f32 %v1314, %v1315
  %v1317 = vsel %vm1048, %v1219, 0.0
  %v1318 = vadd.f32 %v1316, %v1317
  %v1319 = vsel %vm1048, %v1220, 0.0
  %v1320 = vadd.f32 %v1318, %v1319
  %v1321 = vsel %vm1048, %v1221, 0.0
  %v1322 = vadd.f32 %v1320, %v1321
  %v1323 = vsel %vm1048, %v1222, 0.0
  %v1324 = vadd.f32 %v1322, %v1323
  %v1325 = vsel %vm1048, %v1223, 0.0
  %v1326 = vadd.f32 %v1324, %v1325
  %v1327 = vsel %vm1048, %v1224, 0.0
  %v1328 = vadd.f32 %v1326, %v1327
  %v1329 = vsel %vm1048, %v1225, 0.0
  %v1330 = vadd.f32 %v1328, %v1329
  %v1331 = vsel %vm1048, %v1226, 0.0
  %v1332 = vadd.f32 %v1330, %v1331
  %v1333 = vsel %vm1048, %v1227, 0.0
  %v1334 = vadd.f32 %v1332, %v1333
  %v1335 = vsel %vm1048, %v1228, 0.0
  %v1336 = vadd.f32 %v1334, %v1335
  %v1337 = vsel %vm1048, %v1229, 0.0
  %v1338 = vadd.f32 %v1336, %v1337
  %v1339 = vsel %vm1048, %v1230, 0.0
  %v1340 = vadd.f32 %v1338, %v1339
  %v1341 = vsel %vm1048, %v1231, 0.0
  %v1342 = vadd.f32 %v1340, %v1341
  %v1343 = vsel %vm1048, %v1232, 0.0
  %v1344 = vadd.f32 %v1342, %v1343
  %v1345 = vsel %vm1048, %v1233, 0.0
  %v1346 = vadd.f32 %v1344, %v1345
  %v1347 = vsel %vm1048, %v1234, 0.0
  %v1348 = vadd.f32 %v1346, %v1347
  %v1349 = vsel %vm1048, %v1235, 0.0
  %v1350 = vadd.f32 %v1348, %v1349
  %v1351 = vsel %vm1048, %v1236, 0.0
  %v1352 = vadd.f32 %v1350, %v1351
  %v1353 = vsel %vm1048, %v1237, 0.0
  %v1354 = vadd.f32 %v1352, %v1353
  %v1355 = vsel %vm1048, %v1238, 0.0
  %v1356 = vadd.f32 %v1354, %v1355
  %v1357 = vsel %vm1048, %v1239, 0.0
  %v1358 = vadd.f32 %v1356, %v1357
  %v1359 = vsel %vm1048, %v1240, 0.0
  %v1360 = vadd.f32 %v1358, %v1359
  %v1361 = vsel %vm1048, %v1241, 0.0
  %v1362 = vadd.f32 %v1360, %v1361
  %v1363 = vsel %vm1048, %v1242, 0.0
  %v1364 = vadd.f32 %v1362, %v1363
  %v1365 = vsel %vm1048, %v1243, 0.0
  %v1366 = vadd.f32 %v1364, %v1365
  %v1367 = vsel %vm1048, %v1244, 0.0
  %v1368 = vadd.f32 %v1366, %v1367
  %v1369 = vsel %vm1048, %v1245, 0.0
  %v1370 = vadd.f32 %v1368, %v1369
  %v1371 = vsel %vm1048, %v1246, 0.0
  %v1372 = vadd.f32 %v1370, %v1371
  %v1373 = vsel %vm1048, %v1247, 0.0
  %v1374 = vadd.f32 %v1372, %v1373
  %v1375 = vrot.slane %v1374, 4
  %v1376 = vadd.f32 %v1374, %v1375
  %v1377 = vrot.slane %v1376, 2
  %v1378 = vadd.f32 %v1376, %v1377
  %v1379 = vrot.slane %v1378, 1
  %v1380 = vadd.f32 %v1378, %v1379
  %1381 = vst.msk [vmem:[%s7] sm:$0x1] %vm1182, %v1380
  // Predicated region
  $region22: #{se_bottleneck.6} parent=0 // pred_check
    _
  $region23: #{se_bottleneck.6} parent=0 // pred_check_branch
    %1383 = sbr.rel (0) target = $region25
  $region24: #{se_bottleneck.6} parent=0 // pred_region
    _
  $region25: #{se_bottleneck.6} parent=0 // pred_fallthru
    _
  // Predicated region
  $region26: #{se_bottleneck.6} parent=0 // pred_check
    _
  $region27: #{se_bottleneck.6} parent=0 // pred_check_branch
    %1385 = sbr.rel (0) target = $region29
  $region28: #{se_bottleneck.6} parent=0 // pred_region
    _
  $region29: #{se_bottleneck.6} parent=0 // pred_fallthru
    _
  // Predicated region
  $region30: #{se_bottleneck.6} parent=0 // pred_check
    _
  $region31: #{se_bottleneck.6} parent=0 // pred_check_branch
    %1387 = sbr.rel (0) target = $region33
  $region32: #{se_bottleneck.6} parent=0 // pred_region
    _
  $region33: #{se_bottleneck.6} parent=0 // pred_fallthru
    _
  // Predicated region
  $region34: #{se_bottleneck.6} parent=0 // pred_check
    _
  $region35: #{se_bottleneck.6} parent=0 // pred_check_branch
    %1389 = sbr.rel (0) target = $region37
  $region36: #{se_bottleneck.6} parent=0 // pred_region
    _
  $region37: #{se_bottleneck.6} parent=0 // pred_fallthru
    _
  // Predicated region
  $region38: #{se_bottleneck.6} parent=0 // pred_check
    _
  $region39: #{se_bottleneck.6} parent=0 // pred_check_branch
    %1391 = sbr.rel (0) target = $region41
  $region40: #{se_bottleneck.6} parent=0 // pred_region
    _
  $region41: #{se_bottleneck.6} parent=0 // pred_fallthru
    _
  // Predicated region
  $region42: #{se_bottleneck.6} parent=0 // pred_check
    _
  $region43: #{se_bottleneck.6} parent=0 // pred_check_branch
    %1393 = sbr.rel (0) target = $region45
  $region44: #{se_bottleneck.6} parent=0 // pred_region
    _
  $region45: #{se_bottleneck.6} parent=0 // pred_fallthru
    _

// kernel: se_bottleneck.9
$region0: #{se_bottleneck.9}
  #allocation0 [shape = 'u32[]', space=smem, size = 0x4, offset = 0x4, fixed_abs, tag = 'smem constant byte address 0x4 - core index']
  #allocation1 [shape = 'u32[144,128]{1,0:T(1,128)}', space=vmem, size = 0x12000, scoped, tag = 'internal scratch']
  %s0 = inlined_call_operand.vmem [shape: bf16[2,256,4], index: 0, kind: input, shape index: {}]
  %s1 = inlined_call_operand.vmem [shape: f32[1,4], index: 1, kind: input, shape index: {}]
  %s2 = inlined_call_operand.vmem [shape: f32[1,4], index: 2, kind: input, shape index: {}]
  %s3 = inlined_call_operand.vmem [shape: bf16[4,16], index: 3, kind: input, shape index: {}]
  %s4 = inlined_call_operand.vmem [shape: f32[1,16], index: 4, kind: input, shape index: {}]
  %s5 = inlined_call_operand.vmem [shape: f32[2,1,16], index: 5, kind: input, shape index: {}]
  %s6 = inlined_call_operand.vmem [shape: f32[2,256,16], index: 6, kind: input, shape index: {}]
  %s7 = inlined_call_operand.vmem [shape: f32[2,256,16], index: 7, kind: output, shape index: {}]
  %s8 = sld [smem:[#allocation0]]
  $region61: #{se_bottleneck.9} parent=0
    _
  %s10 = ssub.s32 1, %s8
  %s11 = scalar_select 0, %s10, %s8
  loop: start=0, step=1, limit=4
  $region2: #{se_bottleneck.9} parent=0 // loop_pre_header
    _
  $region3: #{se_bottleneck.9} parent=0 // loop_header
    %s13 = sphi 0, %s17
    %p14 = scmp.ge.s32.totalorder %s13, 4
    %s20 = sphi 0, %s32
    %s21 = sphi 0, %s28
    %s22 = sphi 0, %s20
    %s23 = sphi 0, %s21
    %s24 = sphi 0, %s22
    %s25 = sphi 0, %s23
    %s37 = sphi 0, %s39
    %s40 = sphi 0, %s37
    %s41 = sphi 0, %s40
    %s57 = sphi 0, %s41
    %s61 = sphi 0, %s61
    %s63 = sphi 0, %s61
    %s64 = sphi 0, %s63
    %s78 = sphi 0, %s64
    %s82 = sphi 0, %s82
    %s84 = sphi 0, %s82
    %s85 = sphi 0, %s84
    %s99 = sphi 0, %s85
    %s103 = sphi 0, %s103
    %s105 = sphi 0, %s103
    %s106 = sphi 0, %s105
    %s120 = sphi 0, %s106
    %s124 = sphi 0, %s124
    %s126 = sphi 0, %s124
    %s127 = sphi 0, %s126
    %s141 = sphi 0, %s127
    %s147 = sphi 0, %s149
    %s150 = sphi 0, %s147
    %s151 = sphi 0, %s150
    %s167 = sphi 0, %s151
    %s175 = sphi 0, %s177
    %s178 = sphi 0, %s175
    %s179 = sphi 0, %s178
    %s195 = sphi 0, %s179
    %s203 = sphi 0, %s205
    %s206 = sphi 0, %s203
    %s207 = sphi 0, %s206
    %s223 = sphi 0, %s207
  $region4: #{se_bottleneck.9} parent=0 // loop_header_branch
    %16 = sbr.rel (%p14) target = $region8
  $region5: #{se_bottleneck.9} parent=0 // loop_body
    %s18 = ssub.s32 %s13, 1
    %s19 = ssub.s32 %s13, 2
    %s26 = sadd.s32 1, %s21
    %p27 = scmp.ge.s32.totalorder %s26, 1
    %s28 = scalar_select %p27, 0, %s26
    %s29 = sadd.s32 1, %s20
    %s30 = scalar_select %p27, %s29, %s20
    %p31 = scmp.ge.s32.totalorder %s30, 2
    %s32 = scalar_select %p31, 0, %s30
    %s33 = ssub.s32 %s20, %s32
    %s34 = ssub.s32 %s21, %s28
    %s35 = sor.u32 %s33, %s34
    %p36 = scmp.eq.s32.totalorder %s35, 0
    %s38 = sadd.s32 %s37, 1
    %s39 = scalar_select %p36, %s37, %s38
    %p42 = pneg %p36
    %p43 = scmp.eq.s32.totalorder %s13, 1
    %p44 = por %p42, %p43
    %p45 = scmp.ne.s32.totalorder %s37, %s40
    %p46 = scmp.eq.s32.totalorder %s13, 0
    %p47 = por %p45, %p46
    %p48 = scmp.ne.s32.totalorder %s37, %s40
    %p49 = scmp.eq.s32.totalorder %s18, 1
    %p50 = por %p48, %p49
    %p51 = scmp.ne.s32.totalorder %s40, %s41
    %p52 = scmp.eq.s32.totalorder %s18, 0
    %p53 = por %p51, %p52
    %p54 = scmp.ne.s32.totalorder %s40, %s41
    %p55 = scmp.eq.s32.totalorder %s19, 1
    %p56 = por %p54, %p55
    %p58 = scmp.ne.s32.totalorder %s41, %s57
    %p59 = scmp.eq.s32.totalorder %s19, 0
    %p60 = por %p58, %p59
    %s62 = sadd.s32 %s61, 1
    %p65 = scmp.eq.s32.totalorder %s13, 1
    %p66 = scmp.ne.s32.totalorder %s61, %s63
    %p67 = scmp.eq.s32.totalorder %s13, 0
    %p68 = por %p66, %p67
    %p69 = scmp.ne.s32.totalorder %s61, %s63
    %p70 = scmp.eq.s32.totalorder %s18, 1
    %p71 = por %p69, %p70
    %p72 = scmp.ne.s32.totalorder %s63, %s64
    %p73 = scmp.eq.s32.totalorder %s18, 0
    %p74 = por %p72, %p73
    %p75 = scmp.ne.s32.totalorder %s63, %s64
    %p76 = scmp.eq.s32.totalorder %s19, 1
    %p77 = por %p75, %p76
    %p79 = scmp.ne.s32.totalorder %s64, %s78
    %p80 = scmp.eq.s32.totalorder %s19, 0
    %p81 = por %p79, %p80
    %s83 = sadd.s32 %s82, 1
    %p86 = scmp.eq.s32.totalorder %s13, 1
    %p87 = scmp.ne.s32.totalorder %s82, %s84
    %p88 = scmp.eq.s32.totalorder %s13, 0
    %p89 = por %p87, %p88
    %p90 = scmp.ne.s32.totalorder %s82, %s84
    %p91 = scmp.eq.s32.totalorder %s18, 1
    %p92 = por %p90, %p91
    %p93 = scmp.ne.s32.totalorder %s84, %s85
    %p94 = scmp.eq.s32.totalorder %s18, 0
    %p95 = por %p93, %p94
    %p96 = scmp.ne.s32.totalorder %s84, %s85
    %p97 = scmp.eq.s32.totalorder %s19, 1
    %p98 = por %p96, %p97
    %p100 = scmp.ne.s32.totalorder %s85, %s99
    %p101 = scmp.eq.s32.totalorder %s19, 0
    %p102 = por %p100, %p101
    %s104 = sadd.s32 %s103, 1
    %p107 = scmp.eq.s32.totalorder %s13, 1
    %p108 = scmp.ne.s32.totalorder %s103, %s105
    %p109 = scmp.eq.s32.totalorder %s13, 0
    %p110 = por %p108, %p109
    %p111 = scmp.ne.s32.totalorder %s103, %s105
    %p112 = scmp.eq.s32.totalorder %s18, 1
    %p113 = por %p111, %p112
    %p114 = scmp.ne.s32.totalorder %s105, %s106
    %p115 = scmp.eq.s32.totalorder %s18, 0
    %p116 = por %p114, %p115
    %p117 = scmp.ne.s32.totalorder %s105, %s106
    %p118 = scmp.eq.s32.totalorder %s19, 1
    %p119 = por %p117, %p118
    %p121 = scmp.ne.s32.totalorder %s106, %s120
    %p122 = scmp.eq.s32.totalorder %s19, 0
    %p123 = por %p121, %p122
    %s125 = sadd.s32 %s124, 1
    %p128 = scmp.eq.s32.totalorder %s13, 1
    %p129 = scmp.ne.s32.totalorder %s124, %s126
    %p130 = scmp.eq.s32.totalorder %s13, 0
    %p131 = por %p129, %p130
    %p132 = scmp.ne.s32.totalorder %s124, %s126
    %p133 = scmp.eq.s32.totalorder %s18, 1
    %p134 = por %p132, %p133
    %p135 = scmp.ne.s32.totalorder %s126, %s127
    %p136 = scmp.eq.s32.totalorder %s18, 0
    %p137 = por %p135, %p136
    %p138 = scmp.ne.s32.totalorder %s126, %s127
    %p139 = scmp.eq.s32.totalorder %s19, 1
    %p140 = por %p138, %p139
    %p142 = scmp.ne.s32.totalorder %s127, %s141
    %p143 = scmp.eq.s32.totalorder %s19, 0
    %p144 = por %p142, %p143
    %s145 = ssub.s32 %s20, %s32
    %p146 = scmp.eq.s32.totalorder %s145, 0
    %s148 = sadd.s32 %s147, 1
    %s149 = scalar_select %p146, %s147, %s148
    %p152 = pneg %p146
    %p153 = scmp.eq.s32.totalorder %s13, 1
    %p154 = por %p152, %p153
    %p155 = scmp.ne.s32.totalorder %s147, %s150
    %p156 = scmp.eq.s32.totalorder %s13, 0
    %p157 = por %p155, %p156
    %p158 = scmp.ne.s32.totalorder %s147, %s150
    %p159 = scmp.eq.s32.totalorder %s18, 1
    %p160 = por %p158, %p159
    %p161 = scmp.ne.s32.totalorder %s150, %s151
    %p162 = scmp.eq.s32.totalorder %s18, 0
    %p163 = por %p161, %p162
    %p164 = scmp.ne.s32.totalorder %s150, %s151
    %p165 = scmp.eq.s32.totalorder %s19, 1
    %p166 = por %p164, %p165
    %p168 = scmp.ne.s32.totalorder %s151, %s167
    %p169 = scmp.eq.s32.totalorder %s19, 0
    %p170 = por %p168, %p169
    %s171 = ssub.s32 %s20, %s32
    %s172 = ssub.s32 %s21, %s28
    %s173 = sor.u32 %s171, %s172
    %p174 = scmp.eq.s32.totalorder %s173, 0
    %s176 = sadd.s32 %s175, 1
    %s177 = scalar_select %p174, %s175, %s176
    %p180 = pneg %p174
    %p181 = scmp.eq.s32.totalorder %s13, 1
    %p182 = por %p180, %p181
    %p183 = scmp.ne.s32.totalorder %s175, %s178
    %p184 = scmp.eq.s32.totalorder %s13, 0
    %p185 = por %p183, %p184
    %p186 = scmp.ne.s32.totalorder %s175, %s178
    %p187 = scmp.eq.s32.totalorder %s18, 1
    %p188 = por %p186, %p187
    %p189 = scmp.ne.s32.totalorder %s178, %s179
    %p190 = scmp.eq.s32.totalorder %s18, 0
    %p191 = por %p189, %p190
    %p192 = scmp.ne.s32.totalorder %s178, %s179
    %p193 = scmp.eq.s32.totalorder %s19, 1
    %p194 = por %p192, %p193
    %p196 = scmp.ne.s32.totalorder %s179, %s195
    %p197 = scmp.eq.s32.totalorder %s19, 0
    %p198 = por %p196, %p197
    %s199 = ssub.s32 %s20, %s32
    %s200 = ssub.s32 %s21, %s28
    %s201 = sor.u32 %s199, %s200
    %p202 = scmp.eq.s32.totalorder %s201, 0
    %s204 = sadd.s32 %s203, 1
    %s205 = scalar_select %p202, %s203, %s204
    %p208 = pneg %p202
    %p209 = scmp.eq.s32.totalorder %s13, 1
    %p210 = por %p208, %p209
    %p211 = scmp.ne.s32.totalorder %s203, %s206
    %p212 = scmp.eq.s32.totalorder %s13, 0
    %p213 = por %p211, %p212
    %p214 = scmp.ne.s32.totalorder %s203, %s206
    %p215 = scmp.eq.s32.totalorder %s18, 1
    %p216 = por %p214, %p215
    %p217 = scmp.ne.s32.totalorder %s206, %s207
    %p218 = scmp.eq.s32.totalorder %s18, 0
    %p219 = por %p217, %p218
    %p220 = scmp.ne.s32.totalorder %s206, %s207
    %p221 = scmp.eq.s32.totalorder %s19, 1
    %p222 = por %p220, %p221
    %p224 = scmp.ne.s32.totalorder %s207, %s223
    %p225 = scmp.eq.s32.totalorder %s19, 0
    %p226 = por %p224, %p225
    %p227 = scmp.le.s32.totalorder 1, %s13
    %p228 = scmp.lt.s32.totalorder %s13, 3
    %p229 = pnand %p227, %p228
    %p230 = pneg %p229
    // Predicated region
    $region9: #{se_bottleneck.9} parent=5 // pred_check
      _
    $region10: #{se_bottleneck.9} parent=5 // pred_check_branch
      %232 = sbr.rel (%p229) target = $region12
    $region11: #{se_bottleneck.9} parent=5 // pred_region
      %s233 = ssub.s32 %s13, 1
      // Predicated region
      $region13: #{se_bottleneck.9} parent=11 // pred_check
        %p234 = pneg %p74
      $region14: #{se_bottleneck.9} parent=11 // pred_check_branch
        %236 = sbr.rel (%p234) target = $region16
      $region15: #{se_bottleneck.9} parent=11 // pred_region
        _
      $region16: #{se_bottleneck.9} parent=11 // pred_fallthru
        _
      // Predicated region
      $region17: #{se_bottleneck.9} parent=11 // pred_check
        %p237 = pneg %p95
      $region18: #{se_bottleneck.9} parent=11 // pred_check_branch
        %239 = sbr.rel (%p237) target = $region20
      $region19: #{se_bottleneck.9} parent=11 // pred_region
        _
      $region20: #{se_bottleneck.9} parent=11 // pred_fallthru
        _
      // Predicated region
      $region21: #{se_bottleneck.9} parent=11 // pred_check
        %p240 = pneg %p116
      $region22: #{se_bottleneck.9} parent=11 // pred_check_branch
        %242 = sbr.rel (%p240) target = $region24
      $region23: #{se_bottleneck.9} parent=11 // pred_region
        _
      $region24: #{se_bottleneck.9} parent=11 // pred_fallthru
        _
      // Predicated region
      $region25: #{se_bottleneck.9} parent=11 // pred_check
        %p243 = pneg %p137
      $region26: #{se_bottleneck.9} parent=11 // pred_check_branch
        %245 = sbr.rel (%p243) target = $region28
      $region27: #{se_bottleneck.9} parent=11 // pred_region
        _
      $region28: #{se_bottleneck.9} parent=11 // pred_fallthru
        _
    $region12: #{se_bottleneck.9} parent=5 // pred_fallthru
      _
    %p246 = scmp.lt.s32.totalorder %s13, 2
    // Predicated region
    $region29: #{se_bottleneck.9} parent=5 // pred_check
      %p247 = pneg %p246
    $region30: #{se_bottleneck.9} parent=5 // pred_check_branch
      %249 = sbr.rel (%p247) target = $region32
    $region31: #{se_bottleneck.9} parent=5 // pred_region
      // Predicated region
      $region33: #{se_bottleneck.9} parent=31 // pred_check
        %p250 = pneg %p47
      $region34: #{se_bottleneck.9} parent=31 // pred_check_branch
        %252 = sbr.rel (%p250) target = $region36
      $region35: #{se_bottleneck.9} parent=31 // pred_region
        %s253 = smul.u32 32, %s21
        %p254 = scmp.lt.s32.totalorder %s20, 1
        %s255 = scalar_select %p254, %s20, 1
        %p256 = scmp.lt.s32.totalorder %s253, 31
        %s257 = scalar_select %p256, %s253, 31
        %s258 = smul.addr %s255, 32
        %s259 = sadd.s32 %s257, %s258
        %s260 = smul.addr %s259, 4
        %s261 = scalar_lea.vmem %s0, %s260
        %s262 = smul.u32 32, %s21
      $region36: #{se_bottleneck.9} parent=31 // pred_fallthru
        _
      // Predicated region
      $region37: #{se_bottleneck.9} parent=31 // pred_check
        %p263 = pneg %p157
      $region38: #{se_bottleneck.9} parent=31 // pred_check_branch
        %265 = sbr.rel (%p263) target = $region40
      $region39: #{se_bottleneck.9} parent=31 // pred_region
        %p266 = scmp.lt.s32.totalorder %s20, 1
        %s267 = scalar_select %p266, %s20, 1
        %s268 = scalar_lea.vmem %s5, %s267
      $region40: #{se_bottleneck.9} parent=31 // pred_fallthru
        _
      // Predicated region
      $region41: #{se_bottleneck.9} parent=31 // pred_check
        %p269 = pneg %p185
      $region42: #{se_bottleneck.9} parent=31 // pred_check_branch
        %271 = sbr.rel (%p269) target = $region44
      $region43: #{se_bottleneck.9} parent=31 // pred_region
        %s272 = smul.u32 32, %s21
        %p273 = scmp.lt.s32.totalorder %s20, 1
        %s274 = scalar_select %p273, %s20, 1
        %p275 = scmp.lt.s32.totalorder %s272, 31
        %s276 = scalar_select %p275, %s272, 31
        %s277 = smul.addr %s274, 32
        %s278 = sadd.s32 %s276, %s277
        %s279 = smul.addr %s278, 8
        %s280 = scalar_lea.vmem %s6, %s279
        %s281 = smul.u32 32, %s21
      $region44: #{se_bottleneck.9} parent=31 // pred_fallthru
        _
    $region32: #{se_bottleneck.9} parent=5 // pred_fallthru
      _
    %p282 = scmp.le.s32.totalorder 1, %s13
    %p283 = scmp.lt.s32.totalorder %s13, 3
    %p284 = pnand %p282, %p283
    %p285 = pneg %p284
    // Predicated region
    $region45: #{se_bottleneck.9} parent=5 // pred_check
      _
    $region46: #{se_bottleneck.9} parent=5 // pred_check_branch
      %287 = sbr.rel (%p284) target = $region48
    $region47: #{se_bottleneck.9} parent=5 // pred_region
      %s288 = ssub.s32 %s13, 1
      %s289 = smul.u32 32, %s23
      %p290 = scmp.lt.s32.totalorder %s22, 1
      %s291 = scalar_select %p290, %s22, 1
      %p292 = scmp.lt.s32.totalorder %s289, 31
      %s293 = scalar_select %p292, %s289, 31
      %s294 = smul.addr %s291, 32
      %s295 = sadd.s32 %s293, %s294
      %s296 = smul.addr %s295, 4
      %s297 = scalar_lea.vmem %s0, %s296
      %p298 = pneg %p53
      %p299 = pneg %p50
      %p300 = pneg %p74
      %p301 = pneg %p71
      %p302 = pneg %p95
      %p303 = pneg %p92
      %p304 = pneg %p116
      %p305 = pneg %p113
      %p306 = pneg %p137
      %p307 = pneg %p134
      %p308 = scmp.lt.s32.totalorder %s22, 1
      %s309 = scalar_select %p308, %s22, 1
      %s310 = scalar_lea.vmem %s5, %s309
      %p311 = pneg %p163
      %p312 = pneg %p160
      %s313 = smul.u32 32, %s23
      %p314 = scmp.lt.s32.totalorder %s22, 1
      %s315 = scalar_select %p314, %s22, 1
      %p316 = scmp.lt.s32.totalorder %s313, 31
      %s317 = scalar_select %p316, %s313, 31
      %s318 = smul.addr %s315, 32
      %s319 = sadd.s32 %s317, %s318
      %s320 = smul.addr %s319, 8
      %s321 = scalar_lea.vmem %s6, %s320
      %p322 = pneg %p191
      %p323 = pneg %p188
      %p324 = pneg %p219
      %p325 = pneg %p216
      %s326 = smul.u32 32, %s23
      %p327 = scmp.lt.s32.totalorder %s22, 1
      %s328 = scalar_select %p327, %s22, 1
      %p329 = scmp.lt.s32.totalorder %s326, 31
      %s330 = scalar_select %p329, %s326, 31
      %s331 = smul.addr %s328, 32
      %s332 = sadd.s32 %s330, %s331
      %s333 = smul.addr %s332, 8
      %s334 = scalar_lea.vmem %s7, %s333
      %s335 = smul.u32 32, %s23
      %p336 = scmp.lt.s32.totalorder %s22, 1
      %s337 = scalar_select %p336, %s22, 1
      %p338 = scmp.lt.s32.totalorder %s335, 31
      %s339 = scalar_select %p338, %s335, 31
      %s340 = smul.addr %s337, 32
      %s341 = sadd.s32 %s339, %s340
      %s342 = smul.addr %s341, 4
      %s343 = scalar_lea.vmem %s0, %s342
      %s344 = smul.u32 32, %s23
      %p345 = scmp.lt.s32.totalorder %s22, 1
      %s346 = scalar_select %p345, %s22, 1
      %s347 = scalar_lea.vmem %s5, %s346
      %s348 = smul.u32 32, %s23
      %p349 = scmp.lt.s32.totalorder %s22, 1
      %s350 = scalar_select %p349, %s22, 1
      %p351 = scmp.lt.s32.totalorder %s348, 31
      %s352 = scalar_select %p351, %s348, 31
      %s353 = smul.addr %s350, 32
      %s354 = sadd.s32 %s352, %s353
      %s355 = smul.addr %s354, 8
      %s356 = scalar_lea.vmem %s6, %s355
      %s357 = smul.u32 32, %s23
      %s358 = smul.u32 32, %s23
      %p359 = scmp.lt.s32.totalorder %s22, 1
      %s360 = scalar_select %p359, %s22, 1
      %p361 = scmp.lt.s32.totalorder %s358, 31
      %s362 = scalar_select %p361, %s358, 31
      %s363 = smul.addr %s360, 32
      %s364 = sadd.s32 %s362, %s363
      %s365 = smul.addr %s364, 8
      %s366 = scalar_lea.vmem %s7, %s365
      %s367 = smul.u32 32, %s23
      %v369 = vld [vmem:[%s343] sm:$0xf]
      %v370 = vld [vmem:[%s343 + $0x4] sm:$0xf]
      %v371 = vld [vmem:[%s343 + $0x8] sm:$0xf]
      %v372 = vld [vmem:[%s343 + $0xc] sm:$0xf]
      %v373 = vld [vmem:[%s343 + $0x10] sm:$0xf]
      %v374 = vld [vmem:[%s343 + $0x14] sm:$0xf]
      %v375 = vld [vmem:[%s343 + $0x18] sm:$0xf]
      %v376 = vld [vmem:[%s343 + $0x1c] sm:$0xf]
      %v377 = vld [vmem:[%s343 + $0x20] sm:$0xf]
      %v378 = vld [vmem:[%s343 + $0x24] sm:$0xf]
      %v379 = vld [vmem:[%s343 + $0x28] sm:$0xf]
      %v380 = vld [vmem:[%s343 + $0x2c] sm:$0xf]
      %v381 = vld [vmem:[%s343 + $0x30] sm:$0xf]
      %v382 = vld [vmem:[%s343 + $0x34] sm:$0xf]
      %v383 = vld [vmem:[%s343 + $0x38] sm:$0xf]
      %v384 = vld [vmem:[%s343 + $0x3c] sm:$0xf]
      %v385 = vld [vmem:[%s343 + $0x40] sm:$0xf]
      %v386 = vld [vmem:[%s343 + $0x44] sm:$0xf]
      %v387 = vld [vmem:[%s343 + $0x48] sm:$0xf]
      %v388 = vld [vmem:[%s343 + $0x4c] sm:$0xf]
      %v389 = vld [vmem:[%s343 + $0x50] sm:$0xf]
      %v390 = vld [vmem:[%s343 + $0x54] sm:$0xf]
      %v391 = vld [vmem:[%s343 + $0x58] sm:$0xf]
      %v392 = vld [vmem:[%s343 + $0x5c] sm:$0xf]
      %v393 = vld [vmem:[%s343 + $0x60] sm:$0xf]
      %v394 = vld [vmem:[%s343 + $0x64] sm:$0xf]
      %v395 = vld [vmem:[%s343 + $0x68] sm:$0xf]
      %v396 = vld [vmem:[%s343 + $0x6c] sm:$0xf]
      %v397 = vld [vmem:[%s343 + $0x70] sm:$0xf]
      %v398 = vld [vmem:[%s343 + $0x74] sm:$0xf]
      %v399 = vld [vmem:[%s343 + $0x78] sm:$0xf]
      %v400 = vld [vmem:[%s343 + $0x7c] sm:$0xf]
      %v401 = vunpack.c.l.bf16 %v369
      %v402 = vunpack.c.l.bf16 %v370
      %v403 = vunpack.c.l.bf16 %v371
      %v404 = vunpack.c.l.bf16 %v372
      %v405 = vunpack.c.l.bf16 %v373
      %v406 = vunpack.c.l.bf16 %v374
      %v407 = vunpack.c.l.bf16 %v375
      %v408 = vunpack.c.l.bf16 %v376
      %v409 = vunpack.c.l.bf16 %v377
      %v410 = vunpack.c.l.bf16 %v378
      %v411 = vunpack.c.l.bf16 %v379
      %v412 = vunpack.c.l.bf16 %v380
      %v413 = vunpack.c.l.bf16 %v381
      %v414 = vunpack.c.l.bf16 %v382
      %v415 = vunpack.c.l.bf16 %v383
      %v416 = vunpack.c.l.bf16 %v384
      %v417 = vunpack.c.l.bf16 %v385
      %v418 = vunpack.c.l.bf16 %v386
      %v419 = vunpack.c.l.bf16 %v387
      %v420 = vunpack.c.l.bf16 %v388
      %v421 = vunpack.c.l.bf16 %v389
      %v422 = vunpack.c.l.bf16 %v390
      %v423 = vunpack.c.l.bf16 %v391
      %v424 = vunpack.c.l.bf16 %v392
      %v425 = vunpack.c.l.bf16 %v393
      %v426 = vunpack.c.l.bf16 %v394
      %v427 = vunpack.c.l.bf16 %v395
      %v428 = vunpack.c.l.bf16 %v396
      %v429 = vunpack.c.l.bf16 %v397
      %v430 = vunpack.c.l.bf16 %v398
      %v431 = vunpack.c.l.bf16 %v399
      %v432 = vunpack.c.l.bf16 %v400
      %v433 = vld [vmem:[%s1] sm:$0x1]
      %v435 = vlaneseq
      %v436 = vshrl.u32 %v435, 7
      %v437 = vsub.s32 0, %v436
      %v438 = vrot.slane %v433, %v437
      %v440 = vmul.f32 %v401, %v438
      %v441 = vmul.f32 %v402, %v438
      %v442 = vmul.f32 %v403, %v438
      %v443 = vmul.f32 %v404, %v438
      %v444 = vmul.f32 %v405, %v438
      %v445 = vmul.f32 %v406, %v438
      %v446 = vmul.f32 %v407, %v438
      %v447 = vmul.f32 %v408, %v438
      %v448 = vmul.f32 %v409, %v438
      %v449 = vmul.f32 %v410, %v438
      %v450 = vmul.f32 %v411, %v438
      %v451 = vmul.f32 %v412, %v438
      %v452 = vmul.f32 %v413, %v438
      %v453 = vmul.f32 %v414, %v438
      %v454 = vmul.f32 %v415, %v438
      %v455 = vmul.f32 %v416, %v438
      %v456 = vmul.f32 %v417, %v438
      %v457 = vmul.f32 %v418, %v438
      %v458 = vmul.f32 %v419, %v438
      %v459 = vmul.f32 %v420, %v438
      %v460 = vmul.f32 %v421, %v438
      %v461 = vmul.f32 %v422, %v438
      %v462 = vmul.f32 %v423, %v438
      %v463 = vmul.f32 %v424, %v438
      %v464 = vmul.f32 %v425, %v438
      %v465 = vmul.f32 %v426, %v438
      %v466 = vmul.f32 %v427, %v438
      %v467 = vmul.f32 %v428, %v438
      %v468 = vmul.f32 %v429, %v438
      %v469 = vmul.f32 %v430, %v438
      %v470 = vmul.f32 %v431, %v438
      %v471 = vmul.f32 %v432, %v438
      %v472 = vld [vmem:[%s2] sm:$0x1]
      %v474 = vlaneseq
      %v475 = vshrl.u32 %v474, 7
      %v476 = vsub.s32 0, %v475
      %v477 = vrot.slane %v472, %v476
      %v479 = vadd.f32 %v440, %v477
      %v480 = vadd.f32 %v441, %v477
      %v481 = vadd.f32 %v442, %v477
      %v482 = vadd.f32 %v443, %v477
      %v483 = vadd.f32 %v444, %v477
      %v484 = vadd.f32 %v445, %v477
      %v485 = vadd.f32 %v446, %v477
      %v486 = vadd.f32 %v447, %v477
      %v487 = vadd.f32 %v448, %v477
      %v488 = vadd.f32 %v449, %v477
      %v489 = vadd.f32 %v450, %v477
      %v490 = vadd.f32 %v451, %v477
      %v491 = vadd.f32 %v452, %v477
      %v492 = vadd.f32 %v453, %v477
      %v493 = vadd.f32 %v454, %v477
      %v494 = vadd.f32 %v455, %v477
      %v495 = vadd.f32 %v456, %v477
      %v496 = vadd.f32 %v457, %v477
      %v497 = vadd.f32 %v458, %v477
      %v498 = vadd.f32 %v459, %v477
      %v499 = vadd.f32 %v460, %v477
      %v500 = vadd.f32 %v461, %v477
      %v501 = vadd.f32 %v462, %v477
      %v502 = vadd.f32 %v463, %v477
      %v503 = vadd.f32 %v464, %v477
      %v504 = vadd.f32 %v465, %v477
      %v505 = vadd.f32 %v466, %v477
      %v506 = vadd.f32 %v467, %v477
      %v507 = vadd.f32 %v468, %v477
      %v508 = vadd.f32 %v469, %v477
      %v509 = vadd.f32 %v470, %v477
      %v510 = vadd.f32 %v471, %v477
      %v511 = vmax.f32 %v479, 0.0
      %v512 = vmax.f32 %v480, 0.0
      %v513 = vmax.f32 %v481, 0.0
      %v514 = vmax.f32 %v482, 0.0
      %v515 = vmax.f32 %v483, 0.0
      %v516 = vmax.f32 %v484, 0.0
      %v517 = vmax.f32 %v485, 0.0
      %v518 = vmax.f32 %v486, 0.0
      %v519 = vmax.f32 %v487, 0.0
      %v520 = vmax.f32 %v488, 0.0
      %v521 = vmax.f32 %v489, 0.0
      %v522 = vmax.f32 %v490, 0.0
      %v523 = vmax.f32 %v491, 0.0
      %v524 = vmax.f32 %v492, 0.0
      %v525 = vmax.f32 %v493, 0.0
      %v526 = vmax.f32 %v494, 0.0
      %v527 = vmax.f32 %v495, 0.0
      %v528 = vmax.f32 %v496, 0.0
      %v529 = vmax.f32 %v497, 0.0
      %v530 = vmax.f32 %v498, 0.0
      %v531 = vmax.f32 %v499, 0.0
      %v532 = vmax.f32 %v500, 0.0
      %v533 = vmax.f32 %v501, 0.0
      %v534 = vmax.f32 %v502, 0.0
      %v535 = vmax.f32 %v503, 0.0
      %v536 = vmax.f32 %v504, 0.0
      %v537 = vmax.f32 %v505, 0.0
      %v538 = vmax.f32 %v506, 0.0
      %v539 = vmax.f32 %v507, 0.0
      %v540 = vmax.f32 %v508, 0.0
      %v541 = vmax.f32 %v509, 0.0
      %v542 = vmax.f32 %v510, 0.0
      %v543 = vpack.c.bf16 %v512, %v511
      %v544 = vpack.c.bf16 %v514, %v513
      %v545 = vpack.c.bf16 %v516, %v515
      %v546 = vpack.c.bf16 %v518, %v517
      %v547 = vpack.c.bf16 %v520, %v519
      %v548 = vpack.c.bf16 %v522, %v521
      %v549 = vpack.c.bf16 %v524, %v523
      %v550 = vpack.c.bf16 %v526, %v525
      %v551 = vpack.c.bf16 %v528, %v527
      %v552 = vpack.c.bf16 %v530, %v529
      %v553 = vpack.c.bf16 %v532, %v531
      %v554 = vpack.c.bf16 %v534, %v533
      %v555 = vpack.c.bf16 %v536, %v535
      %v556 = vpack.c.bf16 %v538, %v537
      %v557 = vpack.c.bf16 %v540, %v539
      %v558 = vpack.c.bf16 %v542, %v541
      %v559 = vld [vmem:[%s3] sm:$0x3]
      %v560 = vld [vmem:[%s4] sm:$0x1]
      %v562 = vlaneseq
      %v563 = vshrl.u32 %v562, 7
      %v564 = vsub.s32 0, %v563
      %v565 = vrot.slane %v560, %v564
      %vm567 = vcmask 31744
      %v569 = vsel %vm567, %v543, 0
      %v572 = vsel %vm567, %v544, 0
      %v575 = vsel %vm567, %v545, 0
      %v578 = vsel %vm567, %v546, 0
      %v581 = vsel %vm567, %v547, 0
      %v584 = vsel %vm567, %v548, 0
      %v587 = vsel %vm567, %v549, 0
      %v590 = vsel %vm567, %v550, 0
      %v593 = vsel %vm567, %v551, 0
      %v596 = vsel %vm567, %v552, 0
      %v599 = vsel %vm567, %v553, 0
      %v602 = vsel %vm567, %v554, 0
      %v605 = vsel %vm567, %v555, 0
      %v608 = vsel %vm567, %v556, 0
      %v611 = vsel %vm567, %v557, 0
      %v614 = vsel %vm567, %v558, 0
      %vm616 = vcmask 1041408
      %v618 = vsel %vm616, %v559, 0
      %620 = vmatprep.subr.bf16.mxu0 0
      %621 = vmatpush1.bf16.msra.mxu0 0
      %622 = vmatprep.subr.bf16.mxu0 0
      %623 = vmatpush1.bf16.msra.mxu0 0
      %624 = vmatprep.subr.bf16.mxu0 0
      %625 = vmatpush1.bf16.msra.mxu0 0
      %626 = vmatprep.subr.bf16.mxu0 0
      %627 = vmatpush1.bf16.msra.mxu0 0
      %628 = vmatprep.subr.bf16.mxu0 0
      %629 = vmatpush1.bf16.msra.mxu0 0
      %630 = vmatprep.subr.bf16.mxu0 0
      %631 = vmatpush1.bf16.msra.mxu0 0
      %632 = vmatprep.subr.bf16.mxu0 0
      %633 = vmatpush1.bf16.msra.mxu0 0
      %634 = vmatprep.subr.bf16.mxu0 0
      %635 = vmatpush1.bf16.msra.mxu0 %v618
      %636 = vmatprep.subr.bf16.mxu0 0
      %637 = vmatpush2.bf16.msra.mxu0 0
      %638 = vmatprep.subr.bf16.mxu0 0
      %639 = vmatpush2.bf16.msra.mxu0 0
      %640 = vmatprep.subr.bf16.mxu0 0
      %641 = vmatpush2.bf16.msra.mxu0 0
      %642 = vmatprep.subr.bf16.mxu0 0
      %643 = vmatpush2.bf16.msra.mxu0 0
      %644 = vmatprep.subr.bf16.mxu0 0
      %645 = vmatpush2.bf16.msra.mxu0 0
      %646 = vmatprep.subr.bf16.mxu0 0
      %647 = vmatpush2.bf16.msra.mxu0 0
      %648 = vmatprep.subr.bf16.mxu0 0
      %649 = vmatpush2.bf16.msra.mxu0 0
      %650 = vmatprep.subr.bf16.mxu0 0
      %651 = vmatpush2.bf16.msra.mxu0 0
      %652 = vmatprep.mubr.bf16.mxu0 0
      %653 = vmatmul.mubr.bf16.gmra.mxu0 %v569
      %v654 = vpop.f32.mrf.mxu0
      %v655 = vadd.f32 %v565, %v654
      %v656 = vpop.f32.mrf.mxu0
      %v657 = vpop.f32.mrf.mxu0
      %v658 = vadd.f32 %v565, %v657
      %v659 = vpop.f32.mrf.mxu0
      %660 = vmatprep.mubr.bf16.mxu0 0
      %661 = vmatmul.mubr.bf16.gmra.mxu0 %v572
      %v662 = vpop.f32.mrf.mxu0
      %v663 = vadd.f32 %v565, %v662
      %v664 = vpop.f32.mrf.mxu0
      %v665 = vpop.f32.mrf.mxu0
      %v666 = vadd.f32 %v565, %v665
      %v667 = vpop.f32.mrf.mxu0
      %668 = vmatprep.mubr.bf16.mxu0 0
      %669 = vmatmul.mubr.bf16.gmra.mxu0 %v575
      %v670 = vpop.f32.mrf.mxu0
      %v671 = vadd.f32 %v565, %v670
      %v672 = vpop.f32.mrf.mxu0
      %v673 = vpop.f32.mrf.mxu0
      %v674 = vadd.f32 %v565, %v673
      %v675 = vpop.f32.mrf.mxu0
      %676 = vmatprep.mubr.bf16.mxu0 0
      %677 = vmatmul.mubr.bf16.gmra.mxu0 %v578
      %v678 = vpop.f32.mrf.mxu0
      %v679 = vadd.f32 %v565, %v678
      %v680 = vpop.f32.mrf.mxu0
      %v681 = vpop.f32.mrf.mxu0
      %v682 = vadd.f32 %v565, %v681
      %v683 = vpop.f32.mrf.mxu0
      %684 = vmatprep.mubr.bf16.mxu0 0
      %685 = vmatmul.mubr.bf16.gmra.mxu0 %v581
      %v686 = vpop.f32.mrf.mxu0
      %v687 = vadd.f32 %v565, %v686
      %v688 = vpop.f32.mrf.mxu0
      %v689 = vpop.f32.mrf.mxu0
      %v690 = vadd.f32 %v565, %v689
      %v691 = vpop.f32.mrf.mxu0
      %692 = vmatprep.mubr.bf16.mxu0 0
      %693 = vmatmul.mubr.bf16.gmra.mxu0 %v584
      %v694 = vpop.f32.mrf.mxu0
      %v695 = vadd.f32 %v565, %v694
      %v696 = vpop.f32.mrf.mxu0
      %v697 = vpop.f32.mrf.mxu0
      %v698 = vadd.f32 %v565, %v697
      %v699 = vpop.f32.mrf.mxu0
      %700 = vmatprep.mubr.bf16.mxu0 0
      %701 = vmatmul.mubr.bf16.gmra.mxu0 %v587
      %v702 = vpop.f32.mrf.mxu0
      %v703 = vadd.f32 %v565, %v702
      %v704 = vpop.f32.mrf.mxu0
      %v705 = vpop.f32.mrf.mxu0
      %v706 = vadd.f32 %v565, %v705
      %v707 = vpop.f32.mrf.mxu0
      %708 = vmatprep.mubr.bf16.mxu0 0
      %709 = vmatmul.mubr.bf16.gmra.mxu0 %v590
      %v710 = vpop.f32.mrf.mxu0
      %v711 = vadd.f32 %v565, %v710
      %v712 = vpop.f32.mrf.mxu0
      %v713 = vpop.f32.mrf.mxu0
      %v714 = vadd.f32 %v565, %v713
      %v715 = vpop.f32.mrf.mxu0
      %716 = vmatprep.mubr.bf16.mxu0 0
      %717 = vmatmul.mubr.bf16.gmra.mxu0 %v593
      %v718 = vpop.f32.mrf.mxu0
      %v719 = vadd.f32 %v565, %v718
      %v720 = vpop.f32.mrf.mxu0
      %v721 = vpop.f32.mrf.mxu0
      %v722 = vadd.f32 %v565, %v721
      %v723 = vpop.f32.mrf.mxu0
      %724 = vmatprep.mubr.bf16.mxu0 0
      %725 = vmatmul.mubr.bf16.gmra.mxu0 %v596
      %v726 = vpop.f32.mrf.mxu0
      %v727 = vadd.f32 %v565, %v726
      %v728 = vpop.f32.mrf.mxu0
      %v729 = vpop.f32.mrf.mxu0
      %v730 = vadd.f32 %v565, %v729
      %v731 = vpop.f32.mrf.mxu0
      %732 = vmatprep.mubr.bf16.mxu0 0
      %733 = vmatmul.mubr.bf16.gmra.mxu0 %v599
      %v734 = vpop.f32.mrf.mxu0
      %v735 = vadd.f32 %v565, %v734
      %v736 = vpop.f32.mrf.mxu0
      %v737 = vpop.f32.mrf.mxu0
      %v738 = vadd.f32 %v565, %v737
      %v739 = vpop.f32.mrf.mxu0
      %740 = vmatprep.mubr.bf16.mxu0 0
      %741 = vmatmul.mubr.bf16.gmra.mxu0 %v602
      %v742 = vpop.f32.mrf.mxu0
      %v743 = vadd.f32 %v565, %v742
      %v744 = vpop.f32.mrf.mxu0
      %v745 = vpop.f32.mrf.mxu0
      %v746 = vadd.f32 %v565, %v745
      %v747 = vpop.f32.mrf.mxu0
      %748 = vmatprep.mubr.bf16.mxu0 0
      %749 = vmatmul.mubr.bf16.gmra.mxu0 %v605
      %v750 = vpop.f32.mrf.mxu0
      %v751 = vadd.f32 %v565, %v750
      %v752 = vpop.f32.mrf.mxu0
      %v753 = vpop.f32.mrf.mxu0
      %v754 = vadd.f32 %v565, %v753
      %v755 = vpop.f32.mrf.mxu0
      %756 = vmatprep.mubr.bf16.mxu0 0
      %757 = vmatmul.mubr.bf16.gmra.mxu0 %v608
      %v758 = vpop.f32.mrf.mxu0
      %v759 = vadd.f32 %v565, %v758
      %v760 = vpop.f32.mrf.mxu0
      %v761 = vpop.f32.mrf.mxu0
      %v762 = vadd.f32 %v565, %v761
      %v763 = vpop.f32.mrf.mxu0
      %764 = vmatprep.mubr.bf16.mxu0 0
      %765 = vmatmul.mubr.bf16.gmra.mxu0 %v611
      %v766 = vpop.f32.mrf.mxu0
      %v767 = vadd.f32 %v565, %v766
      %v768 = vpop.f32.mrf.mxu0
      %v769 = vpop.f32.mrf.mxu0
      %v770 = vadd.f32 %v565, %v769
      %v771 = vpop.f32.mrf.mxu0
      %772 = vmatprep.mubr.bf16.mxu0 0
      %773 = vmatmul.mubr.bf16.gmra.mxu0 %v614
      %v774 = vpop.f32.mrf.mxu0
      %v775 = vadd.f32 %v565, %v774
      %v776 = vpop.f32.mrf.mxu0
      %v777 = vpop.f32.mrf.mxu0
      %v778 = vadd.f32 %v565, %v777
      %v779 = vpop.f32.mrf.mxu0
      %780 = vdwg.mxu0
      %v781 = vld [vmem:[%s347] sm:$0x1]
      %v783 = vlaneseq
      %v784 = vshrl.u32 %v783, 7
      %v785 = vsub.s32 0, %v784
      %v786 = vrot.slane %v781, %v785
      %v788 = vmul.f32 %v655, %v786
      %v789 = vmul.f32 %v658, %v786
      %v790 = vmul.f32 %v663, %v786
      %v791 = vmul.f32 %v666, %v786
      %v792 = vmul.f32 %v671, %v786
      %v793 = vmul.f32 %v674, %v786
      %v794 = vmul.f32 %v679, %v786
      %v795 = vmul.f32 %v682, %v786
      %v796 = vmul.f32 %v687, %v786
      %v797 = vmul.f32 %v690, %v786
      %v798 = vmul.f32 %v695, %v786
      %v799 = vmul.f32 %v698, %v786
      %v800 = vmul.f32 %v703, %v786
      %v801 = vmul.f32 %v706, %v786
      %v802 = vmul.f32 %v711, %v786
      %v803 = vmul.f32 %v714, %v786
      %v804 = vmul.f32 %v719, %v786
      %v805 = vmul.f32 %v722, %v786
      %v806 = vmul.f32 %v727, %v786
      %v807 = vmul.f32 %v730, %v786
      %v808 = vmul.f32 %v735, %v786
      %v809 = vmul.f32 %v738, %v786
      %v810 = vmul.f32 %v743, %v786
      %v811 = vmul.f32 %v746, %v786
      %v812 = vmul.f32 %v751, %v786
      %v813 = vmul.f32 %v754, %v786
      %v814 = vmul.f32 %v759, %v786
      %v815 = vmul.f32 %v762, %v786
      %v816 = vmul.f32 %v767, %v786
      %v817 = vmul.f32 %v770, %v786
      %v818 = vmul.f32 %v775, %v786
      %v819 = vmul.f32 %v778, %v786
      %v820 = vld [vmem:[%s356] sm:$0xff]
      %v821 = vld [vmem:[%s356 + $0x8] sm:$0xff]
      %v822 = vld [vmem:[%s356 + $0x10] sm:$0xff]
      %v823 = vld [vmem:[%s356 + $0x18] sm:$0xff]
      %v824 = vld [vmem:[%s356 + $0x20] sm:$0xff]
      %v825 = vld [vmem:[%s356 + $0x28] sm:$0xff]
      %v826 = vld [vmem:[%s356 + $0x30] sm:$0xff]
      %v827 = vld [vmem:[%s356 + $0x38] sm:$0xff]
      %v828 = vld [vmem:[%s356 + $0x40] sm:$0xff]
      %v829 = vld [vmem:[%s356 + $0x48] sm:$0xff]
      %v830 = vld [vmem:[%s356 + $0x50] sm:$0xff]
      %v831 = vld [vmem:[%s356 + $0x58] sm:$0xff]
      %v832 = vld [vmem:[%s356 + $0x60] sm:$0xff]
      %v833 = vld [vmem:[%s356 + $0x68] sm:$0xff]
      %v834 = vld [vmem:[%s356 + $0x70] sm:$0xff]
      %v835 = vld [vmem:[%s356 + $0x78] sm:$0xff]
      %v836 = vld [vmem:[%s356 + $0x80] sm:$0xff]
      %v837 = vld [vmem:[%s356 + $0x88] sm:$0xff]
      %v838 = vld [vmem:[%s356 + $0x90] sm:$0xff]
      %v839 = vld [vmem:[%s356 + $0x98] sm:$0xff]
      %v840 = vld [vmem:[%s356 + $0xa0] sm:$0xff]
      %v841 = vld [vmem:[%s356 + $0xa8] sm:$0xff]
      %v842 = vld [vmem:[%s356 + $0xb0] sm:$0xff]
      %v843 = vld [vmem:[%s356 + $0xb8] sm:$0xff]
      %v844 = vld [vmem:[%s356 + $0xc0] sm:$0xff]
      %v845 = vld [vmem:[%s356 + $0xc8] sm:$0xff]
      %v846 = vld [vmem:[%s356 + $0xd0] sm:$0xff]
      %v847 = vld [vmem:[%s356 + $0xd8] sm:$0xff]
      %v848 = vld [vmem:[%s356 + $0xe0] sm:$0xff]
      %v849 = vld [vmem:[%s356 + $0xe8] sm:$0xff]
      %v850 = vld [vmem:[%s356 + $0xf0] sm:$0xff]
      %v851 = vld [vmem:[%s356 + $0xf8] sm:$0xff]
      %v852 = vadd.f32 %v788, %v820
      %v853 = vadd.f32 %v789, %v821
      %v854 = vadd.f32 %v790, %v822
      %v855 = vadd.f32 %v791, %v823
      %v856 = vadd.f32 %v792, %v824
      %v857 = vadd.f32 %v793, %v825
      %v858 = vadd.f32 %v794, %v826
      %v859 = vadd.f32 %v795, %v827
      %v860 = vadd.f32 %v796, %v828
      %v861 = vadd.f32 %v797, %v829
      %v862 = vadd.f32 %v798, %v830
      %v863 = vadd.f32 %v799, %v831
      %v864 = vadd.f32 %v800, %v832
      %v865 = vadd.f32 %v801, %v833
      %v866 = vadd.f32 %v802, %v834
      %v867 = vadd.f32 %v803, %v835
      %v868 = vadd.f32 %v804, %v836
      %v869 = vadd.f32 %v805, %v837
      %v870 = vadd.f32 %v806, %v838
      %v871 = vadd.f32 %v807, %v839
      %v872 = vadd.f32 %v808, %v840
      %v873 = vadd.f32 %v809, %v841
      %v874 = vadd.f32 %v810, %v842
      %v875 = vadd.f32 %v811, %v843
      %v876 = vadd.f32 %v812, %v844
      %v877 = vadd.f32 %v813, %v845
      %v878 = vadd.f32 %v814, %v846
      %v879 = vadd.f32 %v815, %v847
      %v880 = vadd.f32 %v816, %v848
      %v881 = vadd.f32 %v817, %v849
      %v882 = vadd.f32 %v818, %v850
      %v883 = vadd.f32 %v819, %v851
      %vm884 = vcmask 130048
      %885 = vst.msk [vmem:[%s366] sm:$0xff] %vm884, %v852
      %886 = vst.msk [vmem:[%s366 + $0x8] sm:$0xff] %vm884, %v853
      %887 = vst.msk [vmem:[%s366 + $0x10] sm:$0xff] %vm884, %v854
      %888 = vst.msk [vmem:[%s366 + $0x18] sm:$0xff] %vm884, %v855
      %889 = vst.msk [vmem:[%s366 + $0x20] sm:$0xff] %vm884, %v856
      %890 = vst.msk [vmem:[%s366 + $0x28] sm:$0xff] %vm884, %v857
      %891 = vst.msk [vmem:[%s366 + $0x30] sm:$0xff] %vm884, %v858
      %892 = vst.msk [vmem:[%s366 + $0x38] sm:$0xff] %vm884, %v859
      %893 = vst.msk [vmem:[%s366 + $0x40] sm:$0xff] %vm884, %v860
      %894 = vst.msk [vmem:[%s366 + $0x48] sm:$0xff] %vm884, %v861
      %895 = vst.msk [vmem:[%s366 + $0x50] sm:$0xff] %vm884, %v862
      %896 = vst.msk [vmem:[%s366 + $0x58] sm:$0xff] %vm884, %v863
      %897 = vst.msk [vmem:[%s366 + $0x60] sm:$0xff] %vm884, %v864
      %898 = vst.msk [vmem:[%s366 + $0x68] sm:$0xff] %vm884, %v865
      %899 = vst.msk [vmem:[%s366 + $0x70] sm:$0xff] %vm884, %v866
      %900 = vst.msk [vmem:[%s366 + $0x78] sm:$0xff] %vm884, %v867
      %901 = vst.msk [vmem:[%s366 + $0x80] sm:$0xff] %vm884, %v868
      %902 = vst.msk [vmem:[%s366 + $0x88] sm:$0xff] %vm884, %v869
      %903 = vst.msk [vmem:[%s366 + $0x90] sm:$0xff] %vm884, %v870
      %904 = vst.msk [vmem:[%s366 + $0x98] sm:$0xff] %vm884, %v871
      %905 = vst.msk [vmem:[%s366 + $0xa0] sm:$0xff] %vm884, %v872
      %906 = vst.msk [vmem:[%s366 + $0xa8] sm:$0xff] %vm884, %v873
      %907 = vst.msk [vmem:[%s366 + $0xb0] sm:$0xff] %vm884, %v874
      %908 = vst.msk [vmem:[%s366 + $0xb8] sm:$0xff] %vm884, %v875
      %909 = vst.msk [vmem:[%s366 + $0xc0] sm:$0xff] %vm884, %v876
      %910 = vst.msk [vmem:[%s366 + $0xc8] sm:$0xff] %vm884, %v877
      %911 = vst.msk [vmem:[%s366 + $0xd0] sm:$0xff] %vm884, %v878
      %912 = vst.msk [vmem:[%s366 + $0xd8] sm:$0xff] %vm884, %v879
      %913 = vst.msk [vmem:[%s366 + $0xe0] sm:$0xff] %vm884, %v880
      %914 = vst.msk [vmem:[%s366 + $0xe8] sm:$0xff] %vm884, %v881
      %915 = vst.msk [vmem:[%s366 + $0xf0] sm:$0xff] %vm884, %v882
      %916 = vst.msk [vmem:[%s366 + $0xf8] sm:$0xff] %vm884, %v883
      %s917 = smul.u32 32, %s23
      %p918 = scmp.lt.s32.totalorder %s22, 1
      %s919 = scalar_select %p918, %s22, 1
      %p920 = scmp.lt.s32.totalorder %s917, 31
      %s921 = scalar_select %p920, %s917, 31
      %s922 = smul.addr %s919, 32
      %s923 = sadd.s32 %s921, %s922
      %s924 = smul.addr %s923, 8
      %s925 = scalar_lea.vmem %s7, %s924
      // Predicated region
      $region49: #{se_bottleneck.9} parent=47 // pred_check
        %p926 = pneg %p216
      $region50: #{se_bottleneck.9} parent=47 // pred_check_branch
        %928 = sbr.rel (%p926) target = $region52
      $region51: #{se_bottleneck.9} parent=47 // pred_region
        %s929 = smul.u32 32, %s23
      $region52: #{se_bottleneck.9} parent=47 // pred_fallthru
        _
    $region48: #{se_bottleneck.9} parent=5 // pred_fallthru
      _
    %p930 = scmp.le.s32.totalorder 2, %s13
    // Predicated region
    $region53: #{se_bottleneck.9} parent=5 // pred_check
      %p931 = pneg %p930
    $region54: #{se_bottleneck.9} parent=5 // pred_check_branch
      %933 = sbr.rel (%p931) target = $region56
    $region55: #{se_bottleneck.9} parent=5 // pred_region
      %s934 = ssub.s32 %s13, 2
      // Predicated region
      $region57: #{se_bottleneck.9} parent=55 // pred_check
        %p935 = pneg %p222
      $region58: #{se_bottleneck.9} parent=55 // pred_check_branch
        %937 = sbr.rel (%p935) target = $region60
      $region59: #{se_bottleneck.9} parent=55 // pred_region
        %s938 = smul.u32 32, %s25
        %p939 = scmp.lt.s32.totalorder %s24, 1
        %s940 = scalar_select %p939, %s24, 1
        %p941 = scmp.lt.s32.totalorder %s938, 31
        %s942 = scalar_select %p941, %s938, 31
        %s943 = smul.addr %s940, 32
        %s944 = sadd.s32 %s942, %s943
        %s945 = smul.addr %s944, 8
        %s946 = scalar_lea.vmem %s7, %s945
      $region60: #{se_bottleneck.9} parent=55 // pred_fallthru
        _
    $region56: #{se_bottleneck.9} parent=5 // pred_fallthru
      _
  $region6: #{se_bottleneck.9} parent=0 // loop_footer
    %s17 = sadd.s32 1, %s13
  $region7: #{se_bottleneck.9} parent=0 // loop_footer_branch
    %12 = sbr.rel target = $region3
  $region8: #{se_bottleneck.9} parent=0 // loop_exit
    _

// kernel: se_bottleneck.7
$region0: #{se_bottleneck.7}
  #allocation0 [shape = 'u32[]', space=smem, size = 0x4, offset = 0x4, fixed_abs, tag = 'smem constant byte address 0x4 - core index']
  #allocation1 [shape = 'u32[144,128]{1,0:T(1,128)}', space=vmem, size = 0x12000, scoped, tag = 'internal scratch']
  #allocation2 [shape = 'f32[18,18,4]{2,1,0:T(8,128)}', space=vmem, size = 0x36000, scoped, tag = 'scratch operand']
  %s0 = inlined_call_operand.vmem [shape: bf16[2,16,16,4], index: 0, kind: input, shape index: {}]
  %s1 = inlined_call_operand.vmem [shape: f32[1,4], index: 1, kind: input, shape index: {}]
  %s2 = inlined_call_operand.vmem [shape: f32[1,4], index: 2, kind: input, shape index: {}]
  %s3 = inlined_call_operand.vmem [shape: bf16[9,4,4], index: 3, kind: input, shape index: {}]
  %s4 = inlined_call_operand.vmem [shape: f32[1,4], index: 4, kind: input, shape index: {}]
  %s5 = inlined_call_operand.vmem [shape: bf16[2,256,4], index: 5, kind: output, shape index: {0}]
  %s6 = inlined_call_operand.vmem [shape: f32[2,1,4], index: 6, kind: output, shape index: {1}]
  %s7 = inlined_call_operand.vmem [shape: f32[2,1,4], index: 7, kind: output, shape index: {2}]
  %8 = xla_tuple %s5, %s6, %s7
  %s9 = sld [smem:[#allocation0]]
  $region69: #{se_bottleneck.7} parent=0
    _
  %s11 = ssub.s32 1, %s9
  %s12 = scalar_select 0, %s11, %s9
  loop: start=0, step=1, limit=4
  $region2: #{se_bottleneck.7} parent=0 // loop_pre_header
    _
  $region3: #{se_bottleneck.7} parent=0 // loop_header
    %s14 = sphi 0, %s18
    %p15 = scmp.ge.s32.totalorder %s14, 4
    %s24 = sphi 0, %s26
    %s27 = sphi 0, %s24
    %s28 = sphi 0, %s27
    %s44 = sphi 0, %s28
    %s48 = sphi 0, %s48
    %s50 = sphi 0, %s48
    %s51 = sphi 0, %s50
    %s65 = sphi 0, %s51
    %s69 = sphi 0, %s69
    %s71 = sphi 0, %s69
    %s72 = sphi 0, %s71
    %s86 = sphi 0, %s72
    %s90 = sphi 0, %s90
    %s92 = sphi 0, %s90
    %s93 = sphi 0, %s92
    %s107 = sphi 0, %s93
    %s111 = sphi 0, %s111
    %s113 = sphi 0, %s111
    %s114 = sphi 0, %s113
    %s128 = sphi 0, %s114
    %s134 = sphi 0, %s136
    %s137 = sphi 0, %s134
    %s138 = sphi 0, %s137
    %s154 = sphi 0, %s138
    %s160 = sphi 0, %s162
    %s163 = sphi 0, %s160
    %s164 = sphi 0, %s163
    %s180 = sphi 0, %s164
    %s186 = sphi 0, %s188
    %s189 = sphi 0, %s186
    %s190 = sphi 0, %s189
    %s206 = sphi 0, %s190
  $region4: #{se_bottleneck.7} parent=0 // loop_header_branch
    %17 = sbr.rel (%p15) target = $region8
  $region5: #{se_bottleneck.7} parent=0 // loop_body
    %s19 = ssub.s32 %s14, 1
    %s20 = ssub.s32 %s14, 2
    %s21 = sadd.s32 %s14, 1
    %s22 = ssub.s32 %s14, %s21
    %p23 = scmp.eq.s32.totalorder %s22, 0
    %s25 = sadd.s32 %s24, 1
    %s26 = scalar_select %p23, %s24, %s25
    %p29 = pneg %p23
    %p30 = scmp.eq.s32.totalorder %s14, 1
    %p31 = por %p29, %p30
    %p32 = scmp.ne.s32.totalorder %s24, %s27
    %p33 = scmp.eq.s32.totalorder %s14, 0
    %p34 = por %p32, %p33
    %p35 = scmp.ne.s32.totalorder %s24, %s27
    %p36 = scmp.eq.s32.totalorder %s19, 1
    %p37 = por %p35, %p36
    %p38 = scmp.ne.s32.totalorder %s27, %s28
    %p39 = scmp.eq.s32.totalorder %s19, 0
    %p40 = por %p38, %p39
    %p41 = scmp.ne.s32.totalorder %s27, %s28
    %p42 = scmp.eq.s32.totalorder %s20, 1
    %p43 = por %p41, %p42
    %p45 = scmp.ne.s32.totalorder %s28, %s44
    %p46 = scmp.eq.s32.totalorder %s20, 0
    %p47 = por %p45, %p46
    %s49 = sadd.s32 %s48, 1
    %p52 = scmp.eq.s32.totalorder %s14, 1
    %p53 = scmp.ne.s32.totalorder %s48, %s50
    %p54 = scmp.eq.s32.totalorder %s14, 0
    %p55 = por %p53, %p54
    %p56 = scmp.ne.s32.totalorder %s48, %s50
    %p57 = scmp.eq.s32.totalorder %s19, 1
    %p58 = por %p56, %p57
    %p59 = scmp.ne.s32.totalorder %s50, %s51
    %p60 = scmp.eq.s32.totalorder %s19, 0
    %p61 = por %p59, %p60
    %p62 = scmp.ne.s32.totalorder %s50, %s51
    %p63 = scmp.eq.s32.totalorder %s20, 1
    %p64 = por %p62, %p63
    %p66 = scmp.ne.s32.totalorder %s51, %s65
    %p67 = scmp.eq.s32.totalorder %s20, 0
    %p68 = por %p66, %p67
    %s70 = sadd.s32 %s69, 1
    %p73 = scmp.eq.s32.totalorder %s14, 1
    %p74 = scmp.ne.s32.totalorder %s69, %s71
    %p75 = scmp.eq.s32.totalorder %s14, 0
    %p76 = por %p74, %p75
    %p77 = scmp.ne.s32.totalorder %s69, %s71
    %p78 = scmp.eq.s32.totalorder %s19, 1
    %p79 = por %p77, %p78
    %p80 = scmp.ne.s32.totalorder %s71, %s72
    %p81 = scmp.eq.s32.totalorder %s19, 0
    %p82 = por %p80, %p81
    %p83 = scmp.ne.s32.totalorder %s71, %s72
    %p84 = scmp.eq.s32.totalorder %s20, 1
    %p85 = por %p83, %p84
    %p87 = scmp.ne.s32.totalorder %s72, %s86
    %p88 = scmp.eq.s32.totalorder %s20, 0
    %p89 = por %p87, %p88
    %s91 = sadd.s32 %s90, 1
    %p94 = scmp.eq.s32.totalorder %s14, 1
    %p95 = scmp.ne.s32.totalorder %s90, %s92
    %p96 = scmp.eq.s32.totalorder %s14, 0
    %p97 = por %p95, %p96
    %p98 = scmp.ne.s32.totalorder %s90, %s92
    %p99 = scmp.eq.s32.totalorder %s19, 1
    %p100 = por %p98, %p99
    %p101 = scmp.ne.s32.totalorder %s92, %s93
    %p102 = scmp.eq.s32.totalorder %s19, 0
    %p103 = por %p101, %p102
    %p104 = scmp.ne.s32.totalorder %s92, %s93
    %p105 = scmp.eq.s32.totalorder %s20, 1
    %p106 = por %p104, %p105
    %p108 = scmp.ne.s32.totalorder %s93, %s107
    %p109 = scmp.eq.s32.totalorder %s20, 0
    %p110 = por %p108, %p109
    %s112 = sadd.s32 %s111, 1
    %p115 = scmp.eq.s32.totalorder %s14, 1
    %p116 = scmp.ne.s32.totalorder %s111, %s113
    %p117 = scmp.eq.s32.totalorder %s14, 0
    %p118 = por %p116, %p117
    %p119 = scmp.ne.s32.totalorder %s111, %s113
    %p120 = scmp.eq.s32.totalorder %s19, 1
    %p121 = por %p119, %p120
    %p122 = scmp.ne.s32.totalorder %s113, %s114
    %p123 = scmp.eq.s32.totalorder %s19, 0
    %p124 = por %p122, %p123
    %p125 = scmp.ne.s32.totalorder %s113, %s114
    %p126 = scmp.eq.s32.totalorder %s20, 1
    %p127 = por %p125, %p126
    %p129 = scmp.ne.s32.totalorder %s114, %s128
    %p130 = scmp.eq.s32.totalorder %s20, 0
    %p131 = por %p129, %p130
    %s132 = ssub.s32 %s14, %s21
    %p133 = scmp.eq.s32.totalorder %s132, 0
    %s135 = sadd.s32 %s134, 1
    %s136 = scalar_select %p133, %s134, %s135
    %p139 = pneg %p133
    %p140 = scmp.eq.s32.totalorder %s14, 1
    %p141 = por %p139, %p140
    %p142 = scmp.ne.s32.totalorder %s134, %s137
    %p143 = scmp.eq.s32.totalorder %s14, 0
    %p144 = por %p142, %p143
    %p145 = scmp.ne.s32.totalorder %s134, %s137
    %p146 = scmp.eq.s32.totalorder %s19, 1
    %p147 = por %p145, %p146
    %p148 = scmp.ne.s32.totalorder %s137, %s138
    %p149 = scmp.eq.s32.totalorder %s19, 0
    %p150 = por %p148, %p149
    %p151 = scmp.ne.s32.totalorder %s137, %s138
    %p152 = scmp.eq.s32.totalorder %s20, 1
    %p153 = por %p151, %p152
    %p155 = scmp.ne.s32.totalorder %s138, %s154
    %p156 = scmp.eq.s32.totalorder %s20, 0
    %p157 = por %p155, %p156
    %s158 = ssub.s32 %s14, %s21
    %p159 = scmp.eq.s32.totalorder %s158, 0
    %s161 = sadd.s32 %s160, 1
    %s162 = scalar_select %p159, %s160, %s161
    %p165 = pneg %p159
    %p166 = scmp.eq.s32.totalorder %s14, 1
    %p167 = por %p165, %p166
    %p168 = scmp.ne.s32.totalorder %s160, %s163
    %p169 = scmp.eq.s32.totalorder %s14, 0
    %p170 = por %p168, %p169
    %p171 = scmp.ne.s32.totalorder %s160, %s163
    %p172 = scmp.eq.s32.totalorder %s19, 1
    %p173 = por %p171, %p172
    %p174 = scmp.ne.s32.totalorder %s163, %s164
    %p175 = scmp.eq.s32.totalorder %s19, 0
    %p176 = por %p174, %p175
    %p177 = scmp.ne.s32.totalorder %s163, %s164
    %p178 = scmp.eq.s32.totalorder %s20, 1
    %p179 = por %p177, %p178
    %p181 = scmp.ne.s32.totalorder %s164, %s180
    %p182 = scmp.eq.s32.totalorder %s20, 0
    %p183 = por %p181, %p182
    %s184 = ssub.s32 %s14, %s21
    %p185 = scmp.eq.s32.totalorder %s184, 0
    %s187 = sadd.s32 %s186, 1
    %s188 = scalar_select %p185, %s186, %s187
    %p191 = pneg %p185
    %p192 = scmp.eq.s32.totalorder %s14, 1
    %p193 = por %p191, %p192
    %p194 = scmp.ne.s32.totalorder %s186, %s189
    %p195 = scmp.eq.s32.totalorder %s14, 0
    %p196 = por %p194, %p195
    %p197 = scmp.ne.s32.totalorder %s186, %s189
    %p198 = scmp.eq.s32.totalorder %s19, 1
    %p199 = por %p197, %p198
    %p200 = scmp.ne.s32.totalorder %s189, %s190
    %p201 = scmp.eq.s32.totalorder %s19, 0
    %p202 = por %p200, %p201
    %p203 = scmp.ne.s32.totalorder %s189, %s190
    %p204 = scmp.eq.s32.totalorder %s20, 1
    %p205 = por %p203, %p204
    %p207 = scmp.ne.s32.totalorder %s190, %s206
    %p208 = scmp.eq.s32.totalorder %s20, 0
    %p209 = por %p207, %p208
    %p210 = scmp.le.s32.totalorder 1, %s14
    %p211 = scmp.lt.s32.totalorder %s14, 3
    %p212 = pnand %p210, %p211
    %p213 = pneg %p212
    // Predicated region
    $region9: #{se_bottleneck.7} parent=5 // pred_check
      _
    $region10: #{se_bottleneck.7} parent=5 // pred_check_branch
      %215 = sbr.rel (%p212) target = $region12
    $region11: #{se_bottleneck.7} parent=5 // pred_region
      %s216 = ssub.s32 %s14, 1
      // Predicated region
      $region13: #{se_bottleneck.7} parent=11 // pred_check
        %p217 = pneg %p61
      $region14: #{se_bottleneck.7} parent=11 // pred_check_branch
        %219 = sbr.rel (%p217) target = $region16
      $region15: #{se_bottleneck.7} parent=11 // pred_region
        _
      $region16: #{se_bottleneck.7} parent=11 // pred_fallthru
        _
      // Predicated region
      $region17: #{se_bottleneck.7} parent=11 // pred_check
        %p220 = pneg %p82
      $region18: #{se_bottleneck.7} parent=11 // pred_check_branch
        %222 = sbr.rel (%p220) target = $region20
      $region19: #{se_bottleneck.7} parent=11 // pred_region
        _
      $region20: #{se_bottleneck.7} parent=11 // pred_fallthru
        _
      // Predicated region
      $region21: #{se_bottleneck.7} parent=11 // pred_check
        %p223 = pneg %p103
      $region22: #{se_bottleneck.7} parent=11 // pred_check_branch
        %225 = sbr.rel (%p223) target = $region24
      $region23: #{se_bottleneck.7} parent=11 // pred_region
        _
      $region24: #{se_bottleneck.7} parent=11 // pred_fallthru
        _
      // Predicated region
      $region25: #{se_bottleneck.7} parent=11 // pred_check
        %p226 = pneg %p124
      $region26: #{se_bottleneck.7} parent=11 // pred_check_branch
        %228 = sbr.rel (%p226) target = $region28
      $region27: #{se_bottleneck.7} parent=11 // pred_region
        _
      $region28: #{se_bottleneck.7} parent=11 // pred_fallthru
        _
    $region12: #{se_bottleneck.7} parent=5 // pred_fallthru
      _
    %p229 = scmp.lt.s32.totalorder %s14, 2
    // Predicated region
    $region29: #{se_bottleneck.7} parent=5 // pred_check
      %p230 = pneg %p229
    $region30: #{se_bottleneck.7} parent=5 // pred_check_branch
      %232 = sbr.rel (%p230) target = $region32
    $region31: #{se_bottleneck.7} parent=5 // pred_region
      // Predicated region
      $region33: #{se_bottleneck.7} parent=31 // pred_check
        %p233 = pneg %p34
      $region34: #{se_bottleneck.7} parent=31 // pred_check_branch
        %235 = sbr.rel (%p233) target = $region36
      $region35: #{se_bottleneck.7} parent=31 // pred_region
        %p236 = scmp.lt.s32.totalorder %s14, 1
        %s237 = scalar_select %p236, %s14, 1
        %s238 = smul.addr %s237, 32
        %s239 = smul.addr %s238, 4
        %s240 = scalar_lea.vmem %s0, %s239
      $region36: #{se_bottleneck.7} parent=31 // pred_fallthru
        _
    $region32: #{se_bottleneck.7} parent=5 // pred_fallthru
      _
    %p241 = scmp.le.s32.totalorder 1, %s14
    %p242 = scmp.lt.s32.totalorder %s14, 3
    %p243 = pnand %p241, %p242
    %p244 = pneg %p243
    // Predicated region
    $region37: #{se_bottleneck.7} parent=5 // pred_check
      _
    $region38: #{se_bottleneck.7} parent=5 // pred_check_branch
      %246 = sbr.rel (%p243) target = $region40
    $region39: #{se_bottleneck.7} parent=5 // pred_region
      %s247 = ssub.s32 %s14, 1
      %p248 = scmp.lt.s32.totalorder %s19, 1
      %s249 = scalar_select %p248, %s19, 1
      %s250 = smul.addr %s249, 32
      %s251 = smul.addr %s250, 4
      %s252 = scalar_lea.vmem %s0, %s251
      %p253 = pneg %p40
      %p254 = pneg %p37
      %p255 = pneg %p61
      %p256 = pneg %p58
      %p257 = pneg %p82
      %p258 = pneg %p79
      %p259 = pneg %p103
      %p260 = pneg %p100
      %p261 = pneg %p124
      %p262 = pneg %p121
      %p263 = pneg %p150
      %p264 = pneg %p147
      %p265 = scmp.lt.s32.totalorder %s19, 1
      %s266 = scalar_select %p265, %s19, 1
      %s267 = smul.addr %s266, 32
      %s268 = smul.addr %s267, 4
      %s269 = scalar_lea.vmem %s5, %s268
      %p270 = pneg %p176
      %p271 = pneg %p173
      %p272 = scmp.lt.s32.totalorder %s19, 1
      %s273 = scalar_select %p272, %s19, 1
      %s274 = scalar_lea.vmem %s6, %s273
      %p275 = pneg %p202
      %p276 = pneg %p199
      %p277 = scmp.lt.s32.totalorder %s19, 1
      %s278 = scalar_select %p277, %s19, 1
      %s279 = scalar_lea.vmem %s7, %s278
      %p280 = scmp.lt.s32.totalorder %s19, 1
      %s281 = scalar_select %p280, %s19, 1
      %s282 = smul.addr %s281, 32
      %s283 = smul.addr %s282, 4
      %s284 = scalar_lea.vmem %s0, %s283
      %p285 = scmp.lt.s32.totalorder %s19, 1
      %s286 = scalar_select %p285, %s19, 1
      %s287 = smul.addr %s286, 32
      %s288 = smul.addr %s287, 4
      %s289 = scalar_lea.vmem %s5, %s288
      %p290 = scmp.lt.s32.totalorder %s19, 1
      %s291 = scalar_select %p290, %s19, 1
      %s292 = scalar_lea.vmem %s6, %s291
      %p293 = scmp.lt.s32.totalorder %s19, 1
      %s294 = scalar_select %p293, %s19, 1
      %s295 = scalar_lea.vmem %s7, %s294
      %vm297 = vcmask 31744
      %298 = vst.msk [vmem:[#allocation2] sm:$0xff] %vm297, 0.0
      %299 = vst.msk [vmem:[#allocation2 + $0x8] sm:$0xff] %vm297, 0.0
      %vm300 = vcmask 25600
      %301 = vst.msk [vmem:[#allocation2 + $0x10] sm:$0x3] %vm300, 0.0
      %s302 = scalar_lea.vmem [#allocation2], 408
      %303 = vst.msk [vmem:[%s302] sm:$0xff] %vm297, 0.0
      %304 = vst.msk [vmem:[%s302 + $0x8] sm:$0xff] %vm297, 0.0
      %305 = vst.msk [vmem:[%s302 + $0x10] sm:$0x3] %vm300, 0.0
      %vm306 = vcmask 24576
      %307 = vst.msk [vmem:[#allocation2] sm:$0x1] %vm306, 0.0
      %308 = vst.msk [vmem:[#allocation2 + $0x18] sm:$0x1] %vm306, 0.0
      %309 = vst.msk [vmem:[#allocation2 + $0x30] sm:$0x1] %vm306, 0.0
      %310 = vst.msk [vmem:[#allocation2 + $0x48] sm:$0x1] %vm306, 0.0
      %311 = vst.msk [vmem:[#allocation2 + $0x60] sm:$0x1] %vm306, 0.0
      %312 = vst.msk [vmem:[#allocation2 + $0x78] sm:$0x1] %vm306, 0.0
      %313 = vst.msk [vmem:[#allocation2 + $0x90] sm:$0x1] %vm306, 0.0
      %314 = vst.msk [vmem:[#allocation2 + $0xa8] sm:$0x1] %vm306, 0.0
      %315 = vst.msk [vmem:[#allocation2 + $0xc0] sm:$0x1] %vm306, 0.0
      %316 = vst.msk [vmem:[#allocation2 + $0xd8] sm:$0x1] %vm306, 0.0
      %317 = vst.msk [vmem:[#allocation2 + $0xf0] sm:$0x1] %vm306, 0.0
      %318 = vst.msk [vmem:[#allocation2 + $0x108] sm:$0x1] %vm306, 0.0
      %319 = vst.msk [vmem:[#allocation2 + $0x120] sm:$0x1] %vm306, 0.0
      %320 = vst.msk [vmem:[#allocation2 + $0x138] sm:$0x1] %vm306, 0.0
      %321 = vst.msk [vmem:[#allocation2 + $0x150] sm:$0x1] %vm306, 0.0
      %322 = vst.msk [vmem:[#allocation2 + $0x168] sm:$0x1] %vm306, 0.0
      %323 = vst.msk [vmem:[#allocation2 + $0x180] sm:$0x1] %vm306, 0.0
      %324 = vst.msk [vmem:[#allocation2 + $0x198] sm:$0x1] %vm306, 0.0
      %325 = vst.msk [vmem:[#allocation2 + $0x11] sm:$0x1] %vm306, 0.0
      %326 = vst.msk [vmem:[#allocation2 + $0x29] sm:$0x1] %vm306, 0.0
      %327 = vst.msk [vmem:[#allocation2 + $0x41] sm:$0x1] %vm306, 0.0
      %328 = vst.msk [vmem:[#allocation2 + $0x59] sm:$0x1] %vm306, 0.0
      %329 = vst.msk [vmem:[#allocation2 + $0x71] sm:$0x1] %vm306, 0.0
      %330 = vst.msk [vmem:[#allocation2 + $0x89] sm:$0x1] %vm306, 0.0
      %331 = vst.msk [vmem:[#allocation2 + $0xa1] sm:$0x1] %vm306, 0.0
      %332 = vst.msk [vmem:[#allocation2 + $0xb9] sm:$0x1] %vm306, 0.0
      %333 = vst.msk [vmem:[#allocation2 + $0xd1] sm:$0x1] %vm306, 0.0
      %334 = vst.msk [vmem:[#allocation2 + $0xe9] sm:$0x1] %vm306, 0.0
      %335 = vst.msk [vmem:[#allocation2 + $0x101] sm:$0x1] %vm306, 0.0
      %336 = vst.msk [vmem:[#allocation2 + $0x119] sm:$0x1] %vm306, 0.0
      %337 = vst.msk [vmem:[#allocation2 + $0x131] sm:$0x1] %vm306, 0.0
      %338 = vst.msk [vmem:[#allocation2 + $0x149] sm:$0x1] %vm306, 0.0
      %339 = vst.msk [vmem:[#allocation2 + $0x161] sm:$0x1] %vm306, 0.0
      %340 = vst.msk [vmem:[#allocation2 + $0x179] sm:$0x1] %vm306, 0.0
      %341 = vst.msk [vmem:[#allocation2 + $0x191] sm:$0x1] %vm306, 0.0
      %342 = vst.msk [vmem:[#allocation2 + $0x1a9] sm:$0x1] %vm306, 0.0
      %v343 = vld [vmem:[%s284] sm:$0xf]
      %v344 = vld [vmem:[%s284 + $0x4] sm:$0xf]
      %v345 = vld [vmem:[%s284 + $0x8] sm:$0xf]
      %v346 = vld [vmem:[%s284 + $0xc] sm:$0xf]
      %v347 = vld [vmem:[%s284 + $0x10] sm:$0xf]
      %v348 = vld [vmem:[%s284 + $0x14] sm:$0xf]
      %v349 = vld [vmem:[%s284 + $0x18] sm:$0xf]
      %v350 = vld [vmem:[%s284 + $0x1c] sm:$0xf]
      %v351 = vld [vmem:[%s284 + $0x20] sm:$0xf]
      %v352 = vld [vmem:[%s284 + $0x24] sm:$0xf]
      %v353 = vld [vmem:[%s284 + $0x28] sm:$0xf]
      %v354 = vld [vmem:[%s284 + $0x2c] sm:$0xf]
      %v355 = vld [vmem:[%s284 + $0x30] sm:$0xf]
      %v356 = vld [vmem:[%s284 + $0x34] sm:$0xf]
      %v357 = vld [vmem:[%s284 + $0x38] sm:$0xf]
      %v358 = vld [vmem:[%s284 + $0x3c] sm:$0xf]
      %v359 = vld [vmem:[%s284 + $0x40] sm:$0xf]
      %v360 = vld [vmem:[%s284 + $0x44] sm:$0xf]
      %v361 = vld [vmem:[%s284 + $0x48] sm:$0xf]
      %v362 = vld [vmem:[%s284 + $0x4c] sm:$0xf]
      %v363 = vld [vmem:[%s284 + $0x50] sm:$0xf]
      %v364 = vld [vmem:[%s284 + $0x54] sm:$0xf]
      %v365 = vld [vmem:[%s284 + $0x58] sm:$0xf]
      %v366 = vld [vmem:[%s284 + $0x5c] sm:$0xf]
      %v367 = vld [vmem:[%s284 + $0x60] sm:$0xf]
      %v368 = vld [vmem:[%s284 + $0x64] sm:$0xf]
      %v369 = vld [vmem:[%s284 + $0x68] sm:$0xf]
      %v370 = vld [vmem:[%s284 + $0x6c] sm:$0xf]
      %v371 = vld [vmem:[%s284 + $0x70] sm:$0xf]
      %v372 = vld [vmem:[%s284 + $0x74] sm:$0xf]
      %v373 = vld [vmem:[%s284 + $0x78] sm:$0xf]
      %v374 = vld [vmem:[%s284 + $0x7c] sm:$0xf]
      %v375 = vunpack.c.l.bf16 %v343
      %v376 = vunpack.c.l.bf16 %v344
      %v377 = vunpack.c.l.bf16 %v345
      %v378 = vunpack.c.l.bf16 %v346
      %v379 = vunpack.c.l.bf16 %v347
      %v380 = vunpack.c.l.bf16 %v348
      %v381 = vunpack.c.l.bf16 %v349
      %v382 = vunpack.c.l.bf16 %v350
      %v383 = vunpack.c.l.bf16 %v351
      %v384 = vunpack.c.l.bf16 %v352
      %v385 = vunpack.c.l.bf16 %v353
      %v386 = vunpack.c.l.bf16 %v354
      %v387 = vunpack.c.l.bf16 %v355
      %v388 = vunpack.c.l.bf16 %v356
      %v389 = vunpack.c.l.bf16 %v357
      %v390 = vunpack.c.l.bf16 %v358
      %v391 = vunpack.c.l.bf16 %v359
      %v392 = vunpack.c.l.bf16 %v360
      %v393 = vunpack.c.l.bf16 %v361
      %v394 = vunpack.c.l.bf16 %v362
      %v395 = vunpack.c.l.bf16 %v363
      %v396 = vunpack.c.l.bf16 %v364
      %v397 = vunpack.c.l.bf16 %v365
      %v398 = vunpack.c.l.bf16 %v366
      %v399 = vunpack.c.l.bf16 %v367
      %v400 = vunpack.c.l.bf16 %v368
      %v401 = vunpack.c.l.bf16 %v369
      %v402 = vunpack.c.l.bf16 %v370
      %v403 = vunpack.c.l.bf16 %v371
      %v404 = vunpack.c.l.bf16 %v372
      %v405 = vunpack.c.l.bf16 %v373
      %v406 = vunpack.c.l.bf16 %v374
      %v407 = vld [vmem:[%s1] sm:$0x1]
      %v409 = vlaneseq
      %v410 = vshrl.u32 %v409, 7
      %v411 = vsub.s32 0, %v410
      %v412 = vrot.slane %v407, %v411
      %v414 = vmul.f32 %v375, %v412
      %v415 = vmul.f32 %v376, %v412
      %v416 = vmul.f32 %v377, %v412
      %v417 = vmul.f32 %v378, %v412
      %v418 = vmul.f32 %v379, %v412
      %v419 = vmul.f32 %v380, %v412
      %v420 = vmul.f32 %v381, %v412
      %v421 = vmul.f32 %v382, %v412
      %v422 = vmul.f32 %v383, %v412
      %v423 = vmul.f32 %v384, %v412
      %v424 = vmul.f32 %v385, %v412
      %v425 = vmul.f32 %v386, %v412
      %v426 = vmul.f32 %v387, %v412
      %v427 = vmul.f32 %v388, %v412
      %v428 = vmul.f32 %v389, %v412
      %v429 = vmul.f32 %v390, %v412
      %v430 = vmul.f32 %v391, %v412
      %v431 = vmul.f32 %v392, %v412
      %v432 = vmul.f32 %v393, %v412
      %v433 = vmul.f32 %v394, %v412
      %v434 = vmul.f32 %v395, %v412
      %v435 = vmul.f32 %v396, %v412
      %v436 = vmul.f32 %v397, %v412
      %v437 = vmul.f32 %v398, %v412
      %v438 = vmul.f32 %v399, %v412
      %v439 = vmul.f32 %v400, %v412
      %v440 = vmul.f32 %v401, %v412
      %v441 = vmul.f32 %v402, %v412
      %v442 = vmul.f32 %v403, %v412
      %v443 = vmul.f32 %v404, %v412
      %v444 = vmul.f32 %v405, %v412
      %v445 = vmul.f32 %v406, %v412
      %v446 = vld [vmem:[%s2] sm:$0x1]
      %v448 = vlaneseq
      %v449 = vshrl.u32 %v448, 7
      %v450 = vsub.s32 0, %v449
      %v451 = vrot.slane %v446, %v450
      %v453 = vadd.f32 %v414, %v451
      %v454 = vadd.f32 %v415, %v451
      %v455 = vadd.f32 %v416, %v451
      %v456 = vadd.f32 %v417, %v451
      %v457 = vadd.f32 %v418, %v451
      %v458 = vadd.f32 %v419, %v451
      %v459 = vadd.f32 %v420, %v451
      %v460 = vadd.f32 %v421, %v451
      %v461 = vadd.f32 %v422, %v451
      %v462 = vadd.f32 %v423, %v451
      %v463 = vadd.f32 %v424, %v451
      %v464 = vadd.f32 %v425, %v451
      %v465 = vadd.f32 %v426, %v451
      %v466 = vadd.f32 %v427, %v451
      %v467 = vadd.f32 %v428, %v451
      %v468 = vadd.f32 %v429, %v451
      %v469 = vadd.f32 %v430, %v451
      %v470 = vadd.f32 %v431, %v451
      %v471 = vadd.f32 %v432, %v451
      %v472 = vadd.f32 %v433, %v451
      %v473 = vadd.f32 %v434, %v451
      %v474 = vadd.f32 %v435, %v451
      %v475 = vadd.f32 %v436, %v451
      %v476 = vadd.f32 %v437, %v451
      %v477 = vadd.f32 %v438, %v451
      %v478 = vadd.f32 %v439, %v451
      %v479 = vadd.f32 %v440, %v451
      %v480 = vadd.f32 %v441, %v451
      %v481 = vadd.f32 %v442, %v451
      %v482 = vadd.f32 %v443, %v451
      %v483 = vadd.f32 %v444, %v451
      %v484 = vadd.f32 %v445, %v451
      %v485 = vmax.f32 %v453, 0.0
      %v486 = vmax.f32 %v454, 0.0
      %v487 = vmax.f32 %v455, 0.0
      %v488 = vmax.f32 %v456, 0.0
      %v489 = vmax.f32 %v457, 0.0
      %v490 = vmax.f32 %v458, 0.0
      %v491 = vmax.f32 %v459, 0.0
      %v492 = vmax.f32 %v460, 0.0
      %v493 = vmax.f32 %v461, 0.0
      %v494 = vmax.f32 %v462, 0.0
      %v495 = vmax.f32 %v463, 0.0
      %v496 = vmax.f32 %v464, 0.0
      %v497 = vmax.f32 %v465, 0.0
      %v498 = vmax.f32 %v466, 0.0
      %v499 = vmax.f32 %v467, 0.0
      %v500 = vmax.f32 %v468, 0.0
      %v501 = vmax.f32 %v469, 0.0
      %v502 = vmax.f32 %v470, 0.0
      %v503 = vmax.f32 %v471, 0.0
      %v504 = vmax.f32 %v472, 0.0
      %v505 = vmax.f32 %v473, 0.0
      %v506 = vmax.f32 %v474, 0.0
      %v507 = vmax.f32 %v475, 0.0
      %v508 = vmax.f32 %v476, 0.0
      %v509 = vmax.f32 %v477, 0.0
      %v510 = vmax.f32 %v478, 0.0
      %v511 = vmax.f32 %v479, 0.0
      %v512 = vmax.f32 %v480, 0.0
      %v513 = vmax.f32 %v481, 0.0
      %v514 = vmax.f32 %v482, 0.0
      %v515 = vmax.f32 %v483, 0.0
      %v516 = vmax.f32 %v484, 0.0
      %s517 = scalar_lea.vmem [#allocation2], 24
      %518 = vst.msk [vmem:[%s517 + $0x1] sm:$0xff] %vm297, %v485
      %519 = vst.msk [vmem:[%s517 + $0x9] sm:$0xff] %vm297, %v486
      %520 = vst.msk [vmem:[%s517 + $0x19] sm:$0xff] %vm297, %v487
      %521 = vst.msk [vmem:[%s517 + $0x21] sm:$0xff] %vm297, %v488
      %522 = vst.msk [vmem:[%s517 + $0x31] sm:$0xff] %vm297, %v489
      %523 = vst.msk [vmem:[%s517 + $0x39] sm:$0xff] %vm297, %v490
      %524 = vst.msk [vmem:[%s517 + $0x49] sm:$0xff] %vm297, %v491
      %525 = vst.msk [vmem:[%s517 + $0x51] sm:$0xff] %vm297, %v492
      %526 = vst.msk [vmem:[%s517 + $0x61] sm:$0xff] %vm297, %v493
      %527 = vst.msk [vmem:[%s517 + $0x69] sm:$0xff] %vm297, %v494
      %528 = vst.msk [vmem:[%s517 + $0x79] sm:$0xff] %vm297, %v495
      %529 = vst.msk [vmem:[%s517 + $0x81] sm:$0xff] %vm297, %v496
      %530 = vst.msk [vmem:[%s517 + $0x91] sm:$0xff] %vm297, %v497
      %531 = vst.msk [vmem:[%s517 + $0x99] sm:$0xff] %vm297, %v498
      %532 = vst.msk [vmem:[%s517 + $0xa9] sm:$0xff] %vm297, %v499
      %533 = vst.msk [vmem:[%s517 + $0xb1] sm:$0xff] %vm297, %v500
      %534 = vst.msk [vmem:[%s517 + $0xc1] sm:$0xff] %vm297, %v501
      %535 = vst.msk [vmem:[%s517 + $0xc9] sm:$0xff] %vm297, %v502
      %536 = vst.msk [vmem:[%s517 + $0xd9] sm:$0xff] %vm297, %v503
      %537 = vst.msk [vmem:[%s517 + $0xe1] sm:$0xff] %vm297, %v504
      %538 = vst.msk [vmem:[%s517 + $0xf1] sm:$0xff] %vm297, %v505
      %539 = vst.msk [vmem:[%s517 + $0xf9] sm:$0xff] %vm297, %v506
      %540 = vst.msk [vmem:[%s517 + $0x109] sm:$0xff] %vm297, %v507
      %541 = vst.msk [vmem:[%s517 + $0x111] sm:$0xff] %vm297, %v508
      %542 = vst.msk [vmem:[%s517 + $0x121] sm:$0xff] %vm297, %v509
      %543 = vst.msk [vmem:[%s517 + $0x129] sm:$0xff] %vm297, %v510
      %544 = vst.msk [vmem:[%s517 + $0x139] sm:$0xff] %vm297, %v511
      %545 = vst.msk [vmem:[%s517 + $0x141] sm:$0xff] %vm297, %v512
      %546 = vst.msk [vmem:[%s517 + $0x151] sm:$0xff] %vm297, %v513
      %547 = vst.msk [vmem:[%s517 + $0x159] sm:$0xff] %vm297, %v514
      %548 = vst.msk [vmem:[%s517 + $0x169] sm:$0xff] %vm297, %v515
      %549 = vst.msk [vmem:[%s517 + $0x171] sm:$0xff] %vm297, %v516
      %v550 = vld [vmem:[#allocation2] sm:$0xff]
      %v551 = vld [vmem:[#allocation2 + $0x8] sm:$0xff]
      %v552 = vld [vmem:[#allocation2 + $0x18] sm:$0xff]
      %v553 = vld [vmem:[#allocation2 + $0x20] sm:$0xff]
      %v554 = vld [vmem:[#allocation2 + $0x30] sm:$0xff]
      %v555 = vld [vmem:[#allocation2 + $0x38] sm:$0xff]
      %v556 = vld [vmem:[#allocation2 + $0x48] sm:$0xff]
      %v557 = vld [vmem:[#allocation2 + $0x50] sm:$0xff]
      %v558 = vld [vmem:[#allocation2 + $0x60] sm:$0xff]
      %v559 = vld [vmem:[#allocation2 + $0x68] sm:$0xff]
      %v560 = vld [vmem:[#allocation2 + $0x78] sm:$0xff]
      %v561 = vld [vmem:[#allocation2 + $0x80] sm:$0xff]
      %v562 = vld [vmem:[#allocation2 + $0x90] sm:$0xff]
      %v563 = vld [vmem:[#allocation2 + $0x98] sm:$0xff]
      %v564 = vld [vmem:[#allocation2 + $0xa8] sm:$0xff]
      %v565 = vld [vmem:[#allocation2 + $0xb0] sm:$0xff]
      %v566 = vld [vmem:[#allocation2 + $0xc0] sm:$0xff]
      %v567 = vld [vmem:[#allocation2 + $0xc8] sm:$0xff]
      %v568 = vld [vmem:[#allocation2 + $0xd8] sm:$0xff]
      %v569 = vld [vmem:[#allocation2 + $0xe0] sm:$0xff]
      %v570 = vld [vmem:[#allocation2 + $0xf0] sm:$0xff]
      %v571 = vld [vmem:[#allocation2 + $0xf8] sm:$0xff]
      %v572 = vld [vmem:[#allocation2 + $0x108] sm:$0xff]
      %v573 = vld [vmem:[#allocation2 + $0x110] sm:$0xff]
      %v574 = vld [vmem:[#allocation2 + $0x120] sm:$0xff]
      %v575 = vld [vmem:[#allocation2 + $0x128] sm:$0xff]
      %v576 = vld [vmem:[#allocation2 + $0x138] sm:$0xff]
      %v577 = vld [vmem:[#allocation2 + $0x140] sm:$0xff]
      %v578 = vld [vmem:[#allocation2 + $0x150] sm:$0xff]
      %v579 = vld [vmem:[#allocation2 + $0x158] sm:$0xff]
      %v580 = vld [vmem:[#allocation2 + $0x168] sm:$0xff]
      %v581 = vld [vmem:[#allocation2 + $0x170] sm:$0xff]
      %v582 = vpack.c.bf16 %v551, %v550
      %v583 = vpack.c.bf16 %v553, %v552
      %v584 = vpack.c.bf16 %v555, %v554
      %v585 = vpack.c.bf16 %v557, %v556
      %v586 = vpack.c.bf16 %v559, %v558
      %v587 = vpack.c.bf16 %v561, %v560
      %v588 = vpack.c.bf16 %v563, %v562
      %v589 = vpack.c.bf16 %v565, %v564
      %v590 = vpack.c.bf16 %v567, %v566
      %v591 = vpack.c.bf16 %v569, %v568
      %v592 = vpack.c.bf16 %v571, %v570
      %v593 = vpack.c.bf16 %v573, %v572
      %v594 = vpack.c.bf16 %v575, %v574
      %v595 = vpack.c.bf16 %v577, %v576
      %v596 = vpack.c.bf16 %v579, %v578
      %v597 = vpack.c.bf16 %v581, %v580
      %v598 = vld [vmem:[%s3] sm:$0x3]
      %v599 = vld [vmem:[#allocation2 + $0x1] sm:$0xff]
      %v600 = vld [vmem:[#allocation2 + $0x9] sm:$0xff]
      %v601 = vld [vmem:[#allocation2 + $0x19] sm:$0xff]
      %v602 = vld [vmem:[#allocation2 + $0x21] sm:$0xff]
      %v603 = vld [vmem:[#allocation2 + $0x31] sm:$0xff]
      %v604 = vld [vmem:[#allocation2 + $0x39] sm:$0xff]
      %v605 = vld [vmem:[#allocation2 + $0x49] sm:$0xff]
      %v606 = vld [vmem:[#allocation2 + $0x51] sm:$0xff]
      %v607 = vld [vmem:[#allocation2 + $0x61] sm:$0xff]
      %v608 = vld [vmem:[#allocation2 + $0x69] sm:$0xff]
      %v609 = vld [vmem:[#allocation2 + $0x79] sm:$0xff]
      %v610 = vld [vmem:[#allocation2 + $0x81] sm:$0xff]
      %v611 = vld [vmem:[#allocation2 + $0x91] sm:$0xff]
      %v612 = vld [vmem:[#allocation2 + $0x99] sm:$0xff]
      %v613 = vld [vmem:[#allocation2 + $0xa9] sm:$0xff]
      %v614 = vld [vmem:[#allocation2 + $0xb1] sm:$0xff]
      %v615 = vld [vmem:[#allocation2 + $0xc1] sm:$0xff]
      %v616 = vld [vmem:[#allocation2 + $0xc9] sm:$0xff]
      %v617 = vld [vmem:[#allocation2 + $0xd9] sm:$0xff]
      %v618 = vld [vmem:[#allocation2 + $0xe1] sm:$0xff]
      %v619 = vld [vmem:[#allocation2 + $0xf1] sm:$0xff]
      %v620 = vld [vmem:[#allocation2 + $0xf9] sm:$0xff]
      %v621 = vld [vmem:[#allocation2 + $0x109] sm:$0xff]
      %v622 = vld [vmem:[#allocation2 + $0x111] sm:$0xff]
      %v623 = vld [vmem:[#allocation2 + $0x121] sm:$0xff]
      %v624 = vld [vmem:[#allocation2 + $0x129] sm:$0xff]
      %v625 = vld [vmem:[#allocation2 + $0x139] sm:$0xff]
      %v626 = vld [vmem:[#allocation2 + $0x141] sm:$0xff]
      %v627 = vld [vmem:[#allocation2 + $0x151] sm:$0xff]
      %v628 = vld [vmem:[#allocation2 + $0x159] sm:$0xff]
      %v629 = vld [vmem:[#allocation2 + $0x169] sm:$0xff]
      %v630 = vld [vmem:[#allocation2 + $0x171] sm:$0xff]
      %v631 = vpack.c.bf16 %v600, %v599
      %v632 = vpack.c.bf16 %v602, %v601
      %v633 = vpack.c.bf16 %v604, %v603
      %v634 = vpack.c.bf16 %v606, %v605
      %v635 = vpack.c.bf16 %v608, %v607
      %v636 = vpack.c.bf16 %v610, %v609
      %v637 = vpack.c.bf16 %v612, %v611
      %v638 = vpack.c.bf16 %v614, %v613
      %v639 = vpack.c.bf16 %v616, %v615
      %v640 = vpack.c.bf16 %v618, %v617
      %v641 = vpack.c.bf16 %v620, %v619
      %v642 = vpack.c.bf16 %v622, %v621
      %v643 = vpack.c.bf16 %v624, %v623
      %v644 = vpack.c.bf16 %v626, %v625
      %v645 = vpack.c.bf16 %v628, %v627
      %v646 = vpack.c.bf16 %v630, %v629
      %s647 = scalar_lea.vmem %s3, 2
      %v648 = vld [vmem:[%s647] sm:$0x3]
      %v650 = vsel %vm297, %v631, 0
      %v653 = vsel %vm297, %v632, 0
      %v656 = vsel %vm297, %v633, 0
      %v659 = vsel %vm297, %v634, 0
      %v662 = vsel %vm297, %v635, 0
      %v665 = vsel %vm297, %v636, 0
      %v668 = vsel %vm297, %v637, 0
      %v671 = vsel %vm297, %v638, 0
      %v674 = vsel %vm297, %v639, 0
      %v677 = vsel %vm297, %v640, 0
      %v680 = vsel %vm297, %v641, 0
      %v683 = vsel %vm297, %v642, 0
      %v686 = vsel %vm297, %v643, 0
      %v689 = vsel %vm297, %v644, 0
      %v692 = vsel %vm297, %v645, 0
      %v695 = vsel %vm297, %v646, 0
      %vm697 = vcmask 1041408
      %v699 = vsel %vm697, %v648, 0
      %701 = vmatprep.subr.bf16.mxu0 0
      %702 = vmatpush1.bf16.msra.mxu0 0
      %703 = vmatprep.subr.bf16.mxu0 0
      %704 = vmatpush1.bf16.msra.mxu0 0
      %705 = vmatprep.subr.bf16.mxu0 0
      %706 = vmatpush1.bf16.msra.mxu0 0
      %707 = vmatprep.subr.bf16.mxu0 0
      %708 = vmatpush1.bf16.msra.mxu0 0
      %709 = vmatprep.subr.bf16.mxu0 0
      %710 = vmatpush1.bf16.msra.mxu0 0
      %711 = vmatprep.subr.bf16.mxu0 0
      %712 = vmatpush1.bf16.msra.mxu0 0
      %713 = vmatprep.subr.bf16.mxu0 0
      %714 = vmatpush1.bf16.msra.mxu0 0
      %715 = vmatprep.subr.bf16.mxu0 0
      %716 = vmatpush1.bf16.msra.mxu0 %v699
      %717 = vmatprep.subr.bf16.mxu0 0
      %718 = vmatpush2.bf16.msra.mxu0 0
      %719 = vmatprep.subr.bf16.mxu0 0
      %720 = vmatpush2.bf16.msra.mxu0 0
      %721 = vmatprep.subr.bf16.mxu0 0
      %722 = vmatpush2.bf16.msra.mxu0 0
      %723 = vmatprep.subr.bf16.mxu0 0
      %724 = vmatpush2.bf16.msra.mxu0 0
      %725 = vmatprep.subr.bf16.mxu0 0
      %726 = vmatpush2.bf16.msra.mxu0 0
      %727 = vmatprep.subr.bf16.mxu0 0
      %728 = vmatpush2.bf16.msra.mxu0 0
      %729 = vmatprep.subr.bf16.mxu0 0
      %730 = vmatpush2.bf16.msra.mxu0 0
      %731 = vmatprep.subr.bf16.mxu0 0
      %732 = vmatpush2.bf16.msra.mxu0 0
      %733 = vmatprep.mubr.bf16.mxu0 0
      %734 = vmatmul.mubr.bf16.gmra.mxu0 %v650
      %v735 = vpop.f32.mrf.mxu0
      %v736 = vadd.f32 0.0, %v735
      %v737 = vpop.f32.mrf.mxu0
      %v738 = vpop.f32.mrf.mxu0
      %v739 = vadd.f32 0.0, %v738
      %v740 = vpop.f32.mrf.mxu0
      %741 = vmatprep.mubr.bf16.mxu0 0
      %742 = vmatmul.mubr.bf16.gmra.mxu0 %v653
      %v743 = vpop.f32.mrf.mxu0
      %v744 = vadd.f32 0.0, %v743
      %v745 = vpop.f32.mrf.mxu0
      %v746 = vpop.f32.mrf.mxu0
      %v747 = vadd.f32 0.0, %v746
      %v748 = vpop.f32.mrf.mxu0
      %749 = vmatprep.mubr.bf16.mxu0 0
      %750 = vmatmul.mubr.bf16.gmra.mxu0 %v656
      %v751 = vpop.f32.mrf.mxu0
      %v752 = vadd.f32 0.0, %v751
      %v753 = vpop.f32.mrf.mxu0
      %v754 = vpop.f32.mrf.mxu0
      %v755 = vadd.f32 0.0, %v754
      %v756 = vpop.f32.mrf.mxu0
      %757 = vmatprep.mubr.bf16.mxu0 0
      %758 = vmatmul.mubr.bf16.gmra.mxu0 %v659
      %v759 = vpop.f32.mrf.mxu0
      %v760 = vadd.f32 0.0, %v759
      %v761 = vpop.f32.mrf.mxu0
      %v762 = vpop.f32.mrf.mxu0
      %v763 = vadd.f32 0.0, %v762
      %v764 = vpop.f32.mrf.mxu0
      %765 = vmatprep.mubr.bf16.mxu0 0
      %766 = vmatmul.mubr.bf16.gmra.mxu0 %v662
      %v767 = vpop.f32.mrf.mxu0
      %v768 = vadd.f32 0.0, %v767
      %v769 = vpop.f32.mrf.mxu0
      %v770 = vpop.f32.mrf.mxu0
      %v771 = vadd.f32 0.0, %v770
      %v772 = vpop.f32.mrf.mxu0
      %773 = vmatprep.mubr.bf16.mxu0 0
      %774 = vmatmul.mubr.bf16.gmra.mxu0 %v665
      %v775 = vpop.f32.mrf.mxu0
      %v776 = vadd.f32 0.0, %v775
      %v777 = vpop.f32.mrf.mxu0
      %v778 = vpop.f32.mrf.mxu0
      %v779 = vadd.f32 0.0, %v778
      %v780 = vpop.f32.mrf.mxu0
      %781 = vmatprep.mubr.bf16.mxu0 0
      %782 = vmatmul.mubr.bf16.gmra.mxu0 %v668
      %v783 = vpop.f32.mrf.mxu0
      %v784 = vadd.f32 0.0, %v783
      %v785 = vpop.f32.mrf.mxu0
      %v786 = vpop.f32.mrf.mxu0
      %v787 = vadd.f32 0.0, %v786
      %v788 = vpop.f32.mrf.mxu0
      %789 = vmatprep.mubr.bf16.mxu0 0
      %790 = vmatmul.mubr.bf16.gmra.mxu0 %v671
      %v791 = vpop.f32.mrf.mxu0
      %v792 = vadd.f32 0.0, %v791
      %v793 = vpop.f32.mrf.mxu0
      %v794 = vpop.f32.mrf.mxu0
      %v795 = vadd.f32 0.0, %v794
      %v796 = vpop.f32.mrf.mxu0
      %797 = vmatprep.mubr.bf16.mxu0 0
      %798 = vmatmul.mubr.bf16.gmra.mxu0 %v674
      %v799 = vpop.f32.mrf.mxu0
      %v800 = vadd.f32 0.0, %v799
      %v801 = vpop.f32.mrf.mxu0
      %v802 = vpop.f32.mrf.mxu0
      %v803 = vadd.f32 0.0, %v802
      %v804 = vpop.f32.mrf.mxu0
      %805 = vmatprep.mubr.bf16.mxu0 0
      %806 = vmatmul.mubr.bf16.gmra.mxu0 %v677
      %v807 = vpop.f32.mrf.mxu0
      %v808 = vadd.f32 0.0, %v807
      %v809 = vpop.f32.mrf.mxu0
      %v810 = vpop.f32.mrf.mxu0
      %v811 = vadd.f32 0.0, %v810
      %v812 = vpop.f32.mrf.mxu0
      %813 = vmatprep.mubr.bf16.mxu0 0
      %814 = vmatmul.mubr.bf16.gmra.mxu0 %v680
      %v815 = vpop.f32.mrf.mxu0
      %v816 = vadd.f32 0.0, %v815
      %v817 = vpop.f32.mrf.mxu0
      %v818 = vpop.f32.mrf.mxu0
      %v819 = vadd.f32 0.0, %v818
      %v820 = vpop.f32.mrf.mxu0
      %821 = vmatprep.mubr.bf16.mxu0 0
      %822 = vmatmul.mubr.bf16.gmra.mxu0 %v683
      %v823 = vpop.f32.mrf.mxu0
      %v824 = vadd.f32 0.0, %v823
      %v825 = vpop.f32.mrf.mxu0
      %v826 = vpop.f32.mrf.mxu0
      %v827 = vadd.f32 0.0, %v826
      %v828 = vpop.f32.mrf.mxu0
      %829 = vmatprep.mubr.bf16.mxu0 0
      %830 = vmatmul.mubr.bf16.gmra.mxu0 %v686
      %v831 = vpop.f32.mrf.mxu0
      %v832 = vadd.f32 0.0, %v831
      %v833 = vpop.f32.mrf.mxu0
      %v834 = vpop.f32.mrf.mxu0
      %v835 = vadd.f32 0.0, %v834
      %v836 = vpop.f32.mrf.mxu0
      %837 = vmatprep.mubr.bf16.mxu0 0
      %838 = vmatmul.mubr.bf16.gmra.mxu0 %v689
      %v839 = vpop.f32.mrf.mxu0
      %v840 = vadd.f32 0.0, %v839
      %v841 = vpop.f32.mrf.mxu0
      %v842 = vpop.f32.mrf.mxu0
      %v843 = vadd.f32 0.0, %v842
      %v844 = vpop.f32.mrf.mxu0
      %845 = vmatprep.mubr.bf16.mxu0 0
      %846 = vmatmul.mubr.bf16.gmra.mxu0 %v692
      %v847 = vpop.f32.mrf.mxu0
      %v848 = vadd.f32 0.0, %v847
      %v849 = vpop.f32.mrf.mxu0
      %v850 = vpop.f32.mrf.mxu0
      %v851 = vadd.f32 0.0, %v850
      %v852 = vpop.f32.mrf.mxu0
      %853 = vmatprep.mubr.bf16.mxu0 0
      %854 = vmatmul.mubr.bf16.gmra.mxu0 %v695
      %v855 = vpop.f32.mrf.mxu0
      %v856 = vadd.f32 0.0, %v855
      %v857 = vpop.f32.mrf.mxu0
      %v858 = vpop.f32.mrf.mxu0
      %v859 = vadd.f32 0.0, %v858
      %v860 = vpop.f32.mrf.mxu0
      %861 = vdwg.mxu0
      %v863 = vsel %vm297, %v582, 0
      %v866 = vsel %vm297, %v583, 0
      %v869 = vsel %vm297, %v584, 0
      %v872 = vsel %vm297, %v585, 0
      %v875 = vsel %vm297, %v586, 0
      %v878 = vsel %vm297, %v587, 0
      %v881 = vsel %vm297, %v588, 0
      %v884 = vsel %vm297, %v589, 0
      %v887 = vsel %vm297, %v590, 0
      %v890 = vsel %vm297, %v591, 0
      %v893 = vsel %vm297, %v592, 0
      %v896 = vsel %vm297, %v593, 0
      %v899 = vsel %vm297, %v594, 0
      %v902 = vsel %vm297, %v595, 0
      %v905 = vsel %vm297, %v596, 0
      %v908 = vsel %vm297, %v597, 0
      %v911 = vsel %vm697, %v598, 0
      %913 = vmatprep.subr.bf16.mxu0 0
      %914 = vmatpush1.bf16.msra.mxu0 0
      %915 = vmatprep.subr.bf16.mxu0 0
      %916 = vmatpush1.bf16.msra.mxu0 0
      %917 = vmatprep.subr.bf16.mxu0 0
      %918 = vmatpush1.bf16.msra.mxu0 0
      %919 = vmatprep.subr.bf16.mxu0 0
      %920 = vmatpush1.bf16.msra.mxu0 0
      %921 = vmatprep.subr.bf16.mxu0 0
      %922 = vmatpush1.bf16.msra.mxu0 0
      %923 = vmatprep.subr.bf16.mxu0 0
      %924 = vmatpush1.bf16.msra.mxu0 0
      %925 = vmatprep.subr.bf16.mxu0 0
      %926 = vmatpush1.bf16.msra.mxu0 0
      %927 = vmatprep.subr.bf16.mxu0 0
      %928 = vmatpush1.bf16.msra.mxu0 %v911
      %929 = vmatprep.subr.bf16.mxu0 0
      %930 = vmatpush2.bf16.msra.mxu0 0
      %931 = vmatprep.subr.bf16.mxu0 0
      %932 = vmatpush2.bf16.msra.mxu0 0
      %933 = vmatprep.subr.bf16.mxu0 0
      %934 = vmatpush2.bf16.msra.mxu0 0
      %935 = vmatprep.subr.bf16.mxu0 0
      %936 = vmatpush2.bf16.msra.mxu0 0
      %937 = vmatprep.subr.bf16.mxu0 0
      %938 = vmatpush2.bf16.msra.mxu0 0
      %939 = vmatprep.subr.bf16.mxu0 0
      %940 = vmatpush2.bf16.msra.mxu0 0
      %941 = vmatprep.subr.bf16.mxu0 0
      %942 = vmatpush2.bf16.msra.mxu0 0
      %943 = vmatprep.subr.bf16.mxu0 0
      %944 = vmatpush2.bf16.msra.mxu0 0
      %945 = vmatprep.mubr.bf16.mxu0 0
      %946 = vmatmul.mubr.bf16.gmra.mxu0 %v863
      %v947 = vpop.f32.mrf.mxu0
      %v948 = vadd.f32 %v736, %v947
      %v949 = vpop.f32.mrf.mxu0
      %v950 = vpop.f32.mrf.mxu0
      %v951 = vadd.f32 %v739, %v950
      %v952 = vpop.f32.mrf.mxu0
      %953 = vmatprep.mubr.bf16.mxu0 0
      %954 = vmatmul.mubr.bf16.gmra.mxu0 %v866
      %v955 = vpop.f32.mrf.mxu0
      %v956 = vadd.f32 %v744, %v955
      %v957 = vpop.f32.mrf.mxu0
      %v958 = vpop.f32.mrf.mxu0
      %v959 = vadd.f32 %v747, %v958
      %v960 = vpop.f32.mrf.mxu0
      %961 = vmatprep.mubr.bf16.mxu0 0
      %962 = vmatmul.mubr.bf16.gmra.mxu0 %v869
      %v963 = vpop.f32.mrf.mxu0
      %v964 = vadd.f32 %v752, %v963
      %v965 = vpop.f32.mrf.mxu0
      %v966 = vpop.f32.mrf.mxu0
      %v967 = vadd.f32 %v755, %v966
      %v968 = vpop.f32.mrf.mxu0
      %969 = vmatprep.mubr.bf16.mxu0 0
      %970 = vmatmul.mubr.bf16.gmra.mxu0 %v872
      %v971 = vpop.f32.mrf.mxu0
      %v972 = vadd.f32 %v760, %v971
      %v973 = vpop.f32.mrf.mxu0
      %v974 = vpop.f32.mrf.mxu0
      %v975 = vadd.f32 %v763, %v974
      %v976 = vpop.f32.mrf.mxu0
      %977 = vmatprep.mubr.bf16.mxu0 0
      %978 = vmatmul.mubr.bf16.gmra.mxu0 %v875
      %v979 = vpop.f32.mrf.mxu0
      %v980 = vadd.f32 %v768, %v979
      %v981 = vpop.f32.mrf.mxu0
      %v982 = vpop.f32.mrf.mxu0
      %v983 = vadd.f32 %v771, %v982
      %v984 = vpop.f32.mrf.mxu0
      %985 = vmatprep.mubr.bf16.mxu0 0
      %986 = vmatmul.mubr.bf16.gmra.mxu0 %v878
      %v987 = vpop.f32.mrf.mxu0
      %v988 = vadd.f32 %v776, %v987
      %v989 = vpop.f32.mrf.mxu0
      %v990 = vpop.f32.mrf.mxu0
      %v991 = vadd.f32 %v779, %v990
      %v992 = vpop.f32.mrf.mxu0
      %993 = vmatprep.mubr.bf16.mxu0 0
      %994 = vmatmul.mubr.bf16.gmra.mxu0 %v881
      %v995 = vpop.f32.mrf.mxu0
      %v996 = vadd.f32 %v784, %v995
      %v997 = vpop.f32.mrf.mxu0
      %v998 = vpop.f32.mrf.mxu0
      %v999 = vadd.f32 %v787, %v998
      %v1000 = vpop.f32.mrf.mxu0
      %1001 = vmatprep.mubr.bf16.mxu0 0
      %1002 = vmatmul.mubr.bf16.gmra.mxu0 %v884
      %v1003 = vpop.f32.mrf.mxu0
      %v1004 = vadd.f32 %v792, %v1003
      %v1005 = vpop.f32.mrf.mxu0
      %v1006 = vpop.f32.mrf.mxu0
      %v1007 = vadd.f32 %v795, %v1006
      %v1008 = vpop.f32.mrf.mxu0
      %1009 = vmatprep.mubr.bf16.mxu0 0
      %1010 = vmatmul.mubr.bf16.gmra.mxu0 %v887
      %v1011 = vpop.f32.mrf.mxu0
      %v1012 = vadd.f32 %v800, %v1011
      %v1013 = vpop.f32.mrf.mxu0
      %v1014 = vpop.f32.mrf.mxu0
      %v1015 = vadd.f32 %v803, %v1014
      %v1016 = vpop.f32.mrf.mxu0
      %1017 = vmatprep.mubr.bf16.mxu0 0
      %1018 = vmatmul.mubr.bf16.gmra.mxu0 %v890
      %v1019 = vpop.f32.mrf.mxu0
      %v1020 = vadd.f32 %v808, %v1019
      %v1021 = vpop.f32.mrf.mxu0
      %v1022 = vpop.f32.mrf.mxu0
      %v1023 = vadd.f32 %v811, %v1022
      %v1024 = vpop.f32.mrf.mxu0
      %1025 = vmatprep.mubr.bf16.mxu0 0
      %1026 = vmatmul.mubr.bf16.gmra.mxu0 %v893
      %v1027 = vpop.f32.mrf.mxu0
      %v1028 = vadd.f32 %v816, %v1027
      %v1029 = vpop.f32.mrf.mxu0
      %v1030 = vpop.f32.mrf.mxu0
      %v1031 = vadd.f32 %v819, %v1030
      %v1032 = vpop.f32.mrf.mxu0
      %1033 = vmatprep.mubr.bf16.mxu0 0
      %1034 = vmatmul.mubr.bf16.gmra.mxu0 %v896
      %v1035 = vpop.f32.mrf.mxu0
      %v1036 = vadd.f32 %v824, %v1035
      %v1037 = vpop.f32.mrf.mxu0
      %v1038 = vpop.f32.mrf.mxu0
      %v1039 = vadd.f32 %v827, %v1038
      %v1040 = vpop.f32.mrf.mxu0
      %1041 = vmatprep.mubr.bf16.mxu0 0
      %1042 = vmatmul.mubr.bf16.gmra.mxu0 %v899
      %v1043 = vpop.f32.mrf.mxu0
      %v1044 = vadd.f32 %v832, %v1043
      %v1045 = vpop.f32.mrf.mxu0
      %v1046 = vpop.f32.mrf.mxu0
      %v1047 = vadd.f32 %v835, %v1046
      %v1048 = vpop.f32.mrf.mxu0
      %1049 = vmatprep.mubr.bf16.mxu0 0
      %1050 = vmatmul.mubr.bf16.gmra.mxu0 %v902
      %v1051 = vpop.f32.mrf.mxu0
      %v1052 = vadd.f32 %v840, %v1051
      %v1053 = vpop.f32.mrf.mxu0
      %v1054 = vpop.f32.mrf.mxu0
      %v1055 = vadd.f32 %v843, %v1054
      %v1056 = vpop.f32.mrf.mxu0
      %1057 = vmatprep.mubr.bf16.mxu0 0
      %1058 = vmatmul.mubr.bf16.gmra.mxu0 %v905
      %v1059 = vpop.f32.mrf.mxu0
      %v1060 = vadd.f32 %v848, %v1059
      %v1061 = vpop.f32.mrf.mxu0
      %v1062 = vpop.f32.mrf.mxu0
      %v1063 = vadd.f32 %v851, %v1062
      %v1064 = vpop.f32.mrf.mxu0
      %1065 = vmatprep.mubr.bf16.mxu0 0
      %1066 = vmatmul.mubr.bf16.gmra.mxu0 %v908
      %v1067 = vpop.f32.mrf.mxu0
      %v1068 = vadd.f32 %v856, %v1067
      %v1069 = vpop.f32.mrf.mxu0
      %v1070 = vpop.f32.mrf.mxu0
      %v1071 = vadd.f32 %v859, %v1070
      %v1072 = vpop.f32.mrf.mxu0
      %1073 = vdwg.mxu0
      %v1074 = vld [vmem:[#allocation2 + $0x2] sm:$0xff]
      %v1075 = vld [vmem:[#allocation2 + $0xa] sm:$0xff]
      %v1076 = vld [vmem:[#allocation2 + $0x1a] sm:$0xff]
      %v1077 = vld [vmem:[#allocation2 + $0x22] sm:$0xff]
      %v1078 = vld [vmem:[#allocation2 + $0x32] sm:$0xff]
      %v1079 = vld [vmem:[#allocation2 + $0x3a] sm:$0xff]
      %v1080 = vld [vmem:[#allocation2 + $0x4a] sm:$0xff]
      %v1081 = vld [vmem:[#allocation2 + $0x52] sm:$0xff]
      %v1082 = vld [vmem:[#allocation2 + $0x62] sm:$0xff]
      %v1083 = vld [vmem:[#allocation2 + $0x6a] sm:$0xff]
      %v1084 = vld [vmem:[#allocation2 + $0x7a] sm:$0xff]
      %v1085 = vld [vmem:[#allocation2 + $0x82] sm:$0xff]
      %v1086 = vld [vmem:[#allocation2 + $0x92] sm:$0xff]
      %v1087 = vld [vmem:[#allocation2 + $0x9a] sm:$0xff]
      %v1088 = vld [vmem:[#allocation2 + $0xaa] sm:$0xff]
      %v1089 = vld [vmem:[#allocation2 + $0xb2] sm:$0xff]
      %v1090 = vld [vmem:[#allocation2 + $0xc2] sm:$0xff]
      %v1091 = vld [vmem:[#allocation2 + $0xca] sm:$0xff]
      %v1092 = vld [vmem:[#allocation2 + $0xda] sm:$0xff]
      %v1093 = vld [vmem:[#allocation2 + $0xe2] sm:$0xff]
      %v1094 = vld [vmem:[#allocation2 + $0xf2] sm:$0xff]
      %v1095 = vld [vmem:[#allocation2 + $0xfa] sm:$0xff]
      %v1096 = vld [vmem:[#allocation2 + $0x10a] sm:$0xff]
      %v1097 = vld [vmem:[#allocation2 + $0x112] sm:$0xff]
      %v1098 = vld [vmem:[#allocation2 + $0x122] sm:$0xff]
      %v1099 = vld [vmem:[#allocation2 + $0x12a] sm:$0xff]
      %v1100 = vld [vmem:[#allocation2 + $0x13a] sm:$0xff]
      %v1101 = vld [vmem:[#allocation2 + $0x142] sm:$0xff]
      %v1102 = vld [vmem:[#allocation2 + $0x152] sm:$0xff]
      %v1103 = vld [vmem:[#allocation2 + $0x15a] sm:$0xff]
      %v1104 = vld [vmem:[#allocation2 + $0x16a] sm:$0xff]
      %v1105 = vld [vmem:[#allocation2 + $0x172] sm:$0xff]
      %v1106 = vpack.c.bf16 %v1075, %v1074
      %v1107 = vpack.c.bf16 %v1077, %v1076
      %v1108 = vpack.c.bf16 %v1079, %v1078
      %v1109 = vpack.c.bf16 %v1081, %v1080
      %v1110 = vpack.c.bf16 %v1083, %v1082
      %v1111 = vpack.c.bf16 %v1085, %v1084
      %v1112 = vpack.c.bf16 %v1087, %v1086
      %v1113 = vpack.c.bf16 %v1089, %v1088
      %v1114 = vpack.c.bf16 %v1091, %v1090
      %v1115 = vpack.c.bf16 %v1093, %v1092
      %v1116 = vpack.c.bf16 %v1095, %v1094
      %v1117 = vpack.c.bf16 %v1097, %v1096
      %v1118 = vpack.c.bf16 %v1099, %v1098
      %v1119 = vpack.c.bf16 %v1101, %v1100
      %v1120 = vpack.c.bf16 %v1103, %v1102
      %v1121 = vpack.c.bf16 %v1105, %v1104
      %s1122 = scalar_lea.vmem %s3, 4
      %v1123 = vld [vmem:[%s1122] sm:$0x3]
      %v1125 = vsel %vm297, %v1106, 0
      %v1128 = vsel %vm297, %v1107, 0
      %v1131 = vsel %vm297, %v1108, 0
      %v1134 = vsel %vm297, %v1109, 0
      %v1137 = vsel %vm297, %v1110, 0
      %v1140 = vsel %vm297, %v1111, 0
      %v1143 = vsel %vm297, %v1112, 0
      %v1146 = vsel %vm297, %v1113, 0
      %v1149 = vsel %vm297, %v1114, 0
      %v1152 = vsel %vm297, %v1115, 0
      %v1155 = vsel %vm297, %v1116, 0
      %v1158 = vsel %vm297, %v1117, 0
      %v1161 = vsel %vm297, %v1118, 0
      %v1164 = vsel %vm297, %v1119, 0
      %v1167 = vsel %vm297, %v1120, 0
      %v1170 = vsel %vm297, %v1121, 0
      %v1173 = vsel %vm697, %v1123, 0
      %1175 = vmatprep.subr.bf16.mxu0 0
      %1176 = vmatpush1.bf16.msra.mxu0 0
      %1177 = vmatprep.subr.bf16.mxu0 0
      %1178 = vmatpush1.bf16.msra.mxu0 0
      %1179 = vmatprep.subr.bf16.mxu0 0
      %1180 = vmatpush1.bf16.msra.mxu0 0
      %1181 = vmatprep.subr.bf16.mxu0 0
      %1182 = vmatpush1.bf16.msra.mxu0 0
      %1183 = vmatprep.subr.bf16.mxu0 0
      %1184 = vmatpush1.bf16.msra.mxu0 0
      %1185 = vmatprep.subr.bf16.mxu0 0
      %1186 = vmatpush1.bf16.msra.mxu0 0
      %1187 = vmatprep.subr.bf16.mxu0 0
      %1188 = vmatpush1.bf16.msra.mxu0 0
      %1189 = vmatprep.subr.bf16.mxu0 0
      %1190 = vmatpush1.bf16.msra.mxu0 %v1173
      %1191 = vmatprep.subr.bf16.mxu0 0
      %1192 = vmatpush2.bf16.msra.mxu0 0
      %1193 = vmatprep.subr.bf16.mxu0 0
      %1194 = vmatpush2.bf16.msra.mxu0 0
      %1195 = vmatprep.subr.bf16.mxu0 0
      %1196 = vmatpush2.bf16.msra.mxu0 0
      %1197 = vmatprep.subr.bf16.mxu0 0
      %1198 = vmatpush2.bf16.msra.mxu0 0
      %1199 = vmatprep.subr.bf16.mxu0 0
      %1200 = vmatpush2.bf16.msra.mxu0 0
      %1201 = vmatprep.subr.bf16.mxu0 0
      %1202 = vmatpush2.bf16.msra.mxu0 0
      %1203 = vmatprep.subr.bf16.mxu0 0
      %1204 = vmatpush2.bf16.msra.mxu0 0
      %1205 = vmatprep.subr.bf16.mxu0 0
      %1206 = vmatpush2.bf16.msra.mxu0 0
      %1207 = vmatprep.mubr.bf16.mxu0 0
      %1208 = vmatmul.mubr.bf16.gmra.mxu0 %v1125
      %v1209 = vpop.f32.mrf.mxu0
      %v1210 = vadd.f32 0.0, %v1209
      %v1211 = vpop.f32.mrf.mxu0
      %v1212 = vpop.f32.mrf.mxu0
      %v1213 = vadd.f32 0.0, %v1212
      %v1214 = vpop.f32.mrf.mxu0
      %1215 = vmatprep.mubr.bf16.mxu0 0
      %1216 = vmatmul.mubr.bf16.gmra.mxu0 %v1128
      %v1217 = vpop.f32.mrf.mxu0
      %v1218 = vadd.f32 0.0, %v1217
      %v1219 = vpop.f32.mrf.mxu0
      %v1220 = vpop.f32.mrf.mxu0
      %v1221 = vadd.f32 0.0, %v1220
      %v1222 = vpop.f32.mrf.mxu0
      %1223 = vmatprep.mubr.bf16.mxu0 0
      %1224 = vmatmul.mubr.bf16.gmra.mxu0 %v1131
      %v1225 = vpop.f32.mrf.mxu0
      %v1226 = vadd.f32 0.0, %v1225
      %v1227 = vpop.f32.mrf.mxu0
      %v1228 = vpop.f32.mrf.mxu0
      %v1229 = vadd.f32 0.0, %v1228
      %v1230 = vpop.f32.mrf.mxu0
      %1231 = vmatprep.mubr.bf16.mxu0 0
      %1232 = vmatmul.mubr.bf16.gmra.mxu0 %v1134
      %v1233 = vpop.f32.mrf.mxu0
      %v1234 = vadd.f32 0.0, %v1233
      %v1235 = vpop.f32.mrf.mxu0
      %v1236 = vpop.f32.mrf.mxu0
      %v1237 = vadd.f32 0.0, %v1236
      %v1238 = vpop.f32.mrf.mxu0
      %1239 = vmatprep.mubr.bf16.mxu0 0
      %1240 = vmatmul.mubr.bf16.gmra.mxu0 %v1137
      %v1241 = vpop.f32.mrf.mxu0
      %v1242 = vadd.f32 0.0, %v1241
      %v1243 = vpop.f32.mrf.mxu0
      %v1244 = vpop.f32.mrf.mxu0
      %v1245 = vadd.f32 0.0, %v1244
      %v1246 = vpop.f32.mrf.mxu0
      %1247 = vmatprep.mubr.bf16.mxu0 0
      %1248 = vmatmul.mubr.bf16.gmra.mxu0 %v1140
      %v1249 = vpop.f32.mrf.mxu0
      %v1250 = vadd.f32 0.0, %v1249
      %v1251 = vpop.f32.mrf.mxu0
      %v1252 = vpop.f32.mrf.mxu0
      %v1253 = vadd.f32 0.0, %v1252
      %v1254 = vpop.f32.mrf.mxu0
      %1255 = vmatprep.mubr.bf16.mxu0 0
      %1256 = vmatmul.mubr.bf16.gmra.mxu0 %v1143
      %v1257 = vpop.f32.mrf.mxu0
      %v1258 = vadd.f32 0.0, %v1257
      %v1259 = vpop.f32.mrf.mxu0
      %v1260 = vpop.f32.mrf.mxu0
      %v1261 = vadd.f32 0.0, %v1260
      %v1262 = vpop.f32.mrf.mxu0
      %1263 = vmatprep.mubr.bf16.mxu0 0
      %1264 = vmatmul.mubr.bf16.gmra.mxu0 %v1146
      %v1265 = vpop.f32.mrf.mxu0
      %v1266 = vadd.f32 0.0, %v1265
      %v1267 = vpop.f32.mrf.mxu0
      %v1268 = vpop.f32.mrf.mxu0
      %v1269 = vadd.f32 0.0, %v1268
      %v1270 = vpop.f32.mrf.mxu0
      %1271 = vmatprep.mubr.bf16.mxu0 0
      %1272 = vmatmul.mubr.bf16.gmra.mxu0 %v1149
      %v1273 = vpop.f32.mrf.mxu0
      %v1274 = vadd.f32 0.0, %v1273
      %v1275 = vpop.f32.mrf.mxu0
      %v1276 = vpop.f32.mrf.mxu0
      %v1277 = vadd.f32 0.0, %v1276
      %v1278 = vpop.f32.mrf.mxu0
      %1279 = vmatprep.mubr.bf16.mxu0 0
      %1280 = vmatmul.mubr.bf16.gmra.mxu0 %v1152
      %v1281 = vpop.f32.mrf.mxu0
      %v1282 = vadd.f32 0.0, %v1281
      %v1283 = vpop.f32.mrf.mxu0
      %v1284 = vpop.f32.mrf.mxu0
      %v1285 = vadd.f32 0.0, %v1284
      %v1286 = vpop.f32.mrf.mxu0
      %1287 = vmatprep.mubr.bf16.mxu0 0
      %1288 = vmatmul.mubr.bf16.gmra.mxu0 %v1155
      %v1289 = vpop.f32.mrf.mxu0
      %v1290 = vadd.f32 0.0, %v1289
      %v1291 = vpop.f32.mrf.mxu0
      %v1292 = vpop.f32.mrf.mxu0
      %v1293 = vadd.f32 0.0, %v1292
      %v1294 = vpop.f32.mrf.mxu0
      %1295 = vmatprep.mubr.bf16.mxu0 0
      %1296 = vmatmul.mubr.bf16.gmra.mxu0 %v1158
      %v1297 = vpop.f32.mrf.mxu0
      %v1298 = vadd.f32 0.0, %v1297
      %v1299 = vpop.f32.mrf.mxu0
      %v1300 = vpop.f32.mrf.mxu0
      %v1301 = vadd.f32 0.0, %v1300
      %v1302 = vpop.f32.mrf.mxu0
      %1303 = vmatprep.mubr.bf16.mxu0 0
      %1304 = vmatmul.mubr.bf16.gmra.mxu0 %v1161
      %v1305 = vpop.f32.mrf.mxu0
      %v1306 = vadd.f32 0.0, %v1305
      %v1307 = vpop.f32.mrf.mxu0
      %v1308 = vpop.f32.mrf.mxu0
      %v1309 = vadd.f32 0.0, %v1308
      %v1310 = vpop.f32.mrf.mxu0
      %1311 = vmatprep.mubr.bf16.mxu0 0
      %1312 = vmatmul.mubr.bf16.gmra.mxu0 %v1164
      %v1313 = vpop.f32.mrf.mxu0
      %v1314 = vadd.f32 0.0, %v1313
      %v1315 = vpop.f32.mrf.mxu0
      %v1316 = vpop.f32.mrf.mxu0
      %v1317 = vadd.f32 0.0, %v1316
      %v1318 = vpop.f32.mrf.mxu0
      %1319 = vmatprep.mubr.bf16.mxu0 0
      %1320 = vmatmul.mubr.bf16.gmra.mxu0 %v1167
      %v1321 = vpop.f32.mrf.mxu0
      %v1322 = vadd.f32 0.0, %v1321
      %v1323 = vpop.f32.mrf.mxu0
      %v1324 = vpop.f32.mrf.mxu0
      %v1325 = vadd.f32 0.0, %v1324
      %v1326 = vpop.f32.mrf.mxu0
      %1327 = vmatprep.mubr.bf16.mxu0 0
      %1328 = vmatmul.mubr.bf16.gmra.mxu0 %v1170
      %v1329 = vpop.f32.mrf.mxu0
      %v1330 = vadd.f32 0.0, %v1329
      %v1331 = vpop.f32.mrf.mxu0
      %v1332 = vpop.f32.mrf.mxu0
      %v1333 = vadd.f32 0.0, %v1332
      %v1334 = vpop.f32.mrf.mxu0
      %1335 = vdwg.mxu0
      %v1336 = vadd.f32 %v948, %v1210
      %v1337 = vadd.f32 %v951, %v1213
      %v1338 = vadd.f32 %v956, %v1218
      %v1339 = vadd.f32 %v959, %v1221
      %v1340 = vadd.f32 %v964, %v1226
      %v1341 = vadd.f32 %v967, %v1229
      %v1342 = vadd.f32 %v972, %v1234
      %v1343 = vadd.f32 %v975, %v1237
      %v1344 = vadd.f32 %v980, %v1242
      %v1345 = vadd.f32 %v983, %v1245
      %v1346 = vadd.f32 %v988, %v1250
      %v1347 = vadd.f32 %v991, %v1253
      %v1348 = vadd.f32 %v996, %v1258
      %v1349 = vadd.f32 %v999, %v1261
      %v1350 = vadd.f32 %v1004, %v1266
      %v1351 = vadd.f32 %v1007, %v1269
      %v1352 = vadd.f32 %v1012, %v1274
      %v1353 = vadd.f32 %v1015, %v1277
      %v1354 = vadd.f32 %v1020, %v1282
      %v1355 = vadd.f32 %v1023, %v1285
      %v1356 = vadd.f32 %v1028, %v1290
      %v1357 = vadd.f32 %v1031, %v1293
      %v1358 = vadd.f32 %v1036, %v1298
      %v1359 = vadd.f32 %v1039, %v1301
      %v1360 = vadd.f32 %v1044, %v1306
      %v1361 = vadd.f32 %v1047, %v1309
      %v1362 = vadd.f32 %v1052, %v1314
      %v1363 = vadd.f32 %v1055, %v1317
      %v1364 = vadd.f32 %v1060, %v1322
      %v1365 = vadd.f32 %v1063, %v1325
      %v1366 = vadd.f32 %v1068, %v1330
      %v1367 = vadd.f32 %v1071, %v1333
      %v1368 = vld [vmem:[%s517] sm:$0xff]
      %v1369 = vld [vmem:[%s517 + $0x8] sm:$0xff]
      %v1370 = vld [vmem:[%s517 + $0x18] sm:$0xff]
      %v1371 = vld [vmem:[%s517 + $0x20] sm:$0xff]
      %v1372 = vld [vmem:[%s517 + $0x30] sm:$0xff]
      %v1373 = vld [vmem:[%s517 + $0x38] sm:$0xff]
      %v1374 = vld [vmem:[%s517 + $0x48] sm:$0xff]
      %v1375 = vld [vmem:[%s517 + $0x50] sm:$0xff]
      %v1376 = vld [vmem:[%s517 + $0x60] sm:$0xff]
      %v1377 = vld [vmem:[%s517 + $0x68] sm:$0xff]
      %v1378 = vld [vmem:[%s517 + $0x78] sm:$0xff]
      %v1379 = vld [vmem:[%s517 + $0x80] sm:$0xff]
      %v1380 = vld [vmem:[%s517 + $0x90] sm:$0xff]
      %v1381 = vld [vmem:[%s517 + $0x98] sm:$0xff]
      %v1382 = vld [vmem:[%s517 + $0xa8] sm:$0xff]
      %v1383 = vld [vmem:[%s517 + $0xb0] sm:$0xff]
      %v1384 = vld [vmem:[%s517 + $0xc0] sm:$0xff]
      %v1385 = vld [vmem:[%s517 + $0xc8] sm:$0xff]
      %v1386 = vld [vmem:[%s517 + $0xd8] sm:$0xff]
      %v1387 = vld [vmem:[%s517 + $0xe0] sm:$0xff]
      %v1388 = vld [vmem:[%s517 + $0xf0] sm:$0xff]
      %v1389 = vld [vmem:[%s517 + $0xf8] sm:$0xff]
      %v1390 = vld [vmem:[%s517 + $0x108] sm:$0xff]
      %v1391 = vld [vmem:[%s517 + $0x110] sm:$0xff]
      %v1392 = vld [vmem:[%s517 + $0x120] sm:$0xff]
      %v1393 = vld [vmem:[%s517 + $0x128] sm:$0xff]
      %v1394 = vld [vmem:[%s517 + $0x138] sm:$0xff]
      %v1395 = vld [vmem:[%s517 + $0x140] sm:$0xff]
      %v1396 = vld [vmem:[%s517 + $0x150] sm:$0xff]
      %v1397 = vld [vmem:[%s517 + $0x158] sm:$0xff]
      %v1398 = vld [vmem:[%s517 + $0x168] sm:$0xff]
      %v1399 = vld [vmem:[%s517 + $0x170] sm:$0xff]
      %v1400 = vpack.c.bf16 %v1369, %v1368
      %v1401 = vpack.c.bf16 %v1371, %v1370
      %v1402 = vpack.c.bf16 %v1373, %v1372
      %v1403 = vpack.c.bf16 %v1375, %v1374
      %v1404 = vpack.c.bf16 %v1377, %v1376
      %v1405 = vpack.c.bf16 %v1379, %v1378
      %v1406 = vpack.c.bf16 %v1381, %v1380
      %v1407 = vpack.c.bf16 %v1383, %v1382
      %v1408 = vpack.c.bf16 %v1385, %v1384
      %v1409 = vpack.c.bf16 %v1387, %v1386
      %v1410 = vpack.c.bf16 %v1389, %v1388
      %v1411 = vpack.c.bf16 %v1391, %v1390
      %v1412 = vpack.c.bf16 %v1393, %v1392
      %v1413 = vpack.c.bf16 %v1395, %v1394
      %v1414 = vpack.c.bf16 %v1397, %v1396
      %v1415 = vpack.c.bf16 %v1399, %v1398
      %s1416 = scalar_lea.vmem %s3, 6
      %v1417 = vld [vmem:[%s1416] sm:$0x3]
      %v1419 = vsel %vm297, %v1400, 0
      %v1422 = vsel %vm297, %v1401, 0
      %v1425 = vsel %vm297, %v1402, 0
      %v1428 = vsel %vm297, %v1403, 0
      %v1431 = vsel %vm297, %v1404, 0
      %v1434 = vsel %vm297, %v1405, 0
      %v1437 = vsel %vm297, %v1406, 0
      %v1440 = vsel %vm297, %v1407, 0
      %v1443 = vsel %vm297, %v1408, 0
      %v1446 = vsel %vm297, %v1409, 0
      %v1449 = vsel %vm297, %v1410, 0
      %v1452 = vsel %vm297, %v1411, 0
      %v1455 = vsel %vm297, %v1412, 0
      %v1458 = vsel %vm297, %v1413, 0
      %v1461 = vsel %vm297, %v1414, 0
      %v1464 = vsel %vm297, %v1415, 0
      %v1467 = vsel %vm697, %v1417, 0
      %1469 = vmatprep.subr.bf16.mxu0 0
      %1470 = vmatpush1.bf16.msra.mxu0 0
      %1471 = vmatprep.subr.bf16.mxu0 0
      %1472 = vmatpush1.bf16.msra.mxu0 0
      %1473 = vmatprep.subr.bf16.mxu0 0
      %1474 = vmatpush1.bf16.msra.mxu0 0
      %1475 = vmatprep.subr.bf16.mxu0 0
      %1476 = vmatpush1.bf16.msra.mxu0 0
      %1477 = vmatprep.subr.bf16.mxu0 0
      %1478 = vmatpush1.bf16.msra.mxu0 0
      %1479 = vmatprep.subr.bf16.mxu0 0
      %1480 = vmatpush1.bf16.msra.mxu0 0
      %1481 = vmatprep.subr.bf16.mxu0 0
      %1482 = vmatpush1.bf16.msra.mxu0 0
      %1483 = vmatprep.subr.bf16.mxu0 0
      %1484 = vmatpush1.bf16.msra.mxu0 %v1467
      %1485 = vmatprep.subr.bf16.mxu0 0
      %1486 = vmatpush2.bf16.msra.mxu0 0
      %1487 = vmatprep.subr.bf16.mxu0 0
      %1488 = vmatpush2.bf16.msra.mxu0 0
      %1489 = vmatprep.subr.bf16.mxu0 0
      %1490 = vmatpush2.bf16.msra.mxu0 0
      %1491 = vmatprep.subr.bf16.mxu0 0
      %1492 = vmatpush2.bf16.msra.mxu0 0
      %1493 = vmatprep.subr.bf16.mxu0 0
      %1494 = vmatpush2.bf16.msra.mxu0 0
      %1495 = vmatprep.subr.bf16.mxu0 0
      %1496 = vmatpush2.bf16.msra.mxu0 0
      %1497 = vmatprep.subr.bf16.mxu0 0
      %1498 = vmatpush2.bf16.msra.mxu0 0
      %1499 = vmatprep.subr.bf16.mxu0 0
      %1500 = vmatpush2.bf16.msra.mxu0 0
      %1501 = vmatprep.mubr.bf16.mxu0 0
      %1502 = vmatmul.mubr.bf16.gmra.mxu0 %v1419
      %v1503 = vpop.f32.mrf.mxu0
      %v1504 = vadd.f32 0.0, %v1503
      %v1505 = vpop.f32.mrf.mxu0
      %v1506 = vpop.f32.mrf.mxu0
      %v1507 = vadd.f32 0.0, %v1506
      %v1508 = vpop.f32.mrf.mxu0
      %1509 = vmatprep.mubr.bf16.mxu0 0
      %1510 = vmatmul.mubr.bf16.gmra.mxu0 %v1422
      %v1511 = vpop.f32.mrf.mxu0
      %v1512 = vadd.f32 0.0, %v1511
      %v1513 = vpop.f32.mrf.mxu0
      %v1514 = vpop.f32.mrf.mxu0
      %v1515 = vadd.f32 0.0, %v1514
      %v1516 = vpop.f32.mrf.mxu0
      %1517 = vmatprep.mubr.bf16.mxu0 0
      %1518 = vmatmul.mubr.bf16.gmra.mxu0 %v1425
      %v1519 = vpop.f32.mrf.mxu0
      %v1520 = vadd.f32 0.0, %v1519
      %v1521 = vpop.f32.mrf.mxu0
      %v1522 = vpop.f32.mrf.mxu0
      %v1523 = vadd.f32 0.0, %v1522
      %v1524 = vpop.f32.mrf.mxu0
      %1525 = vmatprep.mubr.bf16.mxu0 0
      %1526 = vmatmul.mubr.bf16.gmra.mxu0 %v1428
      %v1527 = vpop.f32.mrf.mxu0
      %v1528 = vadd.f32 0.0, %v1527
      %v1529 = vpop.f32.mrf.mxu0
      %v1530 = vpop.f32.mrf.mxu0
      %v1531 = vadd.f32 0.0, %v1530
      %v1532 = vpop.f32.mrf.mxu0
      %1533 = vmatprep.mubr.bf16.mxu0 0
      %1534 = vmatmul.mubr.bf16.gmra.mxu0 %v1431
      %v1535 = vpop.f32.mrf.mxu0
      %v1536 = vadd.f32 0.0, %v1535
      %v1537 = vpop.f32.mrf.mxu0
      %v1538 = vpop.f32.mrf.mxu0
      %v1539 = vadd.f32 0.0, %v1538
      %v1540 = vpop.f32.mrf.mxu0
      %1541 = vmatprep.mubr.bf16.mxu0 0
      %1542 = vmatmul.mubr.bf16.gmra.mxu0 %v1434
      %v1543 = vpop.f32.mrf.mxu0
      %v1544 = vadd.f32 0.0, %v1543
      %v1545 = vpop.f32.mrf.mxu0
      %v1546 = vpop.f32.mrf.mxu0
      %v1547 = vadd.f32 0.0, %v1546
      %v1548 = vpop.f32.mrf.mxu0
      %1549 = vmatprep.mubr.bf16.mxu0 0
      %1550 = vmatmul.mubr.bf16.gmra.mxu0 %v1437
      %v1551 = vpop.f32.mrf.mxu0
      %v1552 = vadd.f32 0.0, %v1551
      %v1553 = vpop.f32.mrf.mxu0
      %v1554 = vpop.f32.mrf.mxu0
      %v1555 = vadd.f32 0.0, %v1554
      %v1556 = vpop.f32.mrf.mxu0
      %1557 = vmatprep.mubr.bf16.mxu0 0
      %1558 = vmatmul.mubr.bf16.gmra.mxu0 %v1440
      %v1559 = vpop.f32.mrf.mxu0
      %v1560 = vadd.f32 0.0, %v1559
      %v1561 = vpop.f32.mrf.mxu0
      %v1562 = vpop.f32.mrf.mxu0
      %v1563 = vadd.f32 0.0, %v1562
      %v1564 = vpop.f32.mrf.mxu0
      %1565 = vmatprep.mubr.bf16.mxu0 0
      %1566 = vmatmul.mubr.bf16.gmra.mxu0 %v1443
      %v1567 = vpop.f32.mrf.mxu0
      %v1568 = vadd.f32 0.0, %v1567
      %v1569 = vpop.f32.mrf.mxu0
      %v1570 = vpop.f32.mrf.mxu0
      %v1571 = vadd.f32 0.0, %v1570
      %v1572 = vpop.f32.mrf.mxu0
      %1573 = vmatprep.mubr.bf16.mxu0 0
      %1574 = vmatmul.mubr.bf16.gmra.mxu0 %v1446
      %v1575 = vpop.f32.mrf.mxu0
      %v1576 = vadd.f32 0.0, %v1575
      %v1577 = vpop.f32.mrf.mxu0
      %v1578 = vpop.f32.mrf.mxu0
      %v1579 = vadd.f32 0.0, %v1578
      %v1580 = vpop.f32.mrf.mxu0
      %1581 = vmatprep.mubr.bf16.mxu0 0
      %1582 = vmatmul.mubr.bf16.gmra.mxu0 %v1449
      %v1583 = vpop.f32.mrf.mxu0
      %v1584 = vadd.f32 0.0, %v1583
      %v1585 = vpop.f32.mrf.mxu0
      %v1586 = vpop.f32.mrf.mxu0
      %v1587 = vadd.f32 0.0, %v1586
      %v1588 = vpop.f32.mrf.mxu0
      %1589 = vmatprep.mubr.bf16.mxu0 0
      %1590 = vmatmul.mubr.bf16.gmra.mxu0 %v1452
      %v1591 = vpop.f32.mrf.mxu0
      %v1592 = vadd.f32 0.0, %v1591
      %v1593 = vpop.f32.mrf.mxu0
      %v1594 = vpop.f32.mrf.mxu0
      %v1595 = vadd.f32 0.0, %v1594
      %v1596 = vpop.f32.mrf.mxu0
      %1597 = vmatprep.mubr.bf16.mxu0 0
      %1598 = vmatmul.mubr.bf16.gmra.mxu0 %v1455
      %v1599 = vpop.f32.mrf.mxu0
      %v1600 = vadd.f32 0.0, %v1599
      %v1601 = vpop.f32.mrf.mxu0
      %v1602 = vpop.f32.mrf.mxu0
      %v1603 = vadd.f32 0.0, %v1602
      %v1604 = vpop.f32.mrf.mxu0
      %1605 = vmatprep.mubr.bf16.mxu0 0
      %1606 = vmatmul.mubr.bf16.gmra.mxu0 %v1458
      %v1607 = vpop.f32.mrf.mxu0
      %v1608 = vadd.f32 0.0, %v1607
      %v1609 = vpop.f32.mrf.mxu0
      %v1610 = vpop.f32.mrf.mxu0
      %v1611 = vadd.f32 0.0, %v1610
      %v1612 = vpop.f32.mrf.mxu0
      %1613 = vmatprep.mubr.bf16.mxu0 0
      %1614 = vmatmul.mubr.bf16.gmra.mxu0 %v1461
      %v1615 = vpop.f32.mrf.mxu0
      %v1616 = vadd.f32 0.0, %v1615
      %v1617 = vpop.f32.mrf.mxu0
      %v1618 = vpop.f32.mrf.mxu0
      %v1619 = vadd.f32 0.0, %v1618
      %v1620 = vpop.f32.mrf.mxu0
      %1621 = vmatprep.mubr.bf16.mxu0 0
      %1622 = vmatmul.mubr.bf16.gmra.mxu0 %v1464
      %v1623 = vpop.f32.mrf.mxu0
      %v1624 = vadd.f32 0.0, %v1623
      %v1625 = vpop.f32.mrf.mxu0
      %v1626 = vpop.f32.mrf.mxu0
      %v1627 = vadd.f32 0.0, %v1626
      %v1628 = vpop.f32.mrf.mxu0
      %1629 = vdwg.mxu0
      %v1630 = vadd.f32 %v1336, %v1504
      %v1631 = vadd.f32 %v1337, %v1507
      %v1632 = vadd.f32 %v1338, %v1512
      %v1633 = vadd.f32 %v1339, %v1515
      %v1634 = vadd.f32 %v1340, %v1520
      %v1635 = vadd.f32 %v1341, %v1523
      %v1636 = vadd.f32 %v1342, %v1528
      %v1637 = vadd.f32 %v1343, %v1531
      %v1638 = vadd.f32 %v1344, %v1536
      %v1639 = vadd.f32 %v1345, %v1539
      %v1640 = vadd.f32 %v1346, %v1544
      %v1641 = vadd.f32 %v1347, %v1547
      %v1642 = vadd.f32 %v1348, %v1552
      %v1643 = vadd.f32 %v1349, %v1555
      %v1644 = vadd.f32 %v1350, %v1560
      %v1645 = vadd.f32 %v1351, %v1563
      %v1646 = vadd.f32 %v1352, %v1568
      %v1647 = vadd.f32 %v1353, %v1571
      %v1648 = vadd.f32 %v1354, %v1576
      %v1649 = vadd.f32 %v1355, %v1579
      %v1650 = vadd.f32 %v1356, %v1584
      %v1651 = vadd.f32 %v1357, %v1587
      %v1652 = vadd.f32 %v1358, %v1592
      %v1653 = vadd.f32 %v1359, %v1595
      %v1654 = vadd.f32 %v1360, %v1600
      %v1655 = vadd.f32 %v1361, %v1603
      %v1656 = vadd.f32 %v1362, %v1608
      %v1657 = vadd.f32 %v1363, %v1611
      %v1658 = vadd.f32 %v1364, %v1616
      %v1659 = vadd.f32 %v1365, %v1619
      %v1660 = vadd.f32 %v1366, %v1624
      %v1661 = vadd.f32 %v1367, %v1627
      %v1662 = vld [vmem:[%s517 + $0x1] sm:$0xff]
      %v1663 = vld [vmem:[%s517 + $0x9] sm:$0xff]
      %v1664 = vld [vmem:[%s517 + $0x19] sm:$0xff]
      %v1665 = vld [vmem:[%s517 + $0x21] sm:$0xff]
      %v1666 = vld [vmem:[%s517 + $0x31] sm:$0xff]
      %v1667 = vld [vmem:[%s517 + $0x39] sm:$0xff]
      %v1668 = vld [vmem:[%s517 + $0x49] sm:$0xff]
      %v1669 = vld [vmem:[%s517 + $0x51] sm:$0xff]
      %v1670 = vld [vmem:[%s517 + $0x61] sm:$0xff]
      %v1671 = vld [vmem:[%s517 + $0x69] sm:$0xff]
      %v1672 = vld [vmem:[%s517 + $0x79] sm:$0xff]
      %v1673 = vld [vmem:[%s517 + $0x81] sm:$0xff]
      %v1674 = vld [vmem:[%s517 + $0x91] sm:$0xff]
      %v1675 = vld [vmem:[%s517 + $0x99] sm:$0xff]
      %v1676 = vld [vmem:[%s517 + $0xa9] sm:$0xff]
      %v1677 = vld [vmem:[%s517 + $0xb1] sm:$0xff]
      %v1678 = vld [vmem:[%s517 + $0xc1] sm:$0xff]
      %v1679 = vld [vmem:[%s517 + $0xc9] sm:$0xff]
      %v1680 = vld [vmem:[%s517 + $0xd9] sm:$0xff]
      %v1681 = vld [vmem:[%s517 + $0xe1] sm:$0xff]
      %v1682 = vld [vmem:[%s517 + $0xf1] sm:$0xff]
      %v1683 = vld [vmem:[%s517 + $0xf9] sm:$0xff]
      %v1684 = vld [vmem:[%s517 + $0x109] sm:$0xff]
      %v1685 = vld [vmem:[%s517 + $0x111] sm:$0xff]
      %v1686 = vld [vmem:[%s517 + $0x121] sm:$0xff]
      %v1687 = vld [vmem:[%s517 + $0x129] sm:$0xff]
      %v1688 = vld [vmem:[%s517 + $0x139] sm:$0xff]
      %v1689 = vld [vmem:[%s517 + $0x141] sm:$0xff]
      %v1690 = vld [vmem:[%s517 + $0x151] sm:$0xff]
      %v1691 = vld [vmem:[%s517 + $0x159] sm:$0xff]
      %v1692 = vld [vmem:[%s517 + $0x169] sm:$0xff]
      %v1693 = vld [vmem:[%s517 + $0x171] sm:$0xff]
      %v1694 = vpack.c.bf16 %v1663, %v1662
      %v1695 = vpack.c.bf16 %v1665, %v1664
      %v1696 = vpack.c.bf16 %v1667, %v1666
      %v1697 = vpack.c.bf16 %v1669, %v1668
      %v1698 = vpack.c.bf16 %v1671, %v1670
      %v1699 = vpack.c.bf16 %v1673, %v1672
      %v1700 = vpack.c.bf16 %v1675, %v1674
      %v1701 = vpack.c.bf16 %v1677, %v1676
      %v1702 = vpack.c.bf16 %v1679, %v1678
      %v1703 = vpack.c.bf16 %v1681, %v1680
      %v1704 = vpack.c.bf16 %v1683, %v1682
      %v1705 = vpack.c.bf16 %v1685, %v1684
      %v1706 = vpack.c.bf16 %v1687, %v1686
      %v1707 = vpack.c.bf16 %v1689, %v1688
      %v1708 = vpack.c.bf16 %v1691, %v1690
      %v1709 = vpack.c.bf16 %v1693, %v1692
      %s1710 = scalar_lea.vmem %s3, 8
      %v1711 = vld [vmem:[%s1710] sm:$0x3]
      %v1713 = vsel %vm297, %v1694, 0
      %v1716 = vsel %vm297, %v1695, 0
      %v1719 = vsel %vm297, %v1696, 0
      %v1722 = vsel %vm297, %v1697, 0
      %v1725 = vsel %vm297, %v1698, 0
      %v1728 = vsel %vm297, %v1699, 0
      %v1731 = vsel %vm297, %v1700, 0
      %v1734 = vsel %vm297, %v1701, 0
      %v1737 = vsel %vm297, %v1702, 0
      %v1740 = vsel %vm297, %v1703, 0
      %v1743 = vsel %vm297, %v1704, 0
      %v1746 = vsel %vm297, %v1705, 0
      %v1749 = vsel %vm297, %v1706, 0
      %v1752 = vsel %vm297, %v1707, 0
      %v1755 = vsel %vm297, %v1708, 0
      %v1758 = vsel %vm297, %v1709, 0
      %v1761 = vsel %vm697, %v1711, 0
      %1763 = vmatprep.subr.bf16.mxu0 0
      %1764 = vmatpush1.bf16.msra.mxu0 0
      %1765 = vmatprep.subr.bf16.mxu0 0
      %1766 = vmatpush1.bf16.msra.mxu0 0
      %1767 = vmatprep.subr.bf16.mxu0 0
      %1768 = vmatpush1.bf16.msra.mxu0 0
      %1769 = vmatprep.subr.bf16.mxu0 0
      %1770 = vmatpush1.bf16.msra.mxu0 0
      %1771 = vmatprep.subr.bf16.mxu0 0
      %1772 = vmatpush1.bf16.msra.mxu0 0
      %1773 = vmatprep.subr.bf16.mxu0 0
      %1774 = vmatpush1.bf16.msra.mxu0 0
      %1775 = vmatprep.subr.bf16.mxu0 0
      %1776 = vmatpush1.bf16.msra.mxu0 0
      %1777 = vmatprep.subr.bf16.mxu0 0
      %1778 = vmatpush1.bf16.msra.mxu0 %v1761
      %1779 = vmatprep.subr.bf16.mxu0 0
      %1780 = vmatpush2.bf16.msra.mxu0 0
      %1781 = vmatprep.subr.bf16.mxu0 0
      %1782 = vmatpush2.bf16.msra.mxu0 0
      %1783 = vmatprep.subr.bf16.mxu0 0
      %1784 = vmatpush2.bf16.msra.mxu0 0
      %1785 = vmatprep.subr.bf16.mxu0 0
      %1786 = vmatpush2.bf16.msra.mxu0 0
      %1787 = vmatprep.subr.bf16.mxu0 0
      %1788 = vmatpush2.bf16.msra.mxu0 0
      %1789 = vmatprep.subr.bf16.mxu0 0
      %1790 = vmatpush2.bf16.msra.mxu0 0
      %1791 = vmatprep.subr.bf16.mxu0 0
      %1792 = vmatpush2.bf16.msra.mxu0 0
      %1793 = vmatprep.subr.bf16.mxu0 0
      %1794 = vmatpush2.bf16.msra.mxu0 0
      %1795 = vmatprep.mubr.bf16.mxu0 0
      %1796 = vmatmul.mubr.bf16.gmra.mxu0 %v1713
      %v1797 = vpop.f32.mrf.mxu0
      %v1798 = vadd.f32 0.0, %v1797
      %v1799 = vpop.f32.mrf.mxu0
      %v1800 = vpop.f32.mrf.mxu0
      %v1801 = vadd.f32 0.0, %v1800
      %v1802 = vpop.f32.mrf.mxu0
      %1803 = vmatprep.mubr.bf16.mxu0 0
      %1804 = vmatmul.mubr.bf16.gmra.mxu0 %v1716
      %v1805 = vpop.f32.mrf.mxu0
      %v1806 = vadd.f32 0.0, %v1805
      %v1807 = vpop.f32.mrf.mxu0
      %v1808 = vpop.f32.mrf.mxu0
      %v1809 = vadd.f32 0.0, %v1808
      %v1810 = vpop.f32.mrf.mxu0
      %1811 = vmatprep.mubr.bf16.mxu0 0
      %1812 = vmatmul.mubr.bf16.gmra.mxu0 %v1719
      %v1813 = vpop.f32.mrf.mxu0
      %v1814 = vadd.f32 0.0, %v1813
      %v1815 = vpop.f32.mrf.mxu0
      %v1816 = vpop.f32.mrf.mxu0
      %v1817 = vadd.f32 0.0, %v1816
      %v1818 = vpop.f32.mrf.mxu0
      %1819 = vmatprep.mubr.bf16.mxu0 0
      %1820 = vmatmul.mubr.bf16.gmra.mxu0 %v1722
      %v1821 = vpop.f32.mrf.mxu0
      %v1822 = vadd.f32 0.0, %v1821
      %v1823 = vpop.f32.mrf.mxu0
      %v1824 = vpop.f32.mrf.mxu0
      %v1825 = vadd.f32 0.0, %v1824
      %v1826 = vpop.f32.mrf.mxu0
      %1827 = vmatprep.mubr.bf16.mxu0 0
      %1828 = vmatmul.mubr.bf16.gmra.mxu0 %v1725
      %v1829 = vpop.f32.mrf.mxu0
      %v1830 = vadd.f32 0.0, %v1829
      %v1831 = vpop.f32.mrf.mxu0
      %v1832 = vpop.f32.mrf.mxu0
      %v1833 = vadd.f32 0.0, %v1832
      %v1834 = vpop.f32.mrf.mxu0
      %1835 = vmatprep.mubr.bf16.mxu0 0
      %1836 = vmatmul.mubr.bf16.gmra.mxu0 %v1728
      %v1837 = vpop.f32.mrf.mxu0
      %v1838 = vadd.f32 0.0, %v1837
      %v1839 = vpop.f32.mrf.mxu0
      %v1840 = vpop.f32.mrf.mxu0
      %v1841 = vadd.f32 0.0, %v1840
      %v1842 = vpop.f32.mrf.mxu0
      %1843 = vmatprep.mubr.bf16.mxu0 0
      %1844 = vmatmul.mubr.bf16.gmra.mxu0 %v1731
      %v1845 = vpop.f32.mrf.mxu0
      %v1846 = vadd.f32 0.0, %v1845
      %v1847 = vpop.f32.mrf.mxu0
      %v1848 = vpop.f32.mrf.mxu0
      %v1849 = vadd.f32 0.0, %v1848
      %v1850 = vpop.f32.mrf.mxu0
      %1851 = vmatprep.mubr.bf16.mxu0 0
      %1852 = vmatmul.mubr.bf16.gmra.mxu0 %v1734
      %v1853 = vpop.f32.mrf.mxu0
      %v1854 = vadd.f32 0.0, %v1853
      %v1855 = vpop.f32.mrf.mxu0
      %v1856 = vpop.f32.mrf.mxu0
      %v1857 = vadd.f32 0.0, %v1856
      %v1858 = vpop.f32.mrf.mxu0
      %1859 = vmatprep.mubr.bf16.mxu0 0
      %1860 = vmatmul.mubr.bf16.gmra.mxu0 %v1737
      %v1861 = vpop.f32.mrf.mxu0
      %v1862 = vadd.f32 0.0, %v1861
      %v1863 = vpop.f32.mrf.mxu0
      %v1864 = vpop.f32.mrf.mxu0
      %v1865 = vadd.f32 0.0, %v1864
      %v1866 = vpop.f32.mrf.mxu0
      %1867 = vmatprep.mubr.bf16.mxu0 0
      %1868 = vmatmul.mubr.bf16.gmra.mxu0 %v1740
      %v1869 = vpop.f32.mrf.mxu0
      %v1870 = vadd.f32 0.0, %v1869
      %v1871 = vpop.f32.mrf.mxu0
      %v1872 = vpop.f32.mrf.mxu0
      %v1873 = vadd.f32 0.0, %v1872
      %v1874 = vpop.f32.mrf.mxu0
      %1875 = vmatprep.mubr.bf16.mxu0 0
      %1876 = vmatmul.mubr.bf16.gmra.mxu0 %v1743
      %v1877 = vpop.f32.mrf.mxu0
      %v1878 = vadd.f32 0.0, %v1877
      %v1879 = vpop.f32.mrf.mxu0
      %v1880 = vpop.f32.mrf.mxu0
      %v1881 = vadd.f32 0.0, %v1880
      %v1882 = vpop.f32.mrf.mxu0
      %1883 = vmatprep.mubr.bf16.mxu0 0
      %1884 = vmatmul.mubr.bf16.gmra.mxu0 %v1746
      %v1885 = vpop.f32.mrf.mxu0
      %v1886 = vadd.f32 0.0, %v1885
      %v1887 = vpop.f32.mrf.mxu0
      %v1888 = vpop.f32.mrf.mxu0
      %v1889 = vadd.f32 0.0, %v1888
      %v1890 = vpop.f32.mrf.mxu0
      %1891 = vmatprep.mubr.bf16.mxu0 0
      %1892 = vmatmul.mubr.bf16.gmra.mxu0 %v1749
      %v1893 = vpop.f32.mrf.mxu0
      %v1894 = vadd.f32 0.0, %v1893
      %v1895 = vpop.f32.mrf.mxu0
      %v1896 = vpop.f32.mrf.mxu0
      %v1897 = vadd.f32 0.0, %v1896
      %v1898 = vpop.f32.mrf.mxu0
      %1899 = vmatprep.mubr.bf16.mxu0 0
      %1900 = vmatmul.mubr.bf16.gmra.mxu0 %v1752
      %v1901 = vpop.f32.mrf.mxu0
      %v1902 = vadd.f32 0.0, %v1901
      %v1903 = vpop.f32.mrf.mxu0
      %v1904 = vpop.f32.mrf.mxu0
      %v1905 = vadd.f32 0.0, %v1904
      %v1906 = vpop.f32.mrf.mxu0
      %1907 = vmatprep.mubr.bf16.mxu0 0
      %1908 = vmatmul.mubr.bf16.gmra.mxu0 %v1755
      %v1909 = vpop.f32.mrf.mxu0
      %v1910 = vadd.f32 0.0, %v1909
      %v1911 = vpop.f32.mrf.mxu0
      %v1912 = vpop.f32.mrf.mxu0
      %v1913 = vadd.f32 0.0, %v1912
      %v1914 = vpop.f32.mrf.mxu0
      %1915 = vmatprep.mubr.bf16.mxu0 0
      %1916 = vmatmul.mubr.bf16.gmra.mxu0 %v1758
      %v1917 = vpop.f32.mrf.mxu0
      %v1918 = vadd.f32 0.0, %v1917
      %v1919 = vpop.f32.mrf.mxu0
      %v1920 = vpop.f32.mrf.mxu0
      %v1921 = vadd.f32 0.0, %v1920
      %v1922 = vpop.f32.mrf.mxu0
      %1923 = vdwg.mxu0
      %v1924 = vadd.f32 %v1630, %v1798
      %v1925 = vadd.f32 %v1631, %v1801
      %v1926 = vadd.f32 %v1632, %v1806
      %v1927 = vadd.f32 %v1633, %v1809
      %v1928 = vadd.f32 %v1634, %v1814
      %v1929 = vadd.f32 %v1635, %v1817
      %v1930 = vadd.f32 %v1636, %v1822
      %v1931 = vadd.f32 %v1637, %v1825
      %v1932 = vadd.f32 %v1638, %v1830
      %v1933 = vadd.f32 %v1639, %v1833
      %v1934 = vadd.f32 %v1640, %v1838
      %v1935 = vadd.f32 %v1641, %v1841
      %v1936 = vadd.f32 %v1642, %v1846
      %v1937 = vadd.f32 %v1643, %v1849
      %v1938 = vadd.f32 %v1644, %v1854
      %v1939 = vadd.f32 %v1645, %v1857
      %v1940 = vadd.f32 %v1646, %v1862
      %v1941 = vadd.f32 %v1647, %v1865
      %v1942 = vadd.f32 %v1648, %v1870
      %v1943 = vadd.f32 %v1649, %v1873
      %v1944 = vadd.f32 %v1650, %v1878
      %v1945 = vadd.f32 %v1651, %v1881
      %v1946 = vadd.f32 %v1652, %v1886
      %v1947 = vadd.f32 %v1653, %v1889
      %v1948 = vadd.f32 %v1654, %v1894
      %v1949 = vadd.f32 %v1655, %v1897
      %v1950 = vadd.f32 %v1656, %v1902
      %v1951 = vadd.f32 %v1657, %v1905
      %v1952 = vadd.f32 %v1658, %v1910
      %v1953 = vadd.f32 %v1659, %v1913
      %v1954 = vadd.f32 %v1660, %v1918
      %v1955 = vadd.f32 %v1661, %v1921
      %v1956 = vld [vmem:[%s517 + $0x2] sm:$0xff]
      %v1957 = vld [vmem:[%s517 + $0xa] sm:$0xff]
      %v1958 = vld [vmem:[%s517 + $0x1a] sm:$0xff]
      %v1959 = vld [vmem:[%s517 + $0x22] sm:$0xff]
      %v1960 = vld [vmem:[%s517 + $0x32] sm:$0xff]
      %v1961 = vld [vmem:[%s517 + $0x3a] sm:$0xff]
      %v1962 = vld [vmem:[%s517 + $0x4a] sm:$0xff]
      %v1963 = vld [vmem:[%s517 + $0x52] sm:$0xff]
      %v1964 = vld [vmem:[%s517 + $0x62] sm:$0xff]
      %v1965 = vld [vmem:[%s517 + $0x6a] sm:$0xff]
      %v1966 = vld [vmem:[%s517 + $0x7a] sm:$0xff]
      %v1967 = vld [vmem:[%s517 + $0x82] sm:$0xff]
      %v1968 = vld [vmem:[%s517 + $0x92] sm:$0xff]
      %v1969 = vld [vmem:[%s517 + $0x9a] sm:$0xff]
      %v1970 = vld [vmem:[%s517 + $0xaa] sm:$0xff]
      %v1971 = vld [vmem:[%s517 + $0xb2] sm:$0xff]
      %v1972 = vld [vmem:[%s517 + $0xc2] sm:$0xff]
      %v1973 = vld [vmem:[%s517 + $0xca] sm:$0xff]
      %v1974 = vld [vmem:[%s517 + $0xda] sm:$0xff]
      %v1975 = vld [vmem:[%s517 + $0xe2] sm:$0xff]
      %v1976 = vld [vmem:[%s517 + $0xf2] sm:$0xff]
      %v1977 = vld [vmem:[%s517 + $0xfa] sm:$0xff]
      %v1978 = vld [vmem:[%s517 + $0x10a] sm:$0xff]
      %v1979 = vld [vmem:[%s517 + $0x112] sm:$0xff]
      %v1980 = vld [vmem:[%s517 + $0x122] sm:$0xff]
      %v1981 = vld [vmem:[%s517 + $0x12a] sm:$0xff]
      %v1982 = vld [vmem:[%s517 + $0x13a] sm:$0xff]
      %v1983 = vld [vmem:[%s517 + $0x142] sm:$0xff]
      %v1984 = vld [vmem:[%s517 + $0x152] sm:$0xff]
      %v1985 = vld [vmem:[%s517 + $0x15a] sm:$0xff]
      %v1986 = vld [vmem:[%s517 + $0x16a] sm:$0xff]
      %v1987 = vld [vmem:[%s517 + $0x172] sm:$0xff]
      %v1988 = vpack.c.bf16 %v1957, %v1956
      %v1989 = vpack.c.bf16 %v1959, %v1958
      %v1990 = vpack.c.bf16 %v1961, %v1960
      %v1991 = vpack.c.bf16 %v1963, %v1962
      %v1992 = vpack.c.bf16 %v1965, %v1964
      %v1993 = vpack.c.bf16 %v1967, %v1966
      %v1994 = vpack.c.bf16 %v1969, %v1968
      %v1995 = vpack.c.bf16 %v1971, %v1970
      %v1996 = vpack.c.bf16 %v1973, %v1972
      %v1997 = vpack.c.bf16 %v1975, %v1974
      %v1998 = vpack.c.bf16 %v1977, %v1976
      %v1999 = vpack.c.bf16 %v1979, %v1978
      %v2000 = vpack.c.bf16 %v1981, %v1980
      %v2001 = vpack.c.bf16 %v1983, %v1982
      %v2002 = vpack.c.bf16 %v1985, %v1984
      %v2003 = vpack.c.bf16 %v1987, %v1986
      %s2004 = scalar_lea.vmem %s3, 10
      %v2005 = vld [vmem:[%s2004] sm:$0x3]
      %v2007 = vsel %vm297, %v1988, 0
      %v2010 = vsel %vm297, %v1989, 0
      %v2013 = vsel %vm297, %v1990, 0
      %v2016 = vsel %vm297, %v1991, 0
      %v2019 = vsel %vm297, %v1992, 0
      %v2022 = vsel %vm297, %v1993, 0
      %v2025 = vsel %vm297, %v1994, 0
      %v2028 = vsel %vm297, %v1995, 0
      %v2031 = vsel %vm297, %v1996, 0
      %v2034 = vsel %vm297, %v1997, 0
      %v2037 = vsel %vm297, %v1998, 0
      %v2040 = vsel %vm297, %v1999, 0
      %v2043 = vsel %vm297, %v2000, 0
      %v2046 = vsel %vm297, %v2001, 0
      %v2049 = vsel %vm297, %v2002, 0
      %v2052 = vsel %vm297, %v2003, 0
      %v2055 = vsel %vm697, %v2005, 0
      %2057 = vmatprep.subr.bf16.mxu0 0
      %2058 = vmatpush1.bf16.msra.mxu0 0
      %2059 = vmatprep.subr.bf16.mxu0 0
      %2060 = vmatpush1.bf16.msra.mxu0 0
      %2061 = vmatprep.subr.bf16.mxu0 0
      %2062 = vmatpush1.bf16.msra.mxu0 0
      %2063 = vmatprep.subr.bf16.mxu0 0
      %2064 = vmatpush1.bf16.msra.mxu0 0
      %2065 = vmatprep.subr.bf16.mxu0 0
      %2066 = vmatpush1.bf16.msra.mxu0 0
      %2067 = vmatprep.subr.bf16.mxu0 0
      %2068 = vmatpush1.bf16.msra.mxu0 0
      %2069 = vmatprep.subr.bf16.mxu0 0
      %2070 = vmatpush1.bf16.msra.mxu0 0
      %2071 = vmatprep.subr.bf16.mxu0 0
      %2072 = vmatpush1.bf16.msra.mxu0 %v2055
      %2073 = vmatprep.subr.bf16.mxu0 0
      %2074 = vmatpush2.bf16.msra.mxu0 0
      %2075 = vmatprep.subr.bf16.mxu0 0
      %2076 = vmatpush2.bf16.msra.mxu0 0
      %2077 = vmatprep.subr.bf16.mxu0 0
      %2078 = vmatpush2.bf16.msra.mxu0 0
      %2079 = vmatprep.subr.bf16.mxu0 0
      %2080 = vmatpush2.bf16.msra.mxu0 0
      %2081 = vmatprep.subr.bf16.mxu0 0
      %2082 = vmatpush2.bf16.msra.mxu0 0
      %2083 = vmatprep.subr.bf16.mxu0 0
      %2084 = vmatpush2.bf16.msra.mxu0 0
      %2085 = vmatprep.subr.bf16.mxu0 0
      %2086 = vmatpush2.bf16.msra.mxu0 0
      %2087 = vmatprep.subr.bf16.mxu0 0
      %2088 = vmatpush2.bf16.msra.mxu0 0
      %2089 = vmatprep.mubr.bf16.mxu0 0
      %2090 = vmatmul.mubr.bf16.gmra.mxu0 %v2007
      %v2091 = vpop.f32.mrf.mxu0
      %v2092 = vadd.f32 0.0, %v2091
      %v2093 = vpop.f32.mrf.mxu0
      %v2094 = vpop.f32.mrf.mxu0
      %v2095 = vadd.f32 0.0, %v2094
      %v2096 = vpop.f32.mrf.mxu0
      %2097 = vmatprep.mubr.bf16.mxu0 0
      %2098 = vmatmul.mubr.bf16.gmra.mxu0 %v2010
      %v2099 = vpop.f32.mrf.mxu0
      %v2100 = vadd.f32 0.0, %v2099
      %v2101 = vpop.f32.mrf.mxu0
      %v2102 = vpop.f32.mrf.mxu0
      %v2103 = vadd.f32 0.0, %v2102
      %v2104 = vpop.f32.mrf.mxu0
      %2105 = vmatprep.mubr.bf16.mxu0 0
      %2106 = vmatmul.mubr.bf16.gmra.mxu0 %v2013
      %v2107 = vpop.f32.mrf.mxu0
      %v2108 = vadd.f32 0.0, %v2107
      %v2109 = vpop.f32.mrf.mxu0
      %v2110 = vpop.f32.mrf.mxu0
      %v2111 = vadd.f32 0.0, %v2110
      %v2112 = vpop.f32.mrf.mxu0
      %2113 = vmatprep.mubr.bf16.mxu0 0
      %2114 = vmatmul.mubr.bf16.gmra.mxu0 %v2016
      %v2115 = vpop.f32.mrf.mxu0
      %v2116 = vadd.f32 0.0, %v2115
      %v2117 = vpop.f32.mrf.mxu0
      %v2118 = vpop.f32.mrf.mxu0
      %v2119 = vadd.f32 0.0, %v2118
      %v2120 = vpop.f32.mrf.mxu0
      %2121 = vmatprep.mubr.bf16.mxu0 0
      %2122 = vmatmul.mubr.bf16.gmra.mxu0 %v2019
      %v2123 = vpop.f32.mrf.mxu0
      %v2124 = vadd.f32 0.0, %v2123
      %v2125 = vpop.f32.mrf.mxu0
      %v2126 = vpop.f32.mrf.mxu0
      %v2127 = vadd.f32 0.0, %v2126
      %v2128 = vpop.f32.mrf.mxu0
      %2129 = vmatprep.mubr.bf16.mxu0 0
      %2130 = vmatmul.mubr.bf16.gmra.mxu0 %v2022
      %v2131 = vpop.f32.mrf.mxu0
      %v2132 = vadd.f32 0.0, %v2131
      %v2133 = vpop.f32.mrf.mxu0
      %v2134 = vpop.f32.mrf.mxu0
      %v2135 = vadd.f32 0.0, %v2134
      %v2136 = vpop.f32.mrf.mxu0
      %2137 = vmatprep.mubr.bf16.mxu0 0
      %2138 = vmatmul.mubr.bf16.gmra.mxu0 %v2025
      %v2139 = vpop.f32.mrf.mxu0
      %v2140 = vadd.f32 0.0, %v2139
      %v2141 = vpop.f32.mrf.mxu0
      %v2142 = vpop.f32.mrf.mxu0
      %v2143 = vadd.f32 0.0, %v2142
      %v2144 = vpop.f32.mrf.mxu0
      %2145 = vmatprep.mubr.bf16.mxu0 0
      %2146 = vmatmul.mubr.bf16.gmra.mxu0 %v2028
      %v2147 = vpop.f32.mrf.mxu0
      %v2148 = vadd.f32 0.0, %v2147
      %v2149 = vpop.f32.mrf.mxu0
      %v2150 = vpop.f32.mrf.mxu0
      %v2151 = vadd.f32 0.0, %v2150
      %v2152 = vpop.f32.mrf.mxu0
      %2153 = vmatprep.mubr.bf16.mxu0 0
      %2154 = vmatmul.mubr.bf16.gmra.mxu0 %v2031
      %v2155 = vpop.f32.mrf.mxu0
      %v2156 = vadd.f32 0.0, %v2155
      %v2157 = vpop.f32.mrf.mxu0
      %v2158 = vpop.f32.mrf.mxu0
      %v2159 = vadd.f32 0.0, %v2158
      %v2160 = vpop.f32.mrf.mxu0
      %2161 = vmatprep.mubr.bf16.mxu0 0
      %2162 = vmatmul.mubr.bf16.gmra.mxu0 %v2034
      %v2163 = vpop.f32.mrf.mxu0
      %v2164 = vadd.f32 0.0, %v2163
      %v2165 = vpop.f32.mrf.mxu0
      %v2166 = vpop.f32.mrf.mxu0
      %v2167 = vadd.f32 0.0, %v2166
      %v2168 = vpop.f32.mrf.mxu0
      %2169 = vmatprep.mubr.bf16.mxu0 0
      %2170 = vmatmul.mubr.bf16.gmra.mxu0 %v2037
      %v2171 = vpop.f32.mrf.mxu0
      %v2172 = vadd.f32 0.0, %v2171
      %v2173 = vpop.f32.mrf.mxu0
      %v2174 = vpop.f32.mrf.mxu0
      %v2175 = vadd.f32 0.0, %v2174
      %v2176 = vpop.f32.mrf.mxu0
      %2177 = vmatprep.mubr.bf16.mxu0 0
      %2178 = vmatmul.mubr.bf16.gmra.mxu0 %v2040
      %v2179 = vpop.f32.mrf.mxu0
      %v2180 = vadd.f32 0.0, %v2179
      %v2181 = vpop.f32.mrf.mxu0
      %v2182 = vpop.f32.mrf.mxu0
      %v2183 = vadd.f32 0.0, %v2182
      %v2184 = vpop.f32.mrf.mxu0
      %2185 = vmatprep.mubr.bf16.mxu0 0
      %2186 = vmatmul.mubr.bf16.gmra.mxu0 %v2043
      %v2187 = vpop.f32.mrf.mxu0
      %v2188 = vadd.f32 0.0, %v2187
      %v2189 = vpop.f32.mrf.mxu0
      %v2190 = vpop.f32.mrf.mxu0
      %v2191 = vadd.f32 0.0, %v2190
      %v2192 = vpop.f32.mrf.mxu0
      %2193 = vmatprep.mubr.bf16.mxu0 0
      %2194 = vmatmul.mubr.bf16.gmra.mxu0 %v2046
      %v2195 = vpop.f32.mrf.mxu0
      %v2196 = vadd.f32 0.0, %v2195
      %v2197 = vpop.f32.mrf.mxu0
      %v2198 = vpop.f32.mrf.mxu0
      %v2199 = vadd.f32 0.0, %v2198
      %v2200 = vpop.f32.mrf.mxu0
      %2201 = vmatprep.mubr.bf16.mxu0 0
      %2202 = vmatmul.mubr.bf16.gmra.mxu0 %v2049
      %v2203 = vpop.f32.mrf.mxu0
      %v2204 = vadd.f32 0.0, %v2203
      %v2205 = vpop.f32.mrf.mxu0
      %v2206 = vpop.f32.mrf.mxu0
      %v2207 = vadd.f32 0.0, %v2206
      %v2208 = vpop.f32.mrf.mxu0
      %2209 = vmatprep.mubr.bf16.mxu0 0
      %2210 = vmatmul.mubr.bf16.gmra.mxu0 %v2052
      %v2211 = vpop.f32.mrf.mxu0
      %v2212 = vadd.f32 0.0, %v2211
      %v2213 = vpop.f32.mrf.mxu0
      %v2214 = vpop.f32.mrf.mxu0
      %v2215 = vadd.f32 0.0, %v2214
      %v2216 = vpop.f32.mrf.mxu0
      %2217 = vdwg.mxu0
      %v2218 = vadd.f32 %v1924, %v2092
      %v2219 = vadd.f32 %v1925, %v2095
      %v2220 = vadd.f32 %v1926, %v2100
      %v2221 = vadd.f32 %v1927, %v2103
      %v2222 = vadd.f32 %v1928, %v2108
      %v2223 = vadd.f32 %v1929, %v2111
      %v2224 = vadd.f32 %v1930, %v2116
      %v2225 = vadd.f32 %v1931, %v2119
      %v2226 = vadd.f32 %v1932, %v2124
      %v2227 = vadd.f32 %v1933, %v2127
      %v2228 = vadd.f32 %v1934, %v2132
      %v2229 = vadd.f32 %v1935, %v2135
      %v2230 = vadd.f32 %v1936, %v2140
      %v2231 = vadd.f32 %v1937, %v2143
      %v2232 = vadd.f32 %v1938, %v2148
      %v2233 = vadd.f32 %v1939, %v2151
      %v2234 = vadd.f32 %v1940, %v2156
      %v2235 = vadd.f32 %v1941, %v2159
      %v2236 = vadd.f32 %v1942, %v2164
      %v2237 = vadd.f32 %v1943, %v2167
      %v2238 = vadd.f32 %v1944, %v2172
      %v2239 = vadd.f32 %v1945, %v2175
      %v2240 = vadd.f32 %v1946, %v2180
      %v2241 = vadd.f32 %v1947, %v2183
      %v2242 = vadd.f32 %v1948, %v2188
      %v2243 = vadd.f32 %v1949, %v2191
      %v2244 = vadd.f32 %v1950, %v2196
      %v2245 = vadd.f32 %v1951, %v2199
      %v2246 = vadd.f32 %v1952, %v2204
      %v2247 = vadd.f32 %v1953, %v2207
      %v2248 = vadd.f32 %v1954, %v2212
      %v2249 = vadd.f32 %v1955, %v2215
      %s2250 = scalar_lea.vmem [#allocation2], 48
      %v2251 = vld [vmem:[%s2250] sm:$0xff]
      %v2252 = vld [vmem:[%s2250 + $0x8] sm:$0xff]
      %v2253 = vld [vmem:[%s2250 + $0x18] sm:$0xff]
      %v2254 = vld [vmem:[%s2250 + $0x20] sm:$0xff]
      %v2255 = vld [vmem:[%s2250 + $0x30] sm:$0xff]
      %v2256 = vld [vmem:[%s2250 + $0x38] sm:$0xff]
      %v2257 = vld [vmem:[%s2250 + $0x48] sm:$0xff]
      %v2258 = vld [vmem:[%s2250 + $0x50] sm:$0xff]
      %v2259 = vld [vmem:[%s2250 + $0x60] sm:$0xff]
      %v2260 = vld [vmem:[%s2250 + $0x68] sm:$0xff]
      %v2261 = vld [vmem:[%s2250 + $0x78] sm:$0xff]
      %v2262 = vld [vmem:[%s2250 + $0x80] sm:$0xff]
      %v2263 = vld [vmem:[%s2250 + $0x90] sm:$0xff]
      %v2264 = vld [vmem:[%s2250 + $0x98] sm:$0xff]
      %v2265 = vld [vmem:[%s2250 + $0xa8] sm:$0xff]
      %v2266 = vld [vmem:[%s2250 + $0xb0] sm:$0xff]
      %v2267 = vld [vmem:[%s2250 + $0xc0] sm:$0xff]
      %v2268 = vld [vmem:[%s2250 + $0xc8] sm:$0xff]
      %v2269 = vld [vmem:[%s2250 + $0xd8] sm:$0xff]
      %v2270 = vld [vmem:[%s2250 + $0xe0] sm:$0xff]
      %v2271 = vld [vmem:[%s2250 + $0xf0] sm:$0xff]
      %v2272 = vld [vmem:[%s2250 + $0xf8] sm:$0xff]
      %v2273 = vld [vmem:[%s2250 + $0x108] sm:$0xff]
      %v2274 = vld [vmem:[%s2250 + $0x110] sm:$0xff]
      %v2275 = vld [vmem:[%s2250 + $0x120] sm:$0xff]
      %v2276 = vld [vmem:[%s2250 + $0x128] sm:$0xff]
      %v2277 = vld [vmem:[%s2250 + $0x138] sm:$0xff]
      %v2278 = vld [vmem:[%s2250 + $0x140] sm:$0xff]
      %v2279 = vld [vmem:[%s2250 + $0x150] sm:$0xff]
      %v2280 = vld [vmem:[%s2250 + $0x158] sm:$0xff]
      %v2281 = vld [vmem:[%s2250 + $0x168] sm:$0xff]
      %v2282 = vld [vmem:[%s2250 + $0x170] sm:$0xff]
      %v2283 = vpack.c.bf16 %v2252, %v2251
      %v2284 = vpack.c.bf16 %v2254, %v2253
      %v2285 = vpack.c.bf16 %v2256, %v2255
      %v2286 = vpack.c.bf16 %v2258, %v2257
      %v2287 = vpack.c.bf16 %v2260, %v2259
      %v2288 = vpack.c.bf16 %v2262, %v2261
      %v2289 = vpack.c.bf16 %v2264, %v2263
      %v2290 = vpack.c.bf16 %v2266, %v2265
      %v2291 = vpack.c.bf16 %v2268, %v2267
      %v2292 = vpack.c.bf16 %v2270, %v2269
      %v2293 = vpack.c.bf16 %v2272, %v2271
      %v2294 = vpack.c.bf16 %v2274, %v2273
      %v2295 = vpack.c.bf16 %v2276, %v2275
      %v2296 = vpack.c.bf16 %v2278, %v2277
      %v2297 = vpack.c.bf16 %v2280, %v2279
      %v2298 = vpack.c.bf16 %v2282, %v2281
      %s2299 = scalar_lea.vmem %s3, 12
      %v2300 = vld [vmem:[%s2299] sm:$0x3]
      %v2302 = vsel %vm297, %v2283, 0
      %v2305 = vsel %vm297, %v2284, 0
      %v2308 = vsel %vm297, %v2285, 0
      %v2311 = vsel %vm297, %v2286, 0
      %v2314 = vsel %vm297, %v2287, 0
      %v2317 = vsel %vm297, %v2288, 0
      %v2320 = vsel %vm297, %v2289, 0
      %v2323 = vsel %vm297, %v2290, 0
      %v2326 = vsel %vm297, %v2291, 0
      %v2329 = vsel %vm297, %v2292, 0
      %v2332 = vsel %vm297, %v2293, 0
      %v2335 = vsel %vm297, %v2294, 0
      %v2338 = vsel %vm297, %v2295, 0
      %v2341 = vsel %vm297, %v2296, 0
      %v2344 = vsel %vm297, %v2297, 0
      %v2347 = vsel %vm297, %v2298, 0
      %v2350 = vsel %vm697, %v2300, 0
      %2352 = vmatprep.subr.bf16.mxu0 0
      %2353 = vmatpush1.bf16.msra.mxu0 0
      %2354 = vmatprep.subr.bf16.mxu0 0
      %2355 = vmatpush1.bf16.msra.mxu0 0
      %2356 = vmatprep.subr.bf16.mxu0 0
      %2357 = vmatpush1.bf16.msra.mxu0 0
      %2358 = vmatprep.subr.bf16.mxu0 0
      %2359 = vmatpush1.bf16.msra.mxu0 0
      %2360 = vmatprep.subr.bf16.mxu0 0
      %2361 = vmatpush1.bf16.msra.mxu0 0
      %2362 = vmatprep.subr.bf16.mxu0 0
      %2363 = vmatpush1.bf16.msra.mxu0 0
      %2364 = vmatprep.subr.bf16.mxu0 0
      %2365 = vmatpush1.bf16.msra.mxu0 0
      %2366 = vmatprep.subr.bf16.mxu0 0
      %2367 = vmatpush1.bf16.msra.mxu0 %v2350
      %2368 = vmatprep.subr.bf16.mxu0 0
      %2369 = vmatpush2.bf16.msra.mxu0 0
      %2370 = vmatprep.subr.bf16.mxu0 0
      %2371 = vmatpush2.bf16.msra.mxu0 0
      %2372 = vmatprep.subr.bf16.mxu0 0
      %2373 = vmatpush2.bf16.msra.mxu0 0
      %2374 = vmatprep.subr.bf16.mxu0 0
      %2375 = vmatpush2.bf16.msra.mxu0 0
      %2376 = vmatprep.subr.bf16.mxu0 0
      %2377 = vmatpush2.bf16.msra.mxu0 0
      %2378 = vmatprep.subr.bf16.mxu0 0
      %2379 = vmatpush2.bf16.msra.mxu0 0
      %2380 = vmatprep.subr.bf16.mxu0 0
      %2381 = vmatpush2.bf16.msra.mxu0 0
      %2382 = vmatprep.subr.bf16.mxu0 0
      %2383 = vmatpush2.bf16.msra.mxu0 0
      %2384 = vmatprep.mubr.bf16.mxu0 0
      %2385 = vmatmul.mubr.bf16.gmra.mxu0 %v2302
      %v2386 = vpop.f32.mrf.mxu0
      %v2387 = vadd.f32 0.0, %v2386
      %v2388 = vpop.f32.mrf.mxu0
      %v2389 = vpop.f32.mrf.mxu0
      %v2390 = vadd.f32 0.0, %v2389
      %v2391 = vpop.f32.mrf.mxu0
      %2392 = vmatprep.mubr.bf16.mxu0 0
      %2393 = vmatmul.mubr.bf16.gmra.mxu0 %v2305
      %v2394 = vpop.f32.mrf.mxu0
      %v2395 = vadd.f32 0.0, %v2394
      %v2396 = vpop.f32.mrf.mxu0
      %v2397 = vpop.f32.mrf.mxu0
      %v2398 = vadd.f32 0.0, %v2397
      %v2399 = vpop.f32.mrf.mxu0
      %2400 = vmatprep.mubr.bf16.mxu0 0
      %2401 = vmatmul.mubr.bf16.gmra.mxu0 %v2308
      %v2402 = vpop.f32.mrf.mxu0
      %v2403 = vadd.f32 0.0, %v2402
      %v2404 = vpop.f32.mrf.mxu0
      %v2405 = vpop.f32.mrf.mxu0
      %v2406 = vadd.f32 0.0, %v2405
      %v2407 = vpop.f32.mrf.mxu0
      %2408 = vmatprep.mubr.bf16.mxu0 0
      %2409 = vmatmul.mubr.bf16.gmra.mxu0 %v2311
      %v2410 = vpop.f32.mrf.mxu0
      %v2411 = vadd.f32 0.0, %v2410
      %v2412 = vpop.f32.mrf.mxu0
      %v2413 = vpop.f32.mrf.mxu0
      %v2414 = vadd.f32 0.0, %v2413
      %v2415 = vpop.f32.mrf.mxu0
      %2416 = vmatprep.mubr.bf16.mxu0 0
      %2417 = vmatmul.mubr.bf16.gmra.mxu0 %v2314
      %v2418 = vpop.f32.mrf.mxu0
      %v2419 = vadd.f32 0.0, %v2418
      %v2420 = vpop.f32.mrf.mxu0
      %v2421 = vpop.f32.mrf.mxu0
      %v2422 = vadd.f32 0.0, %v2421
      %v2423 = vpop.f32.mrf.mxu0
      %2424 = vmatprep.mubr.bf16.mxu0 0
      %2425 = vmatmul.mubr.bf16.gmra.mxu0 %v2317
      %v2426 = vpop.f32.mrf.mxu0
      %v2427 = vadd.f32 0.0, %v2426
      %v2428 = vpop.f32.mrf.mxu0
      %v2429 = vpop.f32.mrf.mxu0
      %v2430 = vadd.f32 0.0, %v2429
      %v2431 = vpop.f32.mrf.mxu0
      %2432 = vmatprep.mubr.bf16.mxu0 0
      %2433 = vmatmul.mubr.bf16.gmra.mxu0 %v2320
      %v2434 = vpop.f32.mrf.mxu0
      %v2435 = vadd.f32 0.0, %v2434
      %v2436 = vpop.f32.mrf.mxu0
      %v2437 = vpop.f32.mrf.mxu0
      %v2438 = vadd.f32 0.0, %v2437
      %v2439 = vpop.f32.mrf.mxu0
      %2440 = vmatprep.mubr.bf16.mxu0 0
      %2441 = vmatmul.mubr.bf16.gmra.mxu0 %v2323
      %v2442 = vpop.f32.mrf.mxu0
      %v2443 = vadd.f32 0.0, %v2442
      %v2444 = vpop.f32.mrf.mxu0
      %v2445 = vpop.f32.mrf.mxu0
      %v2446 = vadd.f32 0.0, %v2445
      %v2447 = vpop.f32.mrf.mxu0
      %2448 = vmatprep.mubr.bf16.mxu0 0
      %2449 = vmatmul.mubr.bf16.gmra.mxu0 %v2326
      %v2450 = vpop.f32.mrf.mxu0
      %v2451 = vadd.f32 0.0, %v2450
      %v2452 = vpop.f32.mrf.mxu0
      %v2453 = vpop.f32.mrf.mxu0
      %v2454 = vadd.f32 0.0, %v2453
      %v2455 = vpop.f32.mrf.mxu0
      %2456 = vmatprep.mubr.bf16.mxu0 0
      %2457 = vmatmul.mubr.bf16.gmra.mxu0 %v2329
      %v2458 = vpop.f32.mrf.mxu0
      %v2459 = vadd.f32 0.0, %v2458
      %v2460 = vpop.f32.mrf.mxu0
      %v2461 = vpop.f32.mrf.mxu0
      %v2462 = vadd.f32 0.0, %v2461
      %v2463 = vpop.f32.mrf.mxu0
      %2464 = vmatprep.mubr.bf16.mxu0 0
      %2465 = vmatmul.mubr.bf16.gmra.mxu0 %v2332
      %v2466 = vpop.f32.mrf.mxu0
      %v2467 = vadd.f32 0.0, %v2466
      %v2468 = vpop.f32.mrf.mxu0
      %v2469 = vpop.f32.mrf.mxu0
      %v2470 = vadd.f32 0.0, %v2469
      %v2471 = vpop.f32.mrf.mxu0
      %2472 = vmatprep.mubr.bf16.mxu0 0
      %2473 = vmatmul.mubr.bf16.gmra.mxu0 %v2335
      %v2474 = vpop.f32.mrf.mxu0
      %v2475 = vadd.f32 0.0, %v2474
      %v2476 = vpop.f32.mrf.mxu0
      %v2477 = vpop.f32.mrf.mxu0
      %v2478 = vadd.f32 0.0, %v2477
      %v2479 = vpop.f32.mrf.mxu0
      %2480 = vmatprep.mubr.bf16.mxu0 0
      %2481 = vmatmul.mubr.bf16.gmra.mxu0 %v2338
      %v2482 = vpop.f32.mrf.mxu0
      %v2483 = vadd.f32 0.0, %v2482
      %v2484 = vpop.f32.mrf.mxu0
      %v2485 = vpop.f32.mrf.mxu0
      %v2486 = vadd.f32 0.0, %v2485
      %v2487 = vpop.f32.mrf.mxu0
      %2488 = vmatprep.mubr.bf16.mxu0 0
      %2489 = vmatmul.mubr.bf16.gmra.mxu0 %v2341
      %v2490 = vpop.f32.mrf.mxu0
      %v2491 = vadd.f32 0.0, %v2490
      %v2492 = vpop.f32.mrf.mxu0
      %v2493 = vpop.f32.mrf.mxu0
      %v2494 = vadd.f32 0.0, %v2493
      %v2495 = vpop.f32.mrf.mxu0
      %2496 = vmatprep.mubr.bf16.mxu0 0
      %2497 = vmatmul.mubr.bf16.gmra.mxu0 %v2344
      %v2498 = vpop.f32.mrf.mxu0
      %v2499 = vadd.f32 0.0, %v2498
      %v2500 = vpop.f32.mrf.mxu0
      %v2501 = vpop.f32.mrf.mxu0
      %v2502 = vadd.f32 0.0, %v2501
      %v2503 = vpop.f32.mrf.mxu0
      %2504 = vmatprep.mubr.bf16.mxu0 0
      %2505 = vmatmul.mubr.bf16.gmra.mxu0 %v2347
      %v2506 = vpop.f32.mrf.mxu0
      %v2507 = vadd.f32 0.0, %v2506
      %v2508 = vpop.f32.mrf.mxu0
      %v2509 = vpop.f32.mrf.mxu0
      %v2510 = vadd.f32 0.0, %v2509
      %v2511 = vpop.f32.mrf.mxu0
      %2512 = vdwg.mxu0
      %v2513 = vadd.f32 %v2218, %v2387
      %v2514 = vadd.f32 %v2219, %v2390
      %v2515 = vadd.f32 %v2220, %v2395
      %v2516 = vadd.f32 %v2221, %v2398
      %v2517 = vadd.f32 %v2222, %v2403
      %v2518 = vadd.f32 %v2223, %v2406
      %v2519 = vadd.f32 %v2224, %v2411
      %v2520 = vadd.f32 %v2225, %v2414
      %v2521 = vadd.f32 %v2226, %v2419
      %v2522 = vadd.f32 %v2227, %v2422
      %v2523 = vadd.f32 %v2228, %v2427
      %v2524 = vadd.f32 %v2229, %v2430
      %v2525 = vadd.f32 %v2230, %v2435
      %v2526 = vadd.f32 %v2231, %v2438
      %v2527 = vadd.f32 %v2232, %v2443
      %v2528 = vadd.f32 %v2233, %v2446
      %v2529 = vadd.f32 %v2234, %v2451
      %v2530 = vadd.f32 %v2235, %v2454
      %v2531 = vadd.f32 %v2236, %v2459
      %v2532 = vadd.f32 %v2237, %v2462
      %v2533 = vadd.f32 %v2238, %v2467
      %v2534 = vadd.f32 %v2239, %v2470
      %v2535 = vadd.f32 %v2240, %v2475
      %v2536 = vadd.f32 %v2241, %v2478
      %v2537 = vadd.f32 %v2242, %v2483
      %v2538 = vadd.f32 %v2243, %v2486
      %v2539 = vadd.f32 %v2244, %v2491
      %v2540 = vadd.f32 %v2245, %v2494
      %v2541 = vadd.f32 %v2246, %v2499
      %v2542 = vadd.f32 %v2247, %v2502
      %v2543 = vadd.f32 %v2248, %v2507
      %v2544 = vadd.f32 %v2249, %v2510
      %v2545 = vld [vmem:[%s2250 + $0x1] sm:$0xff]
      %v2546 = vld [vmem:[%s2250 + $0x9] sm:$0xff]
      %v2547 = vld [vmem:[%s2250 + $0x19] sm:$0xff]
      %v2548 = vld [vmem:[%s2250 + $0x21] sm:$0xff]
      %v2549 = vld [vmem:[%s2250 + $0x31] sm:$0xff]
      %v2550 = vld [vmem:[%s2250 + $0x39] sm:$0xff]
      %v2551 = vld [vmem:[%s2250 + $0x49] sm:$0xff]
      %v2552 = vld [vmem:[%s2250 + $0x51] sm:$0xff]
      %v2553 = vld [vmem:[%s2250 + $0x61] sm:$0xff]
      %v2554 = vld [vmem:[%s2250 + $0x69] sm:$0xff]
      %v2555 = vld [vmem:[%s2250 + $0x79] sm:$0xff]
      %v2556 = vld [vmem:[%s2250 + $0x81] sm:$0xff]
      %v2557 = vld [vmem:[%s2250 + $0x91] sm:$0xff]
      %v2558 = vld [vmem:[%s2250 + $0x99] sm:$0xff]
      %v2559 = vld [vmem:[%s2250 + $0xa9] sm:$0xff]
      %v2560 = vld [vmem:[%s2250 + $0xb1] sm:$0xff]
      %v2561 = vld [vmem:[%s2250 + $0xc1] sm:$0xff]
      %v2562 = vld [vmem:[%s2250 + $0xc9] sm:$0xff]
      %v2563 = vld [vmem:[%s2250 + $0xd9] sm:$0xff]
      %v2564 = vld [vmem:[%s2250 + $0xe1] sm:$0xff]
      %v2565 = vld [vmem:[%s2250 + $0xf1] sm:$0xff]
      %v2566 = vld [vmem:[%s2250 + $0xf9] sm:$0xff]
      %v2567 = vld [vmem:[%s2250 + $0x109] sm:$0xff]
      %v2568 = vld [vmem:[%s2250 + $0x111] sm:$0xff]
      %v2569 = vld [vmem:[%s2250 + $0x121] sm:$0xff]
      %v2570 = vld [vmem:[%s2250 + $0x129] sm:$0xff]
      %v2571 = vld [vmem:[%s2250 + $0x139] sm:$0xff]
      %v2572 = vld [vmem:[%s2250 + $0x141] sm:$0xff]
      %v2573 = vld [vmem:[%s2250 + $0x151] sm:$0xff]
      %v2574 = vld [vmem:[%s2250 + $0x159] sm:$0xff]
      %v2575 = vld [vmem:[%s2250 + $0x169] sm:$0xff]
      %v2576 = vld [vmem:[%s2250 + $0x171] sm:$0xff]
      %v2577 = vpack.c.bf16 %v2546, %v2545
      %v2578 = vpack.c.bf16 %v2548, %v2547
      %v2579 = vpack.c.bf16 %v2550, %v2549
      %v2580 = vpack.c.bf16 %v2552, %v2551
      %v2581 = vpack.c.bf16 %v2554, %v2553
      %v2582 = vpack.c.bf16 %v2556, %v2555
      %v2583 = vpack.c.bf16 %v2558, %v2557
      %v2584 = vpack.c.bf16 %v2560, %v2559
      %v2585 = vpack.c.bf16 %v2562, %v2561
      %v2586 = vpack.c.bf16 %v2564, %v2563
      %v2587 = vpack.c.bf16 %v2566, %v2565
      %v2588 = vpack.c.bf16 %v2568, %v2567
      %v2589 = vpack.c.bf16 %v2570, %v2569
      %v2590 = vpack.c.bf16 %v2572, %v2571
      %v2591 = vpack.c.bf16 %v2574, %v2573
      %v2592 = vpack.c.bf16 %v2576, %v2575
      %s2593 = scalar_lea.vmem %s3, 14
      %v2594 = vld [vmem:[%s2593] sm:$0x3]
      %v2596 = vsel %vm297, %v2577, 0
      %v2599 = vsel %vm297, %v2578, 0
      %v2602 = vsel %vm297, %v2579, 0
      %v2605 = vsel %vm297, %v2580, 0
      %v2608 = vsel %vm297, %v2581, 0
      %v2611 = vsel %vm297, %v2582, 0
      %v2614 = vsel %vm297, %v2583, 0
      %v2617 = vsel %vm297, %v2584, 0
      %v2620 = vsel %vm297, %v2585, 0
      %v2623 = vsel %vm297, %v2586, 0
      %v2626 = vsel %vm297, %v2587, 0
      %v2629 = vsel %vm297, %v2588, 0
      %v2632 = vsel %vm297, %v2589, 0
      %v2635 = vsel %vm297, %v2590, 0
      %v2638 = vsel %vm297, %v2591, 0
      %v2641 = vsel %vm297, %v2592, 0
      %v2644 = vsel %vm697, %v2594, 0
      %2646 = vmatprep.subr.bf16.mxu0 0
      %2647 = vmatpush1.bf16.msra.mxu0 0
      %2648 = vmatprep.subr.bf16.mxu0 0
      %2649 = vmatpush1.bf16.msra.mxu0 0
      %2650 = vmatprep.subr.bf16.mxu0 0
      %2651 = vmatpush1.bf16.msra.mxu0 0
      %2652 = vmatprep.subr.bf16.mxu0 0
      %2653 = vmatpush1.bf16.msra.mxu0 0
      %2654 = vmatprep.subr.bf16.mxu0 0
      %2655 = vmatpush1.bf16.msra.mxu0 0
      %2656 = vmatprep.subr.bf16.mxu0 0
      %2657 = vmatpush1.bf16.msra.mxu0 0
      %2658 = vmatprep.subr.bf16.mxu0 0
      %2659 = vmatpush1.bf16.msra.mxu0 0
      %2660 = vmatprep.subr.bf16.mxu0 0
      %2661 = vmatpush1.bf16.msra.mxu0 %v2644
      %2662 = vmatprep.subr.bf16.mxu0 0
      %2663 = vmatpush2.bf16.msra.mxu0 0
      %2664 = vmatprep.subr.bf16.mxu0 0
      %2665 = vmatpush2.bf16.msra.mxu0 0
      %2666 = vmatprep.subr.bf16.mxu0 0
      %2667 = vmatpush2.bf16.msra.mxu0 0
      %2668 = vmatprep.subr.bf16.mxu0 0
      %2669 = vmatpush2.bf16.msra.mxu0 0
      %2670 = vmatprep.subr.bf16.mxu0 0
      %2671 = vmatpush2.bf16.msra.mxu0 0
      %2672 = vmatprep.subr.bf16.mxu0 0
      %2673 = vmatpush2.bf16.msra.mxu0 0
      %2674 = vmatprep.subr.bf16.mxu0 0
      %2675 = vmatpush2.bf16.msra.mxu0 0
      %2676 = vmatprep.subr.bf16.mxu0 0
      %2677 = vmatpush2.bf16.msra.mxu0 0
      %2678 = vmatprep.mubr.bf16.mxu0 0
      %2679 = vmatmul.mubr.bf16.gmra.mxu0 %v2596
      %v2680 = vpop.f32.mrf.mxu0
      %v2681 = vadd.f32 0.0, %v2680
      %v2682 = vpop.f32.mrf.mxu0
      %v2683 = vpop.f32.mrf.mxu0
      %v2684 = vadd.f32 0.0, %v2683
      %v2685 = vpop.f32.mrf.mxu0
      %2686 = vmatprep.mubr.bf16.mxu0 0
      %2687 = vmatmul.mubr.bf16.gmra.mxu0 %v2599
      %v2688 = vpop.f32.mrf.mxu0
      %v2689 = vadd.f32 0.0, %v2688
      %v2690 = vpop.f32.mrf.mxu0
      %v2691 = vpop.f32.mrf.mxu0
      %v2692 = vadd.f32 0.0, %v2691
      %v2693 = vpop.f32.mrf.mxu0
      %2694 = vmatprep.mubr.bf16.mxu0 0
      %2695 = vmatmul.mubr.bf16.gmra.mxu0 %v2602
      %v2696 = vpop.f32.mrf.mxu0
      %v2697 = vadd.f32 0.0, %v2696
      %v2698 = vpop.f32.mrf.mxu0
      %v2699 = vpop.f32.mrf.mxu0
      %v2700 = vadd.f32 0.0, %v2699
      %v2701 = vpop.f32.mrf.mxu0
      %2702 = vmatprep.mubr.bf16.mxu0 0
      %2703 = vmatmul.mubr.bf16.gmra.mxu0 %v2605
      %v2704 = vpop.f32.mrf.mxu0
      %v2705 = vadd.f32 0.0, %v2704
      %v2706 = vpop.f32.mrf.mxu0
      %v2707 = vpop.f32.mrf.mxu0
      %v2708 = vadd.f32 0.0, %v2707
      %v2709 = vpop.f32.mrf.mxu0
      %2710 = vmatprep.mubr.bf16.mxu0 0
      %2711 = vmatmul.mubr.bf16.gmra.mxu0 %v2608
      %v2712 = vpop.f32.mrf.mxu0
      %v2713 = vadd.f32 0.0, %v2712
      %v2714 = vpop.f32.mrf.mxu0
      %v2715 = vpop.f32.mrf.mxu0
      %v2716 = vadd.f32 0.0, %v2715
      %v2717 = vpop.f32.mrf.mxu0
      %2718 = vmatprep.mubr.bf16.mxu0 0
      %2719 = vmatmul.mubr.bf16.gmra.mxu0 %v2611
      %v2720 = vpop.f32.mrf.mxu0
      %v2721 = vadd.f32 0.0, %v2720
      %v2722 = vpop.f32.mrf.mxu0
      %v2723 = vpop.f32.mrf.mxu0
      %v2724 = vadd.f32 0.0, %v2723
      %v2725 = vpop.f32.mrf.mxu0
      %2726 = vmatprep.mubr.bf16.mxu0 0
      %2727 = vmatmul.mubr.bf16.gmra.mxu0 %v2614
      %v2728 = vpop.f32.mrf.mxu0
      %v2729 = vadd.f32 0.0, %v2728
      %v2730 = vpop.f32.mrf.mxu0
      %v2731 = vpop.f32.mrf.mxu0
      %v2732 = vadd.f32 0.0, %v2731
      %v2733 = vpop.f32.mrf.mxu0
      %2734 = vmatprep.mubr.bf16.mxu0 0
      %2735 = vmatmul.mubr.bf16.gmra.mxu0 %v2617
      %v2736 = vpop.f32.mrf.mxu0
      %v2737 = vadd.f32 0.0, %v2736
      %v2738 = vpop.f32.mrf.mxu0
      %v2739 = vpop.f32.mrf.mxu0
      %v2740 = vadd.f32 0.0, %v2739
      %v2741 = vpop.f32.mrf.mxu0
      %2742 = vmatprep.mubr.bf16.mxu0 0
      %2743 = vmatmul.mubr.bf16.gmra.mxu0 %v2620
      %v2744 = vpop.f32.mrf.mxu0
      %v2745 = vadd.f32 0.0, %v2744
      %v2746 = vpop.f32.mrf.mxu0
      %v2747 = vpop.f32.mrf.mxu0
      %v2748 = vadd.f32 0.0, %v2747
      %v2749 = vpop.f32.mrf.mxu0
      %2750 = vmatprep.mubr.bf16.mxu0 0
      %2751 = vmatmul.mubr.bf16.gmra.mxu0 %v2623
      %v2752 = vpop.f32.mrf.mxu0
      %v2753 = vadd.f32 0.0, %v2752
      %v2754 = vpop.f32.mrf.mxu0
      %v2755 = vpop.f32.mrf.mxu0
      %v2756 = vadd.f32 0.0, %v2755
      %v2757 = vpop.f32.mrf.mxu0
      %2758 = vmatprep.mubr.bf16.mxu0 0
      %2759 = vmatmul.mubr.bf16.gmra.mxu0 %v2626
      %v2760 = vpop.f32.mrf.mxu0
      %v2761 = vadd.f32 0.0, %v2760
      %v2762 = vpop.f32.mrf.mxu0
      %v2763 = vpop.f32.mrf.mxu0
      %v2764 = vadd.f32 0.0, %v2763
      %v2765 = vpop.f32.mrf.mxu0
      %2766 = vmatprep.mubr.bf16.mxu0 0
      %2767 = vmatmul.mubr.bf16.gmra.mxu0 %v2629
      %v2768 = vpop.f32.mrf.mxu0
      %v2769 = vadd.f32 0.0, %v2768
      %v2770 = vpop.f32.mrf.mxu0
      %v2771 = vpop.f32.mrf.mxu0
      %v2772 = vadd.f32 0.0, %v2771
      %v2773 = vpop.f32.mrf.mxu0
      %2774 = vmatprep.mubr.bf16.mxu0 0
      %2775 = vmatmul.mubr.bf16.gmra.mxu0 %v2632
      %v2776 = vpop.f32.mrf.mxu0
      %v2777 = vadd.f32 0.0, %v2776
      %v2778 = vpop.f32.mrf.mxu0
      %v2779 = vpop.f32.mrf.mxu0
      %v2780 = vadd.f32 0.0, %v2779
      %v2781 = vpop.f32.mrf.mxu0
      %2782 = vmatprep.mubr.bf16.mxu0 0
      %2783 = vmatmul.mubr.bf16.gmra.mxu0 %v2635
      %v2784 = vpop.f32.mrf.mxu0
      %v2785 = vadd.f32 0.0, %v2784
      %v2786 = vpop.f32.mrf.mxu0
      %v2787 = vpop.f32.mrf.mxu0
      %v2788 = vadd.f32 0.0, %v2787
      %v2789 = vpop.f32.mrf.mxu0
      %2790 = vmatprep.mubr.bf16.mxu0 0
      %2791 = vmatmul.mubr.bf16.gmra.mxu0 %v2638
      %v2792 = vpop.f32.mrf.mxu0
      %v2793 = vadd.f32 0.0, %v2792
      %v2794 = vpop.f32.mrf.mxu0
      %v2795 = vpop.f32.mrf.mxu0
      %v2796 = vadd.f32 0.0, %v2795
      %v2797 = vpop.f32.mrf.mxu0
      %2798 = vmatprep.mubr.bf16.mxu0 0
      %2799 = vmatmul.mubr.bf16.gmra.mxu0 %v2641
      %v2800 = vpop.f32.mrf.mxu0
      %v2801 = vadd.f32 0.0, %v2800
      %v2802 = vpop.f32.mrf.mxu0
      %v2803 = vpop.f32.mrf.mxu0
      %v2804 = vadd.f32 0.0, %v2803
      %v2805 = vpop.f32.mrf.mxu0
      %2806 = vdwg.mxu0
      %v2807 = vadd.f32 %v2513, %v2681
      %v2808 = vadd.f32 %v2514, %v2684
      %v2809 = vadd.f32 %v2515, %v2689
      %v2810 = vadd.f32 %v2516, %v2692
      %v2811 = vadd.f32 %v2517, %v2697
      %v2812 = vadd.f32 %v2518, %v2700
      %v2813 = vadd.f32 %v2519, %v2705
      %v2814 = vadd.f32 %v2520, %v2708
      %v2815 = vadd.f32 %v2521, %v2713
      %v2816 = vadd.f32 %v2522, %v2716
      %v2817 = vadd.f32 %v2523, %v2721
      %v2818 = vadd.f32 %v2524, %v2724
      %v2819 = vadd.f32 %v2525, %v2729
      %v2820 = vadd.f32 %v2526, %v2732
      %v2821 = vadd.f32 %v2527, %v2737
      %v2822 = vadd.f32 %v2528, %v2740
      %v2823 = vadd.f32 %v2529, %v2745
      %v2824 = vadd.f32 %v2530, %v2748
      %v2825 = vadd.f32 %v2531, %v2753
      %v2826 = vadd.f32 %v2532, %v2756
      %v2827 = vadd.f32 %v2533, %v2761
      %v2828 = vadd.f32 %v2534, %v2764
      %v2829 = vadd.f32 %v2535, %v2769
      %v2830 = vadd.f32 %v2536, %v2772
      %v2831 = vadd.f32 %v2537, %v2777
      %v2832 = vadd.f32 %v2538, %v2780
      %v2833 = vadd.f32 %v2539, %v2785
      %v2834 = vadd.f32 %v2540, %v2788
      %v2835 = vadd.f32 %v2541, %v2793
      %v2836 = vadd.f32 %v2542, %v2796
      %v2837 = vadd.f32 %v2543, %v2801
      %v2838 = vadd.f32 %v2544, %v2804
      %v2839 = vld [vmem:[%s2250 + $0x2] sm:$0xff]
      %v2840 = vld [vmem:[%s2250 + $0xa] sm:$0xff]
      %v2841 = vld [vmem:[%s2250 + $0x1a] sm:$0xff]
      %v2842 = vld [vmem:[%s2250 + $0x22] sm:$0xff]
      %v2843 = vld [vmem:[%s2250 + $0x32] sm:$0xff]
      %v2844 = vld [vmem:[%s2250 + $0x3a] sm:$0xff]
      %v2845 = vld [vmem:[%s2250 + $0x4a] sm:$0xff]
      %v2846 = vld [vmem:[%s2250 + $0x52] sm:$0xff]
      %v2847 = vld [vmem:[%s2250 + $0x62] sm:$0xff]
      %v2848 = vld [vmem:[%s2250 + $0x6a] sm:$0xff]
      %v2849 = vld [vmem:[%s2250 + $0x7a] sm:$0xff]
      %v2850 = vld [vmem:[%s2250 + $0x82] sm:$0xff]
      %v2851 = vld [vmem:[%s2250 + $0x92] sm:$0xff]
      %v2852 = vld [vmem:[%s2250 + $0x9a] sm:$0xff]
      %v2853 = vld [vmem:[%s2250 + $0xaa] sm:$0xff]
      %v2854 = vld [vmem:[%s2250 + $0xb2] sm:$0xff]
      %v2855 = vld [vmem:[%s2250 + $0xc2] sm:$0xff]
      %v2856 = vld [vmem:[%s2250 + $0xca] sm:$0xff]
      %v2857 = vld [vmem:[%s2250 + $0xda] sm:$0xff]
      %v2858 = vld [vmem:[%s2250 + $0xe2] sm:$0xff]
      %v2859 = vld [vmem:[%s2250 + $0xf2] sm:$0xff]
      %v2860 = vld [vmem:[%s2250 + $0xfa] sm:$0xff]
      %v2861 = vld [vmem:[%s2250 + $0x10a] sm:$0xff]
      %v2862 = vld [vmem:[%s2250 + $0x112] sm:$0xff]
      %v2863 = vld [vmem:[%s2250 + $0x122] sm:$0xff]
      %v2864 = vld [vmem:[%s2250 + $0x12a] sm:$0xff]
      %v2865 = vld [vmem:[%s2250 + $0x13a] sm:$0xff]
      %v2866 = vld [vmem:[%s2250 + $0x142] sm:$0xff]
      %v2867 = vld [vmem:[%s2250 + $0x152] sm:$0xff]
      %v2868 = vld [vmem:[%s2250 + $0x15a] sm:$0xff]
      %v2869 = vld [vmem:[%s2250 + $0x16a] sm:$0xff]
      %v2870 = vld [vmem:[%s2250 + $0x172] sm:$0xff]
      %v2871 = vpack.c.bf16 %v2840, %v2839
      %v2872 = vpack.c.bf16 %v2842, %v2841
      %v2873 = vpack.c.bf16 %v2844, %v2843
      %v2874 = vpack.c.bf16 %v2846, %v2845
      %v2875 = vpack.c.bf16 %v2848, %v2847
      %v2876 = vpack.c.bf16 %v2850, %v2849
      %v2877 = vpack.c.bf16 %v2852, %v2851
      %v2878 = vpack.c.bf16 %v2854, %v2853
      %v2879 = vpack.c.bf16 %v2856, %v2855
      %v2880 = vpack.c.bf16 %v2858, %v2857
      %v2881 = vpack.c.bf16 %v2860, %v2859
      %v2882 = vpack.c.bf16 %v2862, %v2861
      %v2883 = vpack.c.bf16 %v2864, %v2863
      %v2884 = vpack.c.bf16 %v2866, %v2865
      %v2885 = vpack.c.bf16 %v2868, %v2867
      %v2886 = vpack.c.bf16 %v2870, %v2869
      %s2887 = scalar_lea.vmem %s3, 16
      %v2888 = vld [vmem:[%s2887] sm:$0x3]
      %v2890 = vsel %vm297, %v2871, 0
      %v2893 = vsel %vm297, %v2872, 0
      %v2896 = vsel %vm297, %v2873, 0
      %v2899 = vsel %vm297, %v2874, 0
      %v2902 = vsel %vm297, %v2875, 0
      %v2905 = vsel %vm297, %v2876, 0
      %v2908 = vsel %vm297, %v2877, 0
      %v2911 = vsel %vm297, %v2878, 0
      %v2914 = vsel %vm297, %v2879, 0
      %v2917 = vsel %vm297, %v2880, 0
      %v2920 = vsel %vm297, %v2881, 0
      %v2923 = vsel %vm297, %v2882, 0
      %v2926 = vsel %vm297, %v2883, 0
      %v2929 = vsel %vm297, %v2884, 0
      %v2932 = vsel %vm297, %v2885, 0
      %v2935 = vsel %vm297, %v2886, 0
      %v2938 = vsel %vm697, %v2888, 0
      %2940 = vmatprep.subr.bf16.mxu0 0
      %2941 = vmatpush1.bf16.msra.mxu0 0
      %2942 = vmatprep.subr.bf16.mxu0 0
      %2943 = vmatpush1.bf16.msra.mxu0 0
      %2944 = vmatprep.subr.bf16.mxu0 0
      %2945 = vmatpush1.bf16.msra.mxu0 0
      %2946 = vmatprep.subr.bf16.mxu0 0
      %2947 = vmatpush1.bf16.msra.mxu0 0
      %2948 = vmatprep.subr.bf16.mxu0 0
      %2949 = vmatpush1.bf16.msra.mxu0 0
      %2950 = vmatprep.subr.bf16.mxu0 0
      %2951 = vmatpush1.bf16.msra.mxu0 0
      %2952 = vmatprep.subr.bf16.mxu0 0
      %2953 = vmatpush1.bf16.msra.mxu0 0
      %2954 = vmatprep.subr.bf16.mxu0 0
      %2955 = vmatpush1.bf16.msra.mxu0 %v2938
      %2956 = vmatprep.subr.bf16.mxu0 0
      %2957 = vmatpush2.bf16.msra.mxu0 0
      %2958 = vmatprep.subr.bf16.mxu0 0
      %2959 = vmatpush2.bf16.msra.mxu0 0
      %2960 = vmatprep.subr.bf16.mxu0 0
      %2961 = vmatpush2.bf16.msra.mxu0 0
      %2962 = vmatprep.subr.bf16.mxu0 0
      %2963 = vmatpush2.bf16.msra.mxu0 0
      %2964 = vmatprep.subr.bf16.mxu0 0
      %2965 = vmatpush2.bf16.msra.mxu0 0
      %2966 = vmatprep.subr.bf16.mxu0 0
      %2967 = vmatpush2.bf16.msra.mxu0 0
      %2968 = vmatprep.subr.bf16.mxu0 0
      %2969 = vmatpush2.bf16.msra.mxu0 0
      %2970 = vmatprep.subr.bf16.mxu0 0
      %2971 = vmatpush2.bf16.msra.mxu0 0
      %2972 = vmatprep.mubr.bf16.mxu0 0
      %2973 = vmatmul.mubr.bf16.gmra.mxu0 %v2890
      %v2974 = vpop.f32.mrf.mxu0
      %v2975 = vadd.f32 0.0, %v2974
      %v2976 = vpop.f32.mrf.mxu0
      %v2977 = vpop.f32.mrf.mxu0
      %v2978 = vadd.f32 0.0, %v2977
      %v2979 = vpop.f32.mrf.mxu0
      %2980 = vmatprep.mubr.bf16.mxu0 0
      %2981 = vmatmul.mubr.bf16.gmra.mxu0 %v2893
      %v2982 = vpop.f32.mrf.mxu0
      %v2983 = vadd.f32 0.0, %v2982
      %v2984 = vpop.f32.mrf.mxu0
      %v2985 = vpop.f32.mrf.mxu0
      %v2986 = vadd.f32 0.0, %v2985
      %v2987 = vpop.f32.mrf.mxu0
      %2988 = vmatprep.mubr.bf16.mxu0 0
      %2989 = vmatmul.mubr.bf16.gmra.mxu0 %v2896
      %v2990 = vpop.f32.mrf.mxu0
      %v2991 = vadd.f32 0.0, %v2990
      %v2992 = vpop.f32.mrf.mxu0
      %v2993 = vpop.f32.mrf.mxu0
      %v2994 = vadd.f32 0.0, %v2993
      %v2995 = vpop.f32.mrf.mxu0
      %2996 = vmatprep.mubr.bf16.mxu0 0
      %2997 = vmatmul.mubr.bf16.gmra.mxu0 %v2899
      %v2998 = vpop.f32.mrf.mxu0
      %v2999 = vadd.f32 0.0, %v2998
      %v3000 = vpop.f32.mrf.mxu0
      %v3001 = vpop.f32.mrf.mxu0
      %v3002 = vadd.f32 0.0, %v3001
      %v3003 = vpop.f32.mrf.mxu0
      %3004 = vmatprep.mubr.bf16.mxu0 0
      %3005 = vmatmul.mubr.bf16.gmra.mxu0 %v2902
      %v3006 = vpop.f32.mrf.mxu0
      %v3007 = vadd.f32 0.0, %v3006
      %v3008 = vpop.f32.mrf.mxu0
      %v3009 = vpop.f32.mrf.mxu0
      %v3010 = vadd.f32 0.0, %v3009
      %v3011 = vpop.f32.mrf.mxu0
      %3012 = vmatprep.mubr.bf16.mxu0 0
      %3013 = vmatmul.mubr.bf16.gmra.mxu0 %v2905
      %v3014 = vpop.f32.mrf.mxu0
      %v3015 = vadd.f32 0.0, %v3014
      %v3016 = vpop.f32.mrf.mxu0
      %v3017 = vpop.f32.mrf.mxu0
      %v3018 = vadd.f32 0.0, %v3017
      %v3019 = vpop.f32.mrf.mxu0
      %3020 = vmatprep.mubr.bf16.mxu0 0
      %3021 = vmatmul.mubr.bf16.gmra.mxu0 %v2908
      %v3022 = vpop.f32.mrf.mxu0
      %v3023 = vadd.f32 0.0, %v3022
      %v3024 = vpop.f32.mrf.mxu0
      %v3025 = vpop.f32.mrf.mxu0
      %v3026 = vadd.f32 0.0, %v3025
      %v3027 = vpop.f32.mrf.mxu0
      %3028 = vmatprep.mubr.bf16.mxu0 0
      %3029 = vmatmul.mubr.bf16.gmra.mxu0 %v2911
      %v3030 = vpop.f32.mrf.mxu0
      %v3031 = vadd.f32 0.0, %v3030
      %v3032 = vpop.f32.mrf.mxu0
      %v3033 = vpop.f32.mrf.mxu0
      %v3034 = vadd.f32 0.0, %v3033
      %v3035 = vpop.f32.mrf.mxu0
      %3036 = vmatprep.mubr.bf16.mxu0 0
      %3037 = vmatmul.mubr.bf16.gmra.mxu0 %v2914
      %v3038 = vpop.f32.mrf.mxu0
      %v3039 = vadd.f32 0.0, %v3038
      %v3040 = vpop.f32.mrf.mxu0
      %v3041 = vpop.f32.mrf.mxu0
      %v3042 = vadd.f32 0.0, %v3041
      %v3043 = vpop.f32.mrf.mxu0
      %3044 = vmatprep.mubr.bf16.mxu0 0
      %3045 = vmatmul.mubr.bf16.gmra.mxu0 %v2917
      %v3046 = vpop.f32.mrf.mxu0
      %v3047 = vadd.f32 0.0, %v3046
      %v3048 = vpop.f32.mrf.mxu0
      %v3049 = vpop.f32.mrf.mxu0
      %v3050 = vadd.f32 0.0, %v3049
      %v3051 = vpop.f32.mrf.mxu0
      %3052 = vmatprep.mubr.bf16.mxu0 0
      %3053 = vmatmul.mubr.bf16.gmra.mxu0 %v2920
      %v3054 = vpop.f32.mrf.mxu0
      %v3055 = vadd.f32 0.0, %v3054
      %v3056 = vpop.f32.mrf.mxu0
      %v3057 = vpop.f32.mrf.mxu0
      %v3058 = vadd.f32 0.0, %v3057
      %v3059 = vpop.f32.mrf.mxu0
      %3060 = vmatprep.mubr.bf16.mxu0 0
      %3061 = vmatmul.mubr.bf16.gmra.mxu0 %v2923
      %v3062 = vpop.f32.mrf.mxu0
      %v3063 = vadd.f32 0.0, %v3062
      %v3064 = vpop.f32.mrf.mxu0
      %v3065 = vpop.f32.mrf.mxu0
      %v3066 = vadd.f32 0.0, %v3065
      %v3067 = vpop.f32.mrf.mxu0
      %3068 = vmatprep.mubr.bf16.mxu0 0
      %3069 = vmatmul.mubr.bf16.gmra.mxu0 %v2926
      %v3070 = vpop.f32.mrf.mxu0
      %v3071 = vadd.f32 0.0, %v3070
      %v3072 = vpop.f32.mrf.mxu0
      %v3073 = vpop.f32.mrf.mxu0
      %v3074 = vadd.f32 0.0, %v3073
      %v3075 = vpop.f32.mrf.mxu0
      %3076 = vmatprep.mubr.bf16.mxu0 0
      %3077 = vmatmul.mubr.bf16.gmra.mxu0 %v2929
      %v3078 = vpop.f32.mrf.mxu0
      %v3079 = vadd.f32 0.0, %v3078
      %v3080 = vpop.f32.mrf.mxu0
      %v3081 = vpop.f32.mrf.mxu0
      %v3082 = vadd.f32 0.0, %v3081
      %v3083 = vpop.f32.mrf.mxu0
      %3084 = vmatprep.mubr.bf16.mxu0 0
      %3085 = vmatmul.mubr.bf16.gmra.mxu0 %v2932
      %v3086 = vpop.f32.mrf.mxu0
      %v3087 = vadd.f32 0.0, %v3086
      %v3088 = vpop.f32.mrf.mxu0
      %v3089 = vpop.f32.mrf.mxu0
      %v3090 = vadd.f32 0.0, %v3089
      %v3091 = vpop.f32.mrf.mxu0
      %3092 = vmatprep.mubr.bf16.mxu0 0
      %3093 = vmatmul.mubr.bf16.gmra.mxu0 %v2935
      %v3094 = vpop.f32.mrf.mxu0
      %v3095 = vadd.f32 0.0, %v3094
      %v3096 = vpop.f32.mrf.mxu0
      %v3097 = vpop.f32.mrf.mxu0
      %v3098 = vadd.f32 0.0, %v3097
      %v3099 = vpop.f32.mrf.mxu0
      %3100 = vdwg.mxu0
      %v3101 = vadd.f32 %v2807, %v2975
      %v3102 = vadd.f32 %v2808, %v2978
      %v3103 = vadd.f32 %v2809, %v2983
      %v3104 = vadd.f32 %v2810, %v2986
      %v3105 = vadd.f32 %v2811, %v2991
      %v3106 = vadd.f32 %v2812, %v2994
      %v3107 = vadd.f32 %v2813, %v2999
      %v3108 = vadd.f32 %v2814, %v3002
      %v3109 = vadd.f32 %v2815, %v3007
      %v3110 = vadd.f32 %v2816, %v3010
      %v3111 = vadd.f32 %v2817, %v3015
      %v3112 = vadd.f32 %v2818, %v3018
      %v3113 = vadd.f32 %v2819, %v3023
      %v3114 = vadd.f32 %v2820, %v3026
      %v3115 = vadd.f32 %v2821, %v3031
      %v3116 = vadd.f32 %v2822, %v3034
      %v3117 = vadd.f32 %v2823, %v3039
      %v3118 = vadd.f32 %v2824, %v3042
      %v3119 = vadd.f32 %v2825, %v3047
      %v3120 = vadd.f32 %v2826, %v3050
      %v3121 = vadd.f32 %v2827, %v3055
      %v3122 = vadd.f32 %v2828, %v3058
      %v3123 = vadd.f32 %v2829, %v3063
      %v3124 = vadd.f32 %v2830, %v3066
      %v3125 = vadd.f32 %v2831, %v3071
      %v3126 = vadd.f32 %v2832, %v3074
      %v3127 = vadd.f32 %v2833, %v3079
      %v3128 = vadd.f32 %v2834, %v3082
      %v3129 = vadd.f32 %v2835, %v3087
      %v3130 = vadd.f32 %v2836, %v3090
      %v3131 = vadd.f32 %v2837, %v3095
      %v3132 = vadd.f32 %v2838, %v3098
      %v3133 = vld [vmem:[%s4] sm:$0x1]
      %v3135 = vlaneseq
      %v3136 = vshrl.u32 %v3135, 7
      %v3137 = vsub.s32 0, %v3136
      %v3138 = vrot.slane %v3133, %v3137
      %v3140 = vadd.f32 %v3101, %v3138
      %v3141 = vadd.f32 %v3102, %v3138
      %v3142 = vadd.f32 %v3103, %v3138
      %v3143 = vadd.f32 %v3104, %v3138
      %v3144 = vadd.f32 %v3105, %v3138
      %v3145 = vadd.f32 %v3106, %v3138
      %v3146 = vadd.f32 %v3107, %v3138
      %v3147 = vadd.f32 %v3108, %v3138
      %v3148 = vadd.f32 %v3109, %v3138
      %v3149 = vadd.f32 %v3110, %v3138
      %v3150 = vadd.f32 %v3111, %v3138
      %v3151 = vadd.f32 %v3112, %v3138
      %v3152 = vadd.f32 %v3113, %v3138
      %v3153 = vadd.f32 %v3114, %v3138
      %v3154 = vadd.f32 %v3115, %v3138
      %v3155 = vadd.f32 %v3116, %v3138
      %v3156 = vadd.f32 %v3117, %v3138
      %v3157 = vadd.f32 %v3118, %v3138
      %v3158 = vadd.f32 %v3119, %v3138
      %v3159 = vadd.f32 %v3120, %v3138
      %v3160 = vadd.f32 %v3121, %v3138
      %v3161 = vadd.f32 %v3122, %v3138
      %v3162 = vadd.f32 %v3123, %v3138
      %v3163 = vadd.f32 %v3124, %v3138
      %v3164 = vadd.f32 %v3125, %v3138
      %v3165 = vadd.f32 %v3126, %v3138
      %v3166 = vadd.f32 %v3127, %v3138
      %v3167 = vadd.f32 %v3128, %v3138
      %v3168 = vadd.f32 %v3129, %v3138
      %v3169 = vadd.f32 %v3130, %v3138
      %v3170 = vadd.f32 %v3131, %v3138
      %v3171 = vadd.f32 %v3132, %v3138
      %v3172 = vpack.c.bf16 %v3141, %v3140
      %v3173 = vpack.c.bf16 %v3143, %v3142
      %v3174 = vpack.c.bf16 %v3145, %v3144
      %v3175 = vpack.c.bf16 %v3147, %v3146
      %v3176 = vpack.c.bf16 %v3149, %v3148
      %v3177 = vpack.c.bf16 %v3151, %v3150
      %v3178 = vpack.c.bf16 %v3153, %v3152
      %v3179 = vpack.c.bf16 %v3155, %v3154
      %v3180 = vpack.c.bf16 %v3157, %v3156
      %v3181 = vpack.c.bf16 %v3159, %v3158
      %v3182 = vpack.c.bf16 %v3161, %v3160
      %v3183 = vpack.c.bf16 %v3163, %v3162
      %v3184 = vpack.c.bf16 %v3165, %v3164
      %v3185 = vpack.c.bf16 %v3167, %v3166
      %v3186 = vpack.c.bf16 %v3169, %v3168
      %v3187 = vpack.c.bf16 %v3171, %v3170
      %v3204 = vunpack.c.l.b16 %v3172
      %v3205 = vunpack.c.h.b16 %v3172
      %v3206 = vunpack.c.l.b16 %v3173
      %v3207 = vunpack.c.h.b16 %v3173
      %v3208 = vunpack.c.l.b16 %v3174
      %v3209 = vunpack.c.h.b16 %v3174
      %v3210 = vunpack.c.l.b16 %v3175
      %v3211 = vunpack.c.h.b16 %v3175
      %v3212 = vunpack.c.l.b16 %v3176
      %v3213 = vunpack.c.h.b16 %v3176
      %v3214 = vunpack.c.l.b16 %v3177
      %v3215 = vunpack.c.h.b16 %v3177
      %v3216 = vunpack.c.l.b16 %v3178
      %v3217 = vunpack.c.h.b16 %v3178
      %v3218 = vunpack.c.l.b16 %v3179
      %v3219 = vunpack.c.h.b16 %v3179
      %v3220 = vunpack.c.l.b16 %v3180
      %v3221 = vunpack.c.h.b16 %v3180
      %v3222 = vunpack.c.l.b16 %v3181
      %v3223 = vunpack.c.h.b16 %v3181
      %v3224 = vunpack.c.l.b16 %v3182
      %v3225 = vunpack.c.h.b16 %v3182
      %v3226 = vunpack.c.l.b16 %v3183
      %v3227 = vunpack.c.h.b16 %v3183
      %v3228 = vunpack.c.l.b16 %v3184
      %v3229 = vunpack.c.h.b16 %v3184
      %v3230 = vunpack.c.l.b16 %v3185
      %v3231 = vunpack.c.h.b16 %v3185
      %v3232 = vunpack.c.l.b16 %v3186
      %v3233 = vunpack.c.h.b16 %v3186
      %v3234 = vunpack.c.l.b16 %v3187
      %v3235 = vunpack.c.h.b16 %v3187
      %v3236 = vpack.c.b16 %v3204, %v3204
      %v3237 = vpack.c.b16 %v3205, %v3205
      %v3238 = vpack.c.b16 %v3206, %v3206
      %v3239 = vpack.c.b16 %v3207, %v3207
      %v3240 = vpack.c.b16 %v3208, %v3208
      %v3241 = vpack.c.b16 %v3209, %v3209
      %v3242 = vpack.c.b16 %v3210, %v3210
      %v3243 = vpack.c.b16 %v3211, %v3211
      %v3244 = vpack.c.b16 %v3212, %v3212
      %v3245 = vpack.c.b16 %v3213, %v3213
      %v3246 = vpack.c.b16 %v3214, %v3214
      %v3247 = vpack.c.b16 %v3215, %v3215
      %v3248 = vpack.c.b16 %v3216, %v3216
      %v3249 = vpack.c.b16 %v3217, %v3217
      %v3250 = vpack.c.b16 %v3218, %v3218
      %v3251 = vpack.c.b16 %v3219, %v3219
      %v3252 = vpack.c.b16 %v3220, %v3220
      %v3253 = vpack.c.b16 %v3221, %v3221
      %v3254 = vpack.c.b16 %v3222, %v3222
      %v3255 = vpack.c.b16 %v3223, %v3223
      %v3256 = vpack.c.b16 %v3224, %v3224
      %v3257 = vpack.c.b16 %v3225, %v3225
      %v3258 = vpack.c.b16 %v3226, %v3226
      %v3259 = vpack.c.b16 %v3227, %v3227
      %v3260 = vpack.c.b16 %v3228, %v3228
      %v3261 = vpack.c.b16 %v3229, %v3229
      %v3262 = vpack.c.b16 %v3230, %v3230
      %v3263 = vpack.c.b16 %v3231, %v3231
      %v3264 = vpack.c.b16 %v3232, %v3232
      %v3265 = vpack.c.b16 %v3233, %v3233
      %v3266 = vpack.c.b16 %v3234, %v3234
      %v3267 = vpack.c.b16 %v3235, %v3235
      %vm3300 = vcmask 27648
      %3301 = vst.msk [vmem:[%s289] sm:$0xf] %vm3300, %v3236
      %3302 = vst.msk [vmem:[%s289 + $0x4] sm:$0xf] %vm3300, %v3237
      %3303 = vst.msk [vmem:[%s289 + $0x8] sm:$0xf] %vm3300, %v3238
      %3304 = vst.msk [vmem:[%s289 + $0xc] sm:$0xf] %vm3300, %v3239
      %3305 = vst.msk [vmem:[%s289 + $0x10] sm:$0xf] %vm3300, %v3240
      %3306 = vst.msk [vmem:[%s289 + $0x14] sm:$0xf] %vm3300, %v3241
      %3307 = vst.msk [vmem:[%s289 + $0x18] sm:$0xf] %vm3300, %v3242
      %3308 = vst.msk [vmem:[%s289 + $0x1c] sm:$0xf] %vm3300, %v3243
      %3309 = vst.msk [vmem:[%s289 + $0x20] sm:$0xf] %vm3300, %v3244
      %3310 = vst.msk [vmem:[%s289 + $0x24] sm:$0xf] %vm3300, %v3245
      %3311 = vst.msk [vmem:[%s289 + $0x28] sm:$0xf] %vm3300, %v3246
      %3312 = vst.msk [vmem:[%s289 + $0x2c] sm:$0xf] %vm3300, %v3247
      %3313 = vst.msk [vmem:[%s289 + $0x30] sm:$0xf] %vm3300, %v3248
      %3314 = vst.msk [vmem:[%s289 + $0x34] sm:$0xf] %vm3300, %v3249
      %3315 = vst.msk [vmem:[%s289 + $0x38] sm:$0xf] %vm3300, %v3250
      %3316 = vst.msk [vmem:[%s289 + $0x3c] sm:$0xf] %vm3300, %v3251
      %3317 = vst.msk [vmem:[%s289 + $0x40] sm:$0xf] %vm3300, %v3252
      %3318 = vst.msk [vmem:[%s289 + $0x44] sm:$0xf] %vm3300, %v3253
      %3319 = vst.msk [vmem:[%s289 + $0x48] sm:$0xf] %vm3300, %v3254
      %3320 = vst.msk [vmem:[%s289 + $0x4c] sm:$0xf] %vm3300, %v3255
      %3321 = vst.msk [vmem:[%s289 + $0x50] sm:$0xf] %vm3300, %v3256
      %3322 = vst.msk [vmem:[%s289 + $0x54] sm:$0xf] %vm3300, %v3257
      %3323 = vst.msk [vmem:[%s289 + $0x58] sm:$0xf] %vm3300, %v3258
      %3324 = vst.msk [vmem:[%s289 + $0x5c] sm:$0xf] %vm3300, %v3259
      %3325 = vst.msk [vmem:[%s289 + $0x60] sm:$0xf] %vm3300, %v3260
      %3326 = vst.msk [vmem:[%s289 + $0x64] sm:$0xf] %vm3300, %v3261
      %3327 = vst.msk [vmem:[%s289 + $0x68] sm:$0xf] %vm3300, %v3262
      %3328 = vst.msk [vmem:[%s289 + $0x6c] sm:$0xf] %vm3300, %v3263
      %3329 = vst.msk [vmem:[%s289 + $0x70] sm:$0xf] %vm3300, %v3264
      %3330 = vst.msk [vmem:[%s289 + $0x74] sm:$0xf] %vm3300, %v3265
      %3331 = vst.msk [vmem:[%s289 + $0x78] sm:$0xf] %vm3300, %v3266
      %3332 = vst.msk [vmem:[%s289 + $0x7c] sm:$0xf] %vm3300, %v3267
      %v3333 = vsel %vm297, %v3140, 0.0
      %v3334 = vsel %vm297, %v3141, 0.0
      %v3335 = vadd.f32 %v3333, %v3334
      %v3336 = vsel %vm297, %v3142, 0.0
      %v3337 = vadd.f32 %v3335, %v3336
      %v3338 = vsel %vm297, %v3143, 0.0
      %v3339 = vadd.f32 %v3337, %v3338
      %v3340 = vsel %vm297, %v3144, 0.0
      %v3341 = vadd.f32 %v3339, %v3340
      %v3342 = vsel %vm297, %v3145, 0.0
      %v3343 = vadd.f32 %v3341, %v3342
      %v3344 = vsel %vm297, %v3146, 0.0
      %v3345 = vadd.f32 %v3343, %v3344
      %v3346 = vsel %vm297, %v3147, 0.0
      %v3347 = vadd.f32 %v3345, %v3346
      %v3348 = vsel %vm297, %v3148, 0.0
      %v3349 = vadd.f32 %v3347, %v3348
      %v3350 = vsel %vm297, %v3149, 0.0
      %v3351 = vadd.f32 %v3349, %v3350
      %v3352 = vsel %vm297, %v3150, 0.0
      %v3353 = vadd.f32 %v3351, %v3352
      %v3354 = vsel %vm297, %v3151, 0.0
      %v3355 = vadd.f32 %v3353, %v3354
      %v3356 = vsel %vm297, %v3152, 0.0
      %v3357 = vadd.f32 %v3355, %v3356
      %v3358 = vsel %vm297, %v3153, 0.0
      %v3359 = vadd.f32 %v3357, %v3358
      %v3360 = vsel %vm297, %v3154, 0.0
      %v3361 = vadd.f32 %v3359, %v3360
      %v3362 = vsel %vm297, %v3155, 0.0
      %v3363 = vadd.f32 %v3361, %v3362
      %v3364 = vsel %vm297, %v3156, 0.0
      %v3365 = vadd.f32 %v3363, %v3364
      %v3366 = vsel %vm297, %v3157, 0.0
      %v3367 = vadd.f32 %v3365, %v3366
      %v3368 = vsel %vm297, %v3158, 0.0
      %v3369 = vadd.f32 %v3367, %v3368
      %v3370 = vsel %vm297, %v3159, 0.0
      %v3371 = vadd.f32 %v3369, %v3370
      %v3372 = vsel %vm297, %v3160, 0.0
      %v3373 = vadd.f32 %v3371, %v3372
      %v3374 = vsel %vm297, %v3161, 0.0
      %v3375 = vadd.f32 %v3373, %v3374
      %v3376 = vsel %vm297, %v3162, 0.0
      %v3377 = vadd.f32 %v3375, %v3376
      %v3378 = vsel %vm297, %v3163, 0.0
      %v3379 = vadd.f32 %v3377, %v3378
      %v3380 = vsel %vm297, %v3164, 0.0
      %v3381 = vadd.f32 %v3379, %v3380
      %v3382 = vsel %vm297, %v3165, 0.0
      %v3383 = vadd.f32 %v3381, %v3382
      %v3384 = vsel %vm297, %v3166, 0.0
      %v3385 = vadd.f32 %v3383, %v3384
      %v3386 = vsel %vm297, %v3167, 0.0
      %v3387 = vadd.f32 %v3385, %v3386
      %v3388 = vsel %vm297, %v3168, 0.0
      %v3389 = vadd.f32 %v3387, %v3388
      %v3390 = vsel %vm297, %v3169, 0.0
      %v3391 = vadd.f32 %v3389, %v3390
      %v3392 = vsel %vm297, %v3170, 0.0
      %v3393 = vadd.f32 %v3391, %v3392
      %v3394 = vsel %vm297, %v3171, 0.0
      %v3395 = vadd.f32 %v3393, %v3394
      %v3396 = vrot.slane %v3395, 4
      %v3397 = vadd.f32 %v3395, %v3396
      %v3398 = vrot.slane %v3397, 2
      %v3399 = vadd.f32 %v3397, %v3398
      %v3400 = vrot.slane %v3399, 1
      %v3401 = vadd.f32 %v3399, %v3400
      %3402 = vst.msk [vmem:[%s292] sm:$0x1] %vm306, %v3401
      %v3403 = vmul.f32 %v3140, %v3140
      %v3404 = vmul.f32 %v3141, %v3141
      %v3405 = vmul.f32 %v3142, %v3142
      %v3406 = vmul.f32 %v3143, %v3143
      %v3407 = vmul.f32 %v3144, %v3144
      %v3408 = vmul.f32 %v3145, %v3145
      %v3409 = vmul.f32 %v3146, %v3146
      %v3410 = vmul.f32 %v3147, %v3147
      %v3411 = vmul.f32 %v3148, %v3148
      %v3412 = vmul.f32 %v3149, %v3149
      %v3413 = vmul.f32 %v3150, %v3150
      %v3414 = vmul.f32 %v3151, %v3151
      %v3415 = vmul.f32 %v3152, %v3152
      %v3416 = vmul.f32 %v3153, %v3153
      %v3417 = vmul.f32 %v3154, %v3154
      %v3418 = vmul.f32 %v3155, %v3155
      %v3419 = vmul.f32 %v3156, %v3156
      %v3420 = vmul.f32 %v3157, %v3157
      %v3421 = vmul.f32 %v3158, %v3158
      %v3422 = vmul.f32 %v3159, %v3159
      %v3423 = vmul.f32 %v3160, %v3160
      %v3424 = vmul.f32 %v3161, %v3161
      %v3425 = vmul.f32 %v3162, %v3162
      %v3426 = vmul.f32 %v3163, %v3163
      %v3427 = vmul.f32 %v3164, %v3164
      %v3428 = vmul.f32 %v3165, %v3165
      %v3429 = vmul.f32 %v3166, %v3166
      %v3430 = vmul.f32 %v3167, %v3167
      %v3431 = vmul.f32 %v3168, %v3168
      %v3432 = vmul.f32 %v3169, %v3169
      %v3433 = vmul.f32 %v3170, %v3170
      %v3434 = vmul.f32 %v3171, %v3171
      %v3435 = vsel %vm297, %v3403, 0.0
      %v3436 = vsel %vm297, %v3404, 0.0
      %v3437 = vadd.f32 %v3435, %v3436
      %v3438 = vsel %vm297, %v3405, 0.0
      %v3439 = vadd.f32 %v3437, %v3438
      %v3440 = vsel %vm297, %v3406, 0.0
      %v3441 = vadd.f32 %v3439, %v3440
      %v3442 = vsel %vm297, %v3407, 0.0
      %v3443 = vadd.f32 %v3441, %v3442
      %v3444 = vsel %vm297, %v3408, 0.0
      %v3445 = vadd.f32 %v3443, %v3444
      %v3446 = vsel %vm297, %v3409, 0.0
      %v3447 = vadd.f32 %v3445, %v3446
      %v3448 = vsel %vm297, %v3410, 0.0
      %v3449 = vadd.f32 %v3447, %v3448
      %v3450 = vsel %vm297, %v3411, 0.0
      %v3451 = vadd.f32 %v3449, %v3450
      %v3452 = vsel %vm297, %v3412, 0.0
      %v3453 = vadd.f32 %v3451, %v3452
      %v3454 = vsel %vm297, %v3413, 0.0
      %v3455 = vadd.f32 %v3453, %v3454
      %v3456 = vsel %vm297, %v3414, 0.0
      %v3457 = vadd.f32 %v3455, %v3456
      %v3458 = vsel %vm297, %v3415, 0.0
      %v3459 = vadd.f32 %v3457, %v3458
      %v3460 = vsel %vm297, %v3416, 0.0
      %v3461 = vadd.f32 %v3459, %v3460
      %v3462 = vsel %vm297, %v3417, 0.0
      %v3463 = vadd.f32 %v3461, %v3462
      %v3464 = vsel %vm297, %v3418, 0.0
      %v3465 = vadd.f32 %v3463, %v3464
      %v3466 = vsel %vm297, %v3419, 0.0
      %v3467 = vadd.f32 %v3465, %v3466
      %v3468 = vsel %vm297, %v3420, 0.0
      %v3469 = vadd.f32 %v3467, %v3468
      %v3470 = vsel %vm297, %v3421, 0.0
      %v3471 = vadd.f32 %v3469, %v3470
      %v3472 = vsel %vm297, %v3422, 0.0
      %v3473 = vadd.f32 %v3471, %v3472
      %v3474 = vsel %vm297, %v3423, 0.0
      %v3475 = vadd.f32 %v3473, %v3474
      %v3476 = vsel %vm297, %v3424, 0.0
      %v3477 = vadd.f32 %v3475, %v3476
      %v3478 = vsel %vm297, %v3425, 0.0
      %v3479 = vadd.f32 %v3477, %v3478
      %v3480 = vsel %vm297, %v3426, 0.0
      %v3481 = vadd.f32 %v3479, %v3480
      %v3482 = vsel %vm297, %v3427, 0.0
      %v3483 = vadd.f32 %v3481, %v3482
      %v3484 = vsel %vm297, %v3428, 0.0
      %v3485 = vadd.f32 %v3483, %v3484
      %v3486 = vsel %vm297, %v3429, 0.0
      %v3487 = vadd.f32 %v3485, %v3486
      %v3488 = vsel %vm297, %v3430, 0.0
      %v3489 = vadd.f32 %v3487, %v3488
      %v3490 = vsel %vm297, %v3431, 0.0
      %v3491 = vadd.f32 %v3489, %v3490
      %v3492 = vsel %vm297, %v3432, 0.0
      %v3493 = vadd.f32 %v3491, %v3492
      %v3494 = vsel %vm297, %v3433, 0.0
      %v3495 = vadd.f32 %v3493, %v3494
      %v3496 = vsel %vm297, %v3434, 0.0
      %v3497 = vadd.f32 %v3495, %v3496
      %v3498 = vrot.slane %v3497, 4
      %v3499 = vadd.f32 %v3497, %v3498
      %v3500 = vrot.slane %v3499, 2
      %v3501 = vadd.f32 %v3499, %v3500
      %v3502 = vrot.slane %v3501, 1
      %v3503 = vadd.f32 %v3501, %v3502
      %3504 = vst.msk [vmem:[%s295] sm:$0x1] %vm306, %v3503
      %p3505 = scmp.lt.s32.totalorder %s19, 1
      %s3506 = scalar_select %p3505, %s19, 1
      %s3507 = smul.addr %s3506, 32
      %s3508 = smul.addr %s3507, 4
      %s3509 = scalar_lea.vmem %s5, %s3508
      %p3510 = scmp.lt.s32.totalorder %s19, 1
      %s3511 = scalar_select %p3510, %s19, 1
      %s3512 = scalar_lea.vmem %s6, %s3511
      %p3513 = scmp.lt.s32.totalorder %s19, 1
      %s3514 = scalar_select %p3513, %s19, 1
      %s3515 = scalar_lea.vmem %s7, %s3514
      // Predicated region
      $region41: #{se_bottleneck.7} parent=39 // pred_check
        %p3516 = pneg %p147
      $region42: #{se_bottleneck.7} parent=39 // pred_check_branch
        %3518 = sbr.rel (%p3516) target = $region44
      $region43: #{se_bottleneck.7} parent=39 // pred_region
        _
      $region44: #{se_bottleneck.7} parent=39 // pred_fallthru
        _
      // Predicated region
      $region45: #{se_bottleneck.7} parent=39 // pred_check
        %p3519 = pneg %p173
      $region46: #{se_bottleneck.7} parent=39 // pred_check_branch
        %3521 = sbr.rel (%p3519) target = $region48
      $region47: #{se_bottleneck.7} parent=39 // pred_region
        _
      $region48: #{se_bottleneck.7} parent=39 // pred_fallthru
        _
      // Predicated region
      $region49: #{se_bottleneck.7} parent=39 // pred_check
        %p3522 = pneg %p199
      $region50: #{se_bottleneck.7} parent=39 // pred_check_branch
        %3524 = sbr.rel (%p3522) target = $region52
      $region51: #{se_bottleneck.7} parent=39 // pred_region
        _
      $region52: #{se_bottleneck.7} parent=39 // pred_fallthru
        _
    $region40: #{se_bottleneck.7} parent=5 // pred_fallthru
      _
    %p3525 = scmp.le.s32.totalorder 2, %s14
    // Predicated region
    $region53: #{se_bottleneck.7} parent=5 // pred_check
      %p3526 = pneg %p3525
    $region54: #{se_bottleneck.7} parent=5 // pred_check_branch
      %3528 = sbr.rel (%p3526) target = $region56
    $region55: #{se_bottleneck.7} parent=5 // pred_region
      %s3529 = ssub.s32 %s14, 2
      // Predicated region
      $region57: #{se_bottleneck.7} parent=55 // pred_check
        %p3530 = pneg %p153
      $region58: #{se_bottleneck.7} parent=55 // pred_check_branch
        %3532 = sbr.rel (%p3530) target = $region60
      $region59: #{se_bottleneck.7} parent=55 // pred_region
        %p3533 = scmp.lt.s32.totalorder %s20, 1
        %s3534 = scalar_select %p3533, %s20, 1
        %s3535 = smul.addr %s3534, 32
        %s3536 = smul.addr %s3535, 4
        %s3537 = scalar_lea.vmem %s5, %s3536
      $region60: #{se_bottleneck.7} parent=55 // pred_fallthru
        _
      // Predicated region
      $region61: #{se_bottleneck.7} parent=55 // pred_check
        %p3538 = pneg %p179
      $region62: #{se_bottleneck.7} parent=55 // pred_check_branch
        %3540 = sbr.rel (%p3538) target = $region64
      $region63: #{se_bottleneck.7} parent=55 // pred_region
        %p3541 = scmp.lt.s32.totalorder %s20, 1
        %s3542 = scalar_select %p3541, %s20, 1
        %s3543 = scalar_lea.vmem %s6, %s3542
      $region64: #{se_bottleneck.7} parent=55 // pred_fallthru
        _
      // Predicated region
      $region65: #{se_bottleneck.7} parent=55 // pred_check
        %p3544 = pneg %p205
      $region66: #{se_bottleneck.7} parent=55 // pred_check_branch
        %3546 = sbr.rel (%p3544) target = $region68
      $region67: #{se_bottleneck.7} parent=55 // pred_region
        %p3547 = scmp.lt.s32.totalorder %s20, 1
        %s3548 = scalar_select %p3547, %s20, 1
        %s3549 = scalar_lea.vmem %s7, %s3548
      $region68: #{se_bottleneck.7} parent=55 // pred_fallthru
        _
    $region56: #{se_bottleneck.7} parent=5 // pred_fallthru
      _
  $region6: #{se_bottleneck.7} parent=0 // loop_footer
    %s18 = sadd.s32 1, %s14
  $region7: #{se_bottleneck.7} parent=0 // loop_footer_branch
    %13 = sbr.rel target = $region3
  $region8: #{se_bottleneck.7} parent=0 // loop_exit
    _

</llo_original>
